<compile_context>
chip_gen: v5e
topology: v5e:2x2
jax: 0.10.0
libtpu: 0.0.40
codegen_flags: <defaults>
</compile_context>

<pallas_src>
import functools

import jax
import jax.numpy as jnp
from jax.experimental import pallas as pl
from jax.experimental.pallas import tpu as pltpu

BN_EPS = 1e-5


def _round_up(x, m):
    return (x + m - 1) // m * m


# ----------------------------- fused kernel ------------------------------

def _pvnet_kernel(x_ref, mask_ref,
                  we_ref, be_ref, wt_ref, bt_ref,
                  wpv_ref, bpv_ref,
                  wfa_ref, wfb_ref, wv1_ref,
                  bf_ref, bv1_ref, wv2_ref, bv2_ref,
                  sel_ref,
                  p_ref, v_ref,
                  act_scr, pat_scr,
                  *, nb, ch, blocks, wpad, lp, guard):
    M = nb * lp
    G = guard

    # zero ONLY the guard rows; interior rows [G:G+M) are fully overwritten below
    zg = jnp.zeros((G, ch), jnp.float32)
    act_scr[0:G, :] = zg
    act_scr[G + M:G + M + G, :] = zg

    # stage the (spatially zero-padded, channel-padded-to-ch, bf16) input
    act_scr[G:G + M, :] = x_ref[...].astype(jnp.float32)

    # interior mask: broadcast ONCE to (M, ch) and reused by every conv
    mask_b = jnp.broadcast_to(mask_ref[...], (M, ch))

    # flat-row offsets of the 9 taps of a 3x3 / pad=1 conv
    offs = [dy * wpad + dx for dy in (-1, 0, 1) for dx in (-1, 0, 1)]

    def conv3x3(w_bf16, bias, residual=None):
        # assemble the (M, 9*ch) im2col patch in bf16 (cast at the copy) -> one MXU GEMM
        for t, d in enumerate(offs):
            pat_scr[:, t * ch:(t + 1) * ch] = (
                act_scr[G + d:G + d + M, :].astype(jnp.bfloat16))
        y = jnp.dot(pat_scr[...], w_bf16, preferred_element_type=jnp.float32)
        y = y + bias                                      # folded-BN shift
        if residual is not None:
            y = y + residual
        # mask keeps conv zero-padding / per-image tail rows exactly 0 between layers
        return jnp.maximum(y, 0.0) * mask_b

    # entry conv (input channels pre-padded to ch, shares the torso conv path)
    h = conv3x3(we_ref[...], be_ref[...])

    # torso: residual blocks (weights resident in VMEM)
    for b in range(blocks):
        act_scr[G:G + M, :] = h
        y1 = conv3x3(wt_ref[2 * b], bt_ref[2 * b])
        act_scr[G:G + M, :] = y1
        h = conv3x3(wt_ref[2 * b + 1], bt_ref[2 * b + 1], residual=h)

    # ---- heads, batched over images (MXU GEMMs, no per-image loop) ----
    qv = jnp.dot(h, wpv_ref[...], preferred_element_type=jnp.float32) + bpv_ref[...]
    qv = jnp.maximum(qv, 0.0)                              # (M, 3): [p0, p1, v] per position

    # per-position contributions; zero weight rows cancel the nonzero relu(bias) that
    # qv takes on padding/tail rows (h is masked to 0 there)
    cp = qv[:, 0:1] * wfa_ref[...] + qv[:, 1:2] * wfb_ref[...]   # (M, pol_pad)
    cv = qv[:, 2:3] * wv1_ref[...]                               # (M, 256)

    sel = sel_ref[...]                                    # (nbo, M) block-diagonal 0/1
    p_out = jnp.dot(sel, cp, preferred_element_type=jnp.float32) + bf_ref[...]
    v1 = jnp.maximum(
        jnp.dot(sel, cv, preferred_element_type=jnp.float32) + bv1_ref[...], 0.0)
    v_out = jnp.tanh(
        jnp.dot(v1, wv2_ref[...], preferred_element_type=jnp.float32) + bv2_ref[...])

    p_ref[...] = p_out
    v_ref[...] = v_out


def _pvnet_pallas(weight_args, x_flat, *, n_tiles, nb, nbo, ch, blocks,
                  wpad, lp, guard, pol_pad):
    M = nb * lp
    R = M + 2 * guard

    def resident(a):
        r = a.ndim
        return pl.BlockSpec(a.shape, lambda i, _r=r: (0,) * _r)

    kernel = functools.partial(_pvnet_kernel, nb=nb, ch=ch, blocks=blocks,
                               wpad=wpad, lp=lp, guard=guard)

    grid_spec = pltpu.PrefetchScalarGridSpec(
        num_scalar_prefetch=0,
        grid=(n_tiles,),
        in_specs=[pl.BlockSpec((M, ch), lambda i: (i, 0))]
                 + [resident(a) for a in weight_args],
        out_specs=[pl.BlockSpec((nbo, pol_pad), lambda i: (i, 0)),
                   pl.BlockSpec((nbo, pol_pad), lambda i: (i, 0))],
        scratch_shapes=[pltpu.VMEM((R, ch), jnp.float32),      # activations (guarded)
                        pltpu.VMEM((M, 9 * ch), jnp.bfloat16)],  # im2col patch (bf16)
    )
    return pl.pallas_call(
        kernel,
        grid_spec=grid_spec,
        out_shape=(jax.ShapeDtypeStruct((n_tiles * nbo, pol_pad), jnp.float32),
                   jax.ShapeDtypeStruct((n_tiles * nbo, pol_pad), jnp.float32)),
        compiler_params=pltpu.CompilerParams(
            dimension_semantics=("parallel",),
            vmem_limit_bytes=48 * 1024 * 1024),
    )(x_flat, *weight_args)


# ----------------------------- parameters ------------------------------

def init_params(key, bs=9, ch=32, blocks=2):
    wpad = bs + 2
    lp = _round_up(wpad * wpad, 8)          # padded flat rows per image (128 for bs=9)
    hw = bs * bs
    n_logits = hw + 1
    pol_pad = _round_up(max(n_logits, 128), 128)

    state = [key]

    def nk():
        state[0], sub = jax.random.split(state[0])
        return sub

    def fold_bn(c):
        k1, k2, k3, k4 = jax.random.split(nk(), 4)
        gamma = 1.0 + 0.1 * jax.random.normal(k1, (c,), jnp.float32)
        beta = 0.1 * jax.random.normal(k2, (c,), jnp.float32)
        mean = 0.1 * jax.random.normal(k3, (c,), jnp.float32)
        var = jax.random.uniform(k4, (c,), jnp.float32, minval=0.5, maxval=1.5)
        scale = gamma / jnp.sqrt(var + BN_EPS)
        shift = beta - mean * scale
        return scale, shift

    def conv3x3_folded(c_in, c_in_pad, c_out):
        # torch Conv2d weight (c_out, c_in, 3, 3), bias=False; BN scale folded into weight
        w = 0.1 * jax.random.normal(nk(), (c_out, c_in, 3, 3), jnp.float32)
        scale, shift = fold_bn(c_out)
        w = jnp.transpose(w, (2, 3, 1, 0))                           # (ky, kx, c_in, c_out)
        w = jnp.pad(w, ((0, 0), (0, 0), (0, c_in_pad - c_in), (0, 0)))
        w = w.reshape(9 * c_in_pad, c_out) * scale[None, :]
        return w.astype(jnp.bfloat16), shift.reshape(1, c_out)

    p = {}
    # entry conv: input channels padded 2 -> ch so the kernel's tap writes are lane aligned
    p["we"], p["be"] = conv3x3_folded(2, ch, ch)
    wts, bts = [], []
    for _ in range(blocks):
        for _ in range(2):
            w, b = conv3x3_folded(ch, ch, ch)
            wts.append(w)
            bts.append(b)
    p["wt"] = jnp.stack(wts, 0)                      # (2*blocks, 9*ch, ch) bf16
    p["bt"] = jnp.stack(bts, 0)                      # (2*blocks, 1, ch)    f32

    # head 1x1 convs (with bias), fused into one (ch, 3) matrix: cols [p0, p1, v]
    wpc = 0.1 * jax.random.normal(nk(), (2, ch, 1, 1), jnp.float32)
    bpc = 0.1 * jax.random.normal(nk(), (2,), jnp.float32)
    wvc = 0.1 * jax.random.normal(nk(), (1, ch, 1, 1), jnp.float32)
    bvc = 0.1 * jax.random.normal(nk(), (1,), jnp.float32)
    p["wpv"] = jnp.concatenate([wpc.reshape(2, ch).T, wvc.reshape(1, ch).T], axis=1)
    p["bpv"] = jnp.concatenate([bpc, bvc]).reshape(1, 3)

    # interior flat index of board cell (y, x) inside the lp-row per-image layout
    yy = jnp.arange(hw) // bs
    xx = jnp.arange(hw) % bs
    idx = (yy + 1) * wpad + (xx + 1)

    # policy FC Linear(2*hw, hw+1); torch flatten(1) is NCHW (channel-major), absorbed here
    wfc = 0.1 * jax.random.normal(nk(), (n_logits, 2 * hw), jnp.float32)
    bfc = 0.1 * jax.random.normal(nk(), (n_logits,), jnp.float32)
    p["wfa"] = jnp.zeros((lp, pol_pad), jnp.float32).at[idx].set(
        jnp.pad(wfc[:, :hw].T, ((0, 0), (0, pol_pad - n_logits))))
    p["wfb"] = jnp.zeros((lp, pol_pad), jnp.float32).at[idx].set(
        jnp.pad(wfc[:, hw:].T, ((0, 0), (0, pol_pad - n_logits))))
    p["bf"] = jnp.pad(bfc, (0, pol_pad - n_logits)).reshape(1, pol_pad)

    # value FCs: Linear(hw, 256) -> Linear(256, 1); output lane-padded to pol_pad
    wv1 = 0.1 * jax.random.normal(nk(), (256, hw), jnp.float32)
    bv1 = 0.1 * jax.random.normal(nk(), (256,), jnp.float32)
    wv2 = 0.1 * jax.random.normal(nk(), (1, 256), jnp.float32)
    bv2 = 0.1 * jax.random.normal(nk(), (1,), jnp.float32)
    p["wv1"] = jnp.zeros((lp, 256), jnp.float32).at[idx].set(wv1.T)
    p["bv1"] = bv1.reshape(1, 256)
    p["wv2"] = jnp.pad(wv2.T, ((0, 0), (0, pol_pad - 1)))
    p["bv2"] = jnp.pad(bv2, (0, pol_pad - 1)).reshape(1, pol_pad)

    # per-image interior mask over the lp-row padded-flat layout
    j = jnp.arange(lp)
    yp = j // wpad
    xp = j % wpad
    interior = (j < wpad * wpad) & (yp >= 1) & (yp <= bs) & (xp >= 1) & (xp <= bs)
    p["mask_img"] = interior.astype(jnp.float32).reshape(lp, 1)
    return p


# ----------------------------- forward ------------------------------

def policy_value_forward(params, x_nchw):
    we, wt = params["we"], params["wt"]
    ch = we.shape[1]
    blocks = wt.shape[0] // 2
    lp = params["mask_img"].shape[0]
    pol_pad = params["bf"].shape[1]

    n, c_in, bs, _ = x_nchw.shape
    wpad = bs + 2
    guard = _round_up(wpad + 1, 8)
    n_logits = bs * bs + 1
    assert lp == _round_up(wpad * wpad, 8)

    # batch tiling: >=2 grid steps whenever possible (v7x has 2 TensorCores)
    if n <= 8:
        nb = max(1, (n + 1) // 2)
    elif n <= 128:
        nb = 8
    else:
        nb = 16
    nbo = max(nb, 8)                      # output row-block padded up to 8 sublanes
    n_pad = _round_up(n, nb)
    n_tiles = n_pad // nb
    M = nb * lp

    # NCHW -> NHWC, zero-pad spatially (+1 each side) and channels c_in -> ch (lane aligned)
    x = jnp.transpose(x_nchw, (0, 2, 3, 1)).astype(jnp.float32)
    x = jnp.pad(x, ((0, 0), (1, 1), (1, 1), (0, ch - c_in)))
    x = x.reshape(n, wpad * wpad, ch)
    x = jnp.pad(x, ((0, 0), (0, lp - wpad * wpad), (0, 0)))     # per-image flat pad
    if n_pad != n:
        x = jnp.pad(x, ((0, n_pad - n), (0, 0), (0, 0)))
    x_flat = x.reshape(n_pad * lp, ch).astype(jnp.bfloat16)

    # per-tile resident tensors (replicated over the nb images of one grid step)
    mask_rep = jnp.tile(params["mask_img"], (nb, 1))            # (M, 1)
    wfa_rep = jnp.tile(params["wfa"], (nb, 1))                  # (M, pol_pad)
    wfb_rep = jnp.tile(params["wfb"], (nb, 1))                  # (M, pol_pad)
    wv1_rep = jnp.tile(params["wv1"], (nb, 1))                  # (M, 256)
    # block-diagonal image selector: sel[r, m] = 1 iff m // lp == r (rows >= nb are zero)
    sel = (jnp.arange(M)[None, :] // lp ==
           jnp.arange(nbo)[:, None]).astype(jnp.float32)        # (nbo, M)

    weight_args = (mask_rep, params["we"], params["be"], params["wt"], params["bt"],
                   params["wpv"], params["bpv"],
                   wfa_rep, wfb_rep, wv1_rep,
                   params["bf"], params["bv1"], params["wv2"], params["bv2"],
                   sel)

    p_pad, v_pad = _pvnet_pallas(weight_args, x_flat,
                                 n_tiles=n_tiles, nb=nb, nbo=nbo, ch=ch,
                                 blocks=blocks, wpad=wpad, lp=lp, guard=guard,
                                 pol_pad=pol_pad)
    p_pad = p_pad.reshape(n_tiles, nbo, pol_pad)[:, :nb].reshape(n_pad, pol_pad)
    v_pad = v_pad.reshape(n_tiles, nbo, pol_pad)[:, :nb].reshape(n_pad, pol_pad)
    return p_pad[:n, :n_logits], v_pad[:n, :1]


if __name__ == "__main__":
    bs, ch, blocks, batch = 9, 32, 2, 2   # small config; module defaults are ch=128, blocks=6
    key = jax.random.PRNGKey(0)
    kp, kx = jax.random.split(key)
    params = init_params(kp, bs=bs, ch=ch, blocks=blocks)
    x = jax.random.normal(kx, (batch, 2, bs, bs), jnp.float32)  # NCHW, like PyTorch

    fwd = jax.jit(policy_value_forward)
    p, v = fwd(params, x)
    jax.block_until_ready((p, v))

    assert p.shape == (batch, bs * bs + 1), p.shape
    assert v.shape == (batch, 1), v.shape
    assert bool(jnp.all(jnp.isfinite(p))) and bool(jnp.all(jnp.isfinite(v)))
    assert bool(jnp.all(jnp.abs(v) <= 1.0))
    print("KERNEL_OK")
</pallas_src>

<mosaic_0001>
module attributes {stable_mosaic.version = 11 : i64} {
  func.func @_pvnet_kernel(%arg0: i32, %arg1: memref<128x32xbf16, #tpu.memory_space<vmem>>, %arg2: memref<128x1xf32, #tpu.memory_space<vmem>>, %arg3: memref<288x32xbf16, #tpu.memory_space<vmem>>, %arg4: memref<1x32xf32, #tpu.memory_space<vmem>>, %arg5: memref<4x288x32xbf16, #tpu.memory_space<vmem>>, %arg6: memref<4x1x32xf32, #tpu.memory_space<vmem>>, %arg7: memref<32x3xf32, #tpu.memory_space<vmem>>, %arg8: memref<1x3xf32, #tpu.memory_space<vmem>>, %arg9: memref<128x128xf32, #tpu.memory_space<vmem>>, %arg10: memref<128x128xf32, #tpu.memory_space<vmem>>, %arg11: memref<128x256xf32, #tpu.memory_space<vmem>>, %arg12: memref<1x128xf32, #tpu.memory_space<vmem>>, %arg13: memref<1x256xf32, #tpu.memory_space<vmem>>, %arg14: memref<256x128xf32, #tpu.memory_space<vmem>>, %arg15: memref<1x128xf32, #tpu.memory_space<vmem>>, %arg16: memref<8x128xf32, #tpu.memory_space<vmem>>, %arg17: memref<8x128xf32, #tpu.memory_space<vmem>>, %arg18: memref<8x128xf32, #tpu.memory_space<vmem>>, %arg19: memref<160x32xf32, #tpu.memory_space<vmem>>, %arg20: memref<128x288xbf16, #tpu.memory_space<vmem>>) attributes {dimension_semantics = [#tpu.dimension_semantics<parallel>], iteration_bounds = array<i64: 2>, scalar_prefetch = 0 : i64, scratch_operands = 2 : i64, tpu.core_type = #tpu.core_type<tc>, window_params = [{transform_indices = @transform_0, window_bounds = array<i64: 128, 32>}, {pipeline_mode = #tpu.pipeline_mode<synchronous>, transform_indices = @transform_1, window_bounds = array<i64: 128, 1>}, {pipeline_mode = #tpu.pipeline_mode<synchronous>, transform_indices = @transform_2, window_bounds = array<i64: 288, 32>}, {pipeline_mode = #tpu.pipeline_mode<synchronous>, transform_indices = @transform_3, window_bounds = array<i64: 1, 32>}, {pipeline_mode = #tpu.pipeline_mode<synchronous>, transform_indices = @transform_4, window_bounds = array<i64: 4, 288, 32>}, {pipeline_mode = #tpu.pipeline_mode<synchronous>, transform_indices = @transform_5, window_bounds = array<i64: 4, 1, 32>}, {pipeline_mode = #tpu.pipeline_mode<synchronous>, transform_indices = @transform_6, window_bounds = array<i64: 32, 3>}, {pipeline_mode = #tpu.pipeline_mode<synchronous>, transform_indices = @transform_7, window_bounds = array<i64: 1, 3>}, {pipeline_mode = #tpu.pipeline_mode<synchronous>, transform_indices = @transform_8, window_bounds = array<i64: 128, 128>}, {pipeline_mode = #tpu.pipeline_mode<synchronous>, transform_indices = @transform_9, window_bounds = array<i64: 128, 128>}, {pipeline_mode = #tpu.pipeline_mode<synchronous>, transform_indices = @transform_10, window_bounds = array<i64: 128, 256>}, {pipeline_mode = #tpu.pipeline_mode<synchronous>, transform_indices = @transform_11, window_bounds = array<i64: 1, 128>}, {pipeline_mode = #tpu.pipeline_mode<synchronous>, transform_indices = @transform_12, window_bounds = array<i64: 1, 256>}, {pipeline_mode = #tpu.pipeline_mode<synchronous>, transform_indices = @transform_13, window_bounds = array<i64: 256, 128>}, {pipeline_mode = #tpu.pipeline_mode<synchronous>, transform_indices = @transform_14, window_bounds = array<i64: 1, 128>}, {pipeline_mode = #tpu.pipeline_mode<synchronous>, transform_indices = @transform_15, window_bounds = array<i64: 8, 128>}, {transform_indices = @transform_16, window_bounds = array<i64: 8, 128>}, {transform_indices = @transform_17, window_bounds = array<i64: 8, 128>}]} {
    %cst = arith.constant 0.000000e+00 : f32
    %0 = vector.broadcast %cst : f32 to vector<16x32xf32>
    %c0 = arith.constant 0 : index
    %c0_0 = arith.constant 0 : index
    %1 = vector.load %arg19[%c0, %c0_0] : memref<160x32xf32, #tpu.memory_space<vmem>>, vector<16x32xf32>
    tpu.vector_store %arg19[%c0, %c0_0], %0 {strides = array<i32>} : memref<160x32xf32, #tpu.memory_space<vmem>>, vector<16x32xf32>,
    %c144 = arith.constant 144 : index
    %c0_1 = arith.constant 0 : index
    %2 = vector.load %arg19[%c144, %c0_1] : memref<160x32xf32, #tpu.memory_space<vmem>>, vector<16x32xf32>
    tpu.vector_store %arg19[%c144, %c0_1], %0 {strides = array<i32>} : memref<160x32xf32, #tpu.memory_space<vmem>>, vector<16x32xf32>,
    %c0_2 = arith.constant 0 : index
    %c0_3 = arith.constant 0 : index
    %3 = vector.load %arg1[%c0_2, %c0_3] : memref<128x32xbf16, #tpu.memory_space<vmem>>, vector<128x32xbf16>
    %4 = arith.extf %3 : vector<128x32xbf16> to vector<128x32xf32>
    %c16 = arith.constant 16 : index
    %c0_4 = arith.constant 0 : index
    %5 = vector.load %arg19[%c16, %c0_4] : memref<160x32xf32, #tpu.memory_space<vmem>>, vector<128x32xf32>
    tpu.vector_store %arg19[%c16, %c0_4], %4 {strides = array<i32>} : memref<160x32xf32, #tpu.memory_space<vmem>>, vector<128x32xf32>,
    %c0_5 = arith.constant 0 : index
    %c0_6 = arith.constant 0 : index
    %6 = vector.load %arg2[%c0_5, %c0_6] : memref<128x1xf32, #tpu.memory_space<vmem>>, vector<128x1xf32>
    %7 = vector.shape_cast %6 : vector<128x1xf32> to vector<128x1xf32>
    %8 = vector.broadcast %7 : vector<128x1xf32> to vector<128x32xf32>
    %c0_7 = arith.constant 0 : index
    %c0_8 = arith.constant 0 : index
    %9 = vector.load %arg3[%c0_7, %c0_8] : memref<288x32xbf16, #tpu.memory_space<vmem>>, vector<288x32xbf16>
    %c0_9 = arith.constant 0 : index
    %c0_10 = arith.constant 0 : index
    %10 = vector.load %arg4[%c0_9, %c0_10] : memref<1x32xf32, #tpu.memory_space<vmem>>, vector<1x32xf32>
    %c4 = arith.constant 4 : index
    %c0_11 = arith.constant 0 : index
    %11 = vector.load %arg19[%c4, %c0_11] : memref<160x32xf32, #tpu.memory_space<vmem>>, vector<128x32xf32>
    %12 = arith.truncf %11 : vector<128x32xf32> to vector<128x32xbf16>
    %c0_12 = arith.constant 0 : index
    %c0_13 = arith.constant 0 : index
    %13 = vector.load %arg20[%c0_12, %c0_13] : memref<128x288xbf16, #tpu.memory_space<vmem>>, vector<128x32xbf16>
    tpu.vector_store %arg20[%c0_12, %c0_13], %12 {strides = array<i32>} : memref<128x288xbf16, #tpu.memory_space<vmem>>, vector<128x32xbf16>,
    %c5 = arith.constant 5 : index
    %c0_14 = arith.constant 0 : index
    %14 = vector.load %arg19[%c5, %c0_14] : memref<160x32xf32, #tpu.memory_space<vmem>>, vector<128x32xf32>
    %15 = arith.truncf %14 : vector<128x32xf32> to vector<128x32xbf16>
    %c0_15 = arith.constant 0 : index
    %c32 = arith.constant 32 : index
    %16 = vector.load %arg20[%c0_15, %c32] : memref<128x288xbf16, #tpu.memory_space<vmem>>, vector<128x32xbf16>
    tpu.vector_store %arg20[%c0_15, %c32], %15 {strides = array<i32>} : memref<128x288xbf16, #tpu.memory_space<vmem>>, vector<128x32xbf16>,
    %c6 = arith.constant 6 : index
    %c0_16 = arith.constant 0 : index
    %17 = vector.load %arg19[%c6, %c0_16] : memref<160x32xf32, #tpu.memory_space<vmem>>, vector<128x32xf32>
    %18 = arith.truncf %17 : vector<128x32xf32> to vector<128x32xbf16>
    %c0_17 = arith.constant 0 : index
    %c64 = arith.constant 64 : index
    %19 = vector.load %arg20[%c0_17, %c64] : memref<128x288xbf16, #tpu.memory_space<vmem>>, vector<128x32xbf16>
    tpu.vector_store %arg20[%c0_17, %c64], %18 {strides = array<i32>} : memref<128x288xbf16, #tpu.memory_space<vmem>>, vector<128x32xbf16>,
    %c15 = arith.constant 15 : index
    %c0_18 = arith.constant 0 : index
    %20 = vector.load %arg19[%c15, %c0_18] : memref<160x32xf32, #tpu.memory_space<vmem>>, vector<128x32xf32>
    %21 = arith.truncf %20 : vector<128x32xf32> to vector<128x32xbf16>
    %c0_19 = arith.constant 0 : index
    %c96 = arith.constant 96 : index
    %22 = vector.load %arg20[%c0_19, %c96] : memref<128x288xbf16, #tpu.memory_space<vmem>>, vector<128x32xbf16>
    tpu.vector_store %arg20[%c0_19, %c96], %21 {strides = array<i32>} : memref<128x288xbf16, #tpu.memory_space<vmem>>, vector<128x32xbf16>,
    %c16_20 = arith.constant 16 : index
    %c0_21 = arith.constant 0 : index
    %23 = vector.load %arg19[%c16_20, %c0_21] : memref<160x32xf32, #tpu.memory_space<vmem>>, vector<128x32xf32>
    %24 = arith.truncf %23 : vector<128x32xf32> to vector<128x32xbf16>
    %c0_22 = arith.constant 0 : index
    %c128 = arith.constant 128 : index
    %25 = vector.load %arg20[%c0_22, %c128] : memref<128x288xbf16, #tpu.memory_space<vmem>>, vector<128x32xbf16>
    tpu.vector_store %arg20[%c0_22, %c128], %24 {strides = array<i32>} : memref<128x288xbf16, #tpu.memory_space<vmem>>, vector<128x32xbf16>,
    %c17 = arith.constant 17 : index
    %c0_23 = arith.constant 0 : index
    %26 = vector.load %arg19[%c17, %c0_23] : memref<160x32xf32, #tpu.memory_space<vmem>>, vector<128x32xf32>
    %27 = arith.truncf %26 : vector<128x32xf32> to vector<128x32xbf16>
    %c0_24 = arith.constant 0 : index
    %c160 = arith.constant 160 : index
    %28 = vector.load %arg20[%c0_24, %c160] : memref<128x288xbf16, #tpu.memory_space<vmem>>, vector<128x32xbf16>
    tpu.vector_store %arg20[%c0_24, %c160], %27 {strides = array<i32>} : memref<128x288xbf16, #tpu.memory_space<vmem>>, vector<128x32xbf16>,
    %c26 = arith.constant 26 : index
    %c0_25 = arith.constant 0 : index
    %29 = vector.load %arg19[%c26, %c0_25] : memref<160x32xf32, #tpu.memory_space<vmem>>, vector<128x32xf32>
    %30 = arith.truncf %29 : vector<128x32xf32> to vector<128x32xbf16>
    %c0_26 = arith.constant 0 : index
    %c192 = arith.constant 192 : index
    %31 = vector.load %arg20[%c0_26, %c192] : memref<128x288xbf16, #tpu.memory_space<vmem>>, vector<128x32xbf16>
    tpu.vector_store %arg20[%c0_26, %c192], %30 {strides = array<i32>} : memref<128x288xbf16, #tpu.memory_space<vmem>>, vector<128x32xbf16>,
    %c27 = arith.constant 27 : index
    %c0_27 = arith.constant 0 : index
    %32 = vector.load %arg19[%c27, %c0_27] : memref<160x32xf32, #tpu.memory_space<vmem>>, vector<128x32xf32>
    %33 = arith.truncf %32 : vector<128x32xf32> to vector<128x32xbf16>
    %c0_28 = arith.constant 0 : index
    %c224 = arith.constant 224 : index
    %34 = vector.load %arg20[%c0_28, %c224] : memref<128x288xbf16, #tpu.memory_space<vmem>>, vector<128x32xbf16>
    tpu.vector_store %arg20[%c0_28, %c224], %33 {strides = array<i32>} : memref<128x288xbf16, #tpu.memory_space<vmem>>, vector<128x32xbf16>,
    %c28 = arith.constant 28 : index
    %c0_29 = arith.constant 0 : index
    %35 = vector.load %arg19[%c28, %c0_29] : memref<160x32xf32, #tpu.memory_space<vmem>>, vector<128x32xf32>
    %36 = arith.truncf %35 : vector<128x32xf32> to vector<128x32xbf16>
    %c0_30 = arith.constant 0 : index
    %c256 = arith.constant 256 : index
    %37 = vector.load %arg20[%c0_30, %c256] : memref<128x288xbf16, #tpu.memory_space<vmem>>, vector<128x32xbf16>
    tpu.vector_store %arg20[%c0_30, %c256], %36 {strides = array<i32>} : memref<128x288xbf16, #tpu.memory_space<vmem>>, vector<128x32xbf16>,
    %c0_31 = arith.constant 0 : index
    %c0_32 = arith.constant 0 : index
    %38 = vector.load %arg20[%c0_31, %c0_32] : memref<128x288xbf16, #tpu.memory_space<vmem>>, vector<128x288xbf16>
    %cst_33 = arith.constant dense<0.000000e+00> : vector<128x32xf32>
    %39 = tpu.matmul %38, %9, %cst_33 {dimension_numbers = #tpu.dot_dimension_numbers<[1], [0], [0], [1], [0, 0, 1, 1], [], []>} : vector<128x288xbf16>, vector<288x32xbf16>, vector<128x32xf32> -> vector<128x32xf32>
    %40 = vector.broadcast %10 : vector<1x32xf32> to vector<128x32xf32>
    %41 = arith.addf %39, %40 : vector<128x32xf32>
    %cst_34 = arith.constant 0.000000e+00 : f32
    %42 = vector.broadcast %cst_34 : f32 to vector<128x32xf32>
    %43 = arith.maximumf %41, %42 : vector<128x32xf32>
    %44 = arith.mulf %43, %8 : vector<128x32xf32>
    %c16_35 = arith.constant 16 : index
    %c0_36 = arith.constant 0 : index
    %45 = vector.load %arg19[%c16_35, %c0_36] : memref<160x32xf32, #tpu.memory_space<vmem>>, vector<128x32xf32>
    tpu.vector_store %arg19[%c16_35, %c0_36], %44 {strides = array<i32>} : memref<160x32xf32, #tpu.memory_space<vmem>>, vector<128x32xf32>,
    %c0_37 = arith.constant 0 : index
    %c0_38 = arith.constant 0 : index
    %c0_39 = arith.constant 0 : index
    %46 = vector.load %arg5[%c0_37, %c0_38, %c0_39] : memref<4x288x32xbf16, #tpu.memory_space<vmem>>, vector<1x288x32xbf16>
    %47 = vector.shape_cast %46 : vector<1x288x32xbf16> to vector<288x32xbf16>
    %c0_40 = arith.constant 0 : index
    %c0_41 = arith.constant 0 : index
    %c0_42 = arith.constant 0 : index
    %48 = vector.load %arg6[%c0_40, %c0_41, %c0_42] : memref<4x1x32xf32, #tpu.memory_space<vmem>>, vector<1x1x32xf32>
    %49 = vector.shape_cast %48 : vector<1x1x32xf32> to vector<1x32xf32>
    %c4_43 = arith.constant 4 : index
    %c0_44 = arith.constant 0 : index
    %50 = vector.load %arg19[%c4_43, %c0_44] : memref<160x32xf32, #tpu.memory_space<vmem>>, vector<128x32xf32>
    %51 = arith.truncf %50 : vector<128x32xf32> to vector<128x32xbf16>
    %c0_45 = arith.constant 0 : index
    %c0_46 = arith.constant 0 : index
    %52 = vector.load %arg20[%c0_45, %c0_46] : memref<128x288xbf16, #tpu.memory_space<vmem>>, vector<128x32xbf16>
    tpu.vector_store %arg20[%c0_45, %c0_46], %51 {strides = array<i32>} : memref<128x288xbf16, #tpu.memory_space<vmem>>, vector<128x32xbf16>,
    %c5_47 = arith.constant 5 : index
    %c0_48 = arith.constant 0 : index
    %53 = vector.load %arg19[%c5_47, %c0_48] : memref<160x32xf32, #tpu.memory_space<vmem>>, vector<128x32xf32>
    %54 = arith.truncf %53 : vector<128x32xf32> to vector<128x32xbf16>
    %c0_49 = arith.constant 0 : index
    %c32_50 = arith.constant 32 : index
    %55 = vector.load %arg20[%c0_49, %c32_50] : memref<128x288xbf16, #tpu.memory_space<vmem>>, vector<128x32xbf16>
    tpu.vector_store %arg20[%c0_49, %c32_50], %54 {strides = array<i32>} : memref<128x288xbf16, #tpu.memory_space<vmem>>, vector<128x32xbf16>,
    %c6_51 = arith.constant 6 : index
    %c0_52 = arith.constant 0 : index
    %56 = vector.load %arg19[%c6_51, %c0_52] : memref<160x32xf32, #tpu.memory_space<vmem>>, vector<128x32xf32>
    %57 = arith.truncf %56 : vector<128x32xf32> to vector<128x32xbf16>
    %c0_53 = arith.constant 0 : index
    %c64_54 = arith.constant 64 : index
    %58 = vector.load %arg20[%c0_53, %c64_54] : memref<128x288xbf16, #tpu.memory_space<vmem>>, vector<128x32xbf16>
    tpu.vector_store %arg20[%c0_53, %c64_54], %57 {strides = array<i32>} : memref<128x288xbf16, #tpu.memory_space<vmem>>, vector<128x32xbf16>,
    %c15_55 = arith.constant 15 : index
    %c0_56 = arith.constant 0 : index
    %59 = vector.load %arg19[%c15_55, %c0_56] : memref<160x32xf32, #tpu.memory_space<vmem>>, vector<128x32xf32>
    %60 = arith.truncf %59 : vector<128x32xf32> to vector<128x32xbf16>
    %c0_57 = arith.constant 0 : index
    %c96_58 = arith.constant 96 : index
    %61 = vector.load %arg20[%c0_57, %c96_58] : memref<128x288xbf16, #tpu.memory_space<vmem>>, vector<128x32xbf16>
    tpu.vector_store %arg20[%c0_57, %c96_58], %60 {strides = array<i32>} : memref<128x288xbf16, #tpu.memory_space<vmem>>, vector<128x32xbf16>,
    %c16_59 = arith.constant 16 : index
    %c0_60 = arith.constant 0 : index
    %62 = vector.load %arg19[%c16_59, %c0_60] : memref<160x32xf32, #tpu.memory_space<vmem>>, vector<128x32xf32>
    %63 = arith.truncf %62 : vector<128x32xf32> to vector<128x32xbf16>
    %c0_61 = arith.constant 0 : index
    %c128_62 = arith.constant 128 : index
    %64 = vector.load %arg20[%c0_61, %c128_62] : memref<128x288xbf16, #tpu.memory_space<vmem>>, vector<128x32xbf16>
    tpu.vector_store %arg20[%c0_61, %c128_62], %63 {strides = array<i32>} : memref<128x288xbf16, #tpu.memory_space<vmem>>, vector<128x32xbf16>,
    %c17_63 = arith.constant 17 : index
    %c0_64 = arith.constant 0 : index
    %65 = vector.load %arg19[%c17_63, %c0_64] : memref<160x32xf32, #tpu.memory_space<vmem>>, vector<128x32xf32>
    %66 = arith.truncf %65 : vector<128x32xf32> to vector<128x32xbf16>
    %c0_65 = arith.constant 0 : index
    %c160_66 = arith.constant 160 : index
    %67 = vector.load %arg20[%c0_65, %c160_66] : memref<128x288xbf16, #tpu.memory_space<vmem>>, vector<128x32xbf16>
    tpu.vector_store %arg20[%c0_65, %c160_66], %66 {strides = array<i32>} : memref<128x288xbf16, #tpu.memory_space<vmem>>, vector<128x32xbf16>,
    %c26_67 = arith.constant 26 : index
    %c0_68 = arith.constant 0 : index
    %68 = vector.load %arg19[%c26_67, %c0_68] : memref<160x32xf32, #tpu.memory_space<vmem>>, vector<128x32xf32>
    %69 = arith.truncf %68 : vector<128x32xf32> to vector<128x32xbf16>
    %c0_69 = arith.constant 0 : index
    %c192_70 = arith.constant 192 : index
    %70 = vector.load %arg20[%c0_69, %c192_70] : memref<128x288xbf16, #tpu.memory_space<vmem>>, vector<128x32xbf16>
    tpu.vector_store %arg20[%c0_69, %c192_70], %69 {strides = array<i32>} : memref<128x288xbf16, #tpu.memory_space<vmem>>, vector<128x32xbf16>,
    %c27_71 = arith.constant 27 : index
    %c0_72 = arith.constant 0 : index
    %71 = vector.load %arg19[%c27_71, %c0_72] : memref<160x32xf32, #tpu.memory_space<vmem>>, vector<128x32xf32>
    %72 = arith.truncf %71 : vector<128x32xf32> to vector<128x32xbf16>
    %c0_73 = arith.constant 0 : index
    %c224_74 = arith.constant 224 : index
    %73 = vector.load %arg20[%c0_73, %c224_74] : memref<128x288xbf16, #tpu.memory_space<vmem>>, vector<128x32xbf16>
    tpu.vector_store %arg20[%c0_73, %c224_74], %72 {strides = array<i32>} : memref<128x288xbf16, #tpu.memory_space<vmem>>, vector<128x32xbf16>,
    %c28_75 = arith.constant 28 : index
    %c0_76 = arith.constant 0 : index
    %74 = vector.load %arg19[%c28_75, %c0_76] : memref<160x32xf32, #tpu.memory_space<vmem>>, vector<128x32xf32>
    %75 = arith.truncf %74 : vector<128x32xf32> to vector<128x32xbf16>
    %c0_77 = arith.constant 0 : index
    %c256_78 = arith.constant 256 : index
    %76 = vector.load %arg20[%c0_77, %c256_78] : memref<128x288xbf16, #tpu.memory_space<vmem>>, vector<128x32xbf16>
    tpu.vector_store %arg20[%c0_77, %c256_78], %75 {strides = array<i32>} : memref<128x288xbf16, #tpu.memory_space<vmem>>, vector<128x32xbf16>,
    %c0_79 = arith.constant 0 : index
    %c0_80 = arith.constant 0 : index
    %77 = vector.load %arg20[%c0_79, %c0_80] : memref<128x288xbf16, #tpu.memory_space<vmem>>, vector<128x288xbf16>
    %cst_81 = arith.constant dense<0.000000e+00> : vector<128x32xf32>
    %78 = tpu.matmul %77, %47, %cst_81 {dimension_numbers = #tpu.dot_dimension_numbers<[1], [0], [0], [1], [0, 0, 1, 1], [], []>} : vector<128x288xbf16>, vector<288x32xbf16>, vector<128x32xf32> -> vector<128x32xf32>
    %79 = vector.broadcast %49 : vector<1x32xf32> to vector<128x32xf32>
    %80 = arith.addf %78, %79 : vector<128x32xf32>
    %cst_82 = arith.constant 0.000000e+00 : f32
    %81 = vector.broadcast %cst_82 : f32 to vector<128x32xf32>
    %82 = arith.maximumf %80, %81 : vector<128x32xf32>
    %83 = arith.mulf %82, %8 : vector<128x32xf32>
    %c16_83 = arith.constant 16 : index
    %c0_84 = arith.constant 0 : index
    %84 = vector.load %arg19[%c16_83, %c0_84] : memref<160x32xf32, #tpu.memory_space<vmem>>, vector<128x32xf32>
    tpu.vector_store %arg19[%c16_83, %c0_84], %83 {strides = array<i32>} : memref<160x32xf32, #tpu.memory_space<vmem>>, vector<128x32xf32>,
    %c1 = arith.constant 1 : index
    %c0_85 = arith.constant 0 : index
    %c0_86 = arith.constant 0 : index
    %85 = vector.load %arg5[%c1, %c0_85, %c0_86] : memref<4x288x32xbf16, #tpu.memory_space<vmem>>, vector<1x288x32xbf16>
    %86 = vector.shape_cast %85 : vector<1x288x32xbf16> to vector<288x32xbf16>
    %c1_87 = arith.constant 1 : index
    %c0_88 = arith.constant 0 : index
    %c0_89 = arith.constant 0 : index
    %87 = vector.load %arg6[%c1_87, %c0_88, %c0_89] : memref<4x1x32xf32, #tpu.memory_space<vmem>>, vector<1x1x32xf32>
    %88 = vector.shape_cast %87 : vector<1x1x32xf32> to vector<1x32xf32>
    %c4_90 = arith.constant 4 : index
    %c0_91 = arith.constant 0 : index
    %89 = vector.load %arg19[%c4_90, %c0_91] : memref<160x32xf32, #tpu.memory_space<vmem>>, vector<128x32xf32>
    %90 = arith.truncf %89 : vector<128x32xf32> to vector<128x32xbf16>
    %c0_92 = arith.constant 0 : index
    %c0_93 = arith.constant 0 : index
    %91 = vector.load %arg20[%c0_92, %c0_93] : memref<128x288xbf16, #tpu.memory_space<vmem>>, vector<128x32xbf16>
    tpu.vector_store %arg20[%c0_92, %c0_93], %90 {strides = array<i32>} : memref<128x288xbf16, #tpu.memory_space<vmem>>, vector<128x32xbf16>,
    %c5_94 = arith.constant 5 : index
    %c0_95 = arith.constant 0 : index
    %92 = vector.load %arg19[%c5_94, %c0_95] : memref<160x32xf32, #tpu.memory_space<vmem>>, vector<128x32xf32>
    %93 = arith.truncf %92 : vector<128x32xf32> to vector<128x32xbf16>
    %c0_96 = arith.constant 0 : index
    %c32_97 = arith.constant 32 : index
    %94 = vector.load %arg20[%c0_96, %c32_97] : memref<128x288xbf16, #tpu.memory_space<vmem>>, vector<128x32xbf16>
    tpu.vector_store %arg20[%c0_96, %c32_97], %93 {strides = array<i32>} : memref<128x288xbf16, #tpu.memory_space<vmem>>, vector<128x32xbf16>,
    %c6_98 = arith.constant 6 : index
    %c0_99 = arith.constant 0 : index
    %95 = vector.load %arg19[%c6_98, %c0_99] : memref<160x32xf32, #tpu.memory_space<vmem>>, vector<128x32xf32>
    %96 = arith.truncf %95 : vector<128x32xf32> to vector<128x32xbf16>
    %c0_100 = arith.constant 0 : index
    %c64_101 = arith.constant 64 : index
    %97 = vector.load %arg20[%c0_100, %c64_101] : memref<128x288xbf16, #tpu.memory_space<vmem>>, vector<128x32xbf16>
    tpu.vector_store %arg20[%c0_100, %c64_101], %96 {strides = array<i32>} : memref<128x288xbf16, #tpu.memory_space<vmem>>, vector<128x32xbf16>,
    %c15_102 = arith.constant 15 : index
    %c0_103 = arith.constant 0 : index
    %98 = vector.load %arg19[%c15_102, %c0_103] : memref<160x32xf32, #tpu.memory_space<vmem>>, vector<128x32xf32>
    %99 = arith.truncf %98 : vector<128x32xf32> to vector<128x32xbf16>
    %c0_104 = arith.constant 0 : index
    %c96_105 = arith.constant 96 : index
    %100 = vector.load %arg20[%c0_104, %c96_105] : memref<128x288xbf16, #tpu.memory_space<vmem>>, vector<128x32xbf16>
    tpu.vector_store %arg20[%c0_104, %c96_105], %99 {strides = array<i32>} : memref<128x288xbf16, #tpu.memory_space<vmem>>, vector<128x32xbf16>,
    %c16_106 = arith.constant 16 : index
    %c0_107 = arith.constant 0 : index
    %101 = vector.load %arg19[%c16_106, %c0_107] : memref<160x32xf32, #tpu.memory_space<vmem>>, vector<128x32xf32>
    %102 = arith.truncf %101 : vector<128x32xf32> to vector<128x32xbf16>
    %c0_108 = arith.constant 0 : index
    %c128_109 = arith.constant 128 : index
    %103 = vector.load %arg20[%c0_108, %c128_109] : memref<128x288xbf16, #tpu.memory_space<vmem>>, vector<128x32xbf16>
    tpu.vector_store %arg20[%c0_108, %c128_109], %102 {strides = array<i32>} : memref<128x288xbf16, #tpu.memory_space<vmem>>, vector<128x32xbf16>,
    %c17_110 = arith.constant 17 : index
    %c0_111 = arith.constant 0 : index
    %104 = vector.load %arg19[%c17_110, %c0_111] : memref<160x32xf32, #tpu.memory_space<vmem>>, vector<128x32xf32>
    %105 = arith.truncf %104 : vector<128x32xf32> to vector<128x32xbf16>
    %c0_112 = arith.constant 0 : index
    %c160_113 = arith.constant 160 : index
    %106 = vector.load %arg20[%c0_112, %c160_113] : memref<128x288xbf16, #tpu.memory_space<vmem>>, vector<128x32xbf16>
    tpu.vector_store %arg20[%c0_112, %c160_113], %105 {strides = array<i32>} : memref<128x288xbf16, #tpu.memory_space<vmem>>, vector<128x32xbf16>,
    %c26_114 = arith.constant 26 : index
    %c0_115 = arith.constant 0 : index
    %107 = vector.load %arg19[%c26_114, %c0_115] : memref<160x32xf32, #tpu.memory_space<vmem>>, vector<128x32xf32>
    %108 = arith.truncf %107 : vector<128x32xf32> to vector<128x32xbf16>
    %c0_116 = arith.constant 0 : index
    %c192_117 = arith.constant 192 : index
    %109 = vector.load %arg20[%c0_116, %c192_117] : memref<128x288xbf16, #tpu.memory_space<vmem>>, vector<128x32xbf16>
    tpu.vector_store %arg20[%c0_116, %c192_117], %108 {strides = array<i32>} : memref<128x288xbf16, #tpu.memory_space<vmem>>, vector<128x32xbf16>,
    %c27_118 = arith.constant 27 : index
    %c0_119 = arith.constant 0 : index
    %110 = vector.load %arg19[%c27_118, %c0_119] : memref<160x32xf32, #tpu.memory_space<vmem>>, vector<128x32xf32>
    %111 = arith.truncf %110 : vector<128x32xf32> to vector<128x32xbf16>
    %c0_120 = arith.constant 0 : index
    %c224_121 = arith.constant 224 : index
    %112 = vector.load %arg20[%c0_120, %c224_121] : memref<128x288xbf16, #tpu.memory_space<vmem>>, vector<128x32xbf16>
    tpu.vector_store %arg20[%c0_120, %c224_121], %111 {strides = array<i32>} : memref<128x288xbf16, #tpu.memory_space<vmem>>, vector<128x32xbf16>,
    %c28_122 = arith.constant 28 : index
    %c0_123 = arith.constant 0 : index
    %113 = vector.load %arg19[%c28_122, %c0_123] : memref<160x32xf32, #tpu.memory_space<vmem>>, vector<128x32xf32>
    %114 = arith.truncf %113 : vector<128x32xf32> to vector<128x32xbf16>
    %c0_124 = arith.constant 0 : index
    %c256_125 = arith.constant 256 : index
    %115 = vector.load %arg20[%c0_124, %c256_125] : memref<128x288xbf16, #tpu.memory_space<vmem>>, vector<128x32xbf16>
    tpu.vector_store %arg20[%c0_124, %c256_125], %114 {strides = array<i32>} : memref<128x288xbf16, #tpu.memory_space<vmem>>, vector<128x32xbf16>,
    %c0_126 = arith.constant 0 : index
    %c0_127 = arith.constant 0 : index
    %116 = vector.load %arg20[%c0_126, %c0_127] : memref<128x288xbf16, #tpu.memory_space<vmem>>, vector<128x288xbf16>
    %cst_128 = arith.constant dense<0.000000e+00> : vector<128x32xf32>
    %117 = tpu.matmul %116, %86, %cst_128 {dimension_numbers = #tpu.dot_dimension_numbers<[1], [0], [0], [1], [0, 0, 1, 1], [], []>} : vector<128x288xbf16>, vector<288x32xbf16>, vector<128x32xf32> -> vector<128x32xf32>
    %118 = vector.broadcast %88 : vector<1x32xf32> to vector<128x32xf32>
    %119 = arith.addf %117, %118 : vector<128x32xf32>
    %120 = arith.addf %119, %44 : vector<128x32xf32>
    %cst_129 = arith.constant 0.000000e+00 : f32
    %121 = vector.broadcast %cst_129 : f32 to vector<128x32xf32>
    %122 = arith.maximumf %120, %121 : vector<128x32xf32>
    %123 = arith.mulf %122, %8 : vector<128x32xf32>
    %c16_130 = arith.constant 16 : index
    %c0_131 = arith.constant 0 : index
    %124 = vector.load %arg19[%c16_130, %c0_131] : memref<160x32xf32, #tpu.memory_space<vmem>>, vector<128x32xf32>
    tpu.vector_store %arg19[%c16_130, %c0_131], %123 {strides = array<i32>} : memref<160x32xf32, #tpu.memory_space<vmem>>, vector<128x32xf32>,
    %c2 = arith.constant 2 : index
    %c0_132 = arith.constant 0 : index
    %c0_133 = arith.constant 0 : index
    %125 = vector.load %arg5[%c2, %c0_132, %c0_133] : memref<4x288x32xbf16, #tpu.memory_space<vmem>>, vector<1x288x32xbf16>
    %126 = vector.shape_cast %125 : vector<1x288x32xbf16> to vector<288x32xbf16>
    %c2_134 = arith.constant 2 : index
    %c0_135 = arith.constant 0 : index
    %c0_136 = arith.constant 0 : index
    %127 = vector.load %arg6[%c2_134, %c0_135, %c0_136] : memref<4x1x32xf32, #tpu.memory_space<vmem>>, vector<1x1x32xf32>
    %128 = vector.shape_cast %127 : vector<1x1x32xf32> to vector<1x32xf32>
    %c4_137 = arith.constant 4 : index
    %c0_138 = arith.constant 0 : index
    %129 = vector.load %arg19[%c4_137, %c0_138] : memref<160x32xf32, #tpu.memory_space<vmem>>, vector<128x32xf32>
    %130 = arith.truncf %129 : vector<128x32xf32> to vector<128x32xbf16>
    %c0_139 = arith.constant 0 : index
    %c0_140 = arith.constant 0 : index
    %131 = vector.load %arg20[%c0_139, %c0_140] : memref<128x288xbf16, #tpu.memory_space<vmem>>, vector<128x32xbf16>
    tpu.vector_store %arg20[%c0_139, %c0_140], %130 {strides = array<i32>} : memref<128x288xbf16, #tpu.memory_space<vmem>>, vector<128x32xbf16>,
    %c5_141 = arith.constant 5 : index
    %c0_142 = arith.constant 0 : index
    %132 = vector.load %arg19[%c5_141, %c0_142] : memref<160x32xf32, #tpu.memory_space<vmem>>, vector<128x32xf32>
    %133 = arith.truncf %132 : vector<128x32xf32> to vector<128x32xbf16>
    %c0_143 = arith.constant 0 : index
    %c32_144 = arith.constant 32 : index
    %134 = vector.load %arg20[%c0_143, %c32_144] : memref<128x288xbf16, #tpu.memory_space<vmem>>, vector<128x32xbf16>
    tpu.vector_store %arg20[%c0_143, %c32_144], %133 {strides = array<i32>} : memref<128x288xbf16, #tpu.memory_space<vmem>>, vector<128x32xbf16>,
    %c6_145 = arith.constant 6 : index
    %c0_146 = arith.constant 0 : index
    %135 = vector.load %arg19[%c6_145, %c0_146] : memref<160x32xf32, #tpu.memory_space<vmem>>, vector<128x32xf32>
    %136 = arith.truncf %135 : vector<128x32xf32> to vector<128x32xbf16>
    %c0_147 = arith.constant 0 : index
    %c64_148 = arith.constant 64 : index
    %137 = vector.load %arg20[%c0_147, %c64_148] : memref<128x288xbf16, #tpu.memory_space<vmem>>, vector<128x32xbf16>
    tpu.vector_store %arg20[%c0_147, %c64_148], %136 {strides = array<i32>} : memref<128x288xbf16, #tpu.memory_space<vmem>>, vector<128x32xbf16>,
    %c15_149 = arith.constant 15 : index
    %c0_150 = arith.constant 0 : index
    %138 = vector.load %arg19[%c15_149, %c0_150] : memref<160x32xf32, #tpu.memory_space<vmem>>, vector<128x32xf32>
    %139 = arith.truncf %138 : vector<128x32xf32> to vector<128x32xbf16>
    %c0_151 = arith.constant 0 : index
    %c96_152 = arith.constant 96 : index
    %140 = vector.load %arg20[%c0_151, %c96_152] : memref<128x288xbf16, #tpu.memory_space<vmem>>, vector<128x32xbf16>
    tpu.vector_store %arg20[%c0_151, %c96_152], %139 {strides = array<i32>} : memref<128x288xbf16, #tpu.memory_space<vmem>>, vector<128x32xbf16>,
    %c16_153 = arith.constant 16 : index
    %c0_154 = arith.constant 0 : index
    %141 = vector.load %arg19[%c16_153, %c0_154] : memref<160x32xf32, #tpu.memory_space<vmem>>, vector<128x32xf32>
    %142 = arith.truncf %141 : vector<128x32xf32> to vector<128x32xbf16>
    %c0_155 = arith.constant 0 : index
    %c128_156 = arith.constant 128 : index
    %143 = vector.load %arg20[%c0_155, %c128_156] : memref<128x288xbf16, #tpu.memory_space<vmem>>, vector<128x32xbf16>
    tpu.vector_store %arg20[%c0_155, %c128_156], %142 {strides = array<i32>} : memref<128x288xbf16, #tpu.memory_space<vmem>>, vector<128x32xbf16>,
    %c17_157 = arith.constant 17 : index
    %c0_158 = arith.constant 0 : index
    %144 = vector.load %arg19[%c17_157, %c0_158] : memref<160x32xf32, #tpu.memory_space<vmem>>, vector<128x32xf32>
    %145 = arith.truncf %144 : vector<128x32xf32> to vector<128x32xbf16>
    %c0_159 = arith.constant 0 : index
    %c160_160 = arith.constant 160 : index
    %146 = vector.load %arg20[%c0_159, %c160_160] : memref<128x288xbf16, #tpu.memory_space<vmem>>, vector<128x32xbf16>
    tpu.vector_store %arg20[%c0_159, %c160_160], %145 {strides = array<i32>} : memref<128x288xbf16, #tpu.memory_space<vmem>>, vector<128x32xbf16>,
    %c26_161 = arith.constant 26 : index
    %c0_162 = arith.constant 0 : index
    %147 = vector.load %arg19[%c26_161, %c0_162] : memref<160x32xf32, #tpu.memory_space<vmem>>, vector<128x32xf32>
    %148 = arith.truncf %147 : vector<128x32xf32> to vector<128x32xbf16>
    %c0_163 = arith.constant 0 : index
    %c192_164 = arith.constant 192 : index
    %149 = vector.load %arg20[%c0_163, %c192_164] : memref<128x288xbf16, #tpu.memory_space<vmem>>, vector<128x32xbf16>
    tpu.vector_store %arg20[%c0_163, %c192_164], %148 {strides = array<i32>} : memref<128x288xbf16, #tpu.memory_space<vmem>>, vector<128x32xbf16>,
    %c27_165 = arith.constant 27 : index
    %c0_166 = arith.constant 0 : index
    %150 = vector.load %arg19[%c27_165, %c0_166] : memref<160x32xf32, #tpu.memory_space<vmem>>, vector<128x32xf32>
    %151 = arith.truncf %150 : vector<128x32xf32> to vector<128x32xbf16>
    %c0_167 = arith.constant 0 : index
    %c224_168 = arith.constant 224 : index
    %152 = vector.load %arg20[%c0_167, %c224_168] : memref<128x288xbf16, #tpu.memory_space<vmem>>, vector<128x32xbf16>
    tpu.vector_store %arg20[%c0_167, %c224_168], %151 {strides = array<i32>} : memref<128x288xbf16, #tpu.memory_space<vmem>>, vector<128x32xbf16>,
    %c28_169 = arith.constant 28 : index
    %c0_170 = arith.constant 0 : index
    %153 = vector.load %arg19[%c28_169, %c0_170] : memref<160x32xf32, #tpu.memory_space<vmem>>, vector<128x32xf32>
    %154 = arith.truncf %153 : vector<128x32xf32> to vector<128x32xbf16>
    %c0_171 = arith.constant 0 : index
    %c256_172 = arith.constant 256 : index
    %155 = vector.load %arg20[%c0_171, %c256_172] : memref<128x288xbf16, #tpu.memory_space<vmem>>, vector<128x32xbf16>
    tpu.vector_store %arg20[%c0_171, %c256_172], %154 {strides = array<i32>} : memref<128x288xbf16, #tpu.memory_space<vmem>>, vector<128x32xbf16>,
    %c0_173 = arith.constant 0 : index
    %c0_174 = arith.constant 0 : index
    %156 = vector.load %arg20[%c0_173, %c0_174] : memref<128x288xbf16, #tpu.memory_space<vmem>>, vector<128x288xbf16>
    %cst_175 = arith.constant dense<0.000000e+00> : vector<128x32xf32>
    %157 = tpu.matmul %156, %126, %cst_175 {dimension_numbers = #tpu.dot_dimension_numbers<[1], [0], [0], [1], [0, 0, 1, 1], [], []>} : vector<128x288xbf16>, vector<288x32xbf16>, vector<128x32xf32> -> vector<128x32xf32>
    %158 = vector.broadcast %128 : vector<1x32xf32> to vector<128x32xf32>
    %159 = arith.addf %157, %158 : vector<128x32xf32>
    %cst_176 = arith.constant 0.000000e+00 : f32
    %160 = vector.broadcast %cst_176 : f32 to vector<128x32xf32>
    %161 = arith.maximumf %159, %160 : vector<128x32xf32>
    %162 = arith.mulf %161, %8 : vector<128x32xf32>
    %c16_177 = arith.constant 16 : index
    %c0_178 = arith.constant 0 : index
    %163 = vector.load %arg19[%c16_177, %c0_178] : memref<160x32xf32, #tpu.memory_space<vmem>>, vector<128x32xf32>
    tpu.vector_store %arg19[%c16_177, %c0_178], %162 {strides = array<i32>} : memref<160x32xf32, #tpu.memory_space<vmem>>, vector<128x32xf32>,
    %c3 = arith.constant 3 : index
    %c0_179 = arith.constant 0 : index
    %c0_180 = arith.constant 0 : index
    %164 = vector.load %arg5[%c3, %c0_179, %c0_180] : memref<4x288x32xbf16, #tpu.memory_space<vmem>>, vector<1x288x32xbf16>
    %165 = vector.shape_cast %164 : vector<1x288x32xbf16> to vector<288x32xbf16>
    %c3_181 = arith.constant 3 : index
    %c0_182 = arith.constant 0 : index
    %c0_183 = arith.constant 0 : index
    %166 = vector.load %arg6[%c3_181, %c0_182, %c0_183] : memref<4x1x32xf32, #tpu.memory_space<vmem>>, vector<1x1x32xf32>
    %167 = vector.shape_cast %166 : vector<1x1x32xf32> to vector<1x32xf32>
    %c4_184 = arith.constant 4 : index
    %c0_185 = arith.constant 0 : index
    %168 = vector.load %arg19[%c4_184, %c0_185] : memref<160x32xf32, #tpu.memory_space<vmem>>, vector<128x32xf32>
    %169 = arith.truncf %168 : vector<128x32xf32> to vector<128x32xbf16>
    %c0_186 = arith.constant 0 : index
    %c0_187 = arith.constant 0 : index
    %170 = vector.load %arg20[%c0_186, %c0_187] : memref<128x288xbf16, #tpu.memory_space<vmem>>, vector<128x32xbf16>
    tpu.vector_store %arg20[%c0_186, %c0_187], %169 {strides = array<i32>} : memref<128x288xbf16, #tpu.memory_space<vmem>>, vector<128x32xbf16>,
    %c5_188 = arith.constant 5 : index
    %c0_189 = arith.constant 0 : index
    %171 = vector.load %arg19[%c5_188, %c0_189] : memref<160x32xf32, #tpu.memory_space<vmem>>, vector<128x32xf32>
    %172 = arith.truncf %171 : vector<128x32xf32> to vector<128x32xbf16>
    %c0_190 = arith.constant 0 : index
    %c32_191 = arith.constant 32 : index
    %173 = vector.load %arg20[%c0_190, %c32_191] : memref<128x288xbf16, #tpu.memory_space<vmem>>, vector<128x32xbf16>
    tpu.vector_store %arg20[%c0_190, %c32_191], %172 {strides = array<i32>} : memref<128x288xbf16, #tpu.memory_space<vmem>>, vector<128x32xbf16>,
    %c6_192 = arith.constant 6 : index
    %c0_193 = arith.constant 0 : index
    %174 = vector.load %arg19[%c6_192, %c0_193] : memref<160x32xf32, #tpu.memory_space<vmem>>, vector<128x32xf32>
    %175 = arith.truncf %174 : vector<128x32xf32> to vector<128x32xbf16>
    %c0_194 = arith.constant 0 : index
    %c64_195 = arith.constant 64 : index
    %176 = vector.load %arg20[%c0_194, %c64_195] : memref<128x288xbf16, #tpu.memory_space<vmem>>, vector<128x32xbf16>
    tpu.vector_store %arg20[%c0_194, %c64_195], %175 {strides = array<i32>} : memref<128x288xbf16, #tpu.memory_space<vmem>>, vector<128x32xbf16>,
    %c15_196 = arith.constant 15 : index
    %c0_197 = arith.constant 0 : index
    %177 = vector.load %arg19[%c15_196, %c0_197] : memref<160x32xf32, #tpu.memory_space<vmem>>, vector<128x32xf32>
    %178 = arith.truncf %177 : vector<128x32xf32> to vector<128x32xbf16>
    %c0_198 = arith.constant 0 : index
    %c96_199 = arith.constant 96 : index
    %179 = vector.load %arg20[%c0_198, %c96_199] : memref<128x288xbf16, #tpu.memory_space<vmem>>, vector<128x32xbf16>
    tpu.vector_store %arg20[%c0_198, %c96_199], %178 {strides = array<i32>} : memref<128x288xbf16, #tpu.memory_space<vmem>>, vector<128x32xbf16>,
    %c16_200 = arith.constant 16 : index
    %c0_201 = arith.constant 0 : index
    %180 = vector.load %arg19[%c16_200, %c0_201] : memref<160x32xf32, #tpu.memory_space<vmem>>, vector<128x32xf32>
    %181 = arith.truncf %180 : vector<128x32xf32> to vector<128x32xbf16>
    %c0_202 = arith.constant 0 : index
    %c128_203 = arith.constant 128 : index
    %182 = vector.load %arg20[%c0_202, %c128_203] : memref<128x288xbf16, #tpu.memory_space<vmem>>, vector<128x32xbf16>
    tpu.vector_store %arg20[%c0_202, %c128_203], %181 {strides = array<i32>} : memref<128x288xbf16, #tpu.memory_space<vmem>>, vector<128x32xbf16>,
    %c17_204 = arith.constant 17 : index
    %c0_205 = arith.constant 0 : index
    %183 = vector.load %arg19[%c17_204, %c0_205] : memref<160x32xf32, #tpu.memory_space<vmem>>, vector<128x32xf32>
    %184 = arith.truncf %183 : vector<128x32xf32> to vector<128x32xbf16>
    %c0_206 = arith.constant 0 : index
    %c160_207 = arith.constant 160 : index
    %185 = vector.load %arg20[%c0_206, %c160_207] : memref<128x288xbf16, #tpu.memory_space<vmem>>, vector<128x32xbf16>
    tpu.vector_store %arg20[%c0_206, %c160_207], %184 {strides = array<i32>} : memref<128x288xbf16, #tpu.memory_space<vmem>>, vector<128x32xbf16>,
    %c26_208 = arith.constant 26 : index
    %c0_209 = arith.constant 0 : index
    %186 = vector.load %arg19[%c26_208, %c0_209] : memref<160x32xf32, #tpu.memory_space<vmem>>, vector<128x32xf32>
    %187 = arith.truncf %186 : vector<128x32xf32> to vector<128x32xbf16>
    %c0_210 = arith.constant 0 : index
    %c192_211 = arith.constant 192 : index
    %188 = vector.load %arg20[%c0_210, %c192_211] : memref<128x288xbf16, #tpu.memory_space<vmem>>, vector<128x32xbf16>
    tpu.vector_store %arg20[%c0_210, %c192_211], %187 {strides = array<i32>} : memref<128x288xbf16, #tpu.memory_space<vmem>>, vector<128x32xbf16>,
    %c27_212 = arith.constant 27 : index
    %c0_213 = arith.constant 0 : index
    %189 = vector.load %arg19[%c27_212, %c0_213] : memref<160x32xf32, #tpu.memory_space<vmem>>, vector<128x32xf32>
    %190 = arith.truncf %189 : vector<128x32xf32> to vector<128x32xbf16>
    %c0_214 = arith.constant 0 : index
    %c224_215 = arith.constant 224 : index
    %191 = vector.load %arg20[%c0_214, %c224_215] : memref<128x288xbf16, #tpu.memory_space<vmem>>, vector<128x32xbf16>
    tpu.vector_store %arg20[%c0_214, %c224_215], %190 {strides = array<i32>} : memref<128x288xbf16, #tpu.memory_space<vmem>>, vector<128x32xbf16>,
    %c28_216 = arith.constant 28 : index
    %c0_217 = arith.constant 0 : index
    %192 = vector.load %arg19[%c28_216, %c0_217] : memref<160x32xf32, #tpu.memory_space<vmem>>, vector<128x32xf32>
    %193 = arith.truncf %192 : vector<128x32xf32> to vector<128x32xbf16>
    %c0_218 = arith.constant 0 : index
    %c256_219 = arith.constant 256 : index
    %194 = vector.load %arg20[%c0_218, %c256_219] : memref<128x288xbf16, #tpu.memory_space<vmem>>, vector<128x32xbf16>
    tpu.vector_store %arg20[%c0_218, %c256_219], %193 {strides = array<i32>} : memref<128x288xbf16, #tpu.memory_space<vmem>>, vector<128x32xbf16>,
    %c0_220 = arith.constant 0 : index
    %c0_221 = arith.constant 0 : index
    %195 = vector.load %arg20[%c0_220, %c0_221] : memref<128x288xbf16, #tpu.memory_space<vmem>>, vector<128x288xbf16>
    %cst_222 = arith.constant dense<0.000000e+00> : vector<128x32xf32>
    %196 = tpu.matmul %195, %165, %cst_222 {dimension_numbers = #tpu.dot_dimension_numbers<[1], [0], [0], [1], [0, 0, 1, 1], [], []>} : vector<128x288xbf16>, vector<288x32xbf16>, vector<128x32xf32> -> vector<128x32xf32>
    %197 = vector.broadcast %167 : vector<1x32xf32> to vector<128x32xf32>
    %198 = arith.addf %196, %197 : vector<128x32xf32>
    %199 = arith.addf %198, %123 : vector<128x32xf32>
    %cst_223 = arith.constant 0.000000e+00 : f32
    %200 = vector.broadcast %cst_223 : f32 to vector<128x32xf32>
    %201 = arith.maximumf %199, %200 : vector<128x32xf32>
    %202 = arith.mulf %201, %8 : vector<128x32xf32>
    %c0_224 = arith.constant 0 : index
    %c0_225 = arith.constant 0 : index
    %203 = vector.load %arg7[%c0_224, %c0_225] : memref<32x3xf32, #tpu.memory_space<vmem>>, vector<32x3xf32>
    %cst_226 = arith.constant dense<0.000000e+00> : vector<128x3xf32>
    %204 = tpu.matmul %202, %203, %cst_226 {dimension_numbers = #tpu.dot_dimension_numbers<[1], [0], [0], [1], [0, 0, 1, 1], [], []>} : vector<128x32xf32>, vector<32x3xf32>, vector<128x3xf32> -> vector<128x3xf32>
    %c0_227 = arith.constant 0 : index
    %c0_228 = arith.constant 0 : index
    %205 = vector.load %arg8[%c0_227, %c0_228] : memref<1x3xf32, #tpu.memory_space<vmem>>, vector<1x3xf32>
    %206 = vector.broadcast %205 : vector<1x3xf32> to vector<128x3xf32>
    %207 = arith.addf %204, %206 : vector<128x3xf32>
    %cst_229 = arith.constant 0.000000e+00 : f32
    %208 = vector.broadcast %cst_229 : f32 to vector<128x3xf32>
    %209 = arith.maximumf %207, %208 : vector<128x3xf32>
    %210 = vector.extract_strided_slice %209 {offsets = [0, 0], sizes = [128, 1], strides = [1, 1]} : vector<128x3xf32> to vector<128x1xf32>
    %c0_230 = arith.constant 0 : index
    %c0_231 = arith.constant 0 : index
    %211 = vector.load %arg9[%c0_230, %c0_231] : memref<128x128xf32, #tpu.memory_space<vmem>>, vector<128x128xf32>
    %212 = vector.broadcast %210 : vector<128x1xf32> to vector<128x128xf32>
    %213 = arith.mulf %212, %211 : vector<128x128xf32>
    %214 = vector.extract_strided_slice %209 {offsets = [0, 1], sizes = [128, 1], strides = [1, 1]} : vector<128x3xf32> to vector<128x1xf32>
    %c0_232 = arith.constant 0 : index
    %c0_233 = arith.constant 0 : index
    %215 = vector.load %arg10[%c0_232, %c0_233] : memref<128x128xf32, #tpu.memory_space<vmem>>, vector<128x128xf32>
    %216 = vector.broadcast %214 : vector<128x1xf32> to vector<128x128xf32>
    %217 = arith.mulf %216, %215 : vector<128x128xf32>
    %218 = arith.addf %213, %217 : vector<128x128xf32>
    %219 = vector.extract_strided_slice %209 {offsets = [0, 2], sizes = [128, 1], strides = [1, 1]} : vector<128x3xf32> to vector<128x1xf32>
    %c0_234 = arith.constant 0 : index
    %c0_235 = arith.constant 0 : index
    %220 = vector.load %arg11[%c0_234, %c0_235] : memref<128x256xf32, #tpu.memory_space<vmem>>, vector<128x256xf32>
    %221 = vector.broadcast %219 : vector<128x1xf32> to vector<128x256xf32>
    %222 = arith.mulf %221, %220 : vector<128x256xf32>
    %c0_236 = arith.constant 0 : index
    %c0_237 = arith.constant 0 : index
    %223 = vector.load %arg16[%c0_236, %c0_237] : memref<8x128xf32, #tpu.memory_space<vmem>>, vector<8x128xf32>
    %cst_238 = arith.constant dense<0.000000e+00> : vector<8x128xf32>
    %224 = tpu.matmul %223, %218, %cst_238 {dimension_numbers = #tpu.dot_dimension_numbers<[1], [0], [0], [1], [0, 0, 1, 1], [], []>} : vector<8x128xf32>, vector<128x128xf32>, vector<8x128xf32> -> vector<8x128xf32>
    %c0_239 = arith.constant 0 : index
    %c0_240 = arith.constant 0 : index
    %225 = vector.load %arg12[%c0_239, %c0_240] : memref<1x128xf32, #tpu.memory_space<vmem>>, vector<1x128xf32>
    %226 = vector.broadcast %225 : vector<1x128xf32> to vector<8x128xf32>
    %227 = arith.addf %224, %226 : vector<8x128xf32>
    %cst_241 = arith.constant dense<0.000000e+00> : vector<8x256xf32>
    %228 = tpu.matmul %223, %222, %cst_241 {dimension_numbers = #tpu.dot_dimension_numbers<[1], [0], [0], [1], [0, 0, 1, 1], [], []>} : vector<8x128xf32>, vector<128x256xf32>, vector<8x256xf32> -> vector<8x256xf32>
    %c0_242 = arith.constant 0 : index
    %c0_243 = arith.constant 0 : index
    %229 = vector.load %arg13[%c0_242, %c0_243] : memref<1x256xf32, #tpu.memory_space<vmem>>, vector<1x256xf32>
    %230 = vector.broadcast %229 : vector<1x256xf32> to vector<8x256xf32>
    %231 = arith.addf %228, %230 : vector<8x256xf32>
    %cst_244 = arith.constant 0.000000e+00 : f32
    %232 = vector.broadcast %cst_244 : f32 to vector<8x256xf32>
    %233 = arith.maximumf %231, %232 : vector<8x256xf32>
    %c0_245 = arith.constant 0 : index
    %c0_246 = arith.constant 0 : index
    %234 = vector.load %arg14[%c0_245, %c0_246] : memref<256x128xf32, #tpu.memory_space<vmem>>, vector<256x128xf32>
    %cst_247 = arith.constant dense<0.000000e+00> : vector<8x128xf32>
    %235 = tpu.matmul %233, %234, %cst_247 {dimension_numbers = #tpu.dot_dimension_numbers<[1], [0], [0], [1], [0, 0, 1, 1], [], []>} : vector<8x256xf32>, vector<256x128xf32>, vector<8x128xf32> -> vector<8x128xf32>
    %c0_248 = arith.constant 0 : index
    %c0_249 = arith.constant 0 : index
    %236 = vector.load %arg15[%c0_248, %c0_249] : memref<1x128xf32, #tpu.memory_space<vmem>>, vector<1x128xf32>
    %237 = vector.broadcast %236 : vector<1x128xf32> to vector<8x128xf32>
    %238 = arith.addf %235, %237 : vector<8x128xf32>
    %239 = math.tanh %238 : vector<8x128xf32>
    %c0_250 = arith.constant 0 : index
    %c0_251 = arith.constant 0 : index
    %240 = vector.load %arg17[%c0_250, %c0_251] : memref<8x128xf32, #tpu.memory_space<vmem>>, vector<8x128xf32>
    tpu.vector_store %arg17[%c0_250, %c0_251], %227 {strides = array<i32>} : memref<8x128xf32, #tpu.memory_space<vmem>>, vector<8x128xf32>,
    %c0_252 = arith.constant 0 : index
    %c0_253 = arith.constant 0 : index
    %241 = vector.load %arg18[%c0_252, %c0_253] : memref<8x128xf32, #tpu.memory_space<vmem>>, vector<8x128xf32>
    tpu.vector_store %arg18[%c0_252, %c0_253], %239 {strides = array<i32>} : memref<8x128xf32, #tpu.memory_space<vmem>>, vector<8x128xf32>,
    return
  }
  func.func @transform_0(%arg0: i32) -> (i32, i32) {
    %c0_i32 = arith.constant 0 : i32
    %c0_i32_0 = arith.constant 0 : i32
    return %arg0, %c0_i32 : i32, i32
  }
  func.func @transform_1(%arg0: i32) -> (i32, i32) {
    %c0_i32 = arith.constant 0 : i32
    %c0_i32_0 = arith.constant 0 : i32
    %c0_i32_1 = arith.constant 0 : i32
    return %c0_i32, %c0_i32_0 : i32, i32
  }
  func.func @transform_2(%arg0: i32) -> (i32, i32) {
    %c0_i32 = arith.constant 0 : i32
    %c0_i32_0 = arith.constant 0 : i32
    %c0_i32_1 = arith.constant 0 : i32
    return %c0_i32, %c0_i32_0 : i32, i32
  }
  func.func @transform_3(%arg0: i32) -> (i32, i32) {
    %c0_i32 = arith.constant 0 : i32
    %c0_i32_0 = arith.constant 0 : i32
    %c0_i32_1 = arith.constant 0 : i32
    return %c0_i32, %c0_i32_0 : i32, i32
  }
  func.func @transform_4(%arg0: i32) -> (i32, i32, i32) {
    %c0_i32 = arith.constant 0 : i32
    %c0_i32_0 = arith.constant 0 : i32
    %c0_i32_1 = arith.constant 0 : i32
    %c0_i32_2 = arith.constant 0 : i32
    return %c0_i32, %c0_i32_0, %c0_i32_1 : i32, i32, i32
  }
  func.func @transform_5(%arg0: i32) -> (i32, i32, i32) {
    %c0_i32 = arith.constant 0 : i32
    %c0_i32_0 = arith.constant 0 : i32
    %c0_i32_1 = arith.constant 0 : i32
    %c0_i32_2 = arith.constant 0 : i32
    return %c0_i32, %c0_i32_0, %c0_i32_1 : i32, i32, i32
  }
  func.func @transform_6(%arg0: i32) -> (i32, i32) {
    %c0_i32 = arith.constant 0 : i32
    %c0_i32_0 = arith.constant 0 : i32
    %c0_i32_1 = arith.constant 0 : i32
    return %c0_i32, %c0_i32_0 : i32, i32
  }
  func.func @transform_7(%arg0: i32) -> (i32, i32) {
    %c0_i32 = arith.constant 0 : i32
    %c0_i32_0 = arith.constant 0 : i32
    %c0_i32_1 = arith.constant 0 : i32
    return %c0_i32, %c0_i32_0 : i32, i32
  }
  func.func @transform_8(%arg0: i32) -> (i32, i32) {
    %c0_i32 = arith.constant 0 : i32
    %c0_i32_0 = arith.constant 0 : i32
    %c0_i32_1 = arith.constant 0 : i32
    return %c0_i32, %c0_i32_0 : i32, i32
  }
  func.func @transform_9(%arg0: i32) -> (i32, i32) {
    %c0_i32 = arith.constant 0 : i32
    %c0_i32_0 = arith.constant 0 : i32
    %c0_i32_1 = arith.constant 0 : i32
    return %c0_i32, %c0_i32_0 : i32, i32
  }
  func.func @transform_10(%arg0: i32) -> (i32, i32) {
    %c0_i32 = arith.constant 0 : i32
    %c0_i32_0 = arith.constant 0 : i32
    %c0_i32_1 = arith.constant 0 : i32
    return %c0_i32, %c0_i32_0 : i32, i32
  }
  func.func @transform_11(%arg0: i32) -> (i32, i32) {
    %c0_i32 = arith.constant 0 : i32
    %c0_i32_0 = arith.constant 0 : i32
    %c0_i32_1 = arith.constant 0 : i32
    return %c0_i32, %c0_i32_0 : i32, i32
  }
  func.func @transform_12(%arg0: i32) -> (i32, i32) {
    %c0_i32 = arith.constant 0 : i32
    %c0_i32_0 = arith.constant 0 : i32
    %c0_i32_1 = arith.constant 0 : i32
    return %c0_i32, %c0_i32_0 : i32, i32
  }
  func.func @transform_13(%arg0: i32) -> (i32, i32) {
    %c0_i32 = arith.constant 0 : i32
    %c0_i32_0 = arith.constant 0 : i32
    %c0_i32_1 = arith.constant 0 : i32
    return %c0_i32, %c0_i32_0 : i32, i32
  }
  func.func @transform_14(%arg0: i32) -> (i32, i32) {
    %c0_i32 = arith.constant 0 : i32
    %c0_i32_0 = arith.constant 0 : i32
    %c0_i32_1 = arith.constant 0 : i32
    return %c0_i32, %c0_i32_0 : i32, i32
  }
  func.func @transform_15(%arg0: i32) -> (i32, i32) {
    %c0_i32 = arith.constant 0 : i32
    %c0_i32_0 = arith.constant 0 : i32
    %c0_i32_1 = arith.constant 0 : i32
    return %c0_i32, %c0_i32_0 : i32, i32
  }
  func.func @transform_16(%arg0: i32) -> (i32, i32) {
    %c0_i32 = arith.constant 0 : i32
    %c0_i32_0 = arith.constant 0 : i32
    return %arg0, %c0_i32 : i32, i32
  }
  func.func @transform_17(%arg0: i32) -> (i32, i32) {
    %c0_i32 = arith.constant 0 : i32
    %c0_i32_0 = arith.constant 0 : i32
    return %arg0, %c0_i32 : i32, i32
  }
}

</mosaic_0001>

<llo_original>
// kernel: policy_value_forward.1
$region0: #{policy_value_forward.1}
  #allocation0 [shape = 'u32[]', space=smem, size = 0x4, offset = 0x4, fixed_abs, tag = 'smem constant byte address 0x4 - core index']
  #allocation1 [shape = 'u32[72,128]{1,0:T(1,128)}', space=vmem, size = 0x9000, scoped, tag = 'internal scratch']
  #allocation2 [shape = 'f32[160,32]{1,0:T(8,128)}', space=vmem, size = 0x14000, scoped, tag = 'scratch operand']
  #allocation3 [shape = 'bf16[128,288]{1,0:T(8,128)(2,1)}', space=vmem, size = 0x18000, scoped, tag = 'scratch operand']
  %s0 = inlined_call_operand.vmem [shape: bf16[256,32], index: 0, kind: input, shape index: {}]
  %s1 = inlined_call_operand.vmem [shape: f32[128,1], index: 1, kind: input, shape index: {}]
  %s2 = inlined_call_operand.vmem [shape: bf16[288,32], index: 2, kind: input, shape index: {}]
  %s3 = inlined_call_operand.vmem [shape: f32[1,32], index: 3, kind: input, shape index: {}]
  %s4 = inlined_call_operand.vmem [shape: bf16[4,288,32], index: 4, kind: input, shape index: {}]
  %s5 = inlined_call_operand.vmem [shape: f32[4,1,32], index: 5, kind: input, shape index: {}]
  %s6 = inlined_call_operand.vmem [shape: f32[32,3], index: 6, kind: input, shape index: {}]
  %s7 = inlined_call_operand.vmem [shape: f32[1,3], index: 7, kind: input, shape index: {}]
  %s8 = inlined_call_operand.vmem [shape: f32[128,128], index: 8, kind: input, shape index: {}]
  %s9 = inlined_call_operand.vmem [shape: f32[128,128], index: 9, kind: input, shape index: {}]
  %s10 = inlined_call_operand.vmem [shape: f32[128,256], index: 10, kind: input, shape index: {}]
  %s11 = inlined_call_operand.vmem [shape: f32[1,128], index: 11, kind: input, shape index: {}]
  %s12 = inlined_call_operand.vmem [shape: f32[1,256], index: 12, kind: input, shape index: {}]
  %s13 = inlined_call_operand.vmem [shape: f32[256,128], index: 13, kind: input, shape index: {}]
  %s14 = inlined_call_operand.vmem [shape: f32[1,128], index: 14, kind: input, shape index: {}]
  %s15 = inlined_call_operand.vmem [shape: f32[8,128], index: 15, kind: input, shape index: {}]
  %s16 = inlined_call_operand.vmem [shape: f32[16,128], index: 16, kind: output, shape index: {0}]
  %s17 = inlined_call_operand.vmem [shape: f32[16,128], index: 17, kind: output, shape index: {1}]
  %18 = xla_tuple %s16, %s17
  %s19 = sld [smem:[#allocation0]]
  $region105: #{policy_value_forward.1} parent=0
    _
  %s21 = ssub.s32 1, %s19
  %s22 = scalar_select 0, %s21, %s19
  loop: start=0, step=1, limit=4
  $region2: #{policy_value_forward.1} parent=0 // loop_pre_header
    _
  $region3: #{policy_value_forward.1} parent=0 // loop_header
    %s24 = sphi 0, %s28
    %p25 = scmp.ge.s32.totalorder %s24, 4
    %s34 = sphi 0, %s36
    %s37 = sphi 0, %s34
    %s38 = sphi 0, %s37
    %s54 = sphi 0, %s38
    %s58 = sphi 0, %s58
    %s60 = sphi 0, %s58
    %s61 = sphi 0, %s60
    %s75 = sphi 0, %s61
    %s79 = sphi 0, %s79
    %s81 = sphi 0, %s79
    %s82 = sphi 0, %s81
    %s96 = sphi 0, %s82
    %s100 = sphi 0, %s100
    %s102 = sphi 0, %s100
    %s103 = sphi 0, %s102
    %s117 = sphi 0, %s103
    %s121 = sphi 0, %s121
    %s123 = sphi 0, %s121
    %s124 = sphi 0, %s123
    %s138 = sphi 0, %s124
    %s142 = sphi 0, %s142
    %s144 = sphi 0, %s142
    %s145 = sphi 0, %s144
    %s159 = sphi 0, %s145
    %s163 = sphi 0, %s163
    %s165 = sphi 0, %s163
    %s166 = sphi 0, %s165
    %s180 = sphi 0, %s166
    %s184 = sphi 0, %s184
    %s186 = sphi 0, %s184
    %s187 = sphi 0, %s186
    %s201 = sphi 0, %s187
    %s205 = sphi 0, %s205
    %s207 = sphi 0, %s205
    %s208 = sphi 0, %s207
    %s222 = sphi 0, %s208
    %s226 = sphi 0, %s226
    %s228 = sphi 0, %s226
    %s229 = sphi 0, %s228
    %s243 = sphi 0, %s229
    %s247 = sphi 0, %s247
    %s249 = sphi 0, %s247
    %s250 = sphi 0, %s249
    %s264 = sphi 0, %s250
    %s268 = sphi 0, %s268
    %s270 = sphi 0, %s268
    %s271 = sphi 0, %s270
    %s285 = sphi 0, %s271
    %s289 = sphi 0, %s289
    %s291 = sphi 0, %s289
    %s292 = sphi 0, %s291
    %s306 = sphi 0, %s292
    %s310 = sphi 0, %s310
    %s312 = sphi 0, %s310
    %s313 = sphi 0, %s312
    %s327 = sphi 0, %s313
    %s331 = sphi 0, %s331
    %s333 = sphi 0, %s331
    %s334 = sphi 0, %s333
    %s348 = sphi 0, %s334
    %s352 = sphi 0, %s352
    %s354 = sphi 0, %s352
    %s355 = sphi 0, %s354
    %s369 = sphi 0, %s355
    %s375 = sphi 0, %s377
    %s378 = sphi 0, %s375
    %s379 = sphi 0, %s378
    %s395 = sphi 0, %s379
    %s401 = sphi 0, %s403
    %s404 = sphi 0, %s401
    %s405 = sphi 0, %s404
    %s421 = sphi 0, %s405
  $region4: #{policy_value_forward.1} parent=0 // loop_header_branch
    %27 = sbr.rel (%p25) target = $region8
  $region5: #{policy_value_forward.1} parent=0 // loop_body
    %s29 = ssub.s32 %s24, 1
    %s30 = ssub.s32 %s24, 2
    %s31 = sadd.s32 %s24, 1
    %s32 = ssub.s32 %s24, %s31
    %p33 = scmp.eq.s32.totalorder %s32, 0
    %s35 = sadd.s32 %s34, 1
    %s36 = scalar_select %p33, %s34, %s35
    %p39 = pneg %p33
    %p40 = scmp.eq.s32.totalorder %s24, 1
    %p41 = por %p39, %p40
    %p42 = scmp.ne.s32.totalorder %s34, %s37
    %p43 = scmp.eq.s32.totalorder %s24, 0
    %p44 = por %p42, %p43
    %p45 = scmp.ne.s32.totalorder %s34, %s37
    %p46 = scmp.eq.s32.totalorder %s29, 1
    %p47 = por %p45, %p46
    %p48 = scmp.ne.s32.totalorder %s37, %s38
    %p49 = scmp.eq.s32.totalorder %s29, 0
    %p50 = por %p48, %p49
    %p51 = scmp.ne.s32.totalorder %s37, %s38
    %p52 = scmp.eq.s32.totalorder %s30, 1
    %p53 = por %p51, %p52
    %p55 = scmp.ne.s32.totalorder %s38, %s54
    %p56 = scmp.eq.s32.totalorder %s30, 0
    %p57 = por %p55, %p56
    %s59 = sadd.s32 %s58, 1
    %p62 = scmp.eq.s32.totalorder %s24, 1
    %p63 = scmp.ne.s32.totalorder %s58, %s60
    %p64 = scmp.eq.s32.totalorder %s24, 0
    %p65 = por %p63, %p64
    %p66 = scmp.ne.s32.totalorder %s58, %s60
    %p67 = scmp.eq.s32.totalorder %s29, 1
    %p68 = por %p66, %p67
    %p69 = scmp.ne.s32.totalorder %s60, %s61
    %p70 = scmp.eq.s32.totalorder %s29, 0
    %p71 = por %p69, %p70
    %p72 = scmp.ne.s32.totalorder %s60, %s61
    %p73 = scmp.eq.s32.totalorder %s30, 1
    %p74 = por %p72, %p73
    %p76 = scmp.ne.s32.totalorder %s61, %s75
    %p77 = scmp.eq.s32.totalorder %s30, 0
    %p78 = por %p76, %p77
    %s80 = sadd.s32 %s79, 1
    %p83 = scmp.eq.s32.totalorder %s24, 1
    %p84 = scmp.ne.s32.totalorder %s79, %s81
    %p85 = scmp.eq.s32.totalorder %s24, 0
    %p86 = por %p84, %p85
    %p87 = scmp.ne.s32.totalorder %s79, %s81
    %p88 = scmp.eq.s32.totalorder %s29, 1
    %p89 = por %p87, %p88
    %p90 = scmp.ne.s32.totalorder %s81, %s82
    %p91 = scmp.eq.s32.totalorder %s29, 0
    %p92 = por %p90, %p91
    %p93 = scmp.ne.s32.totalorder %s81, %s82
    %p94 = scmp.eq.s32.totalorder %s30, 1
    %p95 = por %p93, %p94
    %p97 = scmp.ne.s32.totalorder %s82, %s96
    %p98 = scmp.eq.s32.totalorder %s30, 0
    %p99 = por %p97, %p98
    %s101 = sadd.s32 %s100, 1
    %p104 = scmp.eq.s32.totalorder %s24, 1
    %p105 = scmp.ne.s32.totalorder %s100, %s102
    %p106 = scmp.eq.s32.totalorder %s24, 0
    %p107 = por %p105, %p106
    %p108 = scmp.ne.s32.totalorder %s100, %s102
    %p109 = scmp.eq.s32.totalorder %s29, 1
    %p110 = por %p108, %p109
    %p111 = scmp.ne.s32.totalorder %s102, %s103
    %p112 = scmp.eq.s32.totalorder %s29, 0
    %p113 = por %p111, %p112
    %p114 = scmp.ne.s32.totalorder %s102, %s103
    %p115 = scmp.eq.s32.totalorder %s30, 1
    %p116 = por %p114, %p115
    %p118 = scmp.ne.s32.totalorder %s103, %s117
    %p119 = scmp.eq.s32.totalorder %s30, 0
    %p120 = por %p118, %p119
    %s122 = sadd.s32 %s121, 1
    %p125 = scmp.eq.s32.totalorder %s24, 1
    %p126 = scmp.ne.s32.totalorder %s121, %s123
    %p127 = scmp.eq.s32.totalorder %s24, 0
    %p128 = por %p126, %p127
    %p129 = scmp.ne.s32.totalorder %s121, %s123
    %p130 = scmp.eq.s32.totalorder %s29, 1
    %p131 = por %p129, %p130
    %p132 = scmp.ne.s32.totalorder %s123, %s124
    %p133 = scmp.eq.s32.totalorder %s29, 0
    %p134 = por %p132, %p133
    %p135 = scmp.ne.s32.totalorder %s123, %s124
    %p136 = scmp.eq.s32.totalorder %s30, 1
    %p137 = por %p135, %p136
    %p139 = scmp.ne.s32.totalorder %s124, %s138
    %p140 = scmp.eq.s32.totalorder %s30, 0
    %p141 = por %p139, %p140
    %s143 = sadd.s32 %s142, 1
    %p146 = scmp.eq.s32.totalorder %s24, 1
    %p147 = scmp.ne.s32.totalorder %s142, %s144
    %p148 = scmp.eq.s32.totalorder %s24, 0
    %p149 = por %p147, %p148
    %p150 = scmp.ne.s32.totalorder %s142, %s144
    %p151 = scmp.eq.s32.totalorder %s29, 1
    %p152 = por %p150, %p151
    %p153 = scmp.ne.s32.totalorder %s144, %s145
    %p154 = scmp.eq.s32.totalorder %s29, 0
    %p155 = por %p153, %p154
    %p156 = scmp.ne.s32.totalorder %s144, %s145
    %p157 = scmp.eq.s32.totalorder %s30, 1
    %p158 = por %p156, %p157
    %p160 = scmp.ne.s32.totalorder %s145, %s159
    %p161 = scmp.eq.s32.totalorder %s30, 0
    %p162 = por %p160, %p161
    %s164 = sadd.s32 %s163, 1
    %p167 = scmp.eq.s32.totalorder %s24, 1
    %p168 = scmp.ne.s32.totalorder %s163, %s165
    %p169 = scmp.eq.s32.totalorder %s24, 0
    %p170 = por %p168, %p169
    %p171 = scmp.ne.s32.totalorder %s163, %s165
    %p172 = scmp.eq.s32.totalorder %s29, 1
    %p173 = por %p171, %p172
    %p174 = scmp.ne.s32.totalorder %s165, %s166
    %p175 = scmp.eq.s32.totalorder %s29, 0
    %p176 = por %p174, %p175
    %p177 = scmp.ne.s32.totalorder %s165, %s166
    %p178 = scmp.eq.s32.totalorder %s30, 1
    %p179 = por %p177, %p178
    %p181 = scmp.ne.s32.totalorder %s166, %s180
    %p182 = scmp.eq.s32.totalorder %s30, 0
    %p183 = por %p181, %p182
    %s185 = sadd.s32 %s184, 1
    %p188 = scmp.eq.s32.totalorder %s24, 1
    %p189 = scmp.ne.s32.totalorder %s184, %s186
    %p190 = scmp.eq.s32.totalorder %s24, 0
    %p191 = por %p189, %p190
    %p192 = scmp.ne.s32.totalorder %s184, %s186
    %p193 = scmp.eq.s32.totalorder %s29, 1
    %p194 = por %p192, %p193
    %p195 = scmp.ne.s32.totalorder %s186, %s187
    %p196 = scmp.eq.s32.totalorder %s29, 0
    %p197 = por %p195, %p196
    %p198 = scmp.ne.s32.totalorder %s186, %s187
    %p199 = scmp.eq.s32.totalorder %s30, 1
    %p200 = por %p198, %p199
    %p202 = scmp.ne.s32.totalorder %s187, %s201
    %p203 = scmp.eq.s32.totalorder %s30, 0
    %p204 = por %p202, %p203
    %s206 = sadd.s32 %s205, 1
    %p209 = scmp.eq.s32.totalorder %s24, 1
    %p210 = scmp.ne.s32.totalorder %s205, %s207
    %p211 = scmp.eq.s32.totalorder %s24, 0
    %p212 = por %p210, %p211
    %p213 = scmp.ne.s32.totalorder %s205, %s207
    %p214 = scmp.eq.s32.totalorder %s29, 1
    %p215 = por %p213, %p214
    %p216 = scmp.ne.s32.totalorder %s207, %s208
    %p217 = scmp.eq.s32.totalorder %s29, 0
    %p218 = por %p216, %p217
    %p219 = scmp.ne.s32.totalorder %s207, %s208
    %p220 = scmp.eq.s32.totalorder %s30, 1
    %p221 = por %p219, %p220
    %p223 = scmp.ne.s32.totalorder %s208, %s222
    %p224 = scmp.eq.s32.totalorder %s30, 0
    %p225 = por %p223, %p224
    %s227 = sadd.s32 %s226, 1
    %p230 = scmp.eq.s32.totalorder %s24, 1
    %p231 = scmp.ne.s32.totalorder %s226, %s228
    %p232 = scmp.eq.s32.totalorder %s24, 0
    %p233 = por %p231, %p232
    %p234 = scmp.ne.s32.totalorder %s226, %s228
    %p235 = scmp.eq.s32.totalorder %s29, 1
    %p236 = por %p234, %p235
    %p237 = scmp.ne.s32.totalorder %s228, %s229
    %p238 = scmp.eq.s32.totalorder %s29, 0
    %p239 = por %p237, %p238
    %p240 = scmp.ne.s32.totalorder %s228, %s229
    %p241 = scmp.eq.s32.totalorder %s30, 1
    %p242 = por %p240, %p241
    %p244 = scmp.ne.s32.totalorder %s229, %s243
    %p245 = scmp.eq.s32.totalorder %s30, 0
    %p246 = por %p244, %p245
    %s248 = sadd.s32 %s247, 1
    %p251 = scmp.eq.s32.totalorder %s24, 1
    %p252 = scmp.ne.s32.totalorder %s247, %s249
    %p253 = scmp.eq.s32.totalorder %s24, 0
    %p254 = por %p252, %p253
    %p255 = scmp.ne.s32.totalorder %s247, %s249
    %p256 = scmp.eq.s32.totalorder %s29, 1
    %p257 = por %p255, %p256
    %p258 = scmp.ne.s32.totalorder %s249, %s250
    %p259 = scmp.eq.s32.totalorder %s29, 0
    %p260 = por %p258, %p259
    %p261 = scmp.ne.s32.totalorder %s249, %s250
    %p262 = scmp.eq.s32.totalorder %s30, 1
    %p263 = por %p261, %p262
    %p265 = scmp.ne.s32.totalorder %s250, %s264
    %p266 = scmp.eq.s32.totalorder %s30, 0
    %p267 = por %p265, %p266
    %s269 = sadd.s32 %s268, 1
    %p272 = scmp.eq.s32.totalorder %s24, 1
    %p273 = scmp.ne.s32.totalorder %s268, %s270
    %p274 = scmp.eq.s32.totalorder %s24, 0
    %p275 = por %p273, %p274
    %p276 = scmp.ne.s32.totalorder %s268, %s270
    %p277 = scmp.eq.s32.totalorder %s29, 1
    %p278 = por %p276, %p277
    %p279 = scmp.ne.s32.totalorder %s270, %s271
    %p280 = scmp.eq.s32.totalorder %s29, 0
    %p281 = por %p279, %p280
    %p282 = scmp.ne.s32.totalorder %s270, %s271
    %p283 = scmp.eq.s32.totalorder %s30, 1
    %p284 = por %p282, %p283
    %p286 = scmp.ne.s32.totalorder %s271, %s285
    %p287 = scmp.eq.s32.totalorder %s30, 0
    %p288 = por %p286, %p287
    %s290 = sadd.s32 %s289, 1
    %p293 = scmp.eq.s32.totalorder %s24, 1
    %p294 = scmp.ne.s32.totalorder %s289, %s291
    %p295 = scmp.eq.s32.totalorder %s24, 0
    %p296 = por %p294, %p295
    %p297 = scmp.ne.s32.totalorder %s289, %s291
    %p298 = scmp.eq.s32.totalorder %s29, 1
    %p299 = por %p297, %p298
    %p300 = scmp.ne.s32.totalorder %s291, %s292
    %p301 = scmp.eq.s32.totalorder %s29, 0
    %p302 = por %p300, %p301
    %p303 = scmp.ne.s32.totalorder %s291, %s292
    %p304 = scmp.eq.s32.totalorder %s30, 1
    %p305 = por %p303, %p304
    %p307 = scmp.ne.s32.totalorder %s292, %s306
    %p308 = scmp.eq.s32.totalorder %s30, 0
    %p309 = por %p307, %p308
    %s311 = sadd.s32 %s310, 1
    %p314 = scmp.eq.s32.totalorder %s24, 1
    %p315 = scmp.ne.s32.totalorder %s310, %s312
    %p316 = scmp.eq.s32.totalorder %s24, 0
    %p317 = por %p315, %p316
    %p318 = scmp.ne.s32.totalorder %s310, %s312
    %p319 = scmp.eq.s32.totalorder %s29, 1
    %p320 = por %p318, %p319
    %p321 = scmp.ne.s32.totalorder %s312, %s313
    %p322 = scmp.eq.s32.totalorder %s29, 0
    %p323 = por %p321, %p322
    %p324 = scmp.ne.s32.totalorder %s312, %s313
    %p325 = scmp.eq.s32.totalorder %s30, 1
    %p326 = por %p324, %p325
    %p328 = scmp.ne.s32.totalorder %s313, %s327
    %p329 = scmp.eq.s32.totalorder %s30, 0
    %p330 = por %p328, %p329
    %s332 = sadd.s32 %s331, 1
    %p335 = scmp.eq.s32.totalorder %s24, 1
    %p336 = scmp.ne.s32.totalorder %s331, %s333
    %p337 = scmp.eq.s32.totalorder %s24, 0
    %p338 = por %p336, %p337
    %p339 = scmp.ne.s32.totalorder %s331, %s333
    %p340 = scmp.eq.s32.totalorder %s29, 1
    %p341 = por %p339, %p340
    %p342 = scmp.ne.s32.totalorder %s333, %s334
    %p343 = scmp.eq.s32.totalorder %s29, 0
    %p344 = por %p342, %p343
    %p345 = scmp.ne.s32.totalorder %s333, %s334
    %p346 = scmp.eq.s32.totalorder %s30, 1
    %p347 = por %p345, %p346
    %p349 = scmp.ne.s32.totalorder %s334, %s348
    %p350 = scmp.eq.s32.totalorder %s30, 0
    %p351 = por %p349, %p350
    %s353 = sadd.s32 %s352, 1
    %p356 = scmp.eq.s32.totalorder %s24, 1
    %p357 = scmp.ne.s32.totalorder %s352, %s354
    %p358 = scmp.eq.s32.totalorder %s24, 0
    %p359 = por %p357, %p358
    %p360 = scmp.ne.s32.totalorder %s352, %s354
    %p361 = scmp.eq.s32.totalorder %s29, 1
    %p362 = por %p360, %p361
    %p363 = scmp.ne.s32.totalorder %s354, %s355
    %p364 = scmp.eq.s32.totalorder %s29, 0
    %p365 = por %p363, %p364
    %p366 = scmp.ne.s32.totalorder %s354, %s355
    %p367 = scmp.eq.s32.totalorder %s30, 1
    %p368 = por %p366, %p367
    %p370 = scmp.ne.s32.totalorder %s355, %s369
    %p371 = scmp.eq.s32.totalorder %s30, 0
    %p372 = por %p370, %p371
    %s373 = ssub.s32 %s24, %s31
    %p374 = scmp.eq.s32.totalorder %s373, 0
    %s376 = sadd.s32 %s375, 1
    %s377 = scalar_select %p374, %s375, %s376
    %p380 = pneg %p374
    %p381 = scmp.eq.s32.totalorder %s24, 1
    %p382 = por %p380, %p381
    %p383 = scmp.ne.s32.totalorder %s375, %s378
    %p384 = scmp.eq.s32.totalorder %s24, 0
    %p385 = por %p383, %p384
    %p386 = scmp.ne.s32.totalorder %s375, %s378
    %p387 = scmp.eq.s32.totalorder %s29, 1
    %p388 = por %p386, %p387
    %p389 = scmp.ne.s32.totalorder %s378, %s379
    %p390 = scmp.eq.s32.totalorder %s29, 0
    %p391 = por %p389, %p390
    %p392 = scmp.ne.s32.totalorder %s378, %s379
    %p393 = scmp.eq.s32.totalorder %s30, 1
    %p394 = por %p392, %p393
    %p396 = scmp.ne.s32.totalorder %s379, %s395
    %p397 = scmp.eq.s32.totalorder %s30, 0
    %p398 = por %p396, %p397
    %s399 = ssub.s32 %s24, %s31
    %p400 = scmp.eq.s32.totalorder %s399, 0
    %s402 = sadd.s32 %s401, 1
    %s403 = scalar_select %p400, %s401, %s402
    %p406 = pneg %p400
    %p407 = scmp.eq.s32.totalorder %s24, 1
    %p408 = por %p406, %p407
    %p409 = scmp.ne.s32.totalorder %s401, %s404
    %p410 = scmp.eq.s32.totalorder %s24, 0
    %p411 = por %p409, %p410
    %p412 = scmp.ne.s32.totalorder %s401, %s404
    %p413 = scmp.eq.s32.totalorder %s29, 1
    %p414 = por %p412, %p413
    %p415 = scmp.ne.s32.totalorder %s404, %s405
    %p416 = scmp.eq.s32.totalorder %s29, 0
    %p417 = por %p415, %p416
    %p418 = scmp.ne.s32.totalorder %s404, %s405
    %p419 = scmp.eq.s32.totalorder %s30, 1
    %p420 = por %p418, %p419
    %p422 = scmp.ne.s32.totalorder %s405, %s421
    %p423 = scmp.eq.s32.totalorder %s30, 0
    %p424 = por %p422, %p423
    %p425 = scmp.le.s32.totalorder 1, %s24
    %p426 = scmp.lt.s32.totalorder %s24, 3
    %p427 = pnand %p425, %p426
    %p428 = pneg %p427
    // Predicated region
    $region9: #{policy_value_forward.1} parent=5 // pred_check
      _
    $region10: #{policy_value_forward.1} parent=5 // pred_check_branch
      %430 = sbr.rel (%p427) target = $region12
    $region11: #{policy_value_forward.1} parent=5 // pred_region
      %s431 = ssub.s32 %s24, 1
      // Predicated region
      $region13: #{policy_value_forward.1} parent=11 // pred_check
        %p432 = pneg %p71
      $region14: #{policy_value_forward.1} parent=11 // pred_check_branch
        %434 = sbr.rel (%p432) target = $region16
      $region15: #{policy_value_forward.1} parent=11 // pred_region
        _
      $region16: #{policy_value_forward.1} parent=11 // pred_fallthru
        _
      // Predicated region
      $region17: #{policy_value_forward.1} parent=11 // pred_check
        %p435 = pneg %p92
      $region18: #{policy_value_forward.1} parent=11 // pred_check_branch
        %437 = sbr.rel (%p435) target = $region20
      $region19: #{policy_value_forward.1} parent=11 // pred_region
        _
      $region20: #{policy_value_forward.1} parent=11 // pred_fallthru
        _
      // Predicated region
      $region21: #{policy_value_forward.1} parent=11 // pred_check
        %p438 = pneg %p113
      $region22: #{policy_value_forward.1} parent=11 // pred_check_branch
        %440 = sbr.rel (%p438) target = $region24
      $region23: #{policy_value_forward.1} parent=11 // pred_region
        _
      $region24: #{policy_value_forward.1} parent=11 // pred_fallthru
        _
      // Predicated region
      $region25: #{policy_value_forward.1} parent=11 // pred_check
        %p441 = pneg %p134
      $region26: #{policy_value_forward.1} parent=11 // pred_check_branch
        %443 = sbr.rel (%p441) target = $region28
      $region27: #{policy_value_forward.1} parent=11 // pred_region
        _
      $region28: #{policy_value_forward.1} parent=11 // pred_fallthru
        _
      // Predicated region
      $region29: #{policy_value_forward.1} parent=11 // pred_check
        %p444 = pneg %p155
      $region30: #{policy_value_forward.1} parent=11 // pred_check_branch
        %446 = sbr.rel (%p444) target = $region32
      $region31: #{policy_value_forward.1} parent=11 // pred_region
        _
      $region32: #{policy_value_forward.1} parent=11 // pred_fallthru
        _
      // Predicated region
      $region33: #{policy_value_forward.1} parent=11 // pred_check
        %p447 = pneg %p176
      $region34: #{policy_value_forward.1} parent=11 // pred_check_branch
        %449 = sbr.rel (%p447) target = $region36
      $region35: #{policy_value_forward.1} parent=11 // pred_region
        _
      $region36: #{policy_value_forward.1} parent=11 // pred_fallthru
        _
      // Predicated region
      $region37: #{policy_value_forward.1} parent=11 // pred_check
        %p450 = pneg %p197
      $region38: #{policy_value_forward.1} parent=11 // pred_check_branch
        %452 = sbr.rel (%p450) target = $region40
      $region39: #{policy_value_forward.1} parent=11 // pred_region
        _
      $region40: #{policy_value_forward.1} parent=11 // pred_fallthru
        _
      // Predicated region
      $region41: #{policy_value_forward.1} parent=11 // pred_check
        %p453 = pneg %p218
      $region42: #{policy_value_forward.1} parent=11 // pred_check_branch
        %455 = sbr.rel (%p453) target = $region44
      $region43: #{policy_value_forward.1} parent=11 // pred_region
        _
      $region44: #{policy_value_forward.1} parent=11 // pred_fallthru
        _
      // Predicated region
      $region45: #{policy_value_forward.1} parent=11 // pred_check
        %p456 = pneg %p239
      $region46: #{policy_value_forward.1} parent=11 // pred_check_branch
        %458 = sbr.rel (%p456) target = $region48
      $region47: #{policy_value_forward.1} parent=11 // pred_region
        _
      $region48: #{policy_value_forward.1} parent=11 // pred_fallthru
        _
      // Predicated region
      $region49: #{policy_value_forward.1} parent=11 // pred_check
        %p459 = pneg %p260
      $region50: #{policy_value_forward.1} parent=11 // pred_check_branch
        %461 = sbr.rel (%p459) target = $region52
      $region51: #{policy_value_forward.1} parent=11 // pred_region
        _
      $region52: #{policy_value_forward.1} parent=11 // pred_fallthru
        _
      // Predicated region
      $region53: #{policy_value_forward.1} parent=11 // pred_check
        %p462 = pneg %p281
      $region54: #{policy_value_forward.1} parent=11 // pred_check_branch
        %464 = sbr.rel (%p462) target = $region56
      $region55: #{policy_value_forward.1} parent=11 // pred_region
        _
      $region56: #{policy_value_forward.1} parent=11 // pred_fallthru
        _
      // Predicated region
      $region57: #{policy_value_forward.1} parent=11 // pred_check
        %p465 = pneg %p302
      $region58: #{policy_value_forward.1} parent=11 // pred_check_branch
        %467 = sbr.rel (%p465) target = $region60
      $region59: #{policy_value_forward.1} parent=11 // pred_region
        _
      $region60: #{policy_value_forward.1} parent=11 // pred_fallthru
        _
      // Predicated region
      $region61: #{policy_value_forward.1} parent=11 // pred_check
        %p468 = pneg %p323
      $region62: #{policy_value_forward.1} parent=11 // pred_check_branch
        %470 = sbr.rel (%p468) target = $region64
      $region63: #{policy_value_forward.1} parent=11 // pred_region
        _
      $region64: #{policy_value_forward.1} parent=11 // pred_fallthru
        _
      // Predicated region
      $region65: #{policy_value_forward.1} parent=11 // pred_check
        %p471 = pneg %p344
      $region66: #{policy_value_forward.1} parent=11 // pred_check_branch
        %473 = sbr.rel (%p471) target = $region68
      $region67: #{policy_value_forward.1} parent=11 // pred_region
        _
      $region68: #{policy_value_forward.1} parent=11 // pred_fallthru
        _
      // Predicated region
      $region69: #{policy_value_forward.1} parent=11 // pred_check
        %p474 = pneg %p365
      $region70: #{policy_value_forward.1} parent=11 // pred_check_branch
        %476 = sbr.rel (%p474) target = $region72
      $region71: #{policy_value_forward.1} parent=11 // pred_region
        _
      $region72: #{policy_value_forward.1} parent=11 // pred_fallthru
        _
    $region12: #{policy_value_forward.1} parent=5 // pred_fallthru
      _
    %p477 = scmp.lt.s32.totalorder %s24, 2
    // Predicated region
    $region73: #{policy_value_forward.1} parent=5 // pred_check
      %p478 = pneg %p477
    $region74: #{policy_value_forward.1} parent=5 // pred_check_branch
      %480 = sbr.rel (%p478) target = $region76
    $region75: #{policy_value_forward.1} parent=5 // pred_region
      // Predicated region
      $region77: #{policy_value_forward.1} parent=75 // pred_check
        %p481 = pneg %p44
      $region78: #{policy_value_forward.1} parent=75 // pred_check_branch
        %483 = sbr.rel (%p481) target = $region80
      $region79: #{policy_value_forward.1} parent=75 // pred_region
        %s484 = smul.u32 16, %s24
        %p485 = scmp.lt.s32.totalorder %s484, 31
        %s486 = scalar_select %p485, %s484, 31
        %s487 = smul.addr %s486, 4
        %s488 = scalar_lea.vmem %s0, %s487
        %s489 = smul.u32 16, %s24
      $region80: #{policy_value_forward.1} parent=75 // pred_fallthru
        _
    $region76: #{policy_value_forward.1} parent=5 // pred_fallthru
      _
    %p490 = scmp.le.s32.totalorder 1, %s24
    %p491 = scmp.lt.s32.totalorder %s24, 3
    %p492 = pnand %p490, %p491
    %p493 = pneg %p492
    // Predicated region
    $region81: #{policy_value_forward.1} parent=5 // pred_check
      _
    $region82: #{policy_value_forward.1} parent=5 // pred_check_branch
      %495 = sbr.rel (%p492) target = $region84
    $region83: #{policy_value_forward.1} parent=5 // pred_region
      %s496 = ssub.s32 %s24, 1
      %s497 = smul.u32 16, %s29
      %p498 = scmp.lt.s32.totalorder %s497, 31
      %s499 = scalar_select %p498, %s497, 31
      %s500 = smul.addr %s499, 4
      %s501 = scalar_lea.vmem %s0, %s500
      %p502 = pneg %p50
      %p503 = pneg %p47
      %p504 = pneg %p71
      %p505 = pneg %p68
      %p506 = pneg %p92
      %p507 = pneg %p89
      %p508 = pneg %p113
      %p509 = pneg %p110
      %p510 = pneg %p134
      %p511 = pneg %p131
      %p512 = pneg %p155
      %p513 = pneg %p152
      %p514 = pneg %p176
      %p515 = pneg %p173
      %p516 = pneg %p197
      %p517 = pneg %p194
      %p518 = pneg %p218
      %p519 = pneg %p215
      %p520 = pneg %p239
      %p521 = pneg %p236
      %p522 = pneg %p260
      %p523 = pneg %p257
      %p524 = pneg %p281
      %p525 = pneg %p278
      %p526 = pneg %p302
      %p527 = pneg %p299
      %p528 = pneg %p323
      %p529 = pneg %p320
      %p530 = pneg %p344
      %p531 = pneg %p341
      %p532 = pneg %p365
      %p533 = pneg %p362
      %p534 = pneg %p391
      %p535 = pneg %p388
      %p536 = scmp.lt.s32.totalorder %s29, 1
      %s537 = scalar_select %p536, %s29, 1
      %s538 = smul.addr %s537, 8
      %s539 = scalar_lea.vmem %s16, %s538
      %p540 = pneg %p417
      %p541 = pneg %p414
      %p542 = scmp.lt.s32.totalorder %s29, 1
      %s543 = scalar_select %p542, %s29, 1
      %s544 = smul.addr %s543, 8
      %s545 = scalar_lea.vmem %s17, %s544
      %s546 = smul.u32 16, %s29
      %p547 = scmp.lt.s32.totalorder %s546, 31
      %s548 = scalar_select %p547, %s546, 31
      %s549 = smul.addr %s548, 4
      %s550 = scalar_lea.vmem %s0, %s549
      %s551 = smul.u32 16, %s29
      %p552 = scmp.lt.s32.totalorder %s29, 1
      %s553 = scalar_select %p552, %s29, 1
      %s554 = smul.addr %s553, 8
      %s555 = scalar_lea.vmem %s16, %s554
      %p556 = scmp.lt.s32.totalorder %s29, 1
      %s557 = scalar_select %p556, %s29, 1
      %s558 = smul.addr %s557, 8
      %s559 = scalar_lea.vmem %s17, %s558
      %vm561 = vcmask 261120
      %562 = vst.msk [vmem:[#allocation2] sm:$0xff] %vm561, 0.0
      %563 = vst.msk [vmem:[#allocation2 + $0x8] sm:$0xff] %vm561, 0.0
      %564 = vst.msk [vmem:[#allocation2 + $0x90] sm:$0xff] %vm561, 0.0
      %565 = vst.msk [vmem:[#allocation2 + $0x98] sm:$0xff] %vm561, 0.0
      %v566 = vld [vmem:[%s550] sm:$0xf]
      %v567 = vld [vmem:[%s550 + $0x4] sm:$0xf]
      %v568 = vld [vmem:[%s550 + $0x8] sm:$0xf]
      %v569 = vld [vmem:[%s550 + $0xc] sm:$0xf]
      %v570 = vld [vmem:[%s550 + $0x10] sm:$0xf]
      %v571 = vld [vmem:[%s550 + $0x14] sm:$0xf]
      %v572 = vld [vmem:[%s550 + $0x18] sm:$0xf]
      %v573 = vld [vmem:[%s550 + $0x1c] sm:$0xf]
      %v574 = vld [vmem:[%s550 + $0x20] sm:$0xf]
      %v575 = vld [vmem:[%s550 + $0x24] sm:$0xf]
      %v576 = vld [vmem:[%s550 + $0x28] sm:$0xf]
      %v577 = vld [vmem:[%s550 + $0x2c] sm:$0xf]
      %v578 = vld [vmem:[%s550 + $0x30] sm:$0xf]
      %v579 = vld [vmem:[%s550 + $0x34] sm:$0xf]
      %v580 = vld [vmem:[%s550 + $0x38] sm:$0xf]
      %v581 = vld [vmem:[%s550 + $0x3c] sm:$0xf]
      %v582 = vunpack.c.l.bf16 %v566
      %v583 = vunpack.c.l.bf16 %v567
      %v584 = vunpack.c.l.bf16 %v568
      %v585 = vunpack.c.l.bf16 %v569
      %v586 = vunpack.c.l.bf16 %v570
      %v587 = vunpack.c.l.bf16 %v571
      %v588 = vunpack.c.l.bf16 %v572
      %v589 = vunpack.c.l.bf16 %v573
      %v590 = vunpack.c.l.bf16 %v574
      %v591 = vunpack.c.l.bf16 %v575
      %v592 = vunpack.c.l.bf16 %v576
      %v593 = vunpack.c.l.bf16 %v577
      %v594 = vunpack.c.l.bf16 %v578
      %v595 = vunpack.c.l.bf16 %v579
      %v596 = vunpack.c.l.bf16 %v580
      %v597 = vunpack.c.l.bf16 %v581
      %598 = vst.msk [vmem:[#allocation2 + $0x10] sm:$0xff] %vm561, %v582
      %599 = vst.msk [vmem:[#allocation2 + $0x18] sm:$0xff] %vm561, %v583
      %600 = vst.msk [vmem:[#allocation2 + $0x20] sm:$0xff] %vm561, %v584
      %601 = vst.msk [vmem:[#allocation2 + $0x28] sm:$0xff] %vm561, %v585
      %602 = vst.msk [vmem:[#allocation2 + $0x30] sm:$0xff] %vm561, %v586
      %603 = vst.msk [vmem:[#allocation2 + $0x38] sm:$0xff] %vm561, %v587
      %604 = vst.msk [vmem:[#allocation2 + $0x40] sm:$0xff] %vm561, %v588
      %605 = vst.msk [vmem:[#allocation2 + $0x48] sm:$0xff] %vm561, %v589
      %606 = vst.msk [vmem:[#allocation2 + $0x50] sm:$0xff] %vm561, %v590
      %607 = vst.msk [vmem:[#allocation2 + $0x58] sm:$0xff] %vm561, %v591
      %608 = vst.msk [vmem:[#allocation2 + $0x60] sm:$0xff] %vm561, %v592
      %609 = vst.msk [vmem:[#allocation2 + $0x68] sm:$0xff] %vm561, %v593
      %610 = vst.msk [vmem:[#allocation2 + $0x70] sm:$0xff] %vm561, %v594
      %611 = vst.msk [vmem:[#allocation2 + $0x78] sm:$0xff] %vm561, %v595
      %612 = vst.msk [vmem:[#allocation2 + $0x80] sm:$0xff] %vm561, %v596
      %613 = vst.msk [vmem:[#allocation2 + $0x88] sm:$0xff] %vm561, %v597
      %v614 = vld [vmem:[%s1] sm:$0xff]
      %v615 = vld [vmem:[%s1 + $0x8] sm:$0xff]
      %v616 = vld [vmem:[%s1 + $0x10] sm:$0xff]
      %v617 = vld [vmem:[%s1 + $0x18] sm:$0xff]
      %v618 = vld [vmem:[%s1 + $0x20] sm:$0xff]
      %v619 = vld [vmem:[%s1 + $0x28] sm:$0xff]
      %v620 = vld [vmem:[%s1 + $0x30] sm:$0xff]
      %v621 = vld [vmem:[%s1 + $0x38] sm:$0xff]
      %v622 = vld [vmem:[%s1 + $0x40] sm:$0xff]
      %v623 = vld [vmem:[%s1 + $0x48] sm:$0xff]
      %v624 = vld [vmem:[%s1 + $0x50] sm:$0xff]
      %v625 = vld [vmem:[%s1 + $0x58] sm:$0xff]
      %v626 = vld [vmem:[%s1 + $0x60] sm:$0xff]
      %v627 = vld [vmem:[%s1 + $0x68] sm:$0xff]
      %v628 = vld [vmem:[%s1 + $0x70] sm:$0xff]
      %v629 = vld [vmem:[%s1 + $0x78] sm:$0xff]
      %631 = vset.pattern.permute.xlu0 0
      %632 = vperm.xlu0 %631, %v614
      %v633 = vpop.permute.xlu0 %632
      %636 = vset.pattern.permute.xlu0 0
      %637 = vperm.xlu0 %636, %v615
      %v638 = vpop.permute.xlu0 %637
      %641 = vset.pattern.permute.xlu0 0
      %642 = vperm.xlu0 %641, %v616
      %v643 = vpop.permute.xlu0 %642
      %646 = vset.pattern.permute.xlu0 0
      %647 = vperm.xlu0 %646, %v617
      %v648 = vpop.permute.xlu0 %647
      %651 = vset.pattern.permute.xlu0 0
      %652 = vperm.xlu0 %651, %v618
      %v653 = vpop.permute.xlu0 %652
      %656 = vset.pattern.permute.xlu0 0
      %657 = vperm.xlu0 %656, %v619
      %v658 = vpop.permute.xlu0 %657
      %661 = vset.pattern.permute.xlu0 0
      %662 = vperm.xlu0 %661, %v620
      %v663 = vpop.permute.xlu0 %662
      %666 = vset.pattern.permute.xlu0 0
      %667 = vperm.xlu0 %666, %v621
      %v668 = vpop.permute.xlu0 %667
      %671 = vset.pattern.permute.xlu0 0
      %672 = vperm.xlu0 %671, %v622
      %v673 = vpop.permute.xlu0 %672
      %676 = vset.pattern.permute.xlu0 0
      %677 = vperm.xlu0 %676, %v623
      %v678 = vpop.permute.xlu0 %677
      %681 = vset.pattern.permute.xlu0 0
      %682 = vperm.xlu0 %681, %v624
      %v683 = vpop.permute.xlu0 %682
      %686 = vset.pattern.permute.xlu0 0
      %687 = vperm.xlu0 %686, %v625
      %v688 = vpop.permute.xlu0 %687
      %691 = vset.pattern.permute.xlu0 0
      %692 = vperm.xlu0 %691, %v626
      %v693 = vpop.permute.xlu0 %692
      %696 = vset.pattern.permute.xlu0 0
      %697 = vperm.xlu0 %696, %v627
      %v698 = vpop.permute.xlu0 %697
      %701 = vset.pattern.permute.xlu0 0
      %702 = vperm.xlu0 %701, %v628
      %v703 = vpop.permute.xlu0 %702
      %706 = vset.pattern.permute.xlu0 0
      %707 = vperm.xlu0 %706, %v629
      %v708 = vpop.permute.xlu0 %707
      %v710 = vld [vmem:[%s2] sm:$0xf]
      %v711 = vld [vmem:[%s2 + $0x4] sm:$0xf]
      %v712 = vld [vmem:[%s2 + $0x8] sm:$0xf]
      %v713 = vld [vmem:[%s2 + $0xc] sm:$0xf]
      %v714 = vld [vmem:[%s2 + $0x10] sm:$0xf]
      %v715 = vld [vmem:[%s2 + $0x14] sm:$0xf]
      %v716 = vld [vmem:[%s2 + $0x18] sm:$0xf]
      %v717 = vld [vmem:[%s2 + $0x1c] sm:$0xf]
      %v718 = vld [vmem:[%s2 + $0x20] sm:$0xf]
      %v719 = vld [vmem:[%s2 + $0x24] sm:$0xf]
      %v720 = vld [vmem:[%s2 + $0x28] sm:$0xf]
      %v721 = vld [vmem:[%s2 + $0x2c] sm:$0xf]
      %v722 = vld [vmem:[%s2 + $0x30] sm:$0xf]
      %v723 = vld [vmem:[%s2 + $0x34] sm:$0xf]
      %v724 = vld [vmem:[%s2 + $0x38] sm:$0xf]
      %v725 = vld [vmem:[%s2 + $0x3c] sm:$0xf]
      %v726 = vld [vmem:[%s2 + $0x40] sm:$0xf]
      %v727 = vld [vmem:[%s2 + $0x44] sm:$0xf]
      %v728 = vld [vmem:[%s2 + $0x48] sm:$0xf]
      %v729 = vld [vmem:[%s2 + $0x4c] sm:$0xf]
      %v730 = vld [vmem:[%s2 + $0x50] sm:$0xf]
      %v731 = vld [vmem:[%s2 + $0x54] sm:$0xf]
      %v732 = vld [vmem:[%s2 + $0x58] sm:$0xf]
      %v733 = vld [vmem:[%s2 + $0x5c] sm:$0xf]
      %v734 = vld [vmem:[%s2 + $0x60] sm:$0xf]
      %v735 = vld [vmem:[%s2 + $0x64] sm:$0xf]
      %v736 = vld [vmem:[%s2 + $0x68] sm:$0xf]
      %v737 = vld [vmem:[%s2 + $0x6c] sm:$0xf]
      %v738 = vld [vmem:[%s2 + $0x70] sm:$0xf]
      %v739 = vld [vmem:[%s2 + $0x74] sm:$0xf]
      %v740 = vld [vmem:[%s2 + $0x78] sm:$0xf]
      %v741 = vld [vmem:[%s2 + $0x7c] sm:$0xf]
      %v742 = vld [vmem:[%s2 + $0x80] sm:$0xf]
      %v743 = vld [vmem:[%s2 + $0x84] sm:$0xf]
      %v744 = vld [vmem:[%s2 + $0x88] sm:$0xf]
      %v745 = vld [vmem:[%s2 + $0x8c] sm:$0xf]
      %v746 = vld [vmem:[%s3] sm:$0x1]
      %v747 = vld [vmem:[#allocation2 + $0x4] sm:$0xff]
      %v748 = vld [vmem:[#allocation2 + $0xc] sm:$0xff]
      %v749 = vld [vmem:[#allocation2 + $0x14] sm:$0xff]
      %v750 = vld [vmem:[#allocation2 + $0x1c] sm:$0xff]
      %v751 = vld [vmem:[#allocation2 + $0x24] sm:$0xff]
      %v752 = vld [vmem:[#allocation2 + $0x2c] sm:$0xff]
      %v753 = vld [vmem:[#allocation2 + $0x34] sm:$0xff]
      %v754 = vld [vmem:[#allocation2 + $0x3c] sm:$0xff]
      %v755 = vld [vmem:[#allocation2 + $0x44] sm:$0xff]
      %v756 = vld [vmem:[#allocation2 + $0x4c] sm:$0xff]
      %v757 = vld [vmem:[#allocation2 + $0x54] sm:$0xff]
      %v758 = vld [vmem:[#allocation2 + $0x5c] sm:$0xff]
      %v759 = vld [vmem:[#allocation2 + $0x64] sm:$0xff]
      %v760 = vld [vmem:[#allocation2 + $0x6c] sm:$0xff]
      %v761 = vld [vmem:[#allocation2 + $0x74] sm:$0xff]
      %v762 = vld [vmem:[#allocation2 + $0x7c] sm:$0xff]
      %v763 = vpack.c.bf16 %v747, %v747
      %v764 = vpack.c.bf16 %v748, %v748
      %v765 = vpack.c.bf16 %v749, %v749
      %v766 = vpack.c.bf16 %v750, %v750
      %v767 = vpack.c.bf16 %v751, %v751
      %v768 = vpack.c.bf16 %v752, %v752
      %v769 = vpack.c.bf16 %v753, %v753
      %v770 = vpack.c.bf16 %v754, %v754
      %v771 = vpack.c.bf16 %v755, %v755
      %v772 = vpack.c.bf16 %v756, %v756
      %v773 = vpack.c.bf16 %v757, %v757
      %v774 = vpack.c.bf16 %v758, %v758
      %v775 = vpack.c.bf16 %v759, %v759
      %v776 = vpack.c.bf16 %v760, %v760
      %v777 = vpack.c.bf16 %v761, %v761
      %v778 = vpack.c.bf16 %v762, %v762
      %vm779 = vcmask 257024
      %780 = vst.msk [vmem:[#allocation3] sm:$0xf] %vm779, %v763
      %781 = vst.msk [vmem:[#allocation3 + $0xc] sm:$0xf] %vm779, %v764
      %782 = vst.msk [vmem:[#allocation3 + $0x18] sm:$0xf] %vm779, %v765
      %783 = vst.msk [vmem:[#allocation3 + $0x24] sm:$0xf] %vm779, %v766
      %784 = vst.msk [vmem:[#allocation3 + $0x30] sm:$0xf] %vm779, %v767
      %785 = vst.msk [vmem:[#allocation3 + $0x3c] sm:$0xf] %vm779, %v768
      %786 = vst.msk [vmem:[#allocation3 + $0x48] sm:$0xf] %vm779, %v769
      %787 = vst.msk [vmem:[#allocation3 + $0x54] sm:$0xf] %vm779, %v770
      %788 = vst.msk [vmem:[#allocation3 + $0x60] sm:$0xf] %vm779, %v771
      %789 = vst.msk [vmem:[#allocation3 + $0x6c] sm:$0xf] %vm779, %v772
      %790 = vst.msk [vmem:[#allocation3 + $0x78] sm:$0xf] %vm779, %v773
      %791 = vst.msk [vmem:[#allocation3 + $0x84] sm:$0xf] %vm779, %v774
      %792 = vst.msk [vmem:[#allocation3 + $0x90] sm:$0xf] %vm779, %v775
      %793 = vst.msk [vmem:[#allocation3 + $0x9c] sm:$0xf] %vm779, %v776
      %794 = vst.msk [vmem:[#allocation3 + $0xa8] sm:$0xf] %vm779, %v777
      %795 = vst.msk [vmem:[#allocation3 + $0xb4] sm:$0xf] %vm779, %v778
      %v796 = vld [vmem:[#allocation2 + $0x5] sm:$0xff]
      %v797 = vld [vmem:[#allocation2 + $0xd] sm:$0xff]
      %v798 = vld [vmem:[#allocation2 + $0x15] sm:$0xff]
      %v799 = vld [vmem:[#allocation2 + $0x1d] sm:$0xff]
      %v800 = vld [vmem:[#allocation2 + $0x25] sm:$0xff]
      %v801 = vld [vmem:[#allocation2 + $0x2d] sm:$0xff]
      %v802 = vld [vmem:[#allocation2 + $0x35] sm:$0xff]
      %v803 = vld [vmem:[#allocation2 + $0x3d] sm:$0xff]
      %v804 = vld [vmem:[#allocation2 + $0x45] sm:$0xff]
      %v805 = vld [vmem:[#allocation2 + $0x4d] sm:$0xff]
      %v806 = vld [vmem:[#allocation2 + $0x55] sm:$0xff]
      %v807 = vld [vmem:[#allocation2 + $0x5d] sm:$0xff]
      %v808 = vld [vmem:[#allocation2 + $0x65] sm:$0xff]
      %v809 = vld [vmem:[#allocation2 + $0x6d] sm:$0xff]
      %v810 = vld [vmem:[#allocation2 + $0x75] sm:$0xff]
      %v811 = vld [vmem:[#allocation2 + $0x7d] sm:$0xff]
      %v812 = vpack.c.bf16 %v796, %v796
      %v813 = vpack.c.bf16 %v797, %v797
      %v814 = vpack.c.bf16 %v798, %v798
      %v815 = vpack.c.bf16 %v799, %v799
      %v816 = vpack.c.bf16 %v800, %v800
      %v817 = vpack.c.bf16 %v801, %v801
      %v818 = vpack.c.bf16 %v802, %v802
      %v819 = vpack.c.bf16 %v803, %v803
      %v820 = vpack.c.bf16 %v804, %v804
      %v821 = vpack.c.bf16 %v805, %v805
      %v822 = vpack.c.bf16 %v806, %v806
      %v823 = vpack.c.bf16 %v807, %v807
      %v824 = vpack.c.bf16 %v808, %v808
      %v825 = vpack.c.bf16 %v809, %v809
      %v826 = vpack.c.bf16 %v810, %v810
      %v827 = vpack.c.bf16 %v811, %v811
      %844 = vrot.lane.b32.xlu0 %v812, 32
      %v845 = vpop.permute.xlu0 %844
      %846 = vrot.lane.b32.xlu0 %v813, 32
      %v847 = vpop.permute.xlu0 %846
      %848 = vrot.lane.b32.xlu0 %v814, 32
      %v849 = vpop.permute.xlu0 %848
      %850 = vrot.lane.b32.xlu0 %v815, 32
      %v851 = vpop.permute.xlu0 %850
      %852 = vrot.lane.b32.xlu0 %v816, 32
      %v853 = vpop.permute.xlu0 %852
      %854 = vrot.lane.b32.xlu0 %v817, 32
      %v855 = vpop.permute.xlu0 %854
      %856 = vrot.lane.b32.xlu0 %v818, 32
      %v857 = vpop.permute.xlu0 %856
      %858 = vrot.lane.b32.xlu0 %v819, 32
      %v859 = vpop.permute.xlu0 %858
      %860 = vrot.lane.b32.xlu0 %v820, 32
      %v861 = vpop.permute.xlu0 %860
      %862 = vrot.lane.b32.xlu0 %v821, 32
      %v863 = vpop.permute.xlu0 %862
      %864 = vrot.lane.b32.xlu0 %v822, 32
      %v865 = vpop.permute.xlu0 %864
      %866 = vrot.lane.b32.xlu0 %v823, 32
      %v867 = vpop.permute.xlu0 %866
      %868 = vrot.lane.b32.xlu0 %v824, 32
      %v869 = vpop.permute.xlu0 %868
      %870 = vrot.lane.b32.xlu0 %v825, 32
      %v871 = vpop.permute.xlu0 %870
      %872 = vrot.lane.b32.xlu0 %v826, 32
      %v873 = vpop.permute.xlu0 %872
      %874 = vrot.lane.b32.xlu0 %v827, 32
      %v875 = vpop.permute.xlu0 %874
      %vm892 = vcmask 519424
      %893 = vst.msk [vmem:[#allocation3] sm:$0xf] %vm892, %v845
      %894 = vst.msk [vmem:[#allocation3 + $0xc] sm:$0xf] %vm892, %v847
      %895 = vst.msk [vmem:[#allocation3 + $0x18] sm:$0xf] %vm892, %v849
      %896 = vst.msk [vmem:[#allocation3 + $0x24] sm:$0xf] %vm892, %v851
      %897 = vst.msk [vmem:[#allocation3 + $0x30] sm:$0xf] %vm892, %v853
      %898 = vst.msk [vmem:[#allocation3 + $0x3c] sm:$0xf] %vm892, %v855
      %899 = vst.msk [vmem:[#allocation3 + $0x48] sm:$0xf] %vm892, %v857
      %900 = vst.msk [vmem:[#allocation3 + $0x54] sm:$0xf] %vm892, %v859
      %901 = vst.msk [vmem:[#allocation3 + $0x60] sm:$0xf] %vm892, %v861
      %902 = vst.msk [vmem:[#allocation3 + $0x6c] sm:$0xf] %vm892, %v863
      %903 = vst.msk [vmem:[#allocation3 + $0x78] sm:$0xf] %vm892, %v865
      %904 = vst.msk [vmem:[#allocation3 + $0x84] sm:$0xf] %vm892, %v867
      %905 = vst.msk [vmem:[#allocation3 + $0x90] sm:$0xf] %vm892, %v869
      %906 = vst.msk [vmem:[#allocation3 + $0x9c] sm:$0xf] %vm892, %v871
      %907 = vst.msk [vmem:[#allocation3 + $0xa8] sm:$0xf] %vm892, %v873
      %908 = vst.msk [vmem:[#allocation3 + $0xb4] sm:$0xf] %vm892, %v875
      %v909 = vld [vmem:[#allocation2 + $0x6] sm:$0xff]
      %v910 = vld [vmem:[#allocation2 + $0xe] sm:$0xff]
      %v911 = vld [vmem:[#allocation2 + $0x16] sm:$0xff]
      %v912 = vld [vmem:[#allocation2 + $0x1e] sm:$0xff]
      %v913 = vld [vmem:[#allocation2 + $0x26] sm:$0xff]
      %v914 = vld [vmem:[#allocation2 + $0x2e] sm:$0xff]
      %v915 = vld [vmem:[#allocation2 + $0x36] sm:$0xff]
      %v916 = vld [vmem:[#allocation2 + $0x3e] sm:$0xff]
      %v917 = vld [vmem:[#allocation2 + $0x46] sm:$0xff]
      %v918 = vld [vmem:[#allocation2 + $0x4e] sm:$0xff]
      %v919 = vld [vmem:[#allocation2 + $0x56] sm:$0xff]
      %v920 = vld [vmem:[#allocation2 + $0x5e] sm:$0xff]
      %v921 = vld [vmem:[#allocation2 + $0x66] sm:$0xff]
      %v922 = vld [vmem:[#allocation2 + $0x6e] sm:$0xff]
      %v923 = vld [vmem:[#allocation2 + $0x76] sm:$0xff]
      %v924 = vld [vmem:[#allocation2 + $0x7e] sm:$0xff]
      %v925 = vpack.c.bf16 %v909, %v909
      %v926 = vpack.c.bf16 %v910, %v910
      %v927 = vpack.c.bf16 %v911, %v911
      %v928 = vpack.c.bf16 %v912, %v912
      %v929 = vpack.c.bf16 %v913, %v913
      %v930 = vpack.c.bf16 %v914, %v914
      %v931 = vpack.c.bf16 %v915, %v915
      %v932 = vpack.c.bf16 %v916, %v916
      %v933 = vpack.c.bf16 %v917, %v917
      %v934 = vpack.c.bf16 %v918, %v918
      %v935 = vpack.c.bf16 %v919, %v919
      %v936 = vpack.c.bf16 %v920, %v920
      %v937 = vpack.c.bf16 %v921, %v921
      %v938 = vpack.c.bf16 %v922, %v922
      %v939 = vpack.c.bf16 %v923, %v923
      %v940 = vpack.c.bf16 %v924, %v924
      %957 = vrot.lane.b32.xlu0 %v925, 64
      %v958 = vpop.permute.xlu0 %957
      %959 = vrot.lane.b32.xlu0 %v926, 64
      %v960 = vpop.permute.xlu0 %959
      %961 = vrot.lane.b32.xlu0 %v927, 64
      %v962 = vpop.permute.xlu0 %961
      %963 = vrot.lane.b32.xlu0 %v928, 64
      %v964 = vpop.permute.xlu0 %963
      %965 = vrot.lane.b32.xlu0 %v929, 64
      %v966 = vpop.permute.xlu0 %965
      %967 = vrot.lane.b32.xlu0 %v930, 64
      %v968 = vpop.permute.xlu0 %967
      %969 = vrot.lane.b32.xlu0 %v931, 64
      %v970 = vpop.permute.xlu0 %969
      %971 = vrot.lane.b32.xlu0 %v932, 64
      %v972 = vpop.permute.xlu0 %971
      %973 = vrot.lane.b32.xlu0 %v933, 64
      %v974 = vpop.permute.xlu0 %973
      %975 = vrot.lane.b32.xlu0 %v934, 64
      %v976 = vpop.permute.xlu0 %975
      %977 = vrot.lane.b32.xlu0 %v935, 64
      %v978 = vpop.permute.xlu0 %977
      %979 = vrot.lane.b32.xlu0 %v936, 64
      %v980 = vpop.permute.xlu0 %979
      %981 = vrot.lane.b32.xlu0 %v937, 64
      %v982 = vpop.permute.xlu0 %981
      %983 = vrot.lane.b32.xlu0 %v938, 64
      %v984 = vpop.permute.xlu0 %983
      %985 = vrot.lane.b32.xlu0 %v939, 64
      %v986 = vpop.permute.xlu0 %985
      %987 = vrot.lane.b32.xlu0 %v940, 64
      %v988 = vpop.permute.xlu0 %987
      %vm1005 = vcmask 781824
      %1006 = vst.msk [vmem:[#allocation3] sm:$0xf] %vm1005, %v958
      %1007 = vst.msk [vmem:[#allocation3 + $0xc] sm:$0xf] %vm1005, %v960
      %1008 = vst.msk [vmem:[#allocation3 + $0x18] sm:$0xf] %vm1005, %v962
      %1009 = vst.msk [vmem:[#allocation3 + $0x24] sm:$0xf] %vm1005, %v964
      %1010 = vst.msk [vmem:[#allocation3 + $0x30] sm:$0xf] %vm1005, %v966
      %1011 = vst.msk [vmem:[#allocation3 + $0x3c] sm:$0xf] %vm1005, %v968
      %1012 = vst.msk [vmem:[#allocation3 + $0x48] sm:$0xf] %vm1005, %v970
      %1013 = vst.msk [vmem:[#allocation3 + $0x54] sm:$0xf] %vm1005, %v972
      %1014 = vst.msk [vmem:[#allocation3 + $0x60] sm:$0xf] %vm1005, %v974
      %1015 = vst.msk [vmem:[#allocation3 + $0x6c] sm:$0xf] %vm1005, %v976
      %1016 = vst.msk [vmem:[#allocation3 + $0x78] sm:$0xf] %vm1005, %v978
      %1017 = vst.msk [vmem:[#allocation3 + $0x84] sm:$0xf] %vm1005, %v980
      %1018 = vst.msk [vmem:[#allocation3 + $0x90] sm:$0xf] %vm1005, %v982
      %1019 = vst.msk [vmem:[#allocation3 + $0x9c] sm:$0xf] %vm1005, %v984
      %1020 = vst.msk [vmem:[#allocation3 + $0xa8] sm:$0xf] %vm1005, %v986
      %1021 = vst.msk [vmem:[#allocation3 + $0xb4] sm:$0xf] %vm1005, %v988
      %v1022 = vld [vmem:[#allocation2 + $0xf] sm:$0xff]
      %v1023 = vld [vmem:[#allocation2 + $0x17] sm:$0xff]
      %v1024 = vld [vmem:[#allocation2 + $0x1f] sm:$0xff]
      %v1025 = vld [vmem:[#allocation2 + $0x27] sm:$0xff]
      %v1026 = vld [vmem:[#allocation2 + $0x2f] sm:$0xff]
      %v1027 = vld [vmem:[#allocation2 + $0x37] sm:$0xff]
      %v1028 = vld [vmem:[#allocation2 + $0x3f] sm:$0xff]
      %v1029 = vld [vmem:[#allocation2 + $0x47] sm:$0xff]
      %v1030 = vld [vmem:[#allocation2 + $0x4f] sm:$0xff]
      %v1031 = vld [vmem:[#allocation2 + $0x57] sm:$0xff]
      %v1032 = vld [vmem:[#allocation2 + $0x5f] sm:$0xff]
      %v1033 = vld [vmem:[#allocation2 + $0x67] sm:$0xff]
      %v1034 = vld [vmem:[#allocation2 + $0x6f] sm:$0xff]
      %v1035 = vld [vmem:[#allocation2 + $0x77] sm:$0xff]
      %v1036 = vld [vmem:[#allocation2 + $0x7f] sm:$0xff]
      %v1037 = vld [vmem:[#allocation2 + $0x87] sm:$0xff]
      %v1038 = vpack.c.bf16 %v1022, %v1022
      %v1039 = vpack.c.bf16 %v1023, %v1023
      %v1040 = vpack.c.bf16 %v1024, %v1024
      %v1041 = vpack.c.bf16 %v1025, %v1025
      %v1042 = vpack.c.bf16 %v1026, %v1026
      %v1043 = vpack.c.bf16 %v1027, %v1027
      %v1044 = vpack.c.bf16 %v1028, %v1028
      %v1045 = vpack.c.bf16 %v1029, %v1029
      %v1046 = vpack.c.bf16 %v1030, %v1030
      %v1047 = vpack.c.bf16 %v1031, %v1031
      %v1048 = vpack.c.bf16 %v1032, %v1032
      %v1049 = vpack.c.bf16 %v1033, %v1033
      %v1050 = vpack.c.bf16 %v1034, %v1034
      %v1051 = vpack.c.bf16 %v1035, %v1035
      %v1052 = vpack.c.bf16 %v1036, %v1036
      %v1053 = vpack.c.bf16 %v1037, %v1037
      %1070 = vrot.lane.b32.xlu0 %v1038, 96
      %v1071 = vpop.permute.xlu0 %1070
      %1072 = vrot.lane.b32.xlu0 %v1039, 96
      %v1073 = vpop.permute.xlu0 %1072
      %1074 = vrot.lane.b32.xlu0 %v1040, 96
      %v1075 = vpop.permute.xlu0 %1074
      %1076 = vrot.lane.b32.xlu0 %v1041, 96
      %v1077 = vpop.permute.xlu0 %1076
      %1078 = vrot.lane.b32.xlu0 %v1042, 96
      %v1079 = vpop.permute.xlu0 %1078
      %1080 = vrot.lane.b32.xlu0 %v1043, 96
      %v1081 = vpop.permute.xlu0 %1080
      %1082 = vrot.lane.b32.xlu0 %v1044, 96
      %v1083 = vpop.permute.xlu0 %1082
      %1084 = vrot.lane.b32.xlu0 %v1045, 96
      %v1085 = vpop.permute.xlu0 %1084
      %1086 = vrot.lane.b32.xlu0 %v1046, 96
      %v1087 = vpop.permute.xlu0 %1086
      %1088 = vrot.lane.b32.xlu0 %v1047, 96
      %v1089 = vpop.permute.xlu0 %1088
      %1090 = vrot.lane.b32.xlu0 %v1048, 96
      %v1091 = vpop.permute.xlu0 %1090
      %1092 = vrot.lane.b32.xlu0 %v1049, 96
      %v1093 = vpop.permute.xlu0 %1092
      %1094 = vrot.lane.b32.xlu0 %v1050, 96
      %v1095 = vpop.permute.xlu0 %1094
      %1096 = vrot.lane.b32.xlu0 %v1051, 96
      %v1097 = vpop.permute.xlu0 %1096
      %1098 = vrot.lane.b32.xlu0 %v1052, 96
      %v1099 = vpop.permute.xlu0 %1098
      %1100 = vrot.lane.b32.xlu0 %v1053, 96
      %v1101 = vpop.permute.xlu0 %1100
      %vm1118 = vcmask 1044224
      %1119 = vst.msk [vmem:[#allocation3] sm:$0xf] %vm1118, %v1071
      %1120 = vst.msk [vmem:[#allocation3 + $0xc] sm:$0xf] %vm1118, %v1073
      %1121 = vst.msk [vmem:[#allocation3 + $0x18] sm:$0xf] %vm1118, %v1075
      %1122 = vst.msk [vmem:[#allocation3 + $0x24] sm:$0xf] %vm1118, %v1077
      %1123 = vst.msk [vmem:[#allocation3 + $0x30] sm:$0xf] %vm1118, %v1079
      %1124 = vst.msk [vmem:[#allocation3 + $0x3c] sm:$0xf] %vm1118, %v1081
      %1125 = vst.msk [vmem:[#allocation3 + $0x48] sm:$0xf] %vm1118, %v1083
      %1126 = vst.msk [vmem:[#allocation3 + $0x54] sm:$0xf] %vm1118, %v1085
      %1127 = vst.msk [vmem:[#allocation3 + $0x60] sm:$0xf] %vm1118, %v1087
      %1128 = vst.msk [vmem:[#allocation3 + $0x6c] sm:$0xf] %vm1118, %v1089
      %1129 = vst.msk [vmem:[#allocation3 + $0x78] sm:$0xf] %vm1118, %v1091
      %1130 = vst.msk [vmem:[#allocation3 + $0x84] sm:$0xf] %vm1118, %v1093
      %1131 = vst.msk [vmem:[#allocation3 + $0x90] sm:$0xf] %vm1118, %v1095
      %1132 = vst.msk [vmem:[#allocation3 + $0x9c] sm:$0xf] %vm1118, %v1097
      %1133 = vst.msk [vmem:[#allocation3 + $0xa8] sm:$0xf] %vm1118, %v1099
      %1134 = vst.msk [vmem:[#allocation3 + $0xb4] sm:$0xf] %vm1118, %v1101
      %v1135 = vld [vmem:[#allocation2 + $0x10] sm:$0xff]
      %v1136 = vld [vmem:[#allocation2 + $0x18] sm:$0xff]
      %v1137 = vld [vmem:[#allocation2 + $0x20] sm:$0xff]
      %v1138 = vld [vmem:[#allocation2 + $0x28] sm:$0xff]
      %v1139 = vld [vmem:[#allocation2 + $0x30] sm:$0xff]
      %v1140 = vld [vmem:[#allocation2 + $0x38] sm:$0xff]
      %v1141 = vld [vmem:[#allocation2 + $0x40] sm:$0xff]
      %v1142 = vld [vmem:[#allocation2 + $0x48] sm:$0xff]
      %v1143 = vld [vmem:[#allocation2 + $0x50] sm:$0xff]
      %v1144 = vld [vmem:[#allocation2 + $0x58] sm:$0xff]
      %v1145 = vld [vmem:[#allocation2 + $0x60] sm:$0xff]
      %v1146 = vld [vmem:[#allocation2 + $0x68] sm:$0xff]
      %v1147 = vld [vmem:[#allocation2 + $0x70] sm:$0xff]
      %v1148 = vld [vmem:[#allocation2 + $0x78] sm:$0xff]
      %v1149 = vld [vmem:[#allocation2 + $0x80] sm:$0xff]
      %v1150 = vld [vmem:[#allocation2 + $0x88] sm:$0xff]
      %v1151 = vpack.c.bf16 %v1135, %v1135
      %v1152 = vpack.c.bf16 %v1136, %v1136
      %v1153 = vpack.c.bf16 %v1137, %v1137
      %v1154 = vpack.c.bf16 %v1138, %v1138
      %v1155 = vpack.c.bf16 %v1139, %v1139
      %v1156 = vpack.c.bf16 %v1140, %v1140
      %v1157 = vpack.c.bf16 %v1141, %v1141
      %v1158 = vpack.c.bf16 %v1142, %v1142
      %v1159 = vpack.c.bf16 %v1143, %v1143
      %v1160 = vpack.c.bf16 %v1144, %v1144
      %v1161 = vpack.c.bf16 %v1145, %v1145
      %v1162 = vpack.c.bf16 %v1146, %v1146
      %v1163 = vpack.c.bf16 %v1147, %v1147
      %v1164 = vpack.c.bf16 %v1148, %v1148
      %v1165 = vpack.c.bf16 %v1149, %v1149
      %v1166 = vpack.c.bf16 %v1150, %v1150
      %1167 = vst.msk [vmem:[#allocation3 + $0x4] sm:$0xf] %vm779, %v1151
      %1168 = vst.msk [vmem:[#allocation3 + $0x10] sm:$0xf] %vm779, %v1152
      %1169 = vst.msk [vmem:[#allocation3 + $0x1c] sm:$0xf] %vm779, %v1153
      %1170 = vst.msk [vmem:[#allocation3 + $0x28] sm:$0xf] %vm779, %v1154
      %1171 = vst.msk [vmem:[#allocation3 + $0x34] sm:$0xf] %vm779, %v1155
      %1172 = vst.msk [vmem:[#allocation3 + $0x40] sm:$0xf] %vm779, %v1156
      %1173 = vst.msk [vmem:[#allocation3 + $0x4c] sm:$0xf] %vm779, %v1157
      %1174 = vst.msk [vmem:[#allocation3 + $0x58] sm:$0xf] %vm779, %v1158
      %1175 = vst.msk [vmem:[#allocation3 + $0x64] sm:$0xf] %vm779, %v1159
      %1176 = vst.msk [vmem:[#allocation3 + $0x70] sm:$0xf] %vm779, %v1160
      %1177 = vst.msk [vmem:[#allocation3 + $0x7c] sm:$0xf] %vm779, %v1161
      %1178 = vst.msk [vmem:[#allocation3 + $0x88] sm:$0xf] %vm779, %v1162
      %1179 = vst.msk [vmem:[#allocation3 + $0x94] sm:$0xf] %vm779, %v1163
      %1180 = vst.msk [vmem:[#allocation3 + $0xa0] sm:$0xf] %vm779, %v1164
      %1181 = vst.msk [vmem:[#allocation3 + $0xac] sm:$0xf] %vm779, %v1165
      %1182 = vst.msk [vmem:[#allocation3 + $0xb8] sm:$0xf] %vm779, %v1166
      %v1183 = vld [vmem:[#allocation2 + $0x11] sm:$0xff]
      %v1184 = vld [vmem:[#allocation2 + $0x19] sm:$0xff]
      %v1185 = vld [vmem:[#allocation2 + $0x21] sm:$0xff]
      %v1186 = vld [vmem:[#allocation2 + $0x29] sm:$0xff]
      %v1187 = vld [vmem:[#allocation2 + $0x31] sm:$0xff]
      %v1188 = vld [vmem:[#allocation2 + $0x39] sm:$0xff]
      %v1189 = vld [vmem:[#allocation2 + $0x41] sm:$0xff]
      %v1190 = vld [vmem:[#allocation2 + $0x49] sm:$0xff]
      %v1191 = vld [vmem:[#allocation2 + $0x51] sm:$0xff]
      %v1192 = vld [vmem:[#allocation2 + $0x59] sm:$0xff]
      %v1193 = vld [vmem:[#allocation2 + $0x61] sm:$0xff]
      %v1194 = vld [vmem:[#allocation2 + $0x69] sm:$0xff]
      %v1195 = vld [vmem:[#allocation2 + $0x71] sm:$0xff]
      %v1196 = vld [vmem:[#allocation2 + $0x79] sm:$0xff]
      %v1197 = vld [vmem:[#allocation2 + $0x81] sm:$0xff]
      %v1198 = vld [vmem:[#allocation2 + $0x89] sm:$0xff]
      %v1199 = vpack.c.bf16 %v1183, %v1183
      %v1200 = vpack.c.bf16 %v1184, %v1184
      %v1201 = vpack.c.bf16 %v1185, %v1185
      %v1202 = vpack.c.bf16 %v1186, %v1186
      %v1203 = vpack.c.bf16 %v1187, %v1187
      %v1204 = vpack.c.bf16 %v1188, %v1188
      %v1205 = vpack.c.bf16 %v1189, %v1189
      %v1206 = vpack.c.bf16 %v1190, %v1190
      %v1207 = vpack.c.bf16 %v1191, %v1191
      %v1208 = vpack.c.bf16 %v1192, %v1192
      %v1209 = vpack.c.bf16 %v1193, %v1193
      %v1210 = vpack.c.bf16 %v1194, %v1194
      %v1211 = vpack.c.bf16 %v1195, %v1195
      %v1212 = vpack.c.bf16 %v1196, %v1196
      %v1213 = vpack.c.bf16 %v1197, %v1197
      %v1214 = vpack.c.bf16 %v1198, %v1198
      %1231 = vrot.lane.b32.xlu0 %v1199, 32
      %v1232 = vpop.permute.xlu0 %1231
      %1233 = vrot.lane.b32.xlu0 %v1200, 32
      %v1234 = vpop.permute.xlu0 %1233
      %1235 = vrot.lane.b32.xlu0 %v1201, 32
      %v1236 = vpop.permute.xlu0 %1235
      %1237 = vrot.lane.b32.xlu0 %v1202, 32
      %v1238 = vpop.permute.xlu0 %1237
      %1239 = vrot.lane.b32.xlu0 %v1203, 32
      %v1240 = vpop.permute.xlu0 %1239
      %1241 = vrot.lane.b32.xlu0 %v1204, 32
      %v1242 = vpop.permute.xlu0 %1241
      %1243 = vrot.lane.b32.xlu0 %v1205, 32
      %v1244 = vpop.permute.xlu0 %1243
      %1245 = vrot.lane.b32.xlu0 %v1206, 32
      %v1246 = vpop.permute.xlu0 %1245
      %1247 = vrot.lane.b32.xlu0 %v1207, 32
      %v1248 = vpop.permute.xlu0 %1247
      %1249 = vrot.lane.b32.xlu0 %v1208, 32
      %v1250 = vpop.permute.xlu0 %1249
      %1251 = vrot.lane.b32.xlu0 %v1209, 32
      %v1252 = vpop.permute.xlu0 %1251
      %1253 = vrot.lane.b32.xlu0 %v1210, 32
      %v1254 = vpop.permute.xlu0 %1253
      %1255 = vrot.lane.b32.xlu0 %v1211, 32
      %v1256 = vpop.permute.xlu0 %1255
      %1257 = vrot.lane.b32.xlu0 %v1212, 32
      %v1258 = vpop.permute.xlu0 %1257
      %1259 = vrot.lane.b32.xlu0 %v1213, 32
      %v1260 = vpop.permute.xlu0 %1259
      %1261 = vrot.lane.b32.xlu0 %v1214, 32
      %v1262 = vpop.permute.xlu0 %1261
      %1279 = vst.msk [vmem:[#allocation3 + $0x4] sm:$0xf] %vm892, %v1232
      %1280 = vst.msk [vmem:[#allocation3 + $0x10] sm:$0xf] %vm892, %v1234
      %1281 = vst.msk [vmem:[#allocation3 + $0x1c] sm:$0xf] %vm892, %v1236
      %1282 = vst.msk [vmem:[#allocation3 + $0x28] sm:$0xf] %vm892, %v1238
      %1283 = vst.msk [vmem:[#allocation3 + $0x34] sm:$0xf] %vm892, %v1240
      %1284 = vst.msk [vmem:[#allocation3 + $0x40] sm:$0xf] %vm892, %v1242
      %1285 = vst.msk [vmem:[#allocation3 + $0x4c] sm:$0xf] %vm892, %v1244
      %1286 = vst.msk [vmem:[#allocation3 + $0x58] sm:$0xf] %vm892, %v1246
      %1287 = vst.msk [vmem:[#allocation3 + $0x64] sm:$0xf] %vm892, %v1248
      %1288 = vst.msk [vmem:[#allocation3 + $0x70] sm:$0xf] %vm892, %v1250
      %1289 = vst.msk [vmem:[#allocation3 + $0x7c] sm:$0xf] %vm892, %v1252
      %1290 = vst.msk [vmem:[#allocation3 + $0x88] sm:$0xf] %vm892, %v1254
      %1291 = vst.msk [vmem:[#allocation3 + $0x94] sm:$0xf] %vm892, %v1256
      %1292 = vst.msk [vmem:[#allocation3 + $0xa0] sm:$0xf] %vm892, %v1258
      %1293 = vst.msk [vmem:[#allocation3 + $0xac] sm:$0xf] %vm892, %v1260
      %1294 = vst.msk [vmem:[#allocation3 + $0xb8] sm:$0xf] %vm892, %v1262
      %v1295 = vld [vmem:[#allocation2 + $0x1a] sm:$0xff]
      %v1296 = vld [vmem:[#allocation2 + $0x22] sm:$0xff]
      %v1297 = vld [vmem:[#allocation2 + $0x2a] sm:$0xff]
      %v1298 = vld [vmem:[#allocation2 + $0x32] sm:$0xff]
      %v1299 = vld [vmem:[#allocation2 + $0x3a] sm:$0xff]
      %v1300 = vld [vmem:[#allocation2 + $0x42] sm:$0xff]
      %v1301 = vld [vmem:[#allocation2 + $0x4a] sm:$0xff]
      %v1302 = vld [vmem:[#allocation2 + $0x52] sm:$0xff]
      %v1303 = vld [vmem:[#allocation2 + $0x5a] sm:$0xff]
      %v1304 = vld [vmem:[#allocation2 + $0x62] sm:$0xff]
      %v1305 = vld [vmem:[#allocation2 + $0x6a] sm:$0xff]
      %v1306 = vld [vmem:[#allocation2 + $0x72] sm:$0xff]
      %v1307 = vld [vmem:[#allocation2 + $0x7a] sm:$0xff]
      %v1308 = vld [vmem:[#allocation2 + $0x82] sm:$0xff]
      %v1309 = vld [vmem:[#allocation2 + $0x8a] sm:$0xff]
      %v1310 = vld [vmem:[#allocation2 + $0x92] sm:$0xff]
      %v1311 = vpack.c.bf16 %v1295, %v1295
      %v1312 = vpack.c.bf16 %v1296, %v1296
      %v1313 = vpack.c.bf16 %v1297, %v1297
      %v1314 = vpack.c.bf16 %v1298, %v1298
      %v1315 = vpack.c.bf16 %v1299, %v1299
      %v1316 = vpack.c.bf16 %v1300, %v1300
      %v1317 = vpack.c.bf16 %v1301, %v1301
      %v1318 = vpack.c.bf16 %v1302, %v1302
      %v1319 = vpack.c.bf16 %v1303, %v1303
      %v1320 = vpack.c.bf16 %v1304, %v1304
      %v1321 = vpack.c.bf16 %v1305, %v1305
      %v1322 = vpack.c.bf16 %v1306, %v1306
      %v1323 = vpack.c.bf16 %v1307, %v1307
      %v1324 = vpack.c.bf16 %v1308, %v1308
      %v1325 = vpack.c.bf16 %v1309, %v1309
      %v1326 = vpack.c.bf16 %v1310, %v1310
      %1343 = vrot.lane.b32.xlu0 %v1311, 64
      %v1344 = vpop.permute.xlu0 %1343
      %1345 = vrot.lane.b32.xlu0 %v1312, 64
      %v1346 = vpop.permute.xlu0 %1345
      %1347 = vrot.lane.b32.xlu0 %v1313, 64
      %v1348 = vpop.permute.xlu0 %1347
      %1349 = vrot.lane.b32.xlu0 %v1314, 64
      %v1350 = vpop.permute.xlu0 %1349
      %1351 = vrot.lane.b32.xlu0 %v1315, 64
      %v1352 = vpop.permute.xlu0 %1351
      %1353 = vrot.lane.b32.xlu0 %v1316, 64
      %v1354 = vpop.permute.xlu0 %1353
      %1355 = vrot.lane.b32.xlu0 %v1317, 64
      %v1356 = vpop.permute.xlu0 %1355
      %1357 = vrot.lane.b32.xlu0 %v1318, 64
      %v1358 = vpop.permute.xlu0 %1357
      %1359 = vrot.lane.b32.xlu0 %v1319, 64
      %v1360 = vpop.permute.xlu0 %1359
      %1361 = vrot.lane.b32.xlu0 %v1320, 64
      %v1362 = vpop.permute.xlu0 %1361
      %1363 = vrot.lane.b32.xlu0 %v1321, 64
      %v1364 = vpop.permute.xlu0 %1363
      %1365 = vrot.lane.b32.xlu0 %v1322, 64
      %v1366 = vpop.permute.xlu0 %1365
      %1367 = vrot.lane.b32.xlu0 %v1323, 64
      %v1368 = vpop.permute.xlu0 %1367
      %1369 = vrot.lane.b32.xlu0 %v1324, 64
      %v1370 = vpop.permute.xlu0 %1369
      %1371 = vrot.lane.b32.xlu0 %v1325, 64
      %v1372 = vpop.permute.xlu0 %1371
      %1373 = vrot.lane.b32.xlu0 %v1326, 64
      %v1374 = vpop.permute.xlu0 %1373
      %1391 = vst.msk [vmem:[#allocation3 + $0x4] sm:$0xf] %vm1005, %v1344
      %1392 = vst.msk [vmem:[#allocation3 + $0x10] sm:$0xf] %vm1005, %v1346
      %1393 = vst.msk [vmem:[#allocation3 + $0x1c] sm:$0xf] %vm1005, %v1348
      %1394 = vst.msk [vmem:[#allocation3 + $0x28] sm:$0xf] %vm1005, %v1350
      %1395 = vst.msk [vmem:[#allocation3 + $0x34] sm:$0xf] %vm1005, %v1352
      %1396 = vst.msk [vmem:[#allocation3 + $0x40] sm:$0xf] %vm1005, %v1354
      %1397 = vst.msk [vmem:[#allocation3 + $0x4c] sm:$0xf] %vm1005, %v1356
      %1398 = vst.msk [vmem:[#allocation3 + $0x58] sm:$0xf] %vm1005, %v1358
      %1399 = vst.msk [vmem:[#allocation3 + $0x64] sm:$0xf] %vm1005, %v1360
      %1400 = vst.msk [vmem:[#allocation3 + $0x70] sm:$0xf] %vm1005, %v1362
      %1401 = vst.msk [vmem:[#allocation3 + $0x7c] sm:$0xf] %vm1005, %v1364
      %1402 = vst.msk [vmem:[#allocation3 + $0x88] sm:$0xf] %vm1005, %v1366
      %1403 = vst.msk [vmem:[#allocation3 + $0x94] sm:$0xf] %vm1005, %v1368
      %1404 = vst.msk [vmem:[#allocation3 + $0xa0] sm:$0xf] %vm1005, %v1370
      %1405 = vst.msk [vmem:[#allocation3 + $0xac] sm:$0xf] %vm1005, %v1372
      %1406 = vst.msk [vmem:[#allocation3 + $0xb8] sm:$0xf] %vm1005, %v1374
      %v1407 = vld [vmem:[#allocation2 + $0x1b] sm:$0xff]
      %v1408 = vld [vmem:[#allocation2 + $0x23] sm:$0xff]
      %v1409 = vld [vmem:[#allocation2 + $0x2b] sm:$0xff]
      %v1410 = vld [vmem:[#allocation2 + $0x33] sm:$0xff]
      %v1411 = vld [vmem:[#allocation2 + $0x3b] sm:$0xff]
      %v1412 = vld [vmem:[#allocation2 + $0x43] sm:$0xff]
      %v1413 = vld [vmem:[#allocation2 + $0x4b] sm:$0xff]
      %v1414 = vld [vmem:[#allocation2 + $0x53] sm:$0xff]
      %v1415 = vld [vmem:[#allocation2 + $0x5b] sm:$0xff]
      %v1416 = vld [vmem:[#allocation2 + $0x63] sm:$0xff]
      %v1417 = vld [vmem:[#allocation2 + $0x6b] sm:$0xff]
      %v1418 = vld [vmem:[#allocation2 + $0x73] sm:$0xff]
      %v1419 = vld [vmem:[#allocation2 + $0x7b] sm:$0xff]
      %v1420 = vld [vmem:[#allocation2 + $0x83] sm:$0xff]
      %v1421 = vld [vmem:[#allocation2 + $0x8b] sm:$0xff]
      %v1422 = vld [vmem:[#allocation2 + $0x93] sm:$0xff]
      %v1423 = vpack.c.bf16 %v1407, %v1407
      %v1424 = vpack.c.bf16 %v1408, %v1408
      %v1425 = vpack.c.bf16 %v1409, %v1409
      %v1426 = vpack.c.bf16 %v1410, %v1410
      %v1427 = vpack.c.bf16 %v1411, %v1411
      %v1428 = vpack.c.bf16 %v1412, %v1412
      %v1429 = vpack.c.bf16 %v1413, %v1413
      %v1430 = vpack.c.bf16 %v1414, %v1414
      %v1431 = vpack.c.bf16 %v1415, %v1415
      %v1432 = vpack.c.bf16 %v1416, %v1416
      %v1433 = vpack.c.bf16 %v1417, %v1417
      %v1434 = vpack.c.bf16 %v1418, %v1418
      %v1435 = vpack.c.bf16 %v1419, %v1419
      %v1436 = vpack.c.bf16 %v1420, %v1420
      %v1437 = vpack.c.bf16 %v1421, %v1421
      %v1438 = vpack.c.bf16 %v1422, %v1422
      %1455 = vrot.lane.b32.xlu0 %v1423, 96
      %v1456 = vpop.permute.xlu0 %1455
      %1457 = vrot.lane.b32.xlu0 %v1424, 96
      %v1458 = vpop.permute.xlu0 %1457
      %1459 = vrot.lane.b32.xlu0 %v1425, 96
      %v1460 = vpop.permute.xlu0 %1459
      %1461 = vrot.lane.b32.xlu0 %v1426, 96
      %v1462 = vpop.permute.xlu0 %1461
      %1463 = vrot.lane.b32.xlu0 %v1427, 96
      %v1464 = vpop.permute.xlu0 %1463
      %1465 = vrot.lane.b32.xlu0 %v1428, 96
      %v1466 = vpop.permute.xlu0 %1465
      %1467 = vrot.lane.b32.xlu0 %v1429, 96
      %v1468 = vpop.permute.xlu0 %1467
      %1469 = vrot.lane.b32.xlu0 %v1430, 96
      %v1470 = vpop.permute.xlu0 %1469
      %1471 = vrot.lane.b32.xlu0 %v1431, 96
      %v1472 = vpop.permute.xlu0 %1471
      %1473 = vrot.lane.b32.xlu0 %v1432, 96
      %v1474 = vpop.permute.xlu0 %1473
      %1475 = vrot.lane.b32.xlu0 %v1433, 96
      %v1476 = vpop.permute.xlu0 %1475
      %1477 = vrot.lane.b32.xlu0 %v1434, 96
      %v1478 = vpop.permute.xlu0 %1477
      %1479 = vrot.lane.b32.xlu0 %v1435, 96
      %v1480 = vpop.permute.xlu0 %1479
      %1481 = vrot.lane.b32.xlu0 %v1436, 96
      %v1482 = vpop.permute.xlu0 %1481
      %1483 = vrot.lane.b32.xlu0 %v1437, 96
      %v1484 = vpop.permute.xlu0 %1483
      %1485 = vrot.lane.b32.xlu0 %v1438, 96
      %v1486 = vpop.permute.xlu0 %1485
      %1503 = vst.msk [vmem:[#allocation3 + $0x4] sm:$0xf] %vm1118, %v1456
      %1504 = vst.msk [vmem:[#allocation3 + $0x10] sm:$0xf] %vm1118, %v1458
      %1505 = vst.msk [vmem:[#allocation3 + $0x1c] sm:$0xf] %vm1118, %v1460
      %1506 = vst.msk [vmem:[#allocation3 + $0x28] sm:$0xf] %vm1118, %v1462
      %1507 = vst.msk [vmem:[#allocation3 + $0x34] sm:$0xf] %vm1118, %v1464
      %1508 = vst.msk [vmem:[#allocation3 + $0x40] sm:$0xf] %vm1118, %v1466
      %1509 = vst.msk [vmem:[#allocation3 + $0x4c] sm:$0xf] %vm1118, %v1468
      %1510 = vst.msk [vmem:[#allocation3 + $0x58] sm:$0xf] %vm1118, %v1470
      %1511 = vst.msk [vmem:[#allocation3 + $0x64] sm:$0xf] %vm1118, %v1472
      %1512 = vst.msk [vmem:[#allocation3 + $0x70] sm:$0xf] %vm1118, %v1474
      %1513 = vst.msk [vmem:[#allocation3 + $0x7c] sm:$0xf] %vm1118, %v1476
      %1514 = vst.msk [vmem:[#allocation3 + $0x88] sm:$0xf] %vm1118, %v1478
      %1515 = vst.msk [vmem:[#allocation3 + $0x94] sm:$0xf] %vm1118, %v1480
      %1516 = vst.msk [vmem:[#allocation3 + $0xa0] sm:$0xf] %vm1118, %v1482
      %1517 = vst.msk [vmem:[#allocation3 + $0xac] sm:$0xf] %vm1118, %v1484
      %1518 = vst.msk [vmem:[#allocation3 + $0xb8] sm:$0xf] %vm1118, %v1486
      %v1519 = vld [vmem:[#allocation2 + $0x1c] sm:$0xff]
      %v1520 = vld [vmem:[#allocation2 + $0x24] sm:$0xff]
      %v1521 = vld [vmem:[#allocation2 + $0x2c] sm:$0xff]
      %v1522 = vld [vmem:[#allocation2 + $0x34] sm:$0xff]
      %v1523 = vld [vmem:[#allocation2 + $0x3c] sm:$0xff]
      %v1524 = vld [vmem:[#allocation2 + $0x44] sm:$0xff]
      %v1525 = vld [vmem:[#allocation2 + $0x4c] sm:$0xff]
      %v1526 = vld [vmem:[#allocation2 + $0x54] sm:$0xff]
      %v1527 = vld [vmem:[#allocation2 + $0x5c] sm:$0xff]
      %v1528 = vld [vmem:[#allocation2 + $0x64] sm:$0xff]
      %v1529 = vld [vmem:[#allocation2 + $0x6c] sm:$0xff]
      %v1530 = vld [vmem:[#allocation2 + $0x74] sm:$0xff]
      %v1531 = vld [vmem:[#allocation2 + $0x7c] sm:$0xff]
      %v1532 = vld [vmem:[#allocation2 + $0x84] sm:$0xff]
      %v1533 = vld [vmem:[#allocation2 + $0x8c] sm:$0xff]
      %v1534 = vld [vmem:[#allocation2 + $0x94] sm:$0xff]
      %v1535 = vpack.c.bf16 %v1519, %v1519
      %v1536 = vpack.c.bf16 %v1520, %v1520
      %v1537 = vpack.c.bf16 %v1521, %v1521
      %v1538 = vpack.c.bf16 %v1522, %v1522
      %v1539 = vpack.c.bf16 %v1523, %v1523
      %v1540 = vpack.c.bf16 %v1524, %v1524
      %v1541 = vpack.c.bf16 %v1525, %v1525
      %v1542 = vpack.c.bf16 %v1526, %v1526
      %v1543 = vpack.c.bf16 %v1527, %v1527
      %v1544 = vpack.c.bf16 %v1528, %v1528
      %v1545 = vpack.c.bf16 %v1529, %v1529
      %v1546 = vpack.c.bf16 %v1530, %v1530
      %v1547 = vpack.c.bf16 %v1531, %v1531
      %v1548 = vpack.c.bf16 %v1532, %v1532
      %v1549 = vpack.c.bf16 %v1533, %v1533
      %v1550 = vpack.c.bf16 %v1534, %v1534
      %1551 = vst.msk [vmem:[#allocation3 + $0x8] sm:$0xf] %vm779, %v1535
      %1552 = vst.msk [vmem:[#allocation3 + $0x14] sm:$0xf] %vm779, %v1536
      %1553 = vst.msk [vmem:[#allocation3 + $0x20] sm:$0xf] %vm779, %v1537
      %1554 = vst.msk [vmem:[#allocation3 + $0x2c] sm:$0xf] %vm779, %v1538
      %1555 = vst.msk [vmem:[#allocation3 + $0x38] sm:$0xf] %vm779, %v1539
      %1556 = vst.msk [vmem:[#allocation3 + $0x44] sm:$0xf] %vm779, %v1540
      %1557 = vst.msk [vmem:[#allocation3 + $0x50] sm:$0xf] %vm779, %v1541
      %1558 = vst.msk [vmem:[#allocation3 + $0x5c] sm:$0xf] %vm779, %v1542
      %1559 = vst.msk [vmem:[#allocation3 + $0x68] sm:$0xf] %vm779, %v1543
      %1560 = vst.msk [vmem:[#allocation3 + $0x74] sm:$0xf] %vm779, %v1544
      %1561 = vst.msk [vmem:[#allocation3 + $0x80] sm:$0xf] %vm779, %v1545
      %1562 = vst.msk [vmem:[#allocation3 + $0x8c] sm:$0xf] %vm779, %v1546
      %1563 = vst.msk [vmem:[#allocation3 + $0x98] sm:$0xf] %vm779, %v1547
      %1564 = vst.msk [vmem:[#allocation3 + $0xa4] sm:$0xf] %vm779, %v1548
      %1565 = vst.msk [vmem:[#allocation3 + $0xb0] sm:$0xf] %vm779, %v1549
      %1566 = vst.msk [vmem:[#allocation3 + $0xbc] sm:$0xf] %vm779, %v1550
      %v1567 = vld [vmem:[#allocation3] sm:$0xff]
      %v1568 = vld [vmem:[#allocation3 + $0x8] sm:$0xf]
      %v1569 = vld [vmem:[#allocation3 + $0xc] sm:$0xff]
      %v1570 = vld [vmem:[#allocation3 + $0x14] sm:$0xf]
      %v1571 = vld [vmem:[#allocation3 + $0x18] sm:$0xff]
      %v1572 = vld [vmem:[#allocation3 + $0x20] sm:$0xf]
      %v1573 = vld [vmem:[#allocation3 + $0x24] sm:$0xff]
      %v1574 = vld [vmem:[#allocation3 + $0x2c] sm:$0xf]
      %v1575 = vld [vmem:[#allocation3 + $0x30] sm:$0xff]
      %v1576 = vld [vmem:[#allocation3 + $0x38] sm:$0xf]
      %v1577 = vld [vmem:[#allocation3 + $0x3c] sm:$0xff]
      %v1578 = vld [vmem:[#allocation3 + $0x44] sm:$0xf]
      %v1579 = vld [vmem:[#allocation3 + $0x48] sm:$0xff]
      %v1580 = vld [vmem:[#allocation3 + $0x50] sm:$0xf]
      %v1581 = vld [vmem:[#allocation3 + $0x54] sm:$0xff]
      %v1582 = vld [vmem:[#allocation3 + $0x5c] sm:$0xf]
      %v1583 = vld [vmem:[#allocation3 + $0x60] sm:$0xff]
      %v1584 = vld [vmem:[#allocation3 + $0x68] sm:$0xf]
      %v1585 = vld [vmem:[#allocation3 + $0x6c] sm:$0xff]
      %v1586 = vld [vmem:[#allocation3 + $0x74] sm:$0xf]
      %v1587 = vld [vmem:[#allocation3 + $0x78] sm:$0xff]
      %v1588 = vld [vmem:[#allocation3 + $0x80] sm:$0xf]
      %v1589 = vld [vmem:[#allocation3 + $0x84] sm:$0xff]
      %v1590 = vld [vmem:[#allocation3 + $0x8c] sm:$0xf]
      %v1591 = vld [vmem:[#allocation3 + $0x90] sm:$0xff]
      %v1592 = vld [vmem:[#allocation3 + $0x98] sm:$0xf]
      %v1593 = vld [vmem:[#allocation3 + $0x9c] sm:$0xff]
      %v1594 = vld [vmem:[#allocation3 + $0xa4] sm:$0xf]
      %v1595 = vld [vmem:[#allocation3 + $0xa8] sm:$0xff]
      %v1596 = vld [vmem:[#allocation3 + $0xb0] sm:$0xf]
      %v1597 = vld [vmem:[#allocation3 + $0xb4] sm:$0xff]
      %v1598 = vld [vmem:[#allocation3 + $0xbc] sm:$0xf]
      %v1600 = vperm.slane %v746, 0
      %v1634 = vunpack.c.l.b16 %v1567
      %v1635 = vunpack.c.h.b16 %v1567
      %v1636 = vunpack.c.l.b16 %v1568
      %v1637 = vunpack.c.l.b16 %v1569
      %v1638 = vunpack.c.h.b16 %v1569
      %v1639 = vunpack.c.l.b16 %v1570
      %v1640 = vunpack.c.l.b16 %v1571
      %v1641 = vunpack.c.h.b16 %v1571
      %v1642 = vunpack.c.l.b16 %v1572
      %v1643 = vunpack.c.l.b16 %v1573
      %v1644 = vunpack.c.h.b16 %v1573
      %v1645 = vunpack.c.l.b16 %v1574
      %v1646 = vunpack.c.l.b16 %v1575
      %v1647 = vunpack.c.h.b16 %v1575
      %v1648 = vunpack.c.l.b16 %v1576
      %v1649 = vunpack.c.l.b16 %v1577
      %v1650 = vunpack.c.h.b16 %v1577
      %v1651 = vunpack.c.l.b16 %v1578
      %v1652 = vunpack.c.l.b16 %v1579
      %v1653 = vunpack.c.h.b16 %v1579
      %v1654 = vunpack.c.l.b16 %v1580
      %v1655 = vunpack.c.l.b16 %v1581
      %v1656 = vunpack.c.h.b16 %v1581
      %v1657 = vunpack.c.l.b16 %v1582
      %v1658 = vunpack.c.l.b16 %v1583
      %v1659 = vunpack.c.h.b16 %v1583
      %v1660 = vunpack.c.l.b16 %v1584
      %v1661 = vunpack.c.l.b16 %v1585
      %v1662 = vunpack.c.h.b16 %v1585
      %v1663 = vunpack.c.l.b16 %v1586
      %v1664 = vunpack.c.l.b16 %v1587
      %v1665 = vunpack.c.h.b16 %v1587
      %v1666 = vunpack.c.l.b16 %v1588
      %v1667 = vunpack.c.l.b16 %v1589
      %v1668 = vunpack.c.h.b16 %v1589
      %v1669 = vunpack.c.l.b16 %v1590
      %v1670 = vunpack.c.l.b16 %v1591
      %v1671 = vunpack.c.h.b16 %v1591
      %v1672 = vunpack.c.l.b16 %v1592
      %v1673 = vunpack.c.l.b16 %v1593
      %v1674 = vunpack.c.h.b16 %v1593
      %v1675 = vunpack.c.l.b16 %v1594
      %v1676 = vunpack.c.l.b16 %v1595
      %v1677 = vunpack.c.h.b16 %v1595
      %v1678 = vunpack.c.l.b16 %v1596
      %v1679 = vunpack.c.l.b16 %v1597
      %v1680 = vunpack.c.h.b16 %v1597
      %v1681 = vunpack.c.l.b16 %v1598
      %v1682 = vpack.c.b16 %v1637, %v1634
      %v1683 = vpack.c.b16 %v1638, %v1635
      %v1684 = vpack.c.b16 %v1639, %v1636
      %v1685 = vpack.c.b16 %v1643, %v1640
      %v1686 = vpack.c.b16 %v1644, %v1641
      %v1687 = vpack.c.b16 %v1645, %v1642
      %v1688 = vpack.c.b16 %v1649, %v1646
      %v1689 = vpack.c.b16 %v1650, %v1647
      %v1690 = vpack.c.b16 %v1651, %v1648
      %v1691 = vpack.c.b16 %v1655, %v1652
      %v1692 = vpack.c.b16 %v1656, %v1653
      %v1693 = vpack.c.b16 %v1657, %v1654
      %v1694 = vpack.c.b16 %v1661, %v1658
      %v1695 = vpack.c.b16 %v1662, %v1659
      %v1696 = vpack.c.b16 %v1663, %v1660
      %v1697 = vpack.c.b16 %v1667, %v1664
      %v1698 = vpack.c.b16 %v1668, %v1665
      %v1699 = vpack.c.b16 %v1669, %v1666
      %v1700 = vpack.c.b16 %v1673, %v1670
      %v1701 = vpack.c.b16 %v1674, %v1671
      %v1702 = vpack.c.b16 %v1675, %v1672
      %v1703 = vpack.c.b16 %v1679, %v1676
      %v1704 = vpack.c.b16 %v1680, %v1677
      %v1705 = vpack.c.b16 %v1681, %v1678
      %v1758 = vunpack.c.l.b16 %v710
      %v1759 = vunpack.c.l.b16 %v711
      %v1760 = vunpack.c.l.b16 %v712
      %v1761 = vunpack.c.l.b16 %v713
      %v1762 = vunpack.c.l.b16 %v714
      %v1763 = vunpack.c.l.b16 %v715
      %v1764 = vunpack.c.l.b16 %v716
      %v1765 = vunpack.c.l.b16 %v717
      %v1766 = vunpack.c.l.b16 %v718
      %v1767 = vunpack.c.l.b16 %v719
      %v1768 = vunpack.c.l.b16 %v720
      %v1769 = vunpack.c.l.b16 %v721
      %v1770 = vunpack.c.l.b16 %v722
      %v1771 = vunpack.c.l.b16 %v723
      %v1772 = vunpack.c.l.b16 %v724
      %v1773 = vunpack.c.l.b16 %v725
      %v1774 = vunpack.c.l.b16 %v726
      %v1775 = vunpack.c.l.b16 %v727
      %v1776 = vunpack.c.l.b16 %v728
      %v1777 = vunpack.c.l.b16 %v729
      %v1778 = vunpack.c.l.b16 %v730
      %v1779 = vunpack.c.l.b16 %v731
      %v1780 = vunpack.c.l.b16 %v732
      %v1781 = vunpack.c.l.b16 %v733
      %v1782 = vunpack.c.l.b16 %v734
      %v1783 = vunpack.c.l.b16 %v735
      %v1784 = vunpack.c.l.b16 %v736
      %v1785 = vunpack.c.l.b16 %v737
      %v1786 = vunpack.c.l.b16 %v738
      %v1787 = vunpack.c.l.b16 %v739
      %v1788 = vunpack.c.l.b16 %v740
      %v1789 = vunpack.c.l.b16 %v741
      %v1790 = vunpack.c.l.b16 %v742
      %v1791 = vunpack.c.l.b16 %v743
      %v1792 = vunpack.c.l.b16 %v744
      %v1793 = vunpack.c.l.b16 %v745
      %v1794 = vpack.c.b16 %v1759, %v1758
      %v1795 = vpack.c.b16 %v1761, %v1760
      %v1796 = vpack.c.b16 %v1763, %v1762
      %v1797 = vpack.c.b16 %v1765, %v1764
      %v1798 = vpack.c.b16 %v1767, %v1766
      %v1799 = vpack.c.b16 %v1769, %v1768
      %v1800 = vpack.c.b16 %v1771, %v1770
      %v1801 = vpack.c.b16 %v1773, %v1772
      %v1802 = vpack.c.b16 %v1775, %v1774
      %v1803 = vpack.c.b16 %v1777, %v1776
      %v1804 = vpack.c.b16 %v1779, %v1778
      %v1805 = vpack.c.b16 %v1781, %v1780
      %v1806 = vpack.c.b16 %v1783, %v1782
      %v1807 = vpack.c.b16 %v1785, %v1784
      %v1808 = vpack.c.b16 %v1787, %v1786
      %v1809 = vpack.c.b16 %v1789, %v1788
      %v1810 = vpack.c.b16 %v1791, %v1790
      %v1811 = vpack.c.b16 %v1793, %v1792
      %v1831 = vsel %vm561, %v1684, 0
      %v1834 = vsel %vm561, %v1687, 0
      %v1837 = vsel %vm561, %v1690, 0
      %v1840 = vsel %vm561, %v1693, 0
      %v1843 = vsel %vm561, %v1696, 0
      %v1846 = vsel %vm561, %v1699, 0
      %v1849 = vsel %vm561, %v1702, 0
      %v1852 = vsel %vm561, %v1705, 0
      %1854 = vmatpush.bf16.msra.mxu0 %v1801
      %1855 = vmatpush.bf16.msra.mxu0 %v1800
      %1856 = vmatpush.bf16.msra.mxu0 %v1799
      %1857 = vmatpush.bf16.msra.mxu0 %v1798
      %1858 = vmatpush.bf16.msra.mxu0 %v1797
      %1859 = vmatpush.bf16.msra.mxu0 %v1796
      %1860 = vmatpush.bf16.msra.mxu0 %v1795
      %1861 = vmatpush.bf16.msra.mxu0 %v1794
      %1862 = vmatmul.bf16.gmra.mxu0 %v1682
      %v1863 = vpop.f32.mrf.mxu0
      %v1864 = vadd.f32 %v1600, %v1863
      %v1865 = vpop.f32.mrf.mxu0
      %v1866 = vadd.f32 %v1600, %v1865
      %1867 = vmatmul.bf16.gmra.mxu0 %v1685
      %v1868 = vpop.f32.mrf.mxu0
      %v1869 = vadd.f32 %v1600, %v1868
      %v1870 = vpop.f32.mrf.mxu0
      %v1871 = vadd.f32 %v1600, %v1870
      %1872 = vmatmul.bf16.gmra.mxu0 %v1688
      %v1873 = vpop.f32.mrf.mxu0
      %v1874 = vadd.f32 %v1600, %v1873
      %v1875 = vpop.f32.mrf.mxu0
      %v1876 = vadd.f32 %v1600, %v1875
      %1877 = vmatmul.bf16.gmra.mxu0 %v1691
      %v1878 = vpop.f32.mrf.mxu0
      %v1879 = vadd.f32 %v1600, %v1878
      %v1880 = vpop.f32.mrf.mxu0
      %v1881 = vadd.f32 %v1600, %v1880
      %1882 = vmatmul.bf16.gmra.mxu0 %v1694
      %v1883 = vpop.f32.mrf.mxu0
      %v1884 = vadd.f32 %v1600, %v1883
      %v1885 = vpop.f32.mrf.mxu0
      %v1886 = vadd.f32 %v1600, %v1885
      %1887 = vmatmul.bf16.gmra.mxu0 %v1697
      %v1888 = vpop.f32.mrf.mxu0
      %v1889 = vadd.f32 %v1600, %v1888
      %v1890 = vpop.f32.mrf.mxu0
      %v1891 = vadd.f32 %v1600, %v1890
      %1892 = vmatmul.bf16.gmra.mxu0 %v1700
      %v1893 = vpop.f32.mrf.mxu0
      %v1894 = vadd.f32 %v1600, %v1893
      %v1895 = vpop.f32.mrf.mxu0
      %v1896 = vadd.f32 %v1600, %v1895
      %1897 = vmatmul.bf16.gmra.mxu0 %v1703
      %v1898 = vpop.f32.mrf.mxu0
      %v1899 = vadd.f32 %v1600, %v1898
      %v1900 = vpop.f32.mrf.mxu0
      %v1901 = vadd.f32 %v1600, %v1900
      %1902 = vdwg.mxu0
      %1903 = vmatpush.bf16.msra.mxu0 %v1809
      %1904 = vmatpush.bf16.msra.mxu0 %v1808
      %1905 = vmatpush.bf16.msra.mxu0 %v1807
      %1906 = vmatpush.bf16.msra.mxu0 %v1806
      %1907 = vmatpush.bf16.msra.mxu0 %v1805
      %1908 = vmatpush.bf16.msra.mxu0 %v1804
      %1909 = vmatpush.bf16.msra.mxu0 %v1803
      %1910 = vmatpush.bf16.msra.mxu0 %v1802
      %1911 = vmatmul.bf16.gmra.mxu0 %v1683
      %v1912 = vpop.f32.mrf.mxu0
      %v1913 = vadd.f32 %v1864, %v1912
      %v1914 = vpop.f32.mrf.mxu0
      %v1915 = vadd.f32 %v1866, %v1914
      %1916 = vmatmul.bf16.gmra.mxu0 %v1686
      %v1917 = vpop.f32.mrf.mxu0
      %v1918 = vadd.f32 %v1869, %v1917
      %v1919 = vpop.f32.mrf.mxu0
      %v1920 = vadd.f32 %v1871, %v1919
      %1921 = vmatmul.bf16.gmra.mxu0 %v1689
      %v1922 = vpop.f32.mrf.mxu0
      %v1923 = vadd.f32 %v1874, %v1922
      %v1924 = vpop.f32.mrf.mxu0
      %v1925 = vadd.f32 %v1876, %v1924
      %1926 = vmatmul.bf16.gmra.mxu0 %v1692
      %v1927 = vpop.f32.mrf.mxu0
      %v1928 = vadd.f32 %v1879, %v1927
      %v1929 = vpop.f32.mrf.mxu0
      %v1930 = vadd.f32 %v1881, %v1929
      %1931 = vmatmul.bf16.gmra.mxu0 %v1695
      %v1932 = vpop.f32.mrf.mxu0
      %v1933 = vadd.f32 %v1884, %v1932
      %v1934 = vpop.f32.mrf.mxu0
      %v1935 = vadd.f32 %v1886, %v1934
      %1936 = vmatmul.bf16.gmra.mxu0 %v1698
      %v1937 = vpop.f32.mrf.mxu0
      %v1938 = vadd.f32 %v1889, %v1937
      %v1939 = vpop.f32.mrf.mxu0
      %v1940 = vadd.f32 %v1891, %v1939
      %1941 = vmatmul.bf16.gmra.mxu0 %v1701
      %v1942 = vpop.f32.mrf.mxu0
      %v1943 = vadd.f32 %v1894, %v1942
      %v1944 = vpop.f32.mrf.mxu0
      %v1945 = vadd.f32 %v1896, %v1944
      %1946 = vmatmul.bf16.gmra.mxu0 %v1704
      %v1947 = vpop.f32.mrf.mxu0
      %v1948 = vadd.f32 %v1899, %v1947
      %v1949 = vpop.f32.mrf.mxu0
      %v1950 = vadd.f32 %v1901, %v1949
      %1951 = vdwg.mxu0
      %1952 = vmatpush.bf16.msra.mxu0 0
      %1953 = vmatpush.bf16.msra.mxu0 0
      %1954 = vmatpush.bf16.msra.mxu0 0
      %1955 = vmatpush.bf16.msra.mxu0 0
      %1956 = vmatpush.bf16.msra.mxu0 0
      %1957 = vmatpush.bf16.msra.mxu0 0
      %1958 = vmatpush.bf16.msra.mxu0 %v1811
      %1959 = vmatpush.bf16.msra.mxu0 %v1810
      %1960 = vmatmul.bf16.gmra.mxu0 %v1831
      %v1961 = vpop.f32.mrf.mxu0
      %v1962 = vadd.f32 %v1913, %v1961
      %v1963 = vpop.f32.mrf.mxu0
      %v1964 = vadd.f32 %v1915, %v1963
      %1965 = vmatmul.bf16.gmra.mxu0 %v1834
      %v1966 = vpop.f32.mrf.mxu0
      %v1967 = vadd.f32 %v1918, %v1966
      %v1968 = vpop.f32.mrf.mxu0
      %v1969 = vadd.f32 %v1920, %v1968
      %1970 = vmatmul.bf16.gmra.mxu0 %v1837
      %v1971 = vpop.f32.mrf.mxu0
      %v1972 = vadd.f32 %v1923, %v1971
      %v1973 = vpop.f32.mrf.mxu0
      %v1974 = vadd.f32 %v1925, %v1973
      %1975 = vmatmul.bf16.gmra.mxu0 %v1840
      %v1976 = vpop.f32.mrf.mxu0
      %v1977 = vadd.f32 %v1928, %v1976
      %v1978 = vpop.f32.mrf.mxu0
      %v1979 = vadd.f32 %v1930, %v1978
      %1980 = vmatmul.bf16.gmra.mxu0 %v1843
      %v1981 = vpop.f32.mrf.mxu0
      %v1982 = vadd.f32 %v1933, %v1981
      %v1983 = vpop.f32.mrf.mxu0
      %v1984 = vadd.f32 %v1935, %v1983
      %1985 = vmatmul.bf16.gmra.mxu0 %v1846
      %v1986 = vpop.f32.mrf.mxu0
      %v1987 = vadd.f32 %v1938, %v1986
      %v1988 = vpop.f32.mrf.mxu0
      %v1989 = vadd.f32 %v1940, %v1988
      %1990 = vmatmul.bf16.gmra.mxu0 %v1849
      %v1991 = vpop.f32.mrf.mxu0
      %v1992 = vadd.f32 %v1943, %v1991
      %v1993 = vpop.f32.mrf.mxu0
      %v1994 = vadd.f32 %v1945, %v1993
      %1995 = vmatmul.bf16.gmra.mxu0 %v1852
      %v1996 = vpop.f32.mrf.mxu0
      %v1997 = vadd.f32 %v1948, %v1996
      %v1998 = vpop.f32.mrf.mxu0
      %v1999 = vadd.f32 %v1950, %v1998
      %2000 = vdwg.mxu0
      %v2001 = vmax.f32 %v1962, 0.0
      %v2002 = vmax.f32 %v1964, 0.0
      %v2003 = vmax.f32 %v1967, 0.0
      %v2004 = vmax.f32 %v1969, 0.0
      %v2005 = vmax.f32 %v1972, 0.0
      %v2006 = vmax.f32 %v1974, 0.0
      %v2007 = vmax.f32 %v1977, 0.0
      %v2008 = vmax.f32 %v1979, 0.0
      %v2009 = vmax.f32 %v1982, 0.0
      %v2010 = vmax.f32 %v1984, 0.0
      %v2011 = vmax.f32 %v1987, 0.0
      %v2012 = vmax.f32 %v1989, 0.0
      %v2013 = vmax.f32 %v1992, 0.0
      %v2014 = vmax.f32 %v1994, 0.0
      %v2015 = vmax.f32 %v1997, 0.0
      %v2016 = vmax.f32 %v1999, 0.0
      %v2017 = vmul.f32 %v2001, %v633
      %v2018 = vmul.f32 %v2002, %v638
      %v2019 = vmul.f32 %v2003, %v643
      %v2020 = vmul.f32 %v2004, %v648
      %v2021 = vmul.f32 %v2005, %v653
      %v2022 = vmul.f32 %v2006, %v658
      %v2023 = vmul.f32 %v2007, %v663
      %v2024 = vmul.f32 %v2008, %v668
      %v2025 = vmul.f32 %v2009, %v673
      %v2026 = vmul.f32 %v2010, %v678
      %v2027 = vmul.f32 %v2011, %v683
      %v2028 = vmul.f32 %v2012, %v688
      %v2029 = vmul.f32 %v2013, %v693
      %v2030 = vmul.f32 %v2014, %v698
      %v2031 = vmul.f32 %v2015, %v703
      %v2032 = vmul.f32 %v2016, %v708
      %2033 = vst.msk [vmem:[#allocation2 + $0x10] sm:$0xff] %vm561, %v2017
      %2034 = vst.msk [vmem:[#allocation2 + $0x18] sm:$0xff] %vm561, %v2018
      %2035 = vst.msk [vmem:[#allocation2 + $0x20] sm:$0xff] %vm561, %v2019
      %2036 = vst.msk [vmem:[#allocation2 + $0x28] sm:$0xff] %vm561, %v2020
      %2037 = vst.msk [vmem:[#allocation2 + $0x30] sm:$0xff] %vm561, %v2021
      %2038 = vst.msk [vmem:[#allocation2 + $0x38] sm:$0xff] %vm561, %v2022
      %2039 = vst.msk [vmem:[#allocation2 + $0x40] sm:$0xff] %vm561, %v2023
      %2040 = vst.msk [vmem:[#allocation2 + $0x48] sm:$0xff] %vm561, %v2024
      %2041 = vst.msk [vmem:[#allocation2 + $0x50] sm:$0xff] %vm561, %v2025
      %2042 = vst.msk [vmem:[#allocation2 + $0x58] sm:$0xff] %vm561, %v2026
      %2043 = vst.msk [vmem:[#allocation2 + $0x60] sm:$0xff] %vm561, %v2027
      %2044 = vst.msk [vmem:[#allocation2 + $0x68] sm:$0xff] %vm561, %v2028
      %2045 = vst.msk [vmem:[#allocation2 + $0x70] sm:$0xff] %vm561, %v2029
      %2046 = vst.msk [vmem:[#allocation2 + $0x78] sm:$0xff] %vm561, %v2030
      %2047 = vst.msk [vmem:[#allocation2 + $0x80] sm:$0xff] %vm561, %v2031
      %2048 = vst.msk [vmem:[#allocation2 + $0x88] sm:$0xff] %vm561, %v2032
      %v2049 = vld [vmem:[%s4] sm:$0xf]
      %v2050 = vld [vmem:[%s4 + $0x4] sm:$0xf]
      %v2051 = vld [vmem:[%s4 + $0x8] sm:$0xf]
      %v2052 = vld [vmem:[%s4 + $0xc] sm:$0xf]
      %v2053 = vld [vmem:[%s4 + $0x10] sm:$0xf]
      %v2054 = vld [vmem:[%s4 + $0x14] sm:$0xf]
      %v2055 = vld [vmem:[%s4 + $0x18] sm:$0xf]
      %v2056 = vld [vmem:[%s4 + $0x1c] sm:$0xf]
      %v2057 = vld [vmem:[%s4 + $0x20] sm:$0xf]
      %v2058 = vld [vmem:[%s4 + $0x24] sm:$0xf]
      %v2059 = vld [vmem:[%s4 + $0x28] sm:$0xf]
      %v2060 = vld [vmem:[%s4 + $0x2c] sm:$0xf]
      %v2061 = vld [vmem:[%s4 + $0x30] sm:$0xf]
      %v2062 = vld [vmem:[%s4 + $0x34] sm:$0xf]
      %v2063 = vld [vmem:[%s4 + $0x38] sm:$0xf]
      %v2064 = vld [vmem:[%s4 + $0x3c] sm:$0xf]
      %v2065 = vld [vmem:[%s4 + $0x40] sm:$0xf]
      %v2066 = vld [vmem:[%s4 + $0x44] sm:$0xf]
      %v2067 = vld [vmem:[%s4 + $0x48] sm:$0xf]
      %v2068 = vld [vmem:[%s4 + $0x4c] sm:$0xf]
      %v2069 = vld [vmem:[%s4 + $0x50] sm:$0xf]
      %v2070 = vld [vmem:[%s4 + $0x54] sm:$0xf]
      %v2071 = vld [vmem:[%s4 + $0x58] sm:$0xf]
      %v2072 = vld [vmem:[%s4 + $0x5c] sm:$0xf]
      %v2073 = vld [vmem:[%s4 + $0x60] sm:$0xf]
      %v2074 = vld [vmem:[%s4 + $0x64] sm:$0xf]
      %v2075 = vld [vmem:[%s4 + $0x68] sm:$0xf]
      %v2076 = vld [vmem:[%s4 + $0x6c] sm:$0xf]
      %v2077 = vld [vmem:[%s4 + $0x70] sm:$0xf]
      %v2078 = vld [vmem:[%s4 + $0x74] sm:$0xf]
      %v2079 = vld [vmem:[%s4 + $0x78] sm:$0xf]
      %v2080 = vld [vmem:[%s4 + $0x7c] sm:$0xf]
      %v2081 = vld [vmem:[%s4 + $0x80] sm:$0xf]
      %v2082 = vld [vmem:[%s4 + $0x84] sm:$0xf]
      %v2083 = vld [vmem:[%s4 + $0x88] sm:$0xf]
      %v2084 = vld [vmem:[%s4 + $0x8c] sm:$0xf]
      %v2085 = vld [vmem:[%s5] sm:$0x1]
      %v2086 = vld [vmem:[#allocation2 + $0x4] sm:$0xff]
      %v2087 = vld [vmem:[#allocation2 + $0xc] sm:$0xff]
      %v2088 = vld [vmem:[#allocation2 + $0x14] sm:$0xff]
      %v2089 = vld [vmem:[#allocation2 + $0x1c] sm:$0xff]
      %v2090 = vld [vmem:[#allocation2 + $0x24] sm:$0xff]
      %v2091 = vld [vmem:[#allocation2 + $0x2c] sm:$0xff]
      %v2092 = vld [vmem:[#allocation2 + $0x34] sm:$0xff]
      %v2093 = vld [vmem:[#allocation2 + $0x3c] sm:$0xff]
      %v2094 = vld [vmem:[#allocation2 + $0x44] sm:$0xff]
      %v2095 = vld [vmem:[#allocation2 + $0x4c] sm:$0xff]
      %v2096 = vld [vmem:[#allocation2 + $0x54] sm:$0xff]
      %v2097 = vld [vmem:[#allocation2 + $0x5c] sm:$0xff]
      %v2098 = vld [vmem:[#allocation2 + $0x64] sm:$0xff]
      %v2099 = vld [vmem:[#allocation2 + $0x6c] sm:$0xff]
      %v2100 = vld [vmem:[#allocation2 + $0x74] sm:$0xff]
      %v2101 = vld [vmem:[#allocation2 + $0x7c] sm:$0xff]
      %v2102 = vpack.c.bf16 %v2086, %v2086
      %v2103 = vpack.c.bf16 %v2087, %v2087
      %v2104 = vpack.c.bf16 %v2088, %v2088
      %v2105 = vpack.c.bf16 %v2089, %v2089
      %v2106 = vpack.c.bf16 %v2090, %v2090
      %v2107 = vpack.c.bf16 %v2091, %v2091
      %v2108 = vpack.c.bf16 %v2092, %v2092
      %v2109 = vpack.c.bf16 %v2093, %v2093
      %v2110 = vpack.c.bf16 %v2094, %v2094
      %v2111 = vpack.c.bf16 %v2095, %v2095
      %v2112 = vpack.c.bf16 %v2096, %v2096
      %v2113 = vpack.c.bf16 %v2097, %v2097
      %v2114 = vpack.c.bf16 %v2098, %v2098
      %v2115 = vpack.c.bf16 %v2099, %v2099
      %v2116 = vpack.c.bf16 %v2100, %v2100
      %v2117 = vpack.c.bf16 %v2101, %v2101
      %2118 = vst.msk [vmem:[#allocation3] sm:$0xf] %vm779, %v2102
      %2119 = vst.msk [vmem:[#allocation3 + $0xc] sm:$0xf] %vm779, %v2103
      %2120 = vst.msk [vmem:[#allocation3 + $0x18] sm:$0xf] %vm779, %v2104
      %2121 = vst.msk [vmem:[#allocation3 + $0x24] sm:$0xf] %vm779, %v2105
      %2122 = vst.msk [vmem:[#allocation3 + $0x30] sm:$0xf] %vm779, %v2106
      %2123 = vst.msk [vmem:[#allocation3 + $0x3c] sm:$0xf] %vm779, %v2107
      %2124 = vst.msk [vmem:[#allocation3 + $0x48] sm:$0xf] %vm779, %v2108
      %2125 = vst.msk [vmem:[#allocation3 + $0x54] sm:$0xf] %vm779, %v2109
      %2126 = vst.msk [vmem:[#allocation3 + $0x60] sm:$0xf] %vm779, %v2110
      %2127 = vst.msk [vmem:[#allocation3 + $0x6c] sm:$0xf] %vm779, %v2111
      %2128 = vst.msk [vmem:[#allocation3 + $0x78] sm:$0xf] %vm779, %v2112
      %2129 = vst.msk [vmem:[#allocation3 + $0x84] sm:$0xf] %vm779, %v2113
      %2130 = vst.msk [vmem:[#allocation3 + $0x90] sm:$0xf] %vm779, %v2114
      %2131 = vst.msk [vmem:[#allocation3 + $0x9c] sm:$0xf] %vm779, %v2115
      %2132 = vst.msk [vmem:[#allocation3 + $0xa8] sm:$0xf] %vm779, %v2116
      %2133 = vst.msk [vmem:[#allocation3 + $0xb4] sm:$0xf] %vm779, %v2117
      %v2134 = vld [vmem:[#allocation2 + $0x5] sm:$0xff]
      %v2135 = vld [vmem:[#allocation2 + $0xd] sm:$0xff]
      %v2136 = vld [vmem:[#allocation2 + $0x15] sm:$0xff]
      %v2137 = vld [vmem:[#allocation2 + $0x1d] sm:$0xff]
      %v2138 = vld [vmem:[#allocation2 + $0x25] sm:$0xff]
      %v2139 = vld [vmem:[#allocation2 + $0x2d] sm:$0xff]
      %v2140 = vld [vmem:[#allocation2 + $0x35] sm:$0xff]
      %v2141 = vld [vmem:[#allocation2 + $0x3d] sm:$0xff]
      %v2142 = vld [vmem:[#allocation2 + $0x45] sm:$0xff]
      %v2143 = vld [vmem:[#allocation2 + $0x4d] sm:$0xff]
      %v2144 = vld [vmem:[#allocation2 + $0x55] sm:$0xff]
      %v2145 = vld [vmem:[#allocation2 + $0x5d] sm:$0xff]
      %v2146 = vld [vmem:[#allocation2 + $0x65] sm:$0xff]
      %v2147 = vld [vmem:[#allocation2 + $0x6d] sm:$0xff]
      %v2148 = vld [vmem:[#allocation2 + $0x75] sm:$0xff]
      %v2149 = vld [vmem:[#allocation2 + $0x7d] sm:$0xff]
      %v2150 = vpack.c.bf16 %v2134, %v2134
      %v2151 = vpack.c.bf16 %v2135, %v2135
      %v2152 = vpack.c.bf16 %v2136, %v2136
      %v2153 = vpack.c.bf16 %v2137, %v2137
      %v2154 = vpack.c.bf16 %v2138, %v2138
      %v2155 = vpack.c.bf16 %v2139, %v2139
      %v2156 = vpack.c.bf16 %v2140, %v2140
      %v2157 = vpack.c.bf16 %v2141, %v2141
      %v2158 = vpack.c.bf16 %v2142, %v2142
      %v2159 = vpack.c.bf16 %v2143, %v2143
      %v2160 = vpack.c.bf16 %v2144, %v2144
      %v2161 = vpack.c.bf16 %v2145, %v2145
      %v2162 = vpack.c.bf16 %v2146, %v2146
      %v2163 = vpack.c.bf16 %v2147, %v2147
      %v2164 = vpack.c.bf16 %v2148, %v2148
      %v2165 = vpack.c.bf16 %v2149, %v2149
      %2182 = vrot.lane.b32.xlu0 %v2150, 32
      %v2183 = vpop.permute.xlu0 %2182
      %2184 = vrot.lane.b32.xlu0 %v2151, 32
      %v2185 = vpop.permute.xlu0 %2184
      %2186 = vrot.lane.b32.xlu0 %v2152, 32
      %v2187 = vpop.permute.xlu0 %2186
      %2188 = vrot.lane.b32.xlu0 %v2153, 32
      %v2189 = vpop.permute.xlu0 %2188
      %2190 = vrot.lane.b32.xlu0 %v2154, 32
      %v2191 = vpop.permute.xlu0 %2190
      %2192 = vrot.lane.b32.xlu0 %v2155, 32
      %v2193 = vpop.permute.xlu0 %2192
      %2194 = vrot.lane.b32.xlu0 %v2156, 32
      %v2195 = vpop.permute.xlu0 %2194
      %2196 = vrot.lane.b32.xlu0 %v2157, 32
      %v2197 = vpop.permute.xlu0 %2196
      %2198 = vrot.lane.b32.xlu0 %v2158, 32
      %v2199 = vpop.permute.xlu0 %2198
      %2200 = vrot.lane.b32.xlu0 %v2159, 32
      %v2201 = vpop.permute.xlu0 %2200
      %2202 = vrot.lane.b32.xlu0 %v2160, 32
      %v2203 = vpop.permute.xlu0 %2202
      %2204 = vrot.lane.b32.xlu0 %v2161, 32
      %v2205 = vpop.permute.xlu0 %2204
      %2206 = vrot.lane.b32.xlu0 %v2162, 32
      %v2207 = vpop.permute.xlu0 %2206
      %2208 = vrot.lane.b32.xlu0 %v2163, 32
      %v2209 = vpop.permute.xlu0 %2208
      %2210 = vrot.lane.b32.xlu0 %v2164, 32
      %v2211 = vpop.permute.xlu0 %2210
      %2212 = vrot.lane.b32.xlu0 %v2165, 32
      %v2213 = vpop.permute.xlu0 %2212
      %2230 = vst.msk [vmem:[#allocation3] sm:$0xf] %vm892, %v2183
      %2231 = vst.msk [vmem:[#allocation3 + $0xc] sm:$0xf] %vm892, %v2185
      %2232 = vst.msk [vmem:[#allocation3 + $0x18] sm:$0xf] %vm892, %v2187
      %2233 = vst.msk [vmem:[#allocation3 + $0x24] sm:$0xf] %vm892, %v2189
      %2234 = vst.msk [vmem:[#allocation3 + $0x30] sm:$0xf] %vm892, %v2191
      %2235 = vst.msk [vmem:[#allocation3 + $0x3c] sm:$0xf] %vm892, %v2193
      %2236 = vst.msk [vmem:[#allocation3 + $0x48] sm:$0xf] %vm892, %v2195
      %2237 = vst.msk [vmem:[#allocation3 + $0x54] sm:$0xf] %vm892, %v2197
      %2238 = vst.msk [vmem:[#allocation3 + $0x60] sm:$0xf] %vm892, %v2199
      %2239 = vst.msk [vmem:[#allocation3 + $0x6c] sm:$0xf] %vm892, %v2201
      %2240 = vst.msk [vmem:[#allocation3 + $0x78] sm:$0xf] %vm892, %v2203
      %2241 = vst.msk [vmem:[#allocation3 + $0x84] sm:$0xf] %vm892, %v2205
      %2242 = vst.msk [vmem:[#allocation3 + $0x90] sm:$0xf] %vm892, %v2207
      %2243 = vst.msk [vmem:[#allocation3 + $0x9c] sm:$0xf] %vm892, %v2209
      %2244 = vst.msk [vmem:[#allocation3 + $0xa8] sm:$0xf] %vm892, %v2211
      %2245 = vst.msk [vmem:[#allocation3 + $0xb4] sm:$0xf] %vm892, %v2213
      %v2246 = vld [vmem:[#allocation2 + $0x6] sm:$0xff]
      %v2247 = vld [vmem:[#allocation2 + $0xe] sm:$0xff]
      %v2248 = vld [vmem:[#allocation2 + $0x16] sm:$0xff]
      %v2249 = vld [vmem:[#allocation2 + $0x1e] sm:$0xff]
      %v2250 = vld [vmem:[#allocation2 + $0x26] sm:$0xff]
      %v2251 = vld [vmem:[#allocation2 + $0x2e] sm:$0xff]
      %v2252 = vld [vmem:[#allocation2 + $0x36] sm:$0xff]
      %v2253 = vld [vmem:[#allocation2 + $0x3e] sm:$0xff]
      %v2254 = vld [vmem:[#allocation2 + $0x46] sm:$0xff]
      %v2255 = vld [vmem:[#allocation2 + $0x4e] sm:$0xff]
      %v2256 = vld [vmem:[#allocation2 + $0x56] sm:$0xff]
      %v2257 = vld [vmem:[#allocation2 + $0x5e] sm:$0xff]
      %v2258 = vld [vmem:[#allocation2 + $0x66] sm:$0xff]
      %v2259 = vld [vmem:[#allocation2 + $0x6e] sm:$0xff]
      %v2260 = vld [vmem:[#allocation2 + $0x76] sm:$0xff]
      %v2261 = vld [vmem:[#allocation2 + $0x7e] sm:$0xff]
      %v2262 = vpack.c.bf16 %v2246, %v2246
      %v2263 = vpack.c.bf16 %v2247, %v2247
      %v2264 = vpack.c.bf16 %v2248, %v2248
      %v2265 = vpack.c.bf16 %v2249, %v2249
      %v2266 = vpack.c.bf16 %v2250, %v2250
      %v2267 = vpack.c.bf16 %v2251, %v2251
      %v2268 = vpack.c.bf16 %v2252, %v2252
      %v2269 = vpack.c.bf16 %v2253, %v2253
      %v2270 = vpack.c.bf16 %v2254, %v2254
      %v2271 = vpack.c.bf16 %v2255, %v2255
      %v2272 = vpack.c.bf16 %v2256, %v2256
      %v2273 = vpack.c.bf16 %v2257, %v2257
      %v2274 = vpack.c.bf16 %v2258, %v2258
      %v2275 = vpack.c.bf16 %v2259, %v2259
      %v2276 = vpack.c.bf16 %v2260, %v2260
      %v2277 = vpack.c.bf16 %v2261, %v2261
      %2294 = vrot.lane.b32.xlu0 %v2262, 64
      %v2295 = vpop.permute.xlu0 %2294
      %2296 = vrot.lane.b32.xlu0 %v2263, 64
      %v2297 = vpop.permute.xlu0 %2296
      %2298 = vrot.lane.b32.xlu0 %v2264, 64
      %v2299 = vpop.permute.xlu0 %2298
      %2300 = vrot.lane.b32.xlu0 %v2265, 64
      %v2301 = vpop.permute.xlu0 %2300
      %2302 = vrot.lane.b32.xlu0 %v2266, 64
      %v2303 = vpop.permute.xlu0 %2302
      %2304 = vrot.lane.b32.xlu0 %v2267, 64
      %v2305 = vpop.permute.xlu0 %2304
      %2306 = vrot.lane.b32.xlu0 %v2268, 64
      %v2307 = vpop.permute.xlu0 %2306
      %2308 = vrot.lane.b32.xlu0 %v2269, 64
      %v2309 = vpop.permute.xlu0 %2308
      %2310 = vrot.lane.b32.xlu0 %v2270, 64
      %v2311 = vpop.permute.xlu0 %2310
      %2312 = vrot.lane.b32.xlu0 %v2271, 64
      %v2313 = vpop.permute.xlu0 %2312
      %2314 = vrot.lane.b32.xlu0 %v2272, 64
      %v2315 = vpop.permute.xlu0 %2314
      %2316 = vrot.lane.b32.xlu0 %v2273, 64
      %v2317 = vpop.permute.xlu0 %2316
      %2318 = vrot.lane.b32.xlu0 %v2274, 64
      %v2319 = vpop.permute.xlu0 %2318
      %2320 = vrot.lane.b32.xlu0 %v2275, 64
      %v2321 = vpop.permute.xlu0 %2320
      %2322 = vrot.lane.b32.xlu0 %v2276, 64
      %v2323 = vpop.permute.xlu0 %2322
      %2324 = vrot.lane.b32.xlu0 %v2277, 64
      %v2325 = vpop.permute.xlu0 %2324
      %2342 = vst.msk [vmem:[#allocation3] sm:$0xf] %vm1005, %v2295
      %2343 = vst.msk [vmem:[#allocation3 + $0xc] sm:$0xf] %vm1005, %v2297
      %2344 = vst.msk [vmem:[#allocation3 + $0x18] sm:$0xf] %vm1005, %v2299
      %2345 = vst.msk [vmem:[#allocation3 + $0x24] sm:$0xf] %vm1005, %v2301
      %2346 = vst.msk [vmem:[#allocation3 + $0x30] sm:$0xf] %vm1005, %v2303
      %2347 = vst.msk [vmem:[#allocation3 + $0x3c] sm:$0xf] %vm1005, %v2305
      %2348 = vst.msk [vmem:[#allocation3 + $0x48] sm:$0xf] %vm1005, %v2307
      %2349 = vst.msk [vmem:[#allocation3 + $0x54] sm:$0xf] %vm1005, %v2309
      %2350 = vst.msk [vmem:[#allocation3 + $0x60] sm:$0xf] %vm1005, %v2311
      %2351 = vst.msk [vmem:[#allocation3 + $0x6c] sm:$0xf] %vm1005, %v2313
      %2352 = vst.msk [vmem:[#allocation3 + $0x78] sm:$0xf] %vm1005, %v2315
      %2353 = vst.msk [vmem:[#allocation3 + $0x84] sm:$0xf] %vm1005, %v2317
      %2354 = vst.msk [vmem:[#allocation3 + $0x90] sm:$0xf] %vm1005, %v2319
      %2355 = vst.msk [vmem:[#allocation3 + $0x9c] sm:$0xf] %vm1005, %v2321
      %2356 = vst.msk [vmem:[#allocation3 + $0xa8] sm:$0xf] %vm1005, %v2323
      %2357 = vst.msk [vmem:[#allocation3 + $0xb4] sm:$0xf] %vm1005, %v2325
      %v2358 = vld [vmem:[#allocation2 + $0xf] sm:$0xff]
      %v2359 = vld [vmem:[#allocation2 + $0x17] sm:$0xff]
      %v2360 = vld [vmem:[#allocation2 + $0x1f] sm:$0xff]
      %v2361 = vld [vmem:[#allocation2 + $0x27] sm:$0xff]
      %v2362 = vld [vmem:[#allocation2 + $0x2f] sm:$0xff]
      %v2363 = vld [vmem:[#allocation2 + $0x37] sm:$0xff]
      %v2364 = vld [vmem:[#allocation2 + $0x3f] sm:$0xff]
      %v2365 = vld [vmem:[#allocation2 + $0x47] sm:$0xff]
      %v2366 = vld [vmem:[#allocation2 + $0x4f] sm:$0xff]
      %v2367 = vld [vmem:[#allocation2 + $0x57] sm:$0xff]
      %v2368 = vld [vmem:[#allocation2 + $0x5f] sm:$0xff]
      %v2369 = vld [vmem:[#allocation2 + $0x67] sm:$0xff]
      %v2370 = vld [vmem:[#allocation2 + $0x6f] sm:$0xff]
      %v2371 = vld [vmem:[#allocation2 + $0x77] sm:$0xff]
      %v2372 = vld [vmem:[#allocation2 + $0x7f] sm:$0xff]
      %v2373 = vld [vmem:[#allocation2 + $0x87] sm:$0xff]
      %v2374 = vpack.c.bf16 %v2358, %v2358
      %v2375 = vpack.c.bf16 %v2359, %v2359
      %v2376 = vpack.c.bf16 %v2360, %v2360
      %v2377 = vpack.c.bf16 %v2361, %v2361
      %v2378 = vpack.c.bf16 %v2362, %v2362
      %v2379 = vpack.c.bf16 %v2363, %v2363
      %v2380 = vpack.c.bf16 %v2364, %v2364
      %v2381 = vpack.c.bf16 %v2365, %v2365
      %v2382 = vpack.c.bf16 %v2366, %v2366
      %v2383 = vpack.c.bf16 %v2367, %v2367
      %v2384 = vpack.c.bf16 %v2368, %v2368
      %v2385 = vpack.c.bf16 %v2369, %v2369
      %v2386 = vpack.c.bf16 %v2370, %v2370
      %v2387 = vpack.c.bf16 %v2371, %v2371
      %v2388 = vpack.c.bf16 %v2372, %v2372
      %v2389 = vpack.c.bf16 %v2373, %v2373
      %2406 = vrot.lane.b32.xlu0 %v2374, 96
      %v2407 = vpop.permute.xlu0 %2406
      %2408 = vrot.lane.b32.xlu0 %v2375, 96
      %v2409 = vpop.permute.xlu0 %2408
      %2410 = vrot.lane.b32.xlu0 %v2376, 96
      %v2411 = vpop.permute.xlu0 %2410
      %2412 = vrot.lane.b32.xlu0 %v2377, 96
      %v2413 = vpop.permute.xlu0 %2412
      %2414 = vrot.lane.b32.xlu0 %v2378, 96
      %v2415 = vpop.permute.xlu0 %2414
      %2416 = vrot.lane.b32.xlu0 %v2379, 96
      %v2417 = vpop.permute.xlu0 %2416
      %2418 = vrot.lane.b32.xlu0 %v2380, 96
      %v2419 = vpop.permute.xlu0 %2418
      %2420 = vrot.lane.b32.xlu0 %v2381, 96
      %v2421 = vpop.permute.xlu0 %2420
      %2422 = vrot.lane.b32.xlu0 %v2382, 96
      %v2423 = vpop.permute.xlu0 %2422
      %2424 = vrot.lane.b32.xlu0 %v2383, 96
      %v2425 = vpop.permute.xlu0 %2424
      %2426 = vrot.lane.b32.xlu0 %v2384, 96
      %v2427 = vpop.permute.xlu0 %2426
      %2428 = vrot.lane.b32.xlu0 %v2385, 96
      %v2429 = vpop.permute.xlu0 %2428
      %2430 = vrot.lane.b32.xlu0 %v2386, 96
      %v2431 = vpop.permute.xlu0 %2430
      %2432 = vrot.lane.b32.xlu0 %v2387, 96
      %v2433 = vpop.permute.xlu0 %2432
      %2434 = vrot.lane.b32.xlu0 %v2388, 96
      %v2435 = vpop.permute.xlu0 %2434
      %2436 = vrot.lane.b32.xlu0 %v2389, 96
      %v2437 = vpop.permute.xlu0 %2436
      %2454 = vst.msk [vmem:[#allocation3] sm:$0xf] %vm1118, %v2407
      %2455 = vst.msk [vmem:[#allocation3 + $0xc] sm:$0xf] %vm1118, %v2409
      %2456 = vst.msk [vmem:[#allocation3 + $0x18] sm:$0xf] %vm1118, %v2411
      %2457 = vst.msk [vmem:[#allocation3 + $0x24] sm:$0xf] %vm1118, %v2413
      %2458 = vst.msk [vmem:[#allocation3 + $0x30] sm:$0xf] %vm1118, %v2415
      %2459 = vst.msk [vmem:[#allocation3 + $0x3c] sm:$0xf] %vm1118, %v2417
      %2460 = vst.msk [vmem:[#allocation3 + $0x48] sm:$0xf] %vm1118, %v2419
      %2461 = vst.msk [vmem:[#allocation3 + $0x54] sm:$0xf] %vm1118, %v2421
      %2462 = vst.msk [vmem:[#allocation3 + $0x60] sm:$0xf] %vm1118, %v2423
      %2463 = vst.msk [vmem:[#allocation3 + $0x6c] sm:$0xf] %vm1118, %v2425
      %2464 = vst.msk [vmem:[#allocation3 + $0x78] sm:$0xf] %vm1118, %v2427
      %2465 = vst.msk [vmem:[#allocation3 + $0x84] sm:$0xf] %vm1118, %v2429
      %2466 = vst.msk [vmem:[#allocation3 + $0x90] sm:$0xf] %vm1118, %v2431
      %2467 = vst.msk [vmem:[#allocation3 + $0x9c] sm:$0xf] %vm1118, %v2433
      %2468 = vst.msk [vmem:[#allocation3 + $0xa8] sm:$0xf] %vm1118, %v2435
      %2469 = vst.msk [vmem:[#allocation3 + $0xb4] sm:$0xf] %vm1118, %v2437
      %v2470 = vld [vmem:[#allocation2 + $0x10] sm:$0xff]
      %v2471 = vld [vmem:[#allocation2 + $0x18] sm:$0xff]
      %v2472 = vld [vmem:[#allocation2 + $0x20] sm:$0xff]
      %v2473 = vld [vmem:[#allocation2 + $0x28] sm:$0xff]
      %v2474 = vld [vmem:[#allocation2 + $0x30] sm:$0xff]
      %v2475 = vld [vmem:[#allocation2 + $0x38] sm:$0xff]
      %v2476 = vld [vmem:[#allocation2 + $0x40] sm:$0xff]
      %v2477 = vld [vmem:[#allocation2 + $0x48] sm:$0xff]
      %v2478 = vld [vmem:[#allocation2 + $0x50] sm:$0xff]
      %v2479 = vld [vmem:[#allocation2 + $0x58] sm:$0xff]
      %v2480 = vld [vmem:[#allocation2 + $0x60] sm:$0xff]
      %v2481 = vld [vmem:[#allocation2 + $0x68] sm:$0xff]
      %v2482 = vld [vmem:[#allocation2 + $0x70] sm:$0xff]
      %v2483 = vld [vmem:[#allocation2 + $0x78] sm:$0xff]
      %v2484 = vld [vmem:[#allocation2 + $0x80] sm:$0xff]
      %v2485 = vld [vmem:[#allocation2 + $0x88] sm:$0xff]
      %v2486 = vpack.c.bf16 %v2470, %v2470
      %v2487 = vpack.c.bf16 %v2471, %v2471
      %v2488 = vpack.c.bf16 %v2472, %v2472
      %v2489 = vpack.c.bf16 %v2473, %v2473
      %v2490 = vpack.c.bf16 %v2474, %v2474
      %v2491 = vpack.c.bf16 %v2475, %v2475
      %v2492 = vpack.c.bf16 %v2476, %v2476
      %v2493 = vpack.c.bf16 %v2477, %v2477
      %v2494 = vpack.c.bf16 %v2478, %v2478
      %v2495 = vpack.c.bf16 %v2479, %v2479
      %v2496 = vpack.c.bf16 %v2480, %v2480
      %v2497 = vpack.c.bf16 %v2481, %v2481
      %v2498 = vpack.c.bf16 %v2482, %v2482
      %v2499 = vpack.c.bf16 %v2483, %v2483
      %v2500 = vpack.c.bf16 %v2484, %v2484
      %v2501 = vpack.c.bf16 %v2485, %v2485
      %2502 = vst.msk [vmem:[#allocation3 + $0x4] sm:$0xf] %vm779, %v2486
      %2503 = vst.msk [vmem:[#allocation3 + $0x10] sm:$0xf] %vm779, %v2487
      %2504 = vst.msk [vmem:[#allocation3 + $0x1c] sm:$0xf] %vm779, %v2488
      %2505 = vst.msk [vmem:[#allocation3 + $0x28] sm:$0xf] %vm779, %v2489
      %2506 = vst.msk [vmem:[#allocation3 + $0x34] sm:$0xf] %vm779, %v2490
      %2507 = vst.msk [vmem:[#allocation3 + $0x40] sm:$0xf] %vm779, %v2491
      %2508 = vst.msk [vmem:[#allocation3 + $0x4c] sm:$0xf] %vm779, %v2492
      %2509 = vst.msk [vmem:[#allocation3 + $0x58] sm:$0xf] %vm779, %v2493
      %2510 = vst.msk [vmem:[#allocation3 + $0x64] sm:$0xf] %vm779, %v2494
      %2511 = vst.msk [vmem:[#allocation3 + $0x70] sm:$0xf] %vm779, %v2495
      %2512 = vst.msk [vmem:[#allocation3 + $0x7c] sm:$0xf] %vm779, %v2496
      %2513 = vst.msk [vmem:[#allocation3 + $0x88] sm:$0xf] %vm779, %v2497
      %2514 = vst.msk [vmem:[#allocation3 + $0x94] sm:$0xf] %vm779, %v2498
      %2515 = vst.msk [vmem:[#allocation3 + $0xa0] sm:$0xf] %vm779, %v2499
      %2516 = vst.msk [vmem:[#allocation3 + $0xac] sm:$0xf] %vm779, %v2500
      %2517 = vst.msk [vmem:[#allocation3 + $0xb8] sm:$0xf] %vm779, %v2501
      %v2518 = vld [vmem:[#allocation2 + $0x11] sm:$0xff]
      %v2519 = vld [vmem:[#allocation2 + $0x19] sm:$0xff]
      %v2520 = vld [vmem:[#allocation2 + $0x21] sm:$0xff]
      %v2521 = vld [vmem:[#allocation2 + $0x29] sm:$0xff]
      %v2522 = vld [vmem:[#allocation2 + $0x31] sm:$0xff]
      %v2523 = vld [vmem:[#allocation2 + $0x39] sm:$0xff]
      %v2524 = vld [vmem:[#allocation2 + $0x41] sm:$0xff]
      %v2525 = vld [vmem:[#allocation2 + $0x49] sm:$0xff]
      %v2526 = vld [vmem:[#allocation2 + $0x51] sm:$0xff]
      %v2527 = vld [vmem:[#allocation2 + $0x59] sm:$0xff]
      %v2528 = vld [vmem:[#allocation2 + $0x61] sm:$0xff]
      %v2529 = vld [vmem:[#allocation2 + $0x69] sm:$0xff]
      %v2530 = vld [vmem:[#allocation2 + $0x71] sm:$0xff]
      %v2531 = vld [vmem:[#allocation2 + $0x79] sm:$0xff]
      %v2532 = vld [vmem:[#allocation2 + $0x81] sm:$0xff]
      %v2533 = vld [vmem:[#allocation2 + $0x89] sm:$0xff]
      %v2534 = vpack.c.bf16 %v2518, %v2518
      %v2535 = vpack.c.bf16 %v2519, %v2519
      %v2536 = vpack.c.bf16 %v2520, %v2520
      %v2537 = vpack.c.bf16 %v2521, %v2521
      %v2538 = vpack.c.bf16 %v2522, %v2522
      %v2539 = vpack.c.bf16 %v2523, %v2523
      %v2540 = vpack.c.bf16 %v2524, %v2524
      %v2541 = vpack.c.bf16 %v2525, %v2525
      %v2542 = vpack.c.bf16 %v2526, %v2526
      %v2543 = vpack.c.bf16 %v2527, %v2527
      %v2544 = vpack.c.bf16 %v2528, %v2528
      %v2545 = vpack.c.bf16 %v2529, %v2529
      %v2546 = vpack.c.bf16 %v2530, %v2530
      %v2547 = vpack.c.bf16 %v2531, %v2531
      %v2548 = vpack.c.bf16 %v2532, %v2532
      %v2549 = vpack.c.bf16 %v2533, %v2533
      %2566 = vrot.lane.b32.xlu0 %v2534, 32
      %v2567 = vpop.permute.xlu0 %2566
      %2568 = vrot.lane.b32.xlu0 %v2535, 32
      %v2569 = vpop.permute.xlu0 %2568
      %2570 = vrot.lane.b32.xlu0 %v2536, 32
      %v2571 = vpop.permute.xlu0 %2570
      %2572 = vrot.lane.b32.xlu0 %v2537, 32
      %v2573 = vpop.permute.xlu0 %2572
      %2574 = vrot.lane.b32.xlu0 %v2538, 32
      %v2575 = vpop.permute.xlu0 %2574
      %2576 = vrot.lane.b32.xlu0 %v2539, 32
      %v2577 = vpop.permute.xlu0 %2576
      %2578 = vrot.lane.b32.xlu0 %v2540, 32
      %v2579 = vpop.permute.xlu0 %2578
      %2580 = vrot.lane.b32.xlu0 %v2541, 32
      %v2581 = vpop.permute.xlu0 %2580
      %2582 = vrot.lane.b32.xlu0 %v2542, 32
      %v2583 = vpop.permute.xlu0 %2582
      %2584 = vrot.lane.b32.xlu0 %v2543, 32
      %v2585 = vpop.permute.xlu0 %2584
      %2586 = vrot.lane.b32.xlu0 %v2544, 32
      %v2587 = vpop.permute.xlu0 %2586
      %2588 = vrot.lane.b32.xlu0 %v2545, 32
      %v2589 = vpop.permute.xlu0 %2588
      %2590 = vrot.lane.b32.xlu0 %v2546, 32
      %v2591 = vpop.permute.xlu0 %2590
      %2592 = vrot.lane.b32.xlu0 %v2547, 32
      %v2593 = vpop.permute.xlu0 %2592
      %2594 = vrot.lane.b32.xlu0 %v2548, 32
      %v2595 = vpop.permute.xlu0 %2594
      %2596 = vrot.lane.b32.xlu0 %v2549, 32
      %v2597 = vpop.permute.xlu0 %2596
      %2614 = vst.msk [vmem:[#allocation3 + $0x4] sm:$0xf] %vm892, %v2567
      %2615 = vst.msk [vmem:[#allocation3 + $0x10] sm:$0xf] %vm892, %v2569
      %2616 = vst.msk [vmem:[#allocation3 + $0x1c] sm:$0xf] %vm892, %v2571
      %2617 = vst.msk [vmem:[#allocation3 + $0x28] sm:$0xf] %vm892, %v2573
      %2618 = vst.msk [vmem:[#allocation3 + $0x34] sm:$0xf] %vm892, %v2575
      %2619 = vst.msk [vmem:[#allocation3 + $0x40] sm:$0xf] %vm892, %v2577
      %2620 = vst.msk [vmem:[#allocation3 + $0x4c] sm:$0xf] %vm892, %v2579
      %2621 = vst.msk [vmem:[#allocation3 + $0x58] sm:$0xf] %vm892, %v2581
      %2622 = vst.msk [vmem:[#allocation3 + $0x64] sm:$0xf] %vm892, %v2583
      %2623 = vst.msk [vmem:[#allocation3 + $0x70] sm:$0xf] %vm892, %v2585
      %2624 = vst.msk [vmem:[#allocation3 + $0x7c] sm:$0xf] %vm892, %v2587
      %2625 = vst.msk [vmem:[#allocation3 + $0x88] sm:$0xf] %vm892, %v2589
      %2626 = vst.msk [vmem:[#allocation3 + $0x94] sm:$0xf] %vm892, %v2591
      %2627 = vst.msk [vmem:[#allocation3 + $0xa0] sm:$0xf] %vm892, %v2593
      %2628 = vst.msk [vmem:[#allocation3 + $0xac] sm:$0xf] %vm892, %v2595
      %2629 = vst.msk [vmem:[#allocation3 + $0xb8] sm:$0xf] %vm892, %v2597
      %v2630 = vld [vmem:[#allocation2 + $0x1a] sm:$0xff]
      %v2631 = vld [vmem:[#allocation2 + $0x22] sm:$0xff]
      %v2632 = vld [vmem:[#allocation2 + $0x2a] sm:$0xff]
      %v2633 = vld [vmem:[#allocation2 + $0x32] sm:$0xff]
      %v2634 = vld [vmem:[#allocation2 + $0x3a] sm:$0xff]
      %v2635 = vld [vmem:[#allocation2 + $0x42] sm:$0xff]
      %v2636 = vld [vmem:[#allocation2 + $0x4a] sm:$0xff]
      %v2637 = vld [vmem:[#allocation2 + $0x52] sm:$0xff]
      %v2638 = vld [vmem:[#allocation2 + $0x5a] sm:$0xff]
      %v2639 = vld [vmem:[#allocation2 + $0x62] sm:$0xff]
      %v2640 = vld [vmem:[#allocation2 + $0x6a] sm:$0xff]
      %v2641 = vld [vmem:[#allocation2 + $0x72] sm:$0xff]
      %v2642 = vld [vmem:[#allocation2 + $0x7a] sm:$0xff]
      %v2643 = vld [vmem:[#allocation2 + $0x82] sm:$0xff]
      %v2644 = vld [vmem:[#allocation2 + $0x8a] sm:$0xff]
      %v2645 = vld [vmem:[#allocation2 + $0x92] sm:$0xff]
      %v2646 = vpack.c.bf16 %v2630, %v2630
      %v2647 = vpack.c.bf16 %v2631, %v2631
      %v2648 = vpack.c.bf16 %v2632, %v2632
      %v2649 = vpack.c.bf16 %v2633, %v2633
      %v2650 = vpack.c.bf16 %v2634, %v2634
      %v2651 = vpack.c.bf16 %v2635, %v2635
      %v2652 = vpack.c.bf16 %v2636, %v2636
      %v2653 = vpack.c.bf16 %v2637, %v2637
      %v2654 = vpack.c.bf16 %v2638, %v2638
      %v2655 = vpack.c.bf16 %v2639, %v2639
      %v2656 = vpack.c.bf16 %v2640, %v2640
      %v2657 = vpack.c.bf16 %v2641, %v2641
      %v2658 = vpack.c.bf16 %v2642, %v2642
      %v2659 = vpack.c.bf16 %v2643, %v2643
      %v2660 = vpack.c.bf16 %v2644, %v2644
      %v2661 = vpack.c.bf16 %v2645, %v2645
      %2678 = vrot.lane.b32.xlu0 %v2646, 64
      %v2679 = vpop.permute.xlu0 %2678
      %2680 = vrot.lane.b32.xlu0 %v2647, 64
      %v2681 = vpop.permute.xlu0 %2680
      %2682 = vrot.lane.b32.xlu0 %v2648, 64
      %v2683 = vpop.permute.xlu0 %2682
      %2684 = vrot.lane.b32.xlu0 %v2649, 64
      %v2685 = vpop.permute.xlu0 %2684
      %2686 = vrot.lane.b32.xlu0 %v2650, 64
      %v2687 = vpop.permute.xlu0 %2686
      %2688 = vrot.lane.b32.xlu0 %v2651, 64
      %v2689 = vpop.permute.xlu0 %2688
      %2690 = vrot.lane.b32.xlu0 %v2652, 64
      %v2691 = vpop.permute.xlu0 %2690
      %2692 = vrot.lane.b32.xlu0 %v2653, 64
      %v2693 = vpop.permute.xlu0 %2692
      %2694 = vrot.lane.b32.xlu0 %v2654, 64
      %v2695 = vpop.permute.xlu0 %2694
      %2696 = vrot.lane.b32.xlu0 %v2655, 64
      %v2697 = vpop.permute.xlu0 %2696
      %2698 = vrot.lane.b32.xlu0 %v2656, 64
      %v2699 = vpop.permute.xlu0 %2698
      %2700 = vrot.lane.b32.xlu0 %v2657, 64
      %v2701 = vpop.permute.xlu0 %2700
      %2702 = vrot.lane.b32.xlu0 %v2658, 64
      %v2703 = vpop.permute.xlu0 %2702
      %2704 = vrot.lane.b32.xlu0 %v2659, 64
      %v2705 = vpop.permute.xlu0 %2704
      %2706 = vrot.lane.b32.xlu0 %v2660, 64
      %v2707 = vpop.permute.xlu0 %2706
      %2708 = vrot.lane.b32.xlu0 %v2661, 64
      %v2709 = vpop.permute.xlu0 %2708
      %2726 = vst.msk [vmem:[#allocation3 + $0x4] sm:$0xf] %vm1005, %v2679
      %2727 = vst.msk [vmem:[#allocation3 + $0x10] sm:$0xf] %vm1005, %v2681
      %2728 = vst.msk [vmem:[#allocation3 + $0x1c] sm:$0xf] %vm1005, %v2683
      %2729 = vst.msk [vmem:[#allocation3 + $0x28] sm:$0xf] %vm1005, %v2685
      %2730 = vst.msk [vmem:[#allocation3 + $0x34] sm:$0xf] %vm1005, %v2687
      %2731 = vst.msk [vmem:[#allocation3 + $0x40] sm:$0xf] %vm1005, %v2689
      %2732 = vst.msk [vmem:[#allocation3 + $0x4c] sm:$0xf] %vm1005, %v2691
      %2733 = vst.msk [vmem:[#allocation3 + $0x58] sm:$0xf] %vm1005, %v2693
      %2734 = vst.msk [vmem:[#allocation3 + $0x64] sm:$0xf] %vm1005, %v2695
      %2735 = vst.msk [vmem:[#allocation3 + $0x70] sm:$0xf] %vm1005, %v2697
      %2736 = vst.msk [vmem:[#allocation3 + $0x7c] sm:$0xf] %vm1005, %v2699
      %2737 = vst.msk [vmem:[#allocation3 + $0x88] sm:$0xf] %vm1005, %v2701
      %2738 = vst.msk [vmem:[#allocation3 + $0x94] sm:$0xf] %vm1005, %v2703
      %2739 = vst.msk [vmem:[#allocation3 + $0xa0] sm:$0xf] %vm1005, %v2705
      %2740 = vst.msk [vmem:[#allocation3 + $0xac] sm:$0xf] %vm1005, %v2707
      %2741 = vst.msk [vmem:[#allocation3 + $0xb8] sm:$0xf] %vm1005, %v2709
      %v2742 = vld [vmem:[#allocation2 + $0x1b] sm:$0xff]
      %v2743 = vld [vmem:[#allocation2 + $0x23] sm:$0xff]
      %v2744 = vld [vmem:[#allocation2 + $0x2b] sm:$0xff]
      %v2745 = vld [vmem:[#allocation2 + $0x33] sm:$0xff]
      %v2746 = vld [vmem:[#allocation2 + $0x3b] sm:$0xff]
      %v2747 = vld [vmem:[#allocation2 + $0x43] sm:$0xff]
      %v2748 = vld [vmem:[#allocation2 + $0x4b] sm:$0xff]
      %v2749 = vld [vmem:[#allocation2 + $0x53] sm:$0xff]
      %v2750 = vld [vmem:[#allocation2 + $0x5b] sm:$0xff]
      %v2751 = vld [vmem:[#allocation2 + $0x63] sm:$0xff]
      %v2752 = vld [vmem:[#allocation2 + $0x6b] sm:$0xff]
      %v2753 = vld [vmem:[#allocation2 + $0x73] sm:$0xff]
      %v2754 = vld [vmem:[#allocation2 + $0x7b] sm:$0xff]
      %v2755 = vld [vmem:[#allocation2 + $0x83] sm:$0xff]
      %v2756 = vld [vmem:[#allocation2 + $0x8b] sm:$0xff]
      %v2757 = vld [vmem:[#allocation2 + $0x93] sm:$0xff]
      %v2758 = vpack.c.bf16 %v2742, %v2742
      %v2759 = vpack.c.bf16 %v2743, %v2743
      %v2760 = vpack.c.bf16 %v2744, %v2744
      %v2761 = vpack.c.bf16 %v2745, %v2745
      %v2762 = vpack.c.bf16 %v2746, %v2746
      %v2763 = vpack.c.bf16 %v2747, %v2747
      %v2764 = vpack.c.bf16 %v2748, %v2748
      %v2765 = vpack.c.bf16 %v2749, %v2749
      %v2766 = vpack.c.bf16 %v2750, %v2750
      %v2767 = vpack.c.bf16 %v2751, %v2751
      %v2768 = vpack.c.bf16 %v2752, %v2752
      %v2769 = vpack.c.bf16 %v2753, %v2753
      %v2770 = vpack.c.bf16 %v2754, %v2754
      %v2771 = vpack.c.bf16 %v2755, %v2755
      %v2772 = vpack.c.bf16 %v2756, %v2756
      %v2773 = vpack.c.bf16 %v2757, %v2757
      %2790 = vrot.lane.b32.xlu0 %v2758, 96
      %v2791 = vpop.permute.xlu0 %2790
      %2792 = vrot.lane.b32.xlu0 %v2759, 96
      %v2793 = vpop.permute.xlu0 %2792
      %2794 = vrot.lane.b32.xlu0 %v2760, 96
      %v2795 = vpop.permute.xlu0 %2794
      %2796 = vrot.lane.b32.xlu0 %v2761, 96
      %v2797 = vpop.permute.xlu0 %2796
      %2798 = vrot.lane.b32.xlu0 %v2762, 96
      %v2799 = vpop.permute.xlu0 %2798
      %2800 = vrot.lane.b32.xlu0 %v2763, 96
      %v2801 = vpop.permute.xlu0 %2800
      %2802 = vrot.lane.b32.xlu0 %v2764, 96
      %v2803 = vpop.permute.xlu0 %2802
      %2804 = vrot.lane.b32.xlu0 %v2765, 96
      %v2805 = vpop.permute.xlu0 %2804
      %2806 = vrot.lane.b32.xlu0 %v2766, 96
      %v2807 = vpop.permute.xlu0 %2806
      %2808 = vrot.lane.b32.xlu0 %v2767, 96
      %v2809 = vpop.permute.xlu0 %2808
      %2810 = vrot.lane.b32.xlu0 %v2768, 96
      %v2811 = vpop.permute.xlu0 %2810
      %2812 = vrot.lane.b32.xlu0 %v2769, 96
      %v2813 = vpop.permute.xlu0 %2812
      %2814 = vrot.lane.b32.xlu0 %v2770, 96
      %v2815 = vpop.permute.xlu0 %2814
      %2816 = vrot.lane.b32.xlu0 %v2771, 96
      %v2817 = vpop.permute.xlu0 %2816
      %2818 = vrot.lane.b32.xlu0 %v2772, 96
      %v2819 = vpop.permute.xlu0 %2818
      %2820 = vrot.lane.b32.xlu0 %v2773, 96
      %v2821 = vpop.permute.xlu0 %2820
      %2838 = vst.msk [vmem:[#allocation3 + $0x4] sm:$0xf] %vm1118, %v2791
      %2839 = vst.msk [vmem:[#allocation3 + $0x10] sm:$0xf] %vm1118, %v2793
      %2840 = vst.msk [vmem:[#allocation3 + $0x1c] sm:$0xf] %vm1118, %v2795
      %2841 = vst.msk [vmem:[#allocation3 + $0x28] sm:$0xf] %vm1118, %v2797
      %2842 = vst.msk [vmem:[#allocation3 + $0x34] sm:$0xf] %vm1118, %v2799
      %2843 = vst.msk [vmem:[#allocation3 + $0x40] sm:$0xf] %vm1118, %v2801
      %2844 = vst.msk [vmem:[#allocation3 + $0x4c] sm:$0xf] %vm1118, %v2803
      %2845 = vst.msk [vmem:[#allocation3 + $0x58] sm:$0xf] %vm1118, %v2805
      %2846 = vst.msk [vmem:[#allocation3 + $0x64] sm:$0xf] %vm1118, %v2807
      %2847 = vst.msk [vmem:[#allocation3 + $0x70] sm:$0xf] %vm1118, %v2809
      %2848 = vst.msk [vmem:[#allocation3 + $0x7c] sm:$0xf] %vm1118, %v2811
      %2849 = vst.msk [vmem:[#allocation3 + $0x88] sm:$0xf] %vm1118, %v2813
      %2850 = vst.msk [vmem:[#allocation3 + $0x94] sm:$0xf] %vm1118, %v2815
      %2851 = vst.msk [vmem:[#allocation3 + $0xa0] sm:$0xf] %vm1118, %v2817
      %2852 = vst.msk [vmem:[#allocation3 + $0xac] sm:$0xf] %vm1118, %v2819
      %2853 = vst.msk [vmem:[#allocation3 + $0xb8] sm:$0xf] %vm1118, %v2821
      %v2854 = vld [vmem:[#allocation2 + $0x1c] sm:$0xff]
      %v2855 = vld [vmem:[#allocation2 + $0x24] sm:$0xff]
      %v2856 = vld [vmem:[#allocation2 + $0x2c] sm:$0xff]
      %v2857 = vld [vmem:[#allocation2 + $0x34] sm:$0xff]
      %v2858 = vld [vmem:[#allocation2 + $0x3c] sm:$0xff]
      %v2859 = vld [vmem:[#allocation2 + $0x44] sm:$0xff]
      %v2860 = vld [vmem:[#allocation2 + $0x4c] sm:$0xff]
      %v2861 = vld [vmem:[#allocation2 + $0x54] sm:$0xff]
      %v2862 = vld [vmem:[#allocation2 + $0x5c] sm:$0xff]
      %v2863 = vld [vmem:[#allocation2 + $0x64] sm:$0xff]
      %v2864 = vld [vmem:[#allocation2 + $0x6c] sm:$0xff]
      %v2865 = vld [vmem:[#allocation2 + $0x74] sm:$0xff]
      %v2866 = vld [vmem:[#allocation2 + $0x7c] sm:$0xff]
      %v2867 = vld [vmem:[#allocation2 + $0x84] sm:$0xff]
      %v2868 = vld [vmem:[#allocation2 + $0x8c] sm:$0xff]
      %v2869 = vld [vmem:[#allocation2 + $0x94] sm:$0xff]
      %v2870 = vpack.c.bf16 %v2854, %v2854
      %v2871 = vpack.c.bf16 %v2855, %v2855
      %v2872 = vpack.c.bf16 %v2856, %v2856
      %v2873 = vpack.c.bf16 %v2857, %v2857
      %v2874 = vpack.c.bf16 %v2858, %v2858
      %v2875 = vpack.c.bf16 %v2859, %v2859
      %v2876 = vpack.c.bf16 %v2860, %v2860
      %v2877 = vpack.c.bf16 %v2861, %v2861
      %v2878 = vpack.c.bf16 %v2862, %v2862
      %v2879 = vpack.c.bf16 %v2863, %v2863
      %v2880 = vpack.c.bf16 %v2864, %v2864
      %v2881 = vpack.c.bf16 %v2865, %v2865
      %v2882 = vpack.c.bf16 %v2866, %v2866
      %v2883 = vpack.c.bf16 %v2867, %v2867
      %v2884 = vpack.c.bf16 %v2868, %v2868
      %v2885 = vpack.c.bf16 %v2869, %v2869
      %2886 = vst.msk [vmem:[#allocation3 + $0x8] sm:$0xf] %vm779, %v2870
      %2887 = vst.msk [vmem:[#allocation3 + $0x14] sm:$0xf] %vm779, %v2871
      %2888 = vst.msk [vmem:[#allocation3 + $0x20] sm:$0xf] %vm779, %v2872
      %2889 = vst.msk [vmem:[#allocation3 + $0x2c] sm:$0xf] %vm779, %v2873
      %2890 = vst.msk [vmem:[#allocation3 + $0x38] sm:$0xf] %vm779, %v2874
      %2891 = vst.msk [vmem:[#allocation3 + $0x44] sm:$0xf] %vm779, %v2875
      %2892 = vst.msk [vmem:[#allocation3 + $0x50] sm:$0xf] %vm779, %v2876
      %2893 = vst.msk [vmem:[#allocation3 + $0x5c] sm:$0xf] %vm779, %v2877
      %2894 = vst.msk [vmem:[#allocation3 + $0x68] sm:$0xf] %vm779, %v2878
      %2895 = vst.msk [vmem:[#allocation3 + $0x74] sm:$0xf] %vm779, %v2879
      %2896 = vst.msk [vmem:[#allocation3 + $0x80] sm:$0xf] %vm779, %v2880
      %2897 = vst.msk [vmem:[#allocation3 + $0x8c] sm:$0xf] %vm779, %v2881
      %2898 = vst.msk [vmem:[#allocation3 + $0x98] sm:$0xf] %vm779, %v2882
      %2899 = vst.msk [vmem:[#allocation3 + $0xa4] sm:$0xf] %vm779, %v2883
      %2900 = vst.msk [vmem:[#allocation3 + $0xb0] sm:$0xf] %vm779, %v2884
      %2901 = vst.msk [vmem:[#allocation3 + $0xbc] sm:$0xf] %vm779, %v2885
      %v2902 = vld [vmem:[#allocation3] sm:$0xff]
      %v2903 = vld [vmem:[#allocation3 + $0x8] sm:$0xf]
      %v2904 = vld [vmem:[#allocation3 + $0xc] sm:$0xff]
      %v2905 = vld [vmem:[#allocation3 + $0x14] sm:$0xf]
      %v2906 = vld [vmem:[#allocation3 + $0x18] sm:$0xff]
      %v2907 = vld [vmem:[#allocation3 + $0x20] sm:$0xf]
      %v2908 = vld [vmem:[#allocation3 + $0x24] sm:$0xff]
      %v2909 = vld [vmem:[#allocation3 + $0x2c] sm:$0xf]
      %v2910 = vld [vmem:[#allocation3 + $0x30] sm:$0xff]
      %v2911 = vld [vmem:[#allocation3 + $0x38] sm:$0xf]
      %v2912 = vld [vmem:[#allocation3 + $0x3c] sm:$0xff]
      %v2913 = vld [vmem:[#allocation3 + $0x44] sm:$0xf]
      %v2914 = vld [vmem:[#allocation3 + $0x48] sm:$0xff]
      %v2915 = vld [vmem:[#allocation3 + $0x50] sm:$0xf]
      %v2916 = vld [vmem:[#allocation3 + $0x54] sm:$0xff]
      %v2917 = vld [vmem:[#allocation3 + $0x5c] sm:$0xf]
      %v2918 = vld [vmem:[#allocation3 + $0x60] sm:$0xff]
      %v2919 = vld [vmem:[#allocation3 + $0x68] sm:$0xf]
      %v2920 = vld [vmem:[#allocation3 + $0x6c] sm:$0xff]
      %v2921 = vld [vmem:[#allocation3 + $0x74] sm:$0xf]
      %v2922 = vld [vmem:[#allocation3 + $0x78] sm:$0xff]
      %v2923 = vld [vmem:[#allocation3 + $0x80] sm:$0xf]
      %v2924 = vld [vmem:[#allocation3 + $0x84] sm:$0xff]
      %v2925 = vld [vmem:[#allocation3 + $0x8c] sm:$0xf]
      %v2926 = vld [vmem:[#allocation3 + $0x90] sm:$0xff]
      %v2927 = vld [vmem:[#allocation3 + $0x98] sm:$0xf]
      %v2928 = vld [vmem:[#allocation3 + $0x9c] sm:$0xff]
      %v2929 = vld [vmem:[#allocation3 + $0xa4] sm:$0xf]
      %v2930 = vld [vmem:[#allocation3 + $0xa8] sm:$0xff]
      %v2931 = vld [vmem:[#allocation3 + $0xb0] sm:$0xf]
      %v2932 = vld [vmem:[#allocation3 + $0xb4] sm:$0xff]
      %v2933 = vld [vmem:[#allocation3 + $0xbc] sm:$0xf]
      %v2935 = vperm.slane %v2085, 0
      %v2969 = vunpack.c.l.b16 %v2902
      %v2970 = vunpack.c.h.b16 %v2902
      %v2971 = vunpack.c.l.b16 %v2903
      %v2972 = vunpack.c.l.b16 %v2904
      %v2973 = vunpack.c.h.b16 %v2904
      %v2974 = vunpack.c.l.b16 %v2905
      %v2975 = vunpack.c.l.b16 %v2906
      %v2976 = vunpack.c.h.b16 %v2906
      %v2977 = vunpack.c.l.b16 %v2907
      %v2978 = vunpack.c.l.b16 %v2908
      %v2979 = vunpack.c.h.b16 %v2908
      %v2980 = vunpack.c.l.b16 %v2909
      %v2981 = vunpack.c.l.b16 %v2910
      %v2982 = vunpack.c.h.b16 %v2910
      %v2983 = vunpack.c.l.b16 %v2911
      %v2984 = vunpack.c.l.b16 %v2912
      %v2985 = vunpack.c.h.b16 %v2912
      %v2986 = vunpack.c.l.b16 %v2913
      %v2987 = vunpack.c.l.b16 %v2914
      %v2988 = vunpack.c.h.b16 %v2914
      %v2989 = vunpack.c.l.b16 %v2915
      %v2990 = vunpack.c.l.b16 %v2916
      %v2991 = vunpack.c.h.b16 %v2916
      %v2992 = vunpack.c.l.b16 %v2917
      %v2993 = vunpack.c.l.b16 %v2918
      %v2994 = vunpack.c.h.b16 %v2918
      %v2995 = vunpack.c.l.b16 %v2919
      %v2996 = vunpack.c.l.b16 %v2920
      %v2997 = vunpack.c.h.b16 %v2920
      %v2998 = vunpack.c.l.b16 %v2921
      %v2999 = vunpack.c.l.b16 %v2922
      %v3000 = vunpack.c.h.b16 %v2922
      %v3001 = vunpack.c.l.b16 %v2923
      %v3002 = vunpack.c.l.b16 %v2924
      %v3003 = vunpack.c.h.b16 %v2924
      %v3004 = vunpack.c.l.b16 %v2925
      %v3005 = vunpack.c.l.b16 %v2926
      %v3006 = vunpack.c.h.b16 %v2926
      %v3007 = vunpack.c.l.b16 %v2927
      %v3008 = vunpack.c.l.b16 %v2928
      %v3009 = vunpack.c.h.b16 %v2928
      %v3010 = vunpack.c.l.b16 %v2929
      %v3011 = vunpack.c.l.b16 %v2930
      %v3012 = vunpack.c.h.b16 %v2930
      %v3013 = vunpack.c.l.b16 %v2931
      %v3014 = vunpack.c.l.b16 %v2932
      %v3015 = vunpack.c.h.b16 %v2932
      %v3016 = vunpack.c.l.b16 %v2933
      %v3017 = vpack.c.b16 %v2972, %v2969
      %v3018 = vpack.c.b16 %v2973, %v2970
      %v3019 = vpack.c.b16 %v2974, %v2971
      %v3020 = vpack.c.b16 %v2978, %v2975
      %v3021 = vpack.c.b16 %v2979, %v2976
      %v3022 = vpack.c.b16 %v2980, %v2977
      %v3023 = vpack.c.b16 %v2984, %v2981
      %v3024 = vpack.c.b16 %v2985, %v2982
      %v3025 = vpack.c.b16 %v2986, %v2983
      %v3026 = vpack.c.b16 %v2990, %v2987
      %v3027 = vpack.c.b16 %v2991, %v2988
      %v3028 = vpack.c.b16 %v2992, %v2989
      %v3029 = vpack.c.b16 %v2996, %v2993
      %v3030 = vpack.c.b16 %v2997, %v2994
      %v3031 = vpack.c.b16 %v2998, %v2995
      %v3032 = vpack.c.b16 %v3002, %v2999
      %v3033 = vpack.c.b16 %v3003, %v3000
      %v3034 = vpack.c.b16 %v3004, %v3001
      %v3035 = vpack.c.b16 %v3008, %v3005
      %v3036 = vpack.c.b16 %v3009, %v3006
      %v3037 = vpack.c.b16 %v3010, %v3007
      %v3038 = vpack.c.b16 %v3014, %v3011
      %v3039 = vpack.c.b16 %v3015, %v3012
      %v3040 = vpack.c.b16 %v3016, %v3013
      %v3093 = vunpack.c.l.b16 %v2049
      %v3094 = vunpack.c.l.b16 %v2050
      %v3095 = vunpack.c.l.b16 %v2051
      %v3096 = vunpack.c.l.b16 %v2052
      %v3097 = vunpack.c.l.b16 %v2053
      %v3098 = vunpack.c.l.b16 %v2054
      %v3099 = vunpack.c.l.b16 %v2055
      %v3100 = vunpack.c.l.b16 %v2056
      %v3101 = vunpack.c.l.b16 %v2057
      %v3102 = vunpack.c.l.b16 %v2058
      %v3103 = vunpack.c.l.b16 %v2059
      %v3104 = vunpack.c.l.b16 %v2060
      %v3105 = vunpack.c.l.b16 %v2061
      %v3106 = vunpack.c.l.b16 %v2062
      %v3107 = vunpack.c.l.b16 %v2063
      %v3108 = vunpack.c.l.b16 %v2064
      %v3109 = vunpack.c.l.b16 %v2065
      %v3110 = vunpack.c.l.b16 %v2066
      %v3111 = vunpack.c.l.b16 %v2067
      %v3112 = vunpack.c.l.b16 %v2068
      %v3113 = vunpack.c.l.b16 %v2069
      %v3114 = vunpack.c.l.b16 %v2070
      %v3115 = vunpack.c.l.b16 %v2071
      %v3116 = vunpack.c.l.b16 %v2072
      %v3117 = vunpack.c.l.b16 %v2073
      %v3118 = vunpack.c.l.b16 %v2074
      %v3119 = vunpack.c.l.b16 %v2075
      %v3120 = vunpack.c.l.b16 %v2076
      %v3121 = vunpack.c.l.b16 %v2077
      %v3122 = vunpack.c.l.b16 %v2078
      %v3123 = vunpack.c.l.b16 %v2079
      %v3124 = vunpack.c.l.b16 %v2080
      %v3125 = vunpack.c.l.b16 %v2081
      %v3126 = vunpack.c.l.b16 %v2082
      %v3127 = vunpack.c.l.b16 %v2083
      %v3128 = vunpack.c.l.b16 %v2084
      %v3129 = vpack.c.b16 %v3094, %v3093
      %v3130 = vpack.c.b16 %v3096, %v3095
      %v3131 = vpack.c.b16 %v3098, %v3097
      %v3132 = vpack.c.b16 %v3100, %v3099
      %v3133 = vpack.c.b16 %v3102, %v3101
      %v3134 = vpack.c.b16 %v3104, %v3103
      %v3135 = vpack.c.b16 %v3106, %v3105
      %v3136 = vpack.c.b16 %v3108, %v3107
      %v3137 = vpack.c.b16 %v3110, %v3109
      %v3138 = vpack.c.b16 %v3112, %v3111
      %v3139 = vpack.c.b16 %v3114, %v3113
      %v3140 = vpack.c.b16 %v3116, %v3115
      %v3141 = vpack.c.b16 %v3118, %v3117
      %v3142 = vpack.c.b16 %v3120, %v3119
      %v3143 = vpack.c.b16 %v3122, %v3121
      %v3144 = vpack.c.b16 %v3124, %v3123
      %v3145 = vpack.c.b16 %v3126, %v3125
      %v3146 = vpack.c.b16 %v3128, %v3127
      %v3166 = vsel %vm561, %v3019, 0
      %v3169 = vsel %vm561, %v3022, 0
      %v3172 = vsel %vm561, %v3025, 0
      %v3175 = vsel %vm561, %v3028, 0
      %v3178 = vsel %vm561, %v3031, 0
      %v3181 = vsel %vm561, %v3034, 0
      %v3184 = vsel %vm561, %v3037, 0
      %v3187 = vsel %vm561, %v3040, 0
      %3189 = vmatpush.bf16.msra.mxu0 %v3136
      %3190 = vmatpush.bf16.msra.mxu0 %v3135
      %3191 = vmatpush.bf16.msra.mxu0 %v3134
      %3192 = vmatpush.bf16.msra.mxu0 %v3133
      %3193 = vmatpush.bf16.msra.mxu0 %v3132
      %3194 = vmatpush.bf16.msra.mxu0 %v3131
      %3195 = vmatpush.bf16.msra.mxu0 %v3130
      %3196 = vmatpush.bf16.msra.mxu0 %v3129
      %3197 = vmatmul.bf16.gmra.mxu0 %v3017
      %v3198 = vpop.f32.mrf.mxu0
      %v3199 = vadd.f32 %v2935, %v3198
      %v3200 = vpop.f32.mrf.mxu0
      %v3201 = vadd.f32 %v2935, %v3200
      %3202 = vmatmul.bf16.gmra.mxu0 %v3020
      %v3203 = vpop.f32.mrf.mxu0
      %v3204 = vadd.f32 %v2935, %v3203
      %v3205 = vpop.f32.mrf.mxu0
      %v3206 = vadd.f32 %v2935, %v3205
      %3207 = vmatmul.bf16.gmra.mxu0 %v3023
      %v3208 = vpop.f32.mrf.mxu0
      %v3209 = vadd.f32 %v2935, %v3208
      %v3210 = vpop.f32.mrf.mxu0
      %v3211 = vadd.f32 %v2935, %v3210
      %3212 = vmatmul.bf16.gmra.mxu0 %v3026
      %v3213 = vpop.f32.mrf.mxu0
      %v3214 = vadd.f32 %v2935, %v3213
      %v3215 = vpop.f32.mrf.mxu0
      %v3216 = vadd.f32 %v2935, %v3215
      %3217 = vmatmul.bf16.gmra.mxu0 %v3029
      %v3218 = vpop.f32.mrf.mxu0
      %v3219 = vadd.f32 %v2935, %v3218
      %v3220 = vpop.f32.mrf.mxu0
      %v3221 = vadd.f32 %v2935, %v3220
      %3222 = vmatmul.bf16.gmra.mxu0 %v3032
      %v3223 = vpop.f32.mrf.mxu0
      %v3224 = vadd.f32 %v2935, %v3223
      %v3225 = vpop.f32.mrf.mxu0
      %v3226 = vadd.f32 %v2935, %v3225
      %3227 = vmatmul.bf16.gmra.mxu0 %v3035
      %v3228 = vpop.f32.mrf.mxu0
      %v3229 = vadd.f32 %v2935, %v3228
      %v3230 = vpop.f32.mrf.mxu0
      %v3231 = vadd.f32 %v2935, %v3230
      %3232 = vmatmul.bf16.gmra.mxu0 %v3038
      %v3233 = vpop.f32.mrf.mxu0
      %v3234 = vadd.f32 %v2935, %v3233
      %v3235 = vpop.f32.mrf.mxu0
      %v3236 = vadd.f32 %v2935, %v3235
      %3237 = vdwg.mxu0
      %3238 = vmatpush.bf16.msra.mxu0 %v3144
      %3239 = vmatpush.bf16.msra.mxu0 %v3143
      %3240 = vmatpush.bf16.msra.mxu0 %v3142
      %3241 = vmatpush.bf16.msra.mxu0 %v3141
      %3242 = vmatpush.bf16.msra.mxu0 %v3140
      %3243 = vmatpush.bf16.msra.mxu0 %v3139
      %3244 = vmatpush.bf16.msra.mxu0 %v3138
      %3245 = vmatpush.bf16.msra.mxu0 %v3137
      %3246 = vmatmul.bf16.gmra.mxu0 %v3018
      %v3247 = vpop.f32.mrf.mxu0
      %v3248 = vadd.f32 %v3199, %v3247
      %v3249 = vpop.f32.mrf.mxu0
      %v3250 = vadd.f32 %v3201, %v3249
      %3251 = vmatmul.bf16.gmra.mxu0 %v3021
      %v3252 = vpop.f32.mrf.mxu0
      %v3253 = vadd.f32 %v3204, %v3252
      %v3254 = vpop.f32.mrf.mxu0
      %v3255 = vadd.f32 %v3206, %v3254
      %3256 = vmatmul.bf16.gmra.mxu0 %v3024
      %v3257 = vpop.f32.mrf.mxu0
      %v3258 = vadd.f32 %v3209, %v3257
      %v3259 = vpop.f32.mrf.mxu0
      %v3260 = vadd.f32 %v3211, %v3259
      %3261 = vmatmul.bf16.gmra.mxu0 %v3027
      %v3262 = vpop.f32.mrf.mxu0
      %v3263 = vadd.f32 %v3214, %v3262
      %v3264 = vpop.f32.mrf.mxu0
      %v3265 = vadd.f32 %v3216, %v3264
      %3266 = vmatmul.bf16.gmra.mxu0 %v3030
      %v3267 = vpop.f32.mrf.mxu0
      %v3268 = vadd.f32 %v3219, %v3267
      %v3269 = vpop.f32.mrf.mxu0
      %v3270 = vadd.f32 %v3221, %v3269
      %3271 = vmatmul.bf16.gmra.mxu0 %v3033
      %v3272 = vpop.f32.mrf.mxu0
      %v3273 = vadd.f32 %v3224, %v3272
      %v3274 = vpop.f32.mrf.mxu0
      %v3275 = vadd.f32 %v3226, %v3274
      %3276 = vmatmul.bf16.gmra.mxu0 %v3036
      %v3277 = vpop.f32.mrf.mxu0
      %v3278 = vadd.f32 %v3229, %v3277
      %v3279 = vpop.f32.mrf.mxu0
      %v3280 = vadd.f32 %v3231, %v3279
      %3281 = vmatmul.bf16.gmra.mxu0 %v3039
      %v3282 = vpop.f32.mrf.mxu0
      %v3283 = vadd.f32 %v3234, %v3282
      %v3284 = vpop.f32.mrf.mxu0
      %v3285 = vadd.f32 %v3236, %v3284
      %3286 = vdwg.mxu0
      %3287 = vmatpush.bf16.msra.mxu0 0
      %3288 = vmatpush.bf16.msra.mxu0 0
      %3289 = vmatpush.bf16.msra.mxu0 0
      %3290 = vmatpush.bf16.msra.mxu0 0
      %3291 = vmatpush.bf16.msra.mxu0 0
      %3292 = vmatpush.bf16.msra.mxu0 0
      %3293 = vmatpush.bf16.msra.mxu0 %v3146
      %3294 = vmatpush.bf16.msra.mxu0 %v3145
      %3295 = vmatmul.bf16.gmra.mxu0 %v3166
      %v3296 = vpop.f32.mrf.mxu0
      %v3297 = vadd.f32 %v3248, %v3296
      %v3298 = vpop.f32.mrf.mxu0
      %v3299 = vadd.f32 %v3250, %v3298
      %3300 = vmatmul.bf16.gmra.mxu0 %v3169
      %v3301 = vpop.f32.mrf.mxu0
      %v3302 = vadd.f32 %v3253, %v3301
      %v3303 = vpop.f32.mrf.mxu0
      %v3304 = vadd.f32 %v3255, %v3303
      %3305 = vmatmul.bf16.gmra.mxu0 %v3172
      %v3306 = vpop.f32.mrf.mxu0
      %v3307 = vadd.f32 %v3258, %v3306
      %v3308 = vpop.f32.mrf.mxu0
      %v3309 = vadd.f32 %v3260, %v3308
      %3310 = vmatmul.bf16.gmra.mxu0 %v3175
      %v3311 = vpop.f32.mrf.mxu0
      %v3312 = vadd.f32 %v3263, %v3311
      %v3313 = vpop.f32.mrf.mxu0
      %v3314 = vadd.f32 %v3265, %v3313
      %3315 = vmatmul.bf16.gmra.mxu0 %v3178
      %v3316 = vpop.f32.mrf.mxu0
      %v3317 = vadd.f32 %v3268, %v3316
      %v3318 = vpop.f32.mrf.mxu0
      %v3319 = vadd.f32 %v3270, %v3318
      %3320 = vmatmul.bf16.gmra.mxu0 %v3181
      %v3321 = vpop.f32.mrf.mxu0
      %v3322 = vadd.f32 %v3273, %v3321
      %v3323 = vpop.f32.mrf.mxu0
      %v3324 = vadd.f32 %v3275, %v3323
      %3325 = vmatmul.bf16.gmra.mxu0 %v3184
      %v3326 = vpop.f32.mrf.mxu0
      %v3327 = vadd.f32 %v3278, %v3326
      %v3328 = vpop.f32.mrf.mxu0
      %v3329 = vadd.f32 %v3280, %v3328
      %3330 = vmatmul.bf16.gmra.mxu0 %v3187
      %v3331 = vpop.f32.mrf.mxu0
      %v3332 = vadd.f32 %v3283, %v3331
      %v3333 = vpop.f32.mrf.mxu0
      %v3334 = vadd.f32 %v3285, %v3333
      %3335 = vdwg.mxu0
      %v3336 = vmax.f32 %v3297, 0.0
      %v3337 = vmax.f32 %v3299, 0.0
      %v3338 = vmax.f32 %v3302, 0.0
      %v3339 = vmax.f32 %v3304, 0.0
      %v3340 = vmax.f32 %v3307, 0.0
      %v3341 = vmax.f32 %v3309, 0.0
      %v3342 = vmax.f32 %v3312, 0.0
      %v3343 = vmax.f32 %v3314, 0.0
      %v3344 = vmax.f32 %v3317, 0.0
      %v3345 = vmax.f32 %v3319, 0.0
      %v3346 = vmax.f32 %v3322, 0.0
      %v3347 = vmax.f32 %v3324, 0.0
      %v3348 = vmax.f32 %v3327, 0.0
      %v3349 = vmax.f32 %v3329, 0.0
      %v3350 = vmax.f32 %v3332, 0.0
      %v3351 = vmax.f32 %v3334, 0.0
      %v3352 = vmul.f32 %v3336, %v633
      %v3353 = vmul.f32 %v3337, %v638
      %v3354 = vmul.f32 %v3338, %v643
      %v3355 = vmul.f32 %v3339, %v648
      %v3356 = vmul.f32 %v3340, %v653
      %v3357 = vmul.f32 %v3341, %v658
      %v3358 = vmul.f32 %v3342, %v663
      %v3359 = vmul.f32 %v3343, %v668
      %v3360 = vmul.f32 %v3344, %v673
      %v3361 = vmul.f32 %v3345, %v678
      %v3362 = vmul.f32 %v3346, %v683
      %v3363 = vmul.f32 %v3347, %v688
      %v3364 = vmul.f32 %v3348, %v693
      %v3365 = vmul.f32 %v3349, %v698
      %v3366 = vmul.f32 %v3350, %v703
      %v3367 = vmul.f32 %v3351, %v708
      %3368 = vst.msk [vmem:[#allocation2 + $0x10] sm:$0xff] %vm561, %v3352
      %3369 = vst.msk [vmem:[#allocation2 + $0x18] sm:$0xff] %vm561, %v3353
      %3370 = vst.msk [vmem:[#allocation2 + $0x20] sm:$0xff] %vm561, %v3354
      %3371 = vst.msk [vmem:[#allocation2 + $0x28] sm:$0xff] %vm561, %v3355
      %3372 = vst.msk [vmem:[#allocation2 + $0x30] sm:$0xff] %vm561, %v3356
      %3373 = vst.msk [vmem:[#allocation2 + $0x38] sm:$0xff] %vm561, %v3357
      %3374 = vst.msk [vmem:[#allocation2 + $0x40] sm:$0xff] %vm561, %v3358
      %3375 = vst.msk [vmem:[#allocation2 + $0x48] sm:$0xff] %vm561, %v3359
      %3376 = vst.msk [vmem:[#allocation2 + $0x50] sm:$0xff] %vm561, %v3360
      %3377 = vst.msk [vmem:[#allocation2 + $0x58] sm:$0xff] %vm561, %v3361
      %3378 = vst.msk [vmem:[#allocation2 + $0x60] sm:$0xff] %vm561, %v3362
      %3379 = vst.msk [vmem:[#allocation2 + $0x68] sm:$0xff] %vm561, %v3363
      %3380 = vst.msk [vmem:[#allocation2 + $0x70] sm:$0xff] %vm561, %v3364
      %3381 = vst.msk [vmem:[#allocation2 + $0x78] sm:$0xff] %vm561, %v3365
      %3382 = vst.msk [vmem:[#allocation2 + $0x80] sm:$0xff] %vm561, %v3366
      %3383 = vst.msk [vmem:[#allocation2 + $0x88] sm:$0xff] %vm561, %v3367
      %s3384 = scalar_lea.vmem %s4, 144
      %v3385 = vld [vmem:[%s3384] sm:$0xf]
      %v3386 = vld [vmem:[%s3384 + $0x4] sm:$0xf]
      %v3387 = vld [vmem:[%s3384 + $0x8] sm:$0xf]
      %v3388 = vld [vmem:[%s3384 + $0xc] sm:$0xf]
      %v3389 = vld [vmem:[%s3384 + $0x10] sm:$0xf]
      %v3390 = vld [vmem:[%s3384 + $0x14] sm:$0xf]
      %v3391 = vld [vmem:[%s3384 + $0x18] sm:$0xf]
      %v3392 = vld [vmem:[%s3384 + $0x1c] sm:$0xf]
      %v3393 = vld [vmem:[%s3384 + $0x20] sm:$0xf]
      %v3394 = vld [vmem:[%s3384 + $0x24] sm:$0xf]
      %v3395 = vld [vmem:[%s3384 + $0x28] sm:$0xf]
      %v3396 = vld [vmem:[%s3384 + $0x2c] sm:$0xf]
      %v3397 = vld [vmem:[%s3384 + $0x30] sm:$0xf]
      %v3398 = vld [vmem:[%s3384 + $0x34] sm:$0xf]
      %v3399 = vld [vmem:[%s3384 + $0x38] sm:$0xf]
      %v3400 = vld [vmem:[%s3384 + $0x3c] sm:$0xf]
      %v3401 = vld [vmem:[%s3384 + $0x40] sm:$0xf]
      %v3402 = vld [vmem:[%s3384 + $0x44] sm:$0xf]
      %v3403 = vld [vmem:[%s3384 + $0x48] sm:$0xf]
      %v3404 = vld [vmem:[%s3384 + $0x4c] sm:$0xf]
      %v3405 = vld [vmem:[%s3384 + $0x50] sm:$0xf]
      %v3406 = vld [vmem:[%s3384 + $0x54] sm:$0xf]
      %v3407 = vld [vmem:[%s3384 + $0x58] sm:$0xf]
      %v3408 = vld [vmem:[%s3384 + $0x5c] sm:$0xf]
      %v3409 = vld [vmem:[%s3384 + $0x60] sm:$0xf]
      %v3410 = vld [vmem:[%s3384 + $0x64] sm:$0xf]
      %v3411 = vld [vmem:[%s3384 + $0x68] sm:$0xf]
      %v3412 = vld [vmem:[%s3384 + $0x6c] sm:$0xf]
      %v3413 = vld [vmem:[%s3384 + $0x70] sm:$0xf]
      %v3414 = vld [vmem:[%s3384 + $0x74] sm:$0xf]
      %v3415 = vld [vmem:[%s3384 + $0x78] sm:$0xf]
      %v3416 = vld [vmem:[%s3384 + $0x7c] sm:$0xf]
      %v3417 = vld [vmem:[%s3384 + $0x80] sm:$0xf]
      %v3418 = vld [vmem:[%s3384 + $0x84] sm:$0xf]
      %v3419 = vld [vmem:[%s3384 + $0x88] sm:$0xf]
      %v3420 = vld [vmem:[%s3384 + $0x8c] sm:$0xf]
      %s3421 = scalar_lea.vmem %s5, 1
      %v3422 = vld [vmem:[%s3421] sm:$0x1]
      %v3423 = vld [vmem:[#allocation2 + $0x4] sm:$0xff]
      %v3424 = vld [vmem:[#allocation2 + $0xc] sm:$0xff]
      %v3425 = vld [vmem:[#allocation2 + $0x14] sm:$0xff]
      %v3426 = vld [vmem:[#allocation2 + $0x1c] sm:$0xff]
      %v3427 = vld [vmem:[#allocation2 + $0x24] sm:$0xff]
      %v3428 = vld [vmem:[#allocation2 + $0x2c] sm:$0xff]
      %v3429 = vld [vmem:[#allocation2 + $0x34] sm:$0xff]
      %v3430 = vld [vmem:[#allocation2 + $0x3c] sm:$0xff]
      %v3431 = vld [vmem:[#allocation2 + $0x44] sm:$0xff]
      %v3432 = vld [vmem:[#allocation2 + $0x4c] sm:$0xff]
      %v3433 = vld [vmem:[#allocation2 + $0x54] sm:$0xff]
      %v3434 = vld [vmem:[#allocation2 + $0x5c] sm:$0xff]
      %v3435 = vld [vmem:[#allocation2 + $0x64] sm:$0xff]
      %v3436 = vld [vmem:[#allocation2 + $0x6c] sm:$0xff]
      %v3437 = vld [vmem:[#allocation2 + $0x74] sm:$0xff]
      %v3438 = vld [vmem:[#allocation2 + $0x7c] sm:$0xff]
      %v3439 = vpack.c.bf16 %v3423, %v3423
      %v3440 = vpack.c.bf16 %v3424, %v3424
      %v3441 = vpack.c.bf16 %v3425, %v3425
      %v3442 = vpack.c.bf16 %v3426, %v3426
      %v3443 = vpack.c.bf16 %v3427, %v3427
      %v3444 = vpack.c.bf16 %v3428, %v3428
      %v3445 = vpack.c.bf16 %v3429, %v3429
      %v3446 = vpack.c.bf16 %v3430, %v3430
      %v3447 = vpack.c.bf16 %v3431, %v3431
      %v3448 = vpack.c.bf16 %v3432, %v3432
      %v3449 = vpack.c.bf16 %v3433, %v3433
      %v3450 = vpack.c.bf16 %v3434, %v3434
      %v3451 = vpack.c.bf16 %v3435, %v3435
      %v3452 = vpack.c.bf16 %v3436, %v3436
      %v3453 = vpack.c.bf16 %v3437, %v3437
      %v3454 = vpack.c.bf16 %v3438, %v3438
      %3455 = vst.msk [vmem:[#allocation3] sm:$0xf] %vm779, %v3439
      %3456 = vst.msk [vmem:[#allocation3 + $0xc] sm:$0xf] %vm779, %v3440
      %3457 = vst.msk [vmem:[#allocation3 + $0x18] sm:$0xf] %vm779, %v3441
      %3458 = vst.msk [vmem:[#allocation3 + $0x24] sm:$0xf] %vm779, %v3442
      %3459 = vst.msk [vmem:[#allocation3 + $0x30] sm:$0xf] %vm779, %v3443
      %3460 = vst.msk [vmem:[#allocation3 + $0x3c] sm:$0xf] %vm779, %v3444
      %3461 = vst.msk [vmem:[#allocation3 + $0x48] sm:$0xf] %vm779, %v3445
      %3462 = vst.msk [vmem:[#allocation3 + $0x54] sm:$0xf] %vm779, %v3446
      %3463 = vst.msk [vmem:[#allocation3 + $0x60] sm:$0xf] %vm779, %v3447
      %3464 = vst.msk [vmem:[#allocation3 + $0x6c] sm:$0xf] %vm779, %v3448
      %3465 = vst.msk [vmem:[#allocation3 + $0x78] sm:$0xf] %vm779, %v3449
      %3466 = vst.msk [vmem:[#allocation3 + $0x84] sm:$0xf] %vm779, %v3450
      %3467 = vst.msk [vmem:[#allocation3 + $0x90] sm:$0xf] %vm779, %v3451
      %3468 = vst.msk [vmem:[#allocation3 + $0x9c] sm:$0xf] %vm779, %v3452
      %3469 = vst.msk [vmem:[#allocation3 + $0xa8] sm:$0xf] %vm779, %v3453
      %3470 = vst.msk [vmem:[#allocation3 + $0xb4] sm:$0xf] %vm779, %v3454
      %v3471 = vld [vmem:[#allocation2 + $0x5] sm:$0xff]
      %v3472 = vld [vmem:[#allocation2 + $0xd] sm:$0xff]
      %v3473 = vld [vmem:[#allocation2 + $0x15] sm:$0xff]
      %v3474 = vld [vmem:[#allocation2 + $0x1d] sm:$0xff]
      %v3475 = vld [vmem:[#allocation2 + $0x25] sm:$0xff]
      %v3476 = vld [vmem:[#allocation2 + $0x2d] sm:$0xff]
      %v3477 = vld [vmem:[#allocation2 + $0x35] sm:$0xff]
      %v3478 = vld [vmem:[#allocation2 + $0x3d] sm:$0xff]
      %v3479 = vld [vmem:[#allocation2 + $0x45] sm:$0xff]
      %v3480 = vld [vmem:[#allocation2 + $0x4d] sm:$0xff]
      %v3481 = vld [vmem:[#allocation2 + $0x55] sm:$0xff]
      %v3482 = vld [vmem:[#allocation2 + $0x5d] sm:$0xff]
      %v3483 = vld [vmem:[#allocation2 + $0x65] sm:$0xff]
      %v3484 = vld [vmem:[#allocation2 + $0x6d] sm:$0xff]
      %v3485 = vld [vmem:[#allocation2 + $0x75] sm:$0xff]
      %v3486 = vld [vmem:[#allocation2 + $0x7d] sm:$0xff]
      %v3487 = vpack.c.bf16 %v3471, %v3471
      %v3488 = vpack.c.bf16 %v3472, %v3472
      %v3489 = vpack.c.bf16 %v3473, %v3473
      %v3490 = vpack.c.bf16 %v3474, %v3474
      %v3491 = vpack.c.bf16 %v3475, %v3475
      %v3492 = vpack.c.bf16 %v3476, %v3476
      %v3493 = vpack.c.bf16 %v3477, %v3477
      %v3494 = vpack.c.bf16 %v3478, %v3478
      %v3495 = vpack.c.bf16 %v3479, %v3479
      %v3496 = vpack.c.bf16 %v3480, %v3480
      %v3497 = vpack.c.bf16 %v3481, %v3481
      %v3498 = vpack.c.bf16 %v3482, %v3482
      %v3499 = vpack.c.bf16 %v3483, %v3483
      %v3500 = vpack.c.bf16 %v3484, %v3484
      %v3501 = vpack.c.bf16 %v3485, %v3485
      %v3502 = vpack.c.bf16 %v3486, %v3486
      %3519 = vrot.lane.b32.xlu0 %v3487, 32
      %v3520 = vpop.permute.xlu0 %3519
      %3521 = vrot.lane.b32.xlu0 %v3488, 32
      %v3522 = vpop.permute.xlu0 %3521
      %3523 = vrot.lane.b32.xlu0 %v3489, 32
      %v3524 = vpop.permute.xlu0 %3523
      %3525 = vrot.lane.b32.xlu0 %v3490, 32
      %v3526 = vpop.permute.xlu0 %3525
      %3527 = vrot.lane.b32.xlu0 %v3491, 32
      %v3528 = vpop.permute.xlu0 %3527
      %3529 = vrot.lane.b32.xlu0 %v3492, 32
      %v3530 = vpop.permute.xlu0 %3529
      %3531 = vrot.lane.b32.xlu0 %v3493, 32
      %v3532 = vpop.permute.xlu0 %3531
      %3533 = vrot.lane.b32.xlu0 %v3494, 32
      %v3534 = vpop.permute.xlu0 %3533
      %3535 = vrot.lane.b32.xlu0 %v3495, 32
      %v3536 = vpop.permute.xlu0 %3535
      %3537 = vrot.lane.b32.xlu0 %v3496, 32
      %v3538 = vpop.permute.xlu0 %3537
      %3539 = vrot.lane.b32.xlu0 %v3497, 32
      %v3540 = vpop.permute.xlu0 %3539
      %3541 = vrot.lane.b32.xlu0 %v3498, 32
      %v3542 = vpop.permute.xlu0 %3541
      %3543 = vrot.lane.b32.xlu0 %v3499, 32
      %v3544 = vpop.permute.xlu0 %3543
      %3545 = vrot.lane.b32.xlu0 %v3500, 32
      %v3546 = vpop.permute.xlu0 %3545
      %3547 = vrot.lane.b32.xlu0 %v3501, 32
      %v3548 = vpop.permute.xlu0 %3547
      %3549 = vrot.lane.b32.xlu0 %v3502, 32
      %v3550 = vpop.permute.xlu0 %3549
      %3567 = vst.msk [vmem:[#allocation3] sm:$0xf] %vm892, %v3520
      %3568 = vst.msk [vmem:[#allocation3 + $0xc] sm:$0xf] %vm892, %v3522
      %3569 = vst.msk [vmem:[#allocation3 + $0x18] sm:$0xf] %vm892, %v3524
      %3570 = vst.msk [vmem:[#allocation3 + $0x24] sm:$0xf] %vm892, %v3526
      %3571 = vst.msk [vmem:[#allocation3 + $0x30] sm:$0xf] %vm892, %v3528
      %3572 = vst.msk [vmem:[#allocation3 + $0x3c] sm:$0xf] %vm892, %v3530
      %3573 = vst.msk [vmem:[#allocation3 + $0x48] sm:$0xf] %vm892, %v3532
      %3574 = vst.msk [vmem:[#allocation3 + $0x54] sm:$0xf] %vm892, %v3534
      %3575 = vst.msk [vmem:[#allocation3 + $0x60] sm:$0xf] %vm892, %v3536
      %3576 = vst.msk [vmem:[#allocation3 + $0x6c] sm:$0xf] %vm892, %v3538
      %3577 = vst.msk [vmem:[#allocation3 + $0x78] sm:$0xf] %vm892, %v3540
      %3578 = vst.msk [vmem:[#allocation3 + $0x84] sm:$0xf] %vm892, %v3542
      %3579 = vst.msk [vmem:[#allocation3 + $0x90] sm:$0xf] %vm892, %v3544
      %3580 = vst.msk [vmem:[#allocation3 + $0x9c] sm:$0xf] %vm892, %v3546
      %3581 = vst.msk [vmem:[#allocation3 + $0xa8] sm:$0xf] %vm892, %v3548
      %3582 = vst.msk [vmem:[#allocation3 + $0xb4] sm:$0xf] %vm892, %v3550
      %v3583 = vld [vmem:[#allocation2 + $0x6] sm:$0xff]
      %v3584 = vld [vmem:[#allocation2 + $0xe] sm:$0xff]
      %v3585 = vld [vmem:[#allocation2 + $0x16] sm:$0xff]
      %v3586 = vld [vmem:[#allocation2 + $0x1e] sm:$0xff]
      %v3587 = vld [vmem:[#allocation2 + $0x26] sm:$0xff]
      %v3588 = vld [vmem:[#allocation2 + $0x2e] sm:$0xff]
      %v3589 = vld [vmem:[#allocation2 + $0x36] sm:$0xff]
      %v3590 = vld [vmem:[#allocation2 + $0x3e] sm:$0xff]
      %v3591 = vld [vmem:[#allocation2 + $0x46] sm:$0xff]
      %v3592 = vld [vmem:[#allocation2 + $0x4e] sm:$0xff]
      %v3593 = vld [vmem:[#allocation2 + $0x56] sm:$0xff]
      %v3594 = vld [vmem:[#allocation2 + $0x5e] sm:$0xff]
      %v3595 = vld [vmem:[#allocation2 + $0x66] sm:$0xff]
      %v3596 = vld [vmem:[#allocation2 + $0x6e] sm:$0xff]
      %v3597 = vld [vmem:[#allocation2 + $0x76] sm:$0xff]
      %v3598 = vld [vmem:[#allocation2 + $0x7e] sm:$0xff]
      %v3599 = vpack.c.bf16 %v3583, %v3583
      %v3600 = vpack.c.bf16 %v3584, %v3584
      %v3601 = vpack.c.bf16 %v3585, %v3585
      %v3602 = vpack.c.bf16 %v3586, %v3586
      %v3603 = vpack.c.bf16 %v3587, %v3587
      %v3604 = vpack.c.bf16 %v3588, %v3588
      %v3605 = vpack.c.bf16 %v3589, %v3589
      %v3606 = vpack.c.bf16 %v3590, %v3590
      %v3607 = vpack.c.bf16 %v3591, %v3591
      %v3608 = vpack.c.bf16 %v3592, %v3592
      %v3609 = vpack.c.bf16 %v3593, %v3593
      %v3610 = vpack.c.bf16 %v3594, %v3594
      %v3611 = vpack.c.bf16 %v3595, %v3595
      %v3612 = vpack.c.bf16 %v3596, %v3596
      %v3613 = vpack.c.bf16 %v3597, %v3597
      %v3614 = vpack.c.bf16 %v3598, %v3598
      %3631 = vrot.lane.b32.xlu0 %v3599, 64
      %v3632 = vpop.permute.xlu0 %3631
      %3633 = vrot.lane.b32.xlu0 %v3600, 64
      %v3634 = vpop.permute.xlu0 %3633
      %3635 = vrot.lane.b32.xlu0 %v3601, 64
      %v3636 = vpop.permute.xlu0 %3635
      %3637 = vrot.lane.b32.xlu0 %v3602, 64
      %v3638 = vpop.permute.xlu0 %3637
      %3639 = vrot.lane.b32.xlu0 %v3603, 64
      %v3640 = vpop.permute.xlu0 %3639
      %3641 = vrot.lane.b32.xlu0 %v3604, 64
      %v3642 = vpop.permute.xlu0 %3641
      %3643 = vrot.lane.b32.xlu0 %v3605, 64
      %v3644 = vpop.permute.xlu0 %3643
      %3645 = vrot.lane.b32.xlu0 %v3606, 64
      %v3646 = vpop.permute.xlu0 %3645
      %3647 = vrot.lane.b32.xlu0 %v3607, 64
      %v3648 = vpop.permute.xlu0 %3647
      %3649 = vrot.lane.b32.xlu0 %v3608, 64
      %v3650 = vpop.permute.xlu0 %3649
      %3651 = vrot.lane.b32.xlu0 %v3609, 64
      %v3652 = vpop.permute.xlu0 %3651
      %3653 = vrot.lane.b32.xlu0 %v3610, 64
      %v3654 = vpop.permute.xlu0 %3653
      %3655 = vrot.lane.b32.xlu0 %v3611, 64
      %v3656 = vpop.permute.xlu0 %3655
      %3657 = vrot.lane.b32.xlu0 %v3612, 64
      %v3658 = vpop.permute.xlu0 %3657
      %3659 = vrot.lane.b32.xlu0 %v3613, 64
      %v3660 = vpop.permute.xlu0 %3659
      %3661 = vrot.lane.b32.xlu0 %v3614, 64
      %v3662 = vpop.permute.xlu0 %3661
      %3679 = vst.msk [vmem:[#allocation3] sm:$0xf] %vm1005, %v3632
      %3680 = vst.msk [vmem:[#allocation3 + $0xc] sm:$0xf] %vm1005, %v3634
      %3681 = vst.msk [vmem:[#allocation3 + $0x18] sm:$0xf] %vm1005, %v3636
      %3682 = vst.msk [vmem:[#allocation3 + $0x24] sm:$0xf] %vm1005, %v3638
      %3683 = vst.msk [vmem:[#allocation3 + $0x30] sm:$0xf] %vm1005, %v3640
      %3684 = vst.msk [vmem:[#allocation3 + $0x3c] sm:$0xf] %vm1005, %v3642
      %3685 = vst.msk [vmem:[#allocation3 + $0x48] sm:$0xf] %vm1005, %v3644
      %3686 = vst.msk [vmem:[#allocation3 + $0x54] sm:$0xf] %vm1005, %v3646
      %3687 = vst.msk [vmem:[#allocation3 + $0x60] sm:$0xf] %vm1005, %v3648
      %3688 = vst.msk [vmem:[#allocation3 + $0x6c] sm:$0xf] %vm1005, %v3650
      %3689 = vst.msk [vmem:[#allocation3 + $0x78] sm:$0xf] %vm1005, %v3652
      %3690 = vst.msk [vmem:[#allocation3 + $0x84] sm:$0xf] %vm1005, %v3654
      %3691 = vst.msk [vmem:[#allocation3 + $0x90] sm:$0xf] %vm1005, %v3656
      %3692 = vst.msk [vmem:[#allocation3 + $0x9c] sm:$0xf] %vm1005, %v3658
      %3693 = vst.msk [vmem:[#allocation3 + $0xa8] sm:$0xf] %vm1005, %v3660
      %3694 = vst.msk [vmem:[#allocation3 + $0xb4] sm:$0xf] %vm1005, %v3662
      %v3695 = vld [vmem:[#allocation2 + $0xf] sm:$0xff]
      %v3696 = vld [vmem:[#allocation2 + $0x17] sm:$0xff]
      %v3697 = vld [vmem:[#allocation2 + $0x1f] sm:$0xff]
      %v3698 = vld [vmem:[#allocation2 + $0x27] sm:$0xff]
      %v3699 = vld [vmem:[#allocation2 + $0x2f] sm:$0xff]
      %v3700 = vld [vmem:[#allocation2 + $0x37] sm:$0xff]
      %v3701 = vld [vmem:[#allocation2 + $0x3f] sm:$0xff]
      %v3702 = vld [vmem:[#allocation2 + $0x47] sm:$0xff]
      %v3703 = vld [vmem:[#allocation2 + $0x4f] sm:$0xff]
      %v3704 = vld [vmem:[#allocation2 + $0x57] sm:$0xff]
      %v3705 = vld [vmem:[#allocation2 + $0x5f] sm:$0xff]
      %v3706 = vld [vmem:[#allocation2 + $0x67] sm:$0xff]
      %v3707 = vld [vmem:[#allocation2 + $0x6f] sm:$0xff]
      %v3708 = vld [vmem:[#allocation2 + $0x77] sm:$0xff]
      %v3709 = vld [vmem:[#allocation2 + $0x7f] sm:$0xff]
      %v3710 = vld [vmem:[#allocation2 + $0x87] sm:$0xff]
      %v3711 = vpack.c.bf16 %v3695, %v3695
      %v3712 = vpack.c.bf16 %v3696, %v3696
      %v3713 = vpack.c.bf16 %v3697, %v3697
      %v3714 = vpack.c.bf16 %v3698, %v3698
      %v3715 = vpack.c.bf16 %v3699, %v3699
      %v3716 = vpack.c.bf16 %v3700, %v3700
      %v3717 = vpack.c.bf16 %v3701, %v3701
      %v3718 = vpack.c.bf16 %v3702, %v3702
      %v3719 = vpack.c.bf16 %v3703, %v3703
      %v3720 = vpack.c.bf16 %v3704, %v3704
      %v3721 = vpack.c.bf16 %v3705, %v3705
      %v3722 = vpack.c.bf16 %v3706, %v3706
      %v3723 = vpack.c.bf16 %v3707, %v3707
      %v3724 = vpack.c.bf16 %v3708, %v3708
      %v3725 = vpack.c.bf16 %v3709, %v3709
      %v3726 = vpack.c.bf16 %v3710, %v3710
      %3743 = vrot.lane.b32.xlu0 %v3711, 96
      %v3744 = vpop.permute.xlu0 %3743
      %3745 = vrot.lane.b32.xlu0 %v3712, 96
      %v3746 = vpop.permute.xlu0 %3745
      %3747 = vrot.lane.b32.xlu0 %v3713, 96
      %v3748 = vpop.permute.xlu0 %3747
      %3749 = vrot.lane.b32.xlu0 %v3714, 96
      %v3750 = vpop.permute.xlu0 %3749
      %3751 = vrot.lane.b32.xlu0 %v3715, 96
      %v3752 = vpop.permute.xlu0 %3751
      %3753 = vrot.lane.b32.xlu0 %v3716, 96
      %v3754 = vpop.permute.xlu0 %3753
      %3755 = vrot.lane.b32.xlu0 %v3717, 96
      %v3756 = vpop.permute.xlu0 %3755
      %3757 = vrot.lane.b32.xlu0 %v3718, 96
      %v3758 = vpop.permute.xlu0 %3757
      %3759 = vrot.lane.b32.xlu0 %v3719, 96
      %v3760 = vpop.permute.xlu0 %3759
      %3761 = vrot.lane.b32.xlu0 %v3720, 96
      %v3762 = vpop.permute.xlu0 %3761
      %3763 = vrot.lane.b32.xlu0 %v3721, 96
      %v3764 = vpop.permute.xlu0 %3763
      %3765 = vrot.lane.b32.xlu0 %v3722, 96
      %v3766 = vpop.permute.xlu0 %3765
      %3767 = vrot.lane.b32.xlu0 %v3723, 96
      %v3768 = vpop.permute.xlu0 %3767
      %3769 = vrot.lane.b32.xlu0 %v3724, 96
      %v3770 = vpop.permute.xlu0 %3769
      %3771 = vrot.lane.b32.xlu0 %v3725, 96
      %v3772 = vpop.permute.xlu0 %3771
      %3773 = vrot.lane.b32.xlu0 %v3726, 96
      %v3774 = vpop.permute.xlu0 %3773
      %3791 = vst.msk [vmem:[#allocation3] sm:$0xf] %vm1118, %v3744
      %3792 = vst.msk [vmem:[#allocation3 + $0xc] sm:$0xf] %vm1118, %v3746
      %3793 = vst.msk [vmem:[#allocation3 + $0x18] sm:$0xf] %vm1118, %v3748
      %3794 = vst.msk [vmem:[#allocation3 + $0x24] sm:$0xf] %vm1118, %v3750
      %3795 = vst.msk [vmem:[#allocation3 + $0x30] sm:$0xf] %vm1118, %v3752
      %3796 = vst.msk [vmem:[#allocation3 + $0x3c] sm:$0xf] %vm1118, %v3754
      %3797 = vst.msk [vmem:[#allocation3 + $0x48] sm:$0xf] %vm1118, %v3756
      %3798 = vst.msk [vmem:[#allocation3 + $0x54] sm:$0xf] %vm1118, %v3758
      %3799 = vst.msk [vmem:[#allocation3 + $0x60] sm:$0xf] %vm1118, %v3760
      %3800 = vst.msk [vmem:[#allocation3 + $0x6c] sm:$0xf] %vm1118, %v3762
      %3801 = vst.msk [vmem:[#allocation3 + $0x78] sm:$0xf] %vm1118, %v3764
      %3802 = vst.msk [vmem:[#allocation3 + $0x84] sm:$0xf] %vm1118, %v3766
      %3803 = vst.msk [vmem:[#allocation3 + $0x90] sm:$0xf] %vm1118, %v3768
      %3804 = vst.msk [vmem:[#allocation3 + $0x9c] sm:$0xf] %vm1118, %v3770
      %3805 = vst.msk [vmem:[#allocation3 + $0xa8] sm:$0xf] %vm1118, %v3772
      %3806 = vst.msk [vmem:[#allocation3 + $0xb4] sm:$0xf] %vm1118, %v3774
      %v3807 = vld [vmem:[#allocation2 + $0x10] sm:$0xff]
      %v3808 = vld [vmem:[#allocation2 + $0x18] sm:$0xff]
      %v3809 = vld [vmem:[#allocation2 + $0x20] sm:$0xff]
      %v3810 = vld [vmem:[#allocation2 + $0x28] sm:$0xff]
      %v3811 = vld [vmem:[#allocation2 + $0x30] sm:$0xff]
      %v3812 = vld [vmem:[#allocation2 + $0x38] sm:$0xff]
      %v3813 = vld [vmem:[#allocation2 + $0x40] sm:$0xff]
      %v3814 = vld [vmem:[#allocation2 + $0x48] sm:$0xff]
      %v3815 = vld [vmem:[#allocation2 + $0x50] sm:$0xff]
      %v3816 = vld [vmem:[#allocation2 + $0x58] sm:$0xff]
      %v3817 = vld [vmem:[#allocation2 + $0x60] sm:$0xff]
      %v3818 = vld [vmem:[#allocation2 + $0x68] sm:$0xff]
      %v3819 = vld [vmem:[#allocation2 + $0x70] sm:$0xff]
      %v3820 = vld [vmem:[#allocation2 + $0x78] sm:$0xff]
      %v3821 = vld [vmem:[#allocation2 + $0x80] sm:$0xff]
      %v3822 = vld [vmem:[#allocation2 + $0x88] sm:$0xff]
      %v3823 = vpack.c.bf16 %v3807, %v3807
      %v3824 = vpack.c.bf16 %v3808, %v3808
      %v3825 = vpack.c.bf16 %v3809, %v3809
      %v3826 = vpack.c.bf16 %v3810, %v3810
      %v3827 = vpack.c.bf16 %v3811, %v3811
      %v3828 = vpack.c.bf16 %v3812, %v3812
      %v3829 = vpack.c.bf16 %v3813, %v3813
      %v3830 = vpack.c.bf16 %v3814, %v3814
      %v3831 = vpack.c.bf16 %v3815, %v3815
      %v3832 = vpack.c.bf16 %v3816, %v3816
      %v3833 = vpack.c.bf16 %v3817, %v3817
      %v3834 = vpack.c.bf16 %v3818, %v3818
      %v3835 = vpack.c.bf16 %v3819, %v3819
      %v3836 = vpack.c.bf16 %v3820, %v3820
      %v3837 = vpack.c.bf16 %v3821, %v3821
      %v3838 = vpack.c.bf16 %v3822, %v3822
      %3839 = vst.msk [vmem:[#allocation3 + $0x4] sm:$0xf] %vm779, %v3823
      %3840 = vst.msk [vmem:[#allocation3 + $0x10] sm:$0xf] %vm779, %v3824
      %3841 = vst.msk [vmem:[#allocation3 + $0x1c] sm:$0xf] %vm779, %v3825
      %3842 = vst.msk [vmem:[#allocation3 + $0x28] sm:$0xf] %vm779, %v3826
      %3843 = vst.msk [vmem:[#allocation3 + $0x34] sm:$0xf] %vm779, %v3827
      %3844 = vst.msk [vmem:[#allocation3 + $0x40] sm:$0xf] %vm779, %v3828
      %3845 = vst.msk [vmem:[#allocation3 + $0x4c] sm:$0xf] %vm779, %v3829
      %3846 = vst.msk [vmem:[#allocation3 + $0x58] sm:$0xf] %vm779, %v3830
      %3847 = vst.msk [vmem:[#allocation3 + $0x64] sm:$0xf] %vm779, %v3831
      %3848 = vst.msk [vmem:[#allocation3 + $0x70] sm:$0xf] %vm779, %v3832
      %3849 = vst.msk [vmem:[#allocation3 + $0x7c] sm:$0xf] %vm779, %v3833
      %3850 = vst.msk [vmem:[#allocation3 + $0x88] sm:$0xf] %vm779, %v3834
      %3851 = vst.msk [vmem:[#allocation3 + $0x94] sm:$0xf] %vm779, %v3835
      %3852 = vst.msk [vmem:[#allocation3 + $0xa0] sm:$0xf] %vm779, %v3836
      %3853 = vst.msk [vmem:[#allocation3 + $0xac] sm:$0xf] %vm779, %v3837
      %3854 = vst.msk [vmem:[#allocation3 + $0xb8] sm:$0xf] %vm779, %v3838
      %v3855 = vld [vmem:[#allocation2 + $0x11] sm:$0xff]
      %v3856 = vld [vmem:[#allocation2 + $0x19] sm:$0xff]
      %v3857 = vld [vmem:[#allocation2 + $0x21] sm:$0xff]
      %v3858 = vld [vmem:[#allocation2 + $0x29] sm:$0xff]
      %v3859 = vld [vmem:[#allocation2 + $0x31] sm:$0xff]
      %v3860 = vld [vmem:[#allocation2 + $0x39] sm:$0xff]
      %v3861 = vld [vmem:[#allocation2 + $0x41] sm:$0xff]
      %v3862 = vld [vmem:[#allocation2 + $0x49] sm:$0xff]
      %v3863 = vld [vmem:[#allocation2 + $0x51] sm:$0xff]
      %v3864 = vld [vmem:[#allocation2 + $0x59] sm:$0xff]
      %v3865 = vld [vmem:[#allocation2 + $0x61] sm:$0xff]
      %v3866 = vld [vmem:[#allocation2 + $0x69] sm:$0xff]
      %v3867 = vld [vmem:[#allocation2 + $0x71] sm:$0xff]
      %v3868 = vld [vmem:[#allocation2 + $0x79] sm:$0xff]
      %v3869 = vld [vmem:[#allocation2 + $0x81] sm:$0xff]
      %v3870 = vld [vmem:[#allocation2 + $0x89] sm:$0xff]
      %v3871 = vpack.c.bf16 %v3855, %v3855
      %v3872 = vpack.c.bf16 %v3856, %v3856
      %v3873 = vpack.c.bf16 %v3857, %v3857
      %v3874 = vpack.c.bf16 %v3858, %v3858
      %v3875 = vpack.c.bf16 %v3859, %v3859
      %v3876 = vpack.c.bf16 %v3860, %v3860
      %v3877 = vpack.c.bf16 %v3861, %v3861
      %v3878 = vpack.c.bf16 %v3862, %v3862
      %v3879 = vpack.c.bf16 %v3863, %v3863
      %v3880 = vpack.c.bf16 %v3864, %v3864
      %v3881 = vpack.c.bf16 %v3865, %v3865
      %v3882 = vpack.c.bf16 %v3866, %v3866
      %v3883 = vpack.c.bf16 %v3867, %v3867
      %v3884 = vpack.c.bf16 %v3868, %v3868
      %v3885 = vpack.c.bf16 %v3869, %v3869
      %v3886 = vpack.c.bf16 %v3870, %v3870
      %3903 = vrot.lane.b32.xlu0 %v3871, 32
      %v3904 = vpop.permute.xlu0 %3903
      %3905 = vrot.lane.b32.xlu0 %v3872, 32
      %v3906 = vpop.permute.xlu0 %3905
      %3907 = vrot.lane.b32.xlu0 %v3873, 32
      %v3908 = vpop.permute.xlu0 %3907
      %3909 = vrot.lane.b32.xlu0 %v3874, 32
      %v3910 = vpop.permute.xlu0 %3909
      %3911 = vrot.lane.b32.xlu0 %v3875, 32
      %v3912 = vpop.permute.xlu0 %3911
      %3913 = vrot.lane.b32.xlu0 %v3876, 32
      %v3914 = vpop.permute.xlu0 %3913
      %3915 = vrot.lane.b32.xlu0 %v3877, 32
      %v3916 = vpop.permute.xlu0 %3915
      %3917 = vrot.lane.b32.xlu0 %v3878, 32
      %v3918 = vpop.permute.xlu0 %3917
      %3919 = vrot.lane.b32.xlu0 %v3879, 32
      %v3920 = vpop.permute.xlu0 %3919
      %3921 = vrot.lane.b32.xlu0 %v3880, 32
      %v3922 = vpop.permute.xlu0 %3921
      %3923 = vrot.lane.b32.xlu0 %v3881, 32
      %v3924 = vpop.permute.xlu0 %3923
      %3925 = vrot.lane.b32.xlu0 %v3882, 32
      %v3926 = vpop.permute.xlu0 %3925
      %3927 = vrot.lane.b32.xlu0 %v3883, 32
      %v3928 = vpop.permute.xlu0 %3927
      %3929 = vrot.lane.b32.xlu0 %v3884, 32
      %v3930 = vpop.permute.xlu0 %3929
      %3931 = vrot.lane.b32.xlu0 %v3885, 32
      %v3932 = vpop.permute.xlu0 %3931
      %3933 = vrot.lane.b32.xlu0 %v3886, 32
      %v3934 = vpop.permute.xlu0 %3933
      %3951 = vst.msk [vmem:[#allocation3 + $0x4] sm:$0xf] %vm892, %v3904
      %3952 = vst.msk [vmem:[#allocation3 + $0x10] sm:$0xf] %vm892, %v3906
      %3953 = vst.msk [vmem:[#allocation3 + $0x1c] sm:$0xf] %vm892, %v3908
      %3954 = vst.msk [vmem:[#allocation3 + $0x28] sm:$0xf] %vm892, %v3910
      %3955 = vst.msk [vmem:[#allocation3 + $0x34] sm:$0xf] %vm892, %v3912
      %3956 = vst.msk [vmem:[#allocation3 + $0x40] sm:$0xf] %vm892, %v3914
      %3957 = vst.msk [vmem:[#allocation3 + $0x4c] sm:$0xf] %vm892, %v3916
      %3958 = vst.msk [vmem:[#allocation3 + $0x58] sm:$0xf] %vm892, %v3918
      %3959 = vst.msk [vmem:[#allocation3 + $0x64] sm:$0xf] %vm892, %v3920
      %3960 = vst.msk [vmem:[#allocation3 + $0x70] sm:$0xf] %vm892, %v3922
      %3961 = vst.msk [vmem:[#allocation3 + $0x7c] sm:$0xf] %vm892, %v3924
      %3962 = vst.msk [vmem:[#allocation3 + $0x88] sm:$0xf] %vm892, %v3926
      %3963 = vst.msk [vmem:[#allocation3 + $0x94] sm:$0xf] %vm892, %v3928
      %3964 = vst.msk [vmem:[#allocation3 + $0xa0] sm:$0xf] %vm892, %v3930
      %3965 = vst.msk [vmem:[#allocation3 + $0xac] sm:$0xf] %vm892, %v3932
      %3966 = vst.msk [vmem:[#allocation3 + $0xb8] sm:$0xf] %vm892, %v3934
      %v3967 = vld [vmem:[#allocation2 + $0x1a] sm:$0xff]
      %v3968 = vld [vmem:[#allocation2 + $0x22] sm:$0xff]
      %v3969 = vld [vmem:[#allocation2 + $0x2a] sm:$0xff]
      %v3970 = vld [vmem:[#allocation2 + $0x32] sm:$0xff]
      %v3971 = vld [vmem:[#allocation2 + $0x3a] sm:$0xff]
      %v3972 = vld [vmem:[#allocation2 + $0x42] sm:$0xff]
      %v3973 = vld [vmem:[#allocation2 + $0x4a] sm:$0xff]
      %v3974 = vld [vmem:[#allocation2 + $0x52] sm:$0xff]
      %v3975 = vld [vmem:[#allocation2 + $0x5a] sm:$0xff]
      %v3976 = vld [vmem:[#allocation2 + $0x62] sm:$0xff]
      %v3977 = vld [vmem:[#allocation2 + $0x6a] sm:$0xff]
      %v3978 = vld [vmem:[#allocation2 + $0x72] sm:$0xff]
      %v3979 = vld [vmem:[#allocation2 + $0x7a] sm:$0xff]
      %v3980 = vld [vmem:[#allocation2 + $0x82] sm:$0xff]
      %v3981 = vld [vmem:[#allocation2 + $0x8a] sm:$0xff]
      %v3982 = vld [vmem:[#allocation2 + $0x92] sm:$0xff]
      %v3983 = vpack.c.bf16 %v3967, %v3967
      %v3984 = vpack.c.bf16 %v3968, %v3968
      %v3985 = vpack.c.bf16 %v3969, %v3969
      %v3986 = vpack.c.bf16 %v3970, %v3970
      %v3987 = vpack.c.bf16 %v3971, %v3971
      %v3988 = vpack.c.bf16 %v3972, %v3972
      %v3989 = vpack.c.bf16 %v3973, %v3973
      %v3990 = vpack.c.bf16 %v3974, %v3974
      %v3991 = vpack.c.bf16 %v3975, %v3975
      %v3992 = vpack.c.bf16 %v3976, %v3976
      %v3993 = vpack.c.bf16 %v3977, %v3977
      %v3994 = vpack.c.bf16 %v3978, %v3978
      %v3995 = vpack.c.bf16 %v3979, %v3979
      %v3996 = vpack.c.bf16 %v3980, %v3980
      %v3997 = vpack.c.bf16 %v3981, %v3981
      %v3998 = vpack.c.bf16 %v3982, %v3982
      %4015 = vrot.lane.b32.xlu0 %v3983, 64
      %v4016 = vpop.permute.xlu0 %4015
      %4017 = vrot.lane.b32.xlu0 %v3984, 64
      %v4018 = vpop.permute.xlu0 %4017
      %4019 = vrot.lane.b32.xlu0 %v3985, 64
      %v4020 = vpop.permute.xlu0 %4019
      %4021 = vrot.lane.b32.xlu0 %v3986, 64
      %v4022 = vpop.permute.xlu0 %4021
      %4023 = vrot.lane.b32.xlu0 %v3987, 64
      %v4024 = vpop.permute.xlu0 %4023
      %4025 = vrot.lane.b32.xlu0 %v3988, 64
      %v4026 = vpop.permute.xlu0 %4025
      %4027 = vrot.lane.b32.xlu0 %v3989, 64
      %v4028 = vpop.permute.xlu0 %4027
      %4029 = vrot.lane.b32.xlu0 %v3990, 64
      %v4030 = vpop.permute.xlu0 %4029
      %4031 = vrot.lane.b32.xlu0 %v3991, 64
      %v4032 = vpop.permute.xlu0 %4031
      %4033 = vrot.lane.b32.xlu0 %v3992, 64
      %v4034 = vpop.permute.xlu0 %4033
      %4035 = vrot.lane.b32.xlu0 %v3993, 64
      %v4036 = vpop.permute.xlu0 %4035
      %4037 = vrot.lane.b32.xlu0 %v3994, 64
      %v4038 = vpop.permute.xlu0 %4037
      %4039 = vrot.lane.b32.xlu0 %v3995, 64
      %v4040 = vpop.permute.xlu0 %4039
      %4041 = vrot.lane.b32.xlu0 %v3996, 64
      %v4042 = vpop.permute.xlu0 %4041
      %4043 = vrot.lane.b32.xlu0 %v3997, 64
      %v4044 = vpop.permute.xlu0 %4043
      %4045 = vrot.lane.b32.xlu0 %v3998, 64
      %v4046 = vpop.permute.xlu0 %4045
      %4063 = vst.msk [vmem:[#allocation3 + $0x4] sm:$0xf] %vm1005, %v4016
      %4064 = vst.msk [vmem:[#allocation3 + $0x10] sm:$0xf] %vm1005, %v4018
      %4065 = vst.msk [vmem:[#allocation3 + $0x1c] sm:$0xf] %vm1005, %v4020
      %4066 = vst.msk [vmem:[#allocation3 + $0x28] sm:$0xf] %vm1005, %v4022
      %4067 = vst.msk [vmem:[#allocation3 + $0x34] sm:$0xf] %vm1005, %v4024
      %4068 = vst.msk [vmem:[#allocation3 + $0x40] sm:$0xf] %vm1005, %v4026
      %4069 = vst.msk [vmem:[#allocation3 + $0x4c] sm:$0xf] %vm1005, %v4028
      %4070 = vst.msk [vmem:[#allocation3 + $0x58] sm:$0xf] %vm1005, %v4030
      %4071 = vst.msk [vmem:[#allocation3 + $0x64] sm:$0xf] %vm1005, %v4032
      %4072 = vst.msk [vmem:[#allocation3 + $0x70] sm:$0xf] %vm1005, %v4034
      %4073 = vst.msk [vmem:[#allocation3 + $0x7c] sm:$0xf] %vm1005, %v4036
      %4074 = vst.msk [vmem:[#allocation3 + $0x88] sm:$0xf] %vm1005, %v4038
      %4075 = vst.msk [vmem:[#allocation3 + $0x94] sm:$0xf] %vm1005, %v4040
      %4076 = vst.msk [vmem:[#allocation3 + $0xa0] sm:$0xf] %vm1005, %v4042
      %4077 = vst.msk [vmem:[#allocation3 + $0xac] sm:$0xf] %vm1005, %v4044
      %4078 = vst.msk [vmem:[#allocation3 + $0xb8] sm:$0xf] %vm1005, %v4046
      %v4079 = vld [vmem:[#allocation2 + $0x1b] sm:$0xff]
      %v4080 = vld [vmem:[#allocation2 + $0x23] sm:$0xff]
      %v4081 = vld [vmem:[#allocation2 + $0x2b] sm:$0xff]
      %v4082 = vld [vmem:[#allocation2 + $0x33] sm:$0xff]
      %v4083 = vld [vmem:[#allocation2 + $0x3b] sm:$0xff]
      %v4084 = vld [vmem:[#allocation2 + $0x43] sm:$0xff]
      %v4085 = vld [vmem:[#allocation2 + $0x4b] sm:$0xff]
      %v4086 = vld [vmem:[#allocation2 + $0x53] sm:$0xff]
      %v4087 = vld [vmem:[#allocation2 + $0x5b] sm:$0xff]
      %v4088 = vld [vmem:[#allocation2 + $0x63] sm:$0xff]
      %v4089 = vld [vmem:[#allocation2 + $0x6b] sm:$0xff]
      %v4090 = vld [vmem:[#allocation2 + $0x73] sm:$0xff]
      %v4091 = vld [vmem:[#allocation2 + $0x7b] sm:$0xff]
      %v4092 = vld [vmem:[#allocation2 + $0x83] sm:$0xff]
      %v4093 = vld [vmem:[#allocation2 + $0x8b] sm:$0xff]
      %v4094 = vld [vmem:[#allocation2 + $0x93] sm:$0xff]
      %v4095 = vpack.c.bf16 %v4079, %v4079
      %v4096 = vpack.c.bf16 %v4080, %v4080
      %v4097 = vpack.c.bf16 %v4081, %v4081
      %v4098 = vpack.c.bf16 %v4082, %v4082
      %v4099 = vpack.c.bf16 %v4083, %v4083
      %v4100 = vpack.c.bf16 %v4084, %v4084
      %v4101 = vpack.c.bf16 %v4085, %v4085
      %v4102 = vpack.c.bf16 %v4086, %v4086
      %v4103 = vpack.c.bf16 %v4087, %v4087
      %v4104 = vpack.c.bf16 %v4088, %v4088
      %v4105 = vpack.c.bf16 %v4089, %v4089
      %v4106 = vpack.c.bf16 %v4090, %v4090
      %v4107 = vpack.c.bf16 %v4091, %v4091
      %v4108 = vpack.c.bf16 %v4092, %v4092
      %v4109 = vpack.c.bf16 %v4093, %v4093
      %v4110 = vpack.c.bf16 %v4094, %v4094
      %4127 = vrot.lane.b32.xlu0 %v4095, 96
      %v4128 = vpop.permute.xlu0 %4127
      %4129 = vrot.lane.b32.xlu0 %v4096, 96
      %v4130 = vpop.permute.xlu0 %4129
      %4131 = vrot.lane.b32.xlu0 %v4097, 96
      %v4132 = vpop.permute.xlu0 %4131
      %4133 = vrot.lane.b32.xlu0 %v4098, 96
      %v4134 = vpop.permute.xlu0 %4133
      %4135 = vrot.lane.b32.xlu0 %v4099, 96
      %v4136 = vpop.permute.xlu0 %4135
      %4137 = vrot.lane.b32.xlu0 %v4100, 96
      %v4138 = vpop.permute.xlu0 %4137
      %4139 = vrot.lane.b32.xlu0 %v4101, 96
      %v4140 = vpop.permute.xlu0 %4139
      %4141 = vrot.lane.b32.xlu0 %v4102, 96
      %v4142 = vpop.permute.xlu0 %4141
      %4143 = vrot.lane.b32.xlu0 %v4103, 96
      %v4144 = vpop.permute.xlu0 %4143
      %4145 = vrot.lane.b32.xlu0 %v4104, 96
      %v4146 = vpop.permute.xlu0 %4145
      %4147 = vrot.lane.b32.xlu0 %v4105, 96
      %v4148 = vpop.permute.xlu0 %4147
      %4149 = vrot.lane.b32.xlu0 %v4106, 96
      %v4150 = vpop.permute.xlu0 %4149
      %4151 = vrot.lane.b32.xlu0 %v4107, 96
      %v4152 = vpop.permute.xlu0 %4151
      %4153 = vrot.lane.b32.xlu0 %v4108, 96
      %v4154 = vpop.permute.xlu0 %4153
      %4155 = vrot.lane.b32.xlu0 %v4109, 96
      %v4156 = vpop.permute.xlu0 %4155
      %4157 = vrot.lane.b32.xlu0 %v4110, 96
      %v4158 = vpop.permute.xlu0 %4157
      %4175 = vst.msk [vmem:[#allocation3 + $0x4] sm:$0xf] %vm1118, %v4128
      %4176 = vst.msk [vmem:[#allocation3 + $0x10] sm:$0xf] %vm1118, %v4130
      %4177 = vst.msk [vmem:[#allocation3 + $0x1c] sm:$0xf] %vm1118, %v4132
      %4178 = vst.msk [vmem:[#allocation3 + $0x28] sm:$0xf] %vm1118, %v4134
      %4179 = vst.msk [vmem:[#allocation3 + $0x34] sm:$0xf] %vm1118, %v4136
      %4180 = vst.msk [vmem:[#allocation3 + $0x40] sm:$0xf] %vm1118, %v4138
      %4181 = vst.msk [vmem:[#allocation3 + $0x4c] sm:$0xf] %vm1118, %v4140
      %4182 = vst.msk [vmem:[#allocation3 + $0x58] sm:$0xf] %vm1118, %v4142
      %4183 = vst.msk [vmem:[#allocation3 + $0x64] sm:$0xf] %vm1118, %v4144
      %4184 = vst.msk [vmem:[#allocation3 + $0x70] sm:$0xf] %vm1118, %v4146
      %4185 = vst.msk [vmem:[#allocation3 + $0x7c] sm:$0xf] %vm1118, %v4148
      %4186 = vst.msk [vmem:[#allocation3 + $0x88] sm:$0xf] %vm1118, %v4150
      %4187 = vst.msk [vmem:[#allocation3 + $0x94] sm:$0xf] %vm1118, %v4152
      %4188 = vst.msk [vmem:[#allocation3 + $0xa0] sm:$0xf] %vm1118, %v4154
      %4189 = vst.msk [vmem:[#allocation3 + $0xac] sm:$0xf] %vm1118, %v4156
      %4190 = vst.msk [vmem:[#allocation3 + $0xb8] sm:$0xf] %vm1118, %v4158
      %v4191 = vld [vmem:[#allocation2 + $0x1c] sm:$0xff]
      %v4192 = vld [vmem:[#allocation2 + $0x24] sm:$0xff]
      %v4193 = vld [vmem:[#allocation2 + $0x2c] sm:$0xff]
      %v4194 = vld [vmem:[#allocation2 + $0x34] sm:$0xff]
      %v4195 = vld [vmem:[#allocation2 + $0x3c] sm:$0xff]
      %v4196 = vld [vmem:[#allocation2 + $0x44] sm:$0xff]
      %v4197 = vld [vmem:[#allocation2 + $0x4c] sm:$0xff]
      %v4198 = vld [vmem:[#allocation2 + $0x54] sm:$0xff]
      %v4199 = vld [vmem:[#allocation2 + $0x5c] sm:$0xff]
      %v4200 = vld [vmem:[#allocation2 + $0x64] sm:$0xff]
      %v4201 = vld [vmem:[#allocation2 + $0x6c] sm:$0xff]
      %v4202 = vld [vmem:[#allocation2 + $0x74] sm:$0xff]
      %v4203 = vld [vmem:[#allocation2 + $0x7c] sm:$0xff]
      %v4204 = vld [vmem:[#allocation2 + $0x84] sm:$0xff]
      %v4205 = vld [vmem:[#allocation2 + $0x8c] sm:$0xff]
      %v4206 = vld [vmem:[#allocation2 + $0x94] sm:$0xff]
      %v4207 = vpack.c.bf16 %v4191, %v4191
      %v4208 = vpack.c.bf16 %v4192, %v4192
      %v4209 = vpack.c.bf16 %v4193, %v4193
      %v4210 = vpack.c.bf16 %v4194, %v4194
      %v4211 = vpack.c.bf16 %v4195, %v4195
      %v4212 = vpack.c.bf16 %v4196, %v4196
      %v4213 = vpack.c.bf16 %v4197, %v4197
      %v4214 = vpack.c.bf16 %v4198, %v4198
      %v4215 = vpack.c.bf16 %v4199, %v4199
      %v4216 = vpack.c.bf16 %v4200, %v4200
      %v4217 = vpack.c.bf16 %v4201, %v4201
      %v4218 = vpack.c.bf16 %v4202, %v4202
      %v4219 = vpack.c.bf16 %v4203, %v4203
      %v4220 = vpack.c.bf16 %v4204, %v4204
      %v4221 = vpack.c.bf16 %v4205, %v4205
      %v4222 = vpack.c.bf16 %v4206, %v4206
      %4223 = vst.msk [vmem:[#allocation3 + $0x8] sm:$0xf] %vm779, %v4207
      %4224 = vst.msk [vmem:[#allocation3 + $0x14] sm:$0xf] %vm779, %v4208
      %4225 = vst.msk [vmem:[#allocation3 + $0x20] sm:$0xf] %vm779, %v4209
      %4226 = vst.msk [vmem:[#allocation3 + $0x2c] sm:$0xf] %vm779, %v4210
      %4227 = vst.msk [vmem:[#allocation3 + $0x38] sm:$0xf] %vm779, %v4211
      %4228 = vst.msk [vmem:[#allocation3 + $0x44] sm:$0xf] %vm779, %v4212
      %4229 = vst.msk [vmem:[#allocation3 + $0x50] sm:$0xf] %vm779, %v4213
      %4230 = vst.msk [vmem:[#allocation3 + $0x5c] sm:$0xf] %vm779, %v4214
      %4231 = vst.msk [vmem:[#allocation3 + $0x68] sm:$0xf] %vm779, %v4215
      %4232 = vst.msk [vmem:[#allocation3 + $0x74] sm:$0xf] %vm779, %v4216
      %4233 = vst.msk [vmem:[#allocation3 + $0x80] sm:$0xf] %vm779, %v4217
      %4234 = vst.msk [vmem:[#allocation3 + $0x8c] sm:$0xf] %vm779, %v4218
      %4235 = vst.msk [vmem:[#allocation3 + $0x98] sm:$0xf] %vm779, %v4219
      %4236 = vst.msk [vmem:[#allocation3 + $0xa4] sm:$0xf] %vm779, %v4220
      %4237 = vst.msk [vmem:[#allocation3 + $0xb0] sm:$0xf] %vm779, %v4221
      %4238 = vst.msk [vmem:[#allocation3 + $0xbc] sm:$0xf] %vm779, %v4222
      %v4239 = vld [vmem:[#allocation3] sm:$0xff]
      %v4240 = vld [vmem:[#allocation3 + $0x8] sm:$0xf]
      %v4241 = vld [vmem:[#allocation3 + $0xc] sm:$0xff]
      %v4242 = vld [vmem:[#allocation3 + $0x14] sm:$0xf]
      %v4243 = vld [vmem:[#allocation3 + $0x18] sm:$0xff]
      %v4244 = vld [vmem:[#allocation3 + $0x20] sm:$0xf]
      %v4245 = vld [vmem:[#allocation3 + $0x24] sm:$0xff]
      %v4246 = vld [vmem:[#allocation3 + $0x2c] sm:$0xf]
      %v4247 = vld [vmem:[#allocation3 + $0x30] sm:$0xff]
      %v4248 = vld [vmem:[#allocation3 + $0x38] sm:$0xf]
      %v4249 = vld [vmem:[#allocation3 + $0x3c] sm:$0xff]
      %v4250 = vld [vmem:[#allocation3 + $0x44] sm:$0xf]
      %v4251 = vld [vmem:[#allocation3 + $0x48] sm:$0xff]
      %v4252 = vld [vmem:[#allocation3 + $0x50] sm:$0xf]
      %v4253 = vld [vmem:[#allocation3 + $0x54] sm:$0xff]
      %v4254 = vld [vmem:[#allocation3 + $0x5c] sm:$0xf]
      %v4255 = vld [vmem:[#allocation3 + $0x60] sm:$0xff]
      %v4256 = vld [vmem:[#allocation3 + $0x68] sm:$0xf]
      %v4257 = vld [vmem:[#allocation3 + $0x6c] sm:$0xff]
      %v4258 = vld [vmem:[#allocation3 + $0x74] sm:$0xf]
      %v4259 = vld [vmem:[#allocation3 + $0x78] sm:$0xff]
      %v4260 = vld [vmem:[#allocation3 + $0x80] sm:$0xf]
      %v4261 = vld [vmem:[#allocation3 + $0x84] sm:$0xff]
      %v4262 = vld [vmem:[#allocation3 + $0x8c] sm:$0xf]
      %v4263 = vld [vmem:[#allocation3 + $0x90] sm:$0xff]
      %v4264 = vld [vmem:[#allocation3 + $0x98] sm:$0xf]
      %v4265 = vld [vmem:[#allocation3 + $0x9c] sm:$0xff]
      %v4266 = vld [vmem:[#allocation3 + $0xa4] sm:$0xf]
      %v4267 = vld [vmem:[#allocation3 + $0xa8] sm:$0xff]
      %v4268 = vld [vmem:[#allocation3 + $0xb0] sm:$0xf]
      %v4269 = vld [vmem:[#allocation3 + $0xb4] sm:$0xff]
      %v4270 = vld [vmem:[#allocation3 + $0xbc] sm:$0xf]
      %v4272 = vperm.slane %v3422, 0
      %v4306 = vunpack.c.l.b16 %v4239
      %v4307 = vunpack.c.h.b16 %v4239
      %v4308 = vunpack.c.l.b16 %v4240
      %v4309 = vunpack.c.l.b16 %v4241
      %v4310 = vunpack.c.h.b16 %v4241
      %v4311 = vunpack.c.l.b16 %v4242
      %v4312 = vunpack.c.l.b16 %v4243
      %v4313 = vunpack.c.h.b16 %v4243
      %v4314 = vunpack.c.l.b16 %v4244
      %v4315 = vunpack.c.l.b16 %v4245
      %v4316 = vunpack.c.h.b16 %v4245
      %v4317 = vunpack.c.l.b16 %v4246
      %v4318 = vunpack.c.l.b16 %v4247
      %v4319 = vunpack.c.h.b16 %v4247
      %v4320 = vunpack.c.l.b16 %v4248
      %v4321 = vunpack.c.l.b16 %v4249
      %v4322 = vunpack.c.h.b16 %v4249
      %v4323 = vunpack.c.l.b16 %v4250
      %v4324 = vunpack.c.l.b16 %v4251
      %v4325 = vunpack.c.h.b16 %v4251
      %v4326 = vunpack.c.l.b16 %v4252
      %v4327 = vunpack.c.l.b16 %v4253
      %v4328 = vunpack.c.h.b16 %v4253
      %v4329 = vunpack.c.l.b16 %v4254
      %v4330 = vunpack.c.l.b16 %v4255
      %v4331 = vunpack.c.h.b16 %v4255
      %v4332 = vunpack.c.l.b16 %v4256
      %v4333 = vunpack.c.l.b16 %v4257
      %v4334 = vunpack.c.h.b16 %v4257
      %v4335 = vunpack.c.l.b16 %v4258
      %v4336 = vunpack.c.l.b16 %v4259
      %v4337 = vunpack.c.h.b16 %v4259
      %v4338 = vunpack.c.l.b16 %v4260
      %v4339 = vunpack.c.l.b16 %v4261
      %v4340 = vunpack.c.h.b16 %v4261
      %v4341 = vunpack.c.l.b16 %v4262
      %v4342 = vunpack.c.l.b16 %v4263
      %v4343 = vunpack.c.h.b16 %v4263
      %v4344 = vunpack.c.l.b16 %v4264
      %v4345 = vunpack.c.l.b16 %v4265
      %v4346 = vunpack.c.h.b16 %v4265
      %v4347 = vunpack.c.l.b16 %v4266
      %v4348 = vunpack.c.l.b16 %v4267
      %v4349 = vunpack.c.h.b16 %v4267
      %v4350 = vunpack.c.l.b16 %v4268
      %v4351 = vunpack.c.l.b16 %v4269
      %v4352 = vunpack.c.h.b16 %v4269
      %v4353 = vunpack.c.l.b16 %v4270
      %v4354 = vpack.c.b16 %v4309, %v4306
      %v4355 = vpack.c.b16 %v4310, %v4307
      %v4356 = vpack.c.b16 %v4311, %v4308
      %v4357 = vpack.c.b16 %v4315, %v4312
      %v4358 = vpack.c.b16 %v4316, %v4313
      %v4359 = vpack.c.b16 %v4317, %v4314
      %v4360 = vpack.c.b16 %v4321, %v4318
      %v4361 = vpack.c.b16 %v4322, %v4319
      %v4362 = vpack.c.b16 %v4323, %v4320
      %v4363 = vpack.c.b16 %v4327, %v4324
      %v4364 = vpack.c.b16 %v4328, %v4325
      %v4365 = vpack.c.b16 %v4329, %v4326
      %v4366 = vpack.c.b16 %v4333, %v4330
      %v4367 = vpack.c.b16 %v4334, %v4331
      %v4368 = vpack.c.b16 %v4335, %v4332
      %v4369 = vpack.c.b16 %v4339, %v4336
      %v4370 = vpack.c.b16 %v4340, %v4337
      %v4371 = vpack.c.b16 %v4341, %v4338
      %v4372 = vpack.c.b16 %v4345, %v4342
      %v4373 = vpack.c.b16 %v4346, %v4343
      %v4374 = vpack.c.b16 %v4347, %v4344
      %v4375 = vpack.c.b16 %v4351, %v4348
      %v4376 = vpack.c.b16 %v4352, %v4349
      %v4377 = vpack.c.b16 %v4353, %v4350
      %v4430 = vunpack.c.l.b16 %v3385
      %v4431 = vunpack.c.l.b16 %v3386
      %v4432 = vunpack.c.l.b16 %v3387
      %v4433 = vunpack.c.l.b16 %v3388
      %v4434 = vunpack.c.l.b16 %v3389
      %v4435 = vunpack.c.l.b16 %v3390
      %v4436 = vunpack.c.l.b16 %v3391
      %v4437 = vunpack.c.l.b16 %v3392
      %v4438 = vunpack.c.l.b16 %v3393
      %v4439 = vunpack.c.l.b16 %v3394
      %v4440 = vunpack.c.l.b16 %v3395
      %v4441 = vunpack.c.l.b16 %v3396
      %v4442 = vunpack.c.l.b16 %v3397
      %v4443 = vunpack.c.l.b16 %v3398
      %v4444 = vunpack.c.l.b16 %v3399
      %v4445 = vunpack.c.l.b16 %v3400
      %v4446 = vunpack.c.l.b16 %v3401
      %v4447 = vunpack.c.l.b16 %v3402
      %v4448 = vunpack.c.l.b16 %v3403
      %v4449 = vunpack.c.l.b16 %v3404
      %v4450 = vunpack.c.l.b16 %v3405
      %v4451 = vunpack.c.l.b16 %v3406
      %v4452 = vunpack.c.l.b16 %v3407
      %v4453 = vunpack.c.l.b16 %v3408
      %v4454 = vunpack.c.l.b16 %v3409
      %v4455 = vunpack.c.l.b16 %v3410
      %v4456 = vunpack.c.l.b16 %v3411
      %v4457 = vunpack.c.l.b16 %v3412
      %v4458 = vunpack.c.l.b16 %v3413
      %v4459 = vunpack.c.l.b16 %v3414
      %v4460 = vunpack.c.l.b16 %v3415
      %v4461 = vunpack.c.l.b16 %v3416
      %v4462 = vunpack.c.l.b16 %v3417
      %v4463 = vunpack.c.l.b16 %v3418
      %v4464 = vunpack.c.l.b16 %v3419
      %v4465 = vunpack.c.l.b16 %v3420
      %v4466 = vpack.c.b16 %v4431, %v4430
      %v4467 = vpack.c.b16 %v4433, %v4432
      %v4468 = vpack.c.b16 %v4435, %v4434
      %v4469 = vpack.c.b16 %v4437, %v4436
      %v4470 = vpack.c.b16 %v4439, %v4438
      %v4471 = vpack.c.b16 %v4441, %v4440
      %v4472 = vpack.c.b16 %v4443, %v4442
      %v4473 = vpack.c.b16 %v4445, %v4444
      %v4474 = vpack.c.b16 %v4447, %v4446
      %v4475 = vpack.c.b16 %v4449, %v4448
      %v4476 = vpack.c.b16 %v4451, %v4450
      %v4477 = vpack.c.b16 %v4453, %v4452
      %v4478 = vpack.c.b16 %v4455, %v4454
      %v4479 = vpack.c.b16 %v4457, %v4456
      %v4480 = vpack.c.b16 %v4459, %v4458
      %v4481 = vpack.c.b16 %v4461, %v4460
      %v4482 = vpack.c.b16 %v4463, %v4462
      %v4483 = vpack.c.b16 %v4465, %v4464
      %v4503 = vsel %vm561, %v4356, 0
      %v4506 = vsel %vm561, %v4359, 0
      %v4509 = vsel %vm561, %v4362, 0
      %v4512 = vsel %vm561, %v4365, 0
      %v4515 = vsel %vm561, %v4368, 0
      %v4518 = vsel %vm561, %v4371, 0
      %v4521 = vsel %vm561, %v4374, 0
      %v4524 = vsel %vm561, %v4377, 0
      %4526 = vmatpush.bf16.msra.mxu0 %v4473
      %4527 = vmatpush.bf16.msra.mxu0 %v4472
      %4528 = vmatpush.bf16.msra.mxu0 %v4471
      %4529 = vmatpush.bf16.msra.mxu0 %v4470
      %4530 = vmatpush.bf16.msra.mxu0 %v4469
      %4531 = vmatpush.bf16.msra.mxu0 %v4468
      %4532 = vmatpush.bf16.msra.mxu0 %v4467
      %4533 = vmatpush.bf16.msra.mxu0 %v4466
      %4534 = vmatmul.bf16.gmra.mxu0 %v4354
      %v4535 = vpop.f32.mrf.mxu0
      %v4536 = vadd.f32 %v4272, %v4535
      %v4537 = vpop.f32.mrf.mxu0
      %v4538 = vadd.f32 %v4272, %v4537
      %4539 = vmatmul.bf16.gmra.mxu0 %v4357
      %v4540 = vpop.f32.mrf.mxu0
      %v4541 = vadd.f32 %v4272, %v4540
      %v4542 = vpop.f32.mrf.mxu0
      %v4543 = vadd.f32 %v4272, %v4542
      %4544 = vmatmul.bf16.gmra.mxu0 %v4360
      %v4545 = vpop.f32.mrf.mxu0
      %v4546 = vadd.f32 %v4272, %v4545
      %v4547 = vpop.f32.mrf.mxu0
      %v4548 = vadd.f32 %v4272, %v4547
      %4549 = vmatmul.bf16.gmra.mxu0 %v4363
      %v4550 = vpop.f32.mrf.mxu0
      %v4551 = vadd.f32 %v4272, %v4550
      %v4552 = vpop.f32.mrf.mxu0
      %v4553 = vadd.f32 %v4272, %v4552
      %4554 = vmatmul.bf16.gmra.mxu0 %v4366
      %v4555 = vpop.f32.mrf.mxu0
      %v4556 = vadd.f32 %v4272, %v4555
      %v4557 = vpop.f32.mrf.mxu0
      %v4558 = vadd.f32 %v4272, %v4557
      %4559 = vmatmul.bf16.gmra.mxu0 %v4369
      %v4560 = vpop.f32.mrf.mxu0
      %v4561 = vadd.f32 %v4272, %v4560
      %v4562 = vpop.f32.mrf.mxu0
      %v4563 = vadd.f32 %v4272, %v4562
      %4564 = vmatmul.bf16.gmra.mxu0 %v4372
      %v4565 = vpop.f32.mrf.mxu0
      %v4566 = vadd.f32 %v4272, %v4565
      %v4567 = vpop.f32.mrf.mxu0
      %v4568 = vadd.f32 %v4272, %v4567
      %4569 = vmatmul.bf16.gmra.mxu0 %v4375
      %v4570 = vpop.f32.mrf.mxu0
      %v4571 = vadd.f32 %v4272, %v4570
      %v4572 = vpop.f32.mrf.mxu0
      %v4573 = vadd.f32 %v4272, %v4572
      %4574 = vdwg.mxu0
      %4575 = vmatpush.bf16.msra.mxu0 %v4481
      %4576 = vmatpush.bf16.msra.mxu0 %v4480
      %4577 = vmatpush.bf16.msra.mxu0 %v4479
      %4578 = vmatpush.bf16.msra.mxu0 %v4478
      %4579 = vmatpush.bf16.msra.mxu0 %v4477
      %4580 = vmatpush.bf16.msra.mxu0 %v4476
      %4581 = vmatpush.bf16.msra.mxu0 %v4475
      %4582 = vmatpush.bf16.msra.mxu0 %v4474
      %4583 = vmatmul.bf16.gmra.mxu0 %v4355
      %v4584 = vpop.f32.mrf.mxu0
      %v4585 = vadd.f32 %v4536, %v4584
      %v4586 = vpop.f32.mrf.mxu0
      %v4587 = vadd.f32 %v4538, %v4586
      %4588 = vmatmul.bf16.gmra.mxu0 %v4358
      %v4589 = vpop.f32.mrf.mxu0
      %v4590 = vadd.f32 %v4541, %v4589
      %v4591 = vpop.f32.mrf.mxu0
      %v4592 = vadd.f32 %v4543, %v4591
      %4593 = vmatmul.bf16.gmra.mxu0 %v4361
      %v4594 = vpop.f32.mrf.mxu0
      %v4595 = vadd.f32 %v4546, %v4594
      %v4596 = vpop.f32.mrf.mxu0
      %v4597 = vadd.f32 %v4548, %v4596
      %4598 = vmatmul.bf16.gmra.mxu0 %v4364
      %v4599 = vpop.f32.mrf.mxu0
      %v4600 = vadd.f32 %v4551, %v4599
      %v4601 = vpop.f32.mrf.mxu0
      %v4602 = vadd.f32 %v4553, %v4601
      %4603 = vmatmul.bf16.gmra.mxu0 %v4367
      %v4604 = vpop.f32.mrf.mxu0
      %v4605 = vadd.f32 %v4556, %v4604
      %v4606 = vpop.f32.mrf.mxu0
      %v4607 = vadd.f32 %v4558, %v4606
      %4608 = vmatmul.bf16.gmra.mxu0 %v4370
      %v4609 = vpop.f32.mrf.mxu0
      %v4610 = vadd.f32 %v4561, %v4609
      %v4611 = vpop.f32.mrf.mxu0
      %v4612 = vadd.f32 %v4563, %v4611
      %4613 = vmatmul.bf16.gmra.mxu0 %v4373
      %v4614 = vpop.f32.mrf.mxu0
      %v4615 = vadd.f32 %v4566, %v4614
      %v4616 = vpop.f32.mrf.mxu0
      %v4617 = vadd.f32 %v4568, %v4616
      %4618 = vmatmul.bf16.gmra.mxu0 %v4376
      %v4619 = vpop.f32.mrf.mxu0
      %v4620 = vadd.f32 %v4571, %v4619
      %v4621 = vpop.f32.mrf.mxu0
      %v4622 = vadd.f32 %v4573, %v4621
      %4623 = vdwg.mxu0
      %4624 = vmatpush.bf16.msra.mxu0 0
      %4625 = vmatpush.bf16.msra.mxu0 0
      %4626 = vmatpush.bf16.msra.mxu0 0
      %4627 = vmatpush.bf16.msra.mxu0 0
      %4628 = vmatpush.bf16.msra.mxu0 0
      %4629 = vmatpush.bf16.msra.mxu0 0
      %4630 = vmatpush.bf16.msra.mxu0 %v4483
      %4631 = vmatpush.bf16.msra.mxu0 %v4482
      %4632 = vmatmul.bf16.gmra.mxu0 %v4503
      %v4633 = vpop.f32.mrf.mxu0
      %v4634 = vadd.f32 %v4585, %v4633
      %v4635 = vpop.f32.mrf.mxu0
      %v4636 = vadd.f32 %v4587, %v4635
      %4637 = vmatmul.bf16.gmra.mxu0 %v4506
      %v4638 = vpop.f32.mrf.mxu0
      %v4639 = vadd.f32 %v4590, %v4638
      %v4640 = vpop.f32.mrf.mxu0
      %v4641 = vadd.f32 %v4592, %v4640
      %4642 = vmatmul.bf16.gmra.mxu0 %v4509
      %v4643 = vpop.f32.mrf.mxu0
      %v4644 = vadd.f32 %v4595, %v4643
      %v4645 = vpop.f32.mrf.mxu0
      %v4646 = vadd.f32 %v4597, %v4645
      %4647 = vmatmul.bf16.gmra.mxu0 %v4512
      %v4648 = vpop.f32.mrf.mxu0
      %v4649 = vadd.f32 %v4600, %v4648
      %v4650 = vpop.f32.mrf.mxu0
      %v4651 = vadd.f32 %v4602, %v4650
      %4652 = vmatmul.bf16.gmra.mxu0 %v4515
      %v4653 = vpop.f32.mrf.mxu0
      %v4654 = vadd.f32 %v4605, %v4653
      %v4655 = vpop.f32.mrf.mxu0
      %v4656 = vadd.f32 %v4607, %v4655
      %4657 = vmatmul.bf16.gmra.mxu0 %v4518
      %v4658 = vpop.f32.mrf.mxu0
      %v4659 = vadd.f32 %v4610, %v4658
      %v4660 = vpop.f32.mrf.mxu0
      %v4661 = vadd.f32 %v4612, %v4660
      %4662 = vmatmul.bf16.gmra.mxu0 %v4521
      %v4663 = vpop.f32.mrf.mxu0
      %v4664 = vadd.f32 %v4615, %v4663
      %v4665 = vpop.f32.mrf.mxu0
      %v4666 = vadd.f32 %v4617, %v4665
      %4667 = vmatmul.bf16.gmra.mxu0 %v4524
      %v4668 = vpop.f32.mrf.mxu0
      %v4669 = vadd.f32 %v4620, %v4668
      %v4670 = vpop.f32.mrf.mxu0
      %v4671 = vadd.f32 %v4622, %v4670
      %4672 = vdwg.mxu0
      %v4673 = vadd.f32 %v4634, %v2017
      %v4674 = vadd.f32 %v4636, %v2018
      %v4675 = vadd.f32 %v4639, %v2019
      %v4676 = vadd.f32 %v4641, %v2020
      %v4677 = vadd.f32 %v4644, %v2021
      %v4678 = vadd.f32 %v4646, %v2022
      %v4679 = vadd.f32 %v4649, %v2023
      %v4680 = vadd.f32 %v4651, %v2024
      %v4681 = vadd.f32 %v4654, %v2025
      %v4682 = vadd.f32 %v4656, %v2026
      %v4683 = vadd.f32 %v4659, %v2027
      %v4684 = vadd.f32 %v4661, %v2028
      %v4685 = vadd.f32 %v4664, %v2029
      %v4686 = vadd.f32 %v4666, %v2030
      %v4687 = vadd.f32 %v4669, %v2031
      %v4688 = vadd.f32 %v4671, %v2032
      %v4689 = vmax.f32 %v4673, 0.0
      %v4690 = vmax.f32 %v4674, 0.0
      %v4691 = vmax.f32 %v4675, 0.0
      %v4692 = vmax.f32 %v4676, 0.0
      %v4693 = vmax.f32 %v4677, 0.0
      %v4694 = vmax.f32 %v4678, 0.0
      %v4695 = vmax.f32 %v4679, 0.0
      %v4696 = vmax.f32 %v4680, 0.0
      %v4697 = vmax.f32 %v4681, 0.0
      %v4698 = vmax.f32 %v4682, 0.0
      %v4699 = vmax.f32 %v4683, 0.0
      %v4700 = vmax.f32 %v4684, 0.0
      %v4701 = vmax.f32 %v4685, 0.0
      %v4702 = vmax.f32 %v4686, 0.0
      %v4703 = vmax.f32 %v4687, 0.0
      %v4704 = vmax.f32 %v4688, 0.0
      %v4705 = vmul.f32 %v4689, %v633
      %v4706 = vmul.f32 %v4690, %v638
      %v4707 = vmul.f32 %v4691, %v643
      %v4708 = vmul.f32 %v4692, %v648
      %v4709 = vmul.f32 %v4693, %v653
      %v4710 = vmul.f32 %v4694, %v658
      %v4711 = vmul.f32 %v4695, %v663
      %v4712 = vmul.f32 %v4696, %v668
      %v4713 = vmul.f32 %v4697, %v673
      %v4714 = vmul.f32 %v4698, %v678
      %v4715 = vmul.f32 %v4699, %v683
      %v4716 = vmul.f32 %v4700, %v688
      %v4717 = vmul.f32 %v4701, %v693
      %v4718 = vmul.f32 %v4702, %v698
      %v4719 = vmul.f32 %v4703, %v703
      %v4720 = vmul.f32 %v4704, %v708
      %4721 = vst.msk [vmem:[#allocation2 + $0x10] sm:$0xff] %vm561, %v4705
      %4722 = vst.msk [vmem:[#allocation2 + $0x18] sm:$0xff] %vm561, %v4706
      %4723 = vst.msk [vmem:[#allocation2 + $0x20] sm:$0xff] %vm561, %v4707
      %4724 = vst.msk [vmem:[#allocation2 + $0x28] sm:$0xff] %vm561, %v4708
      %4725 = vst.msk [vmem:[#allocation2 + $0x30] sm:$0xff] %vm561, %v4709
      %4726 = vst.msk [vmem:[#allocation2 + $0x38] sm:$0xff] %vm561, %v4710
      %4727 = vst.msk [vmem:[#allocation2 + $0x40] sm:$0xff] %vm561, %v4711
      %4728 = vst.msk [vmem:[#allocation2 + $0x48] sm:$0xff] %vm561, %v4712
      %4729 = vst.msk [vmem:[#allocation2 + $0x50] sm:$0xff] %vm561, %v4713
      %4730 = vst.msk [vmem:[#allocation2 + $0x58] sm:$0xff] %vm561, %v4714
      %4731 = vst.msk [vmem:[#allocation2 + $0x60] sm:$0xff] %vm561, %v4715
      %4732 = vst.msk [vmem:[#allocation2 + $0x68] sm:$0xff] %vm561, %v4716
      %4733 = vst.msk [vmem:[#allocation2 + $0x70] sm:$0xff] %vm561, %v4717
      %4734 = vst.msk [vmem:[#allocation2 + $0x78] sm:$0xff] %vm561, %v4718
      %4735 = vst.msk [vmem:[#allocation2 + $0x80] sm:$0xff] %vm561, %v4719
      %4736 = vst.msk [vmem:[#allocation2 + $0x88] sm:$0xff] %vm561, %v4720
      %s4737 = scalar_lea.vmem %s4, 288
      %v4738 = vld [vmem:[%s4737] sm:$0xf]
      %v4739 = vld [vmem:[%s4737 + $0x4] sm:$0xf]
      %v4740 = vld [vmem:[%s4737 + $0x8] sm:$0xf]
      %v4741 = vld [vmem:[%s4737 + $0xc] sm:$0xf]
      %v4742 = vld [vmem:[%s4737 + $0x10] sm:$0xf]
      %v4743 = vld [vmem:[%s4737 + $0x14] sm:$0xf]
      %v4744 = vld [vmem:[%s4737 + $0x18] sm:$0xf]
      %v4745 = vld [vmem:[%s4737 + $0x1c] sm:$0xf]
      %v4746 = vld [vmem:[%s4737 + $0x20] sm:$0xf]
      %v4747 = vld [vmem:[%s4737 + $0x24] sm:$0xf]
      %v4748 = vld [vmem:[%s4737 + $0x28] sm:$0xf]
      %v4749 = vld [vmem:[%s4737 + $0x2c] sm:$0xf]
      %v4750 = vld [vmem:[%s4737 + $0x30] sm:$0xf]
      %v4751 = vld [vmem:[%s4737 + $0x34] sm:$0xf]
      %v4752 = vld [vmem:[%s4737 + $0x38] sm:$0xf]
      %v4753 = vld [vmem:[%s4737 + $0x3c] sm:$0xf]
      %v4754 = vld [vmem:[%s4737 + $0x40] sm:$0xf]
      %v4755 = vld [vmem:[%s4737 + $0x44] sm:$0xf]
      %v4756 = vld [vmem:[%s4737 + $0x48] sm:$0xf]
      %v4757 = vld [vmem:[%s4737 + $0x4c] sm:$0xf]
      %v4758 = vld [vmem:[%s4737 + $0x50] sm:$0xf]
      %v4759 = vld [vmem:[%s4737 + $0x54] sm:$0xf]
      %v4760 = vld [vmem:[%s4737 + $0x58] sm:$0xf]
      %v4761 = vld [vmem:[%s4737 + $0x5c] sm:$0xf]
      %v4762 = vld [vmem:[%s4737 + $0x60] sm:$0xf]
      %v4763 = vld [vmem:[%s4737 + $0x64] sm:$0xf]
      %v4764 = vld [vmem:[%s4737 + $0x68] sm:$0xf]
      %v4765 = vld [vmem:[%s4737 + $0x6c] sm:$0xf]
      %v4766 = vld [vmem:[%s4737 + $0x70] sm:$0xf]
      %v4767 = vld [vmem:[%s4737 + $0x74] sm:$0xf]
      %v4768 = vld [vmem:[%s4737 + $0x78] sm:$0xf]
      %v4769 = vld [vmem:[%s4737 + $0x7c] sm:$0xf]
      %v4770 = vld [vmem:[%s4737 + $0x80] sm:$0xf]
      %v4771 = vld [vmem:[%s4737 + $0x84] sm:$0xf]
      %v4772 = vld [vmem:[%s4737 + $0x88] sm:$0xf]
      %v4773 = vld [vmem:[%s4737 + $0x8c] sm:$0xf]
      %s4774 = scalar_lea.vmem %s5, 2
      %v4775 = vld [vmem:[%s4774] sm:$0x1]
      %v4776 = vld [vmem:[#allocation2 + $0x4] sm:$0xff]
      %v4777 = vld [vmem:[#allocation2 + $0xc] sm:$0xff]
      %v4778 = vld [vmem:[#allocation2 + $0x14] sm:$0xff]
      %v4779 = vld [vmem:[#allocation2 + $0x1c] sm:$0xff]
      %v4780 = vld [vmem:[#allocation2 + $0x24] sm:$0xff]
      %v4781 = vld [vmem:[#allocation2 + $0x2c] sm:$0xff]
      %v4782 = vld [vmem:[#allocation2 + $0x34] sm:$0xff]
      %v4783 = vld [vmem:[#allocation2 + $0x3c] sm:$0xff]
      %v4784 = vld [vmem:[#allocation2 + $0x44] sm:$0xff]
      %v4785 = vld [vmem:[#allocation2 + $0x4c] sm:$0xff]
      %v4786 = vld [vmem:[#allocation2 + $0x54] sm:$0xff]
      %v4787 = vld [vmem:[#allocation2 + $0x5c] sm:$0xff]
      %v4788 = vld [vmem:[#allocation2 + $0x64] sm:$0xff]
      %v4789 = vld [vmem:[#allocation2 + $0x6c] sm:$0xff]
      %v4790 = vld [vmem:[#allocation2 + $0x74] sm:$0xff]
      %v4791 = vld [vmem:[#allocation2 + $0x7c] sm:$0xff]
      %v4792 = vpack.c.bf16 %v4776, %v4776
      %v4793 = vpack.c.bf16 %v4777, %v4777
      %v4794 = vpack.c.bf16 %v4778, %v4778
      %v4795 = vpack.c.bf16 %v4779, %v4779
      %v4796 = vpack.c.bf16 %v4780, %v4780
      %v4797 = vpack.c.bf16 %v4781, %v4781
      %v4798 = vpack.c.bf16 %v4782, %v4782
      %v4799 = vpack.c.bf16 %v4783, %v4783
      %v4800 = vpack.c.bf16 %v4784, %v4784
      %v4801 = vpack.c.bf16 %v4785, %v4785
      %v4802 = vpack.c.bf16 %v4786, %v4786
      %v4803 = vpack.c.bf16 %v4787, %v4787
      %v4804 = vpack.c.bf16 %v4788, %v4788
      %v4805 = vpack.c.bf16 %v4789, %v4789
      %v4806 = vpack.c.bf16 %v4790, %v4790
      %v4807 = vpack.c.bf16 %v4791, %v4791
      %4808 = vst.msk [vmem:[#allocation3] sm:$0xf] %vm779, %v4792
      %4809 = vst.msk [vmem:[#allocation3 + $0xc] sm:$0xf] %vm779, %v4793
      %4810 = vst.msk [vmem:[#allocation3 + $0x18] sm:$0xf] %vm779, %v4794
      %4811 = vst.msk [vmem:[#allocation3 + $0x24] sm:$0xf] %vm779, %v4795
      %4812 = vst.msk [vmem:[#allocation3 + $0x30] sm:$0xf] %vm779, %v4796
      %4813 = vst.msk [vmem:[#allocation3 + $0x3c] sm:$0xf] %vm779, %v4797
      %4814 = vst.msk [vmem:[#allocation3 + $0x48] sm:$0xf] %vm779, %v4798
      %4815 = vst.msk [vmem:[#allocation3 + $0x54] sm:$0xf] %vm779, %v4799
      %4816 = vst.msk [vmem:[#allocation3 + $0x60] sm:$0xf] %vm779, %v4800
      %4817 = vst.msk [vmem:[#allocation3 + $0x6c] sm:$0xf] %vm779, %v4801
      %4818 = vst.msk [vmem:[#allocation3 + $0x78] sm:$0xf] %vm779, %v4802
      %4819 = vst.msk [vmem:[#allocation3 + $0x84] sm:$0xf] %vm779, %v4803
      %4820 = vst.msk [vmem:[#allocation3 + $0x90] sm:$0xf] %vm779, %v4804
      %4821 = vst.msk [vmem:[#allocation3 + $0x9c] sm:$0xf] %vm779, %v4805
      %4822 = vst.msk [vmem:[#allocation3 + $0xa8] sm:$0xf] %vm779, %v4806
      %4823 = vst.msk [vmem:[#allocation3 + $0xb4] sm:$0xf] %vm779, %v4807
      %v4824 = vld [vmem:[#allocation2 + $0x5] sm:$0xff]
      %v4825 = vld [vmem:[#allocation2 + $0xd] sm:$0xff]
      %v4826 = vld [vmem:[#allocation2 + $0x15] sm:$0xff]
      %v4827 = vld [vmem:[#allocation2 + $0x1d] sm:$0xff]
      %v4828 = vld [vmem:[#allocation2 + $0x25] sm:$0xff]
      %v4829 = vld [vmem:[#allocation2 + $0x2d] sm:$0xff]
      %v4830 = vld [vmem:[#allocation2 + $0x35] sm:$0xff]
      %v4831 = vld [vmem:[#allocation2 + $0x3d] sm:$0xff]
      %v4832 = vld [vmem:[#allocation2 + $0x45] sm:$0xff]
      %v4833 = vld [vmem:[#allocation2 + $0x4d] sm:$0xff]
      %v4834 = vld [vmem:[#allocation2 + $0x55] sm:$0xff]
      %v4835 = vld [vmem:[#allocation2 + $0x5d] sm:$0xff]
      %v4836 = vld [vmem:[#allocation2 + $0x65] sm:$0xff]
      %v4837 = vld [vmem:[#allocation2 + $0x6d] sm:$0xff]
      %v4838 = vld [vmem:[#allocation2 + $0x75] sm:$0xff]
      %v4839 = vld [vmem:[#allocation2 + $0x7d] sm:$0xff]
      %v4840 = vpack.c.bf16 %v4824, %v4824
      %v4841 = vpack.c.bf16 %v4825, %v4825
      %v4842 = vpack.c.bf16 %v4826, %v4826
      %v4843 = vpack.c.bf16 %v4827, %v4827
      %v4844 = vpack.c.bf16 %v4828, %v4828
      %v4845 = vpack.c.bf16 %v4829, %v4829
      %v4846 = vpack.c.bf16 %v4830, %v4830
      %v4847 = vpack.c.bf16 %v4831, %v4831
      %v4848 = vpack.c.bf16 %v4832, %v4832
      %v4849 = vpack.c.bf16 %v4833, %v4833
      %v4850 = vpack.c.bf16 %v4834, %v4834
      %v4851 = vpack.c.bf16 %v4835, %v4835
      %v4852 = vpack.c.bf16 %v4836, %v4836
      %v4853 = vpack.c.bf16 %v4837, %v4837
      %v4854 = vpack.c.bf16 %v4838, %v4838
      %v4855 = vpack.c.bf16 %v4839, %v4839
      %4872 = vrot.lane.b32.xlu0 %v4840, 32
      %v4873 = vpop.permute.xlu0 %4872
      %4874 = vrot.lane.b32.xlu0 %v4841, 32
      %v4875 = vpop.permute.xlu0 %4874
      %4876 = vrot.lane.b32.xlu0 %v4842, 32
      %v4877 = vpop.permute.xlu0 %4876
      %4878 = vrot.lane.b32.xlu0 %v4843, 32
      %v4879 = vpop.permute.xlu0 %4878
      %4880 = vrot.lane.b32.xlu0 %v4844, 32
      %v4881 = vpop.permute.xlu0 %4880
      %4882 = vrot.lane.b32.xlu0 %v4845, 32
      %v4883 = vpop.permute.xlu0 %4882
      %4884 = vrot.lane.b32.xlu0 %v4846, 32
      %v4885 = vpop.permute.xlu0 %4884
      %4886 = vrot.lane.b32.xlu0 %v4847, 32
      %v4887 = vpop.permute.xlu0 %4886
      %4888 = vrot.lane.b32.xlu0 %v4848, 32
      %v4889 = vpop.permute.xlu0 %4888
      %4890 = vrot.lane.b32.xlu0 %v4849, 32
      %v4891 = vpop.permute.xlu0 %4890
      %4892 = vrot.lane.b32.xlu0 %v4850, 32
      %v4893 = vpop.permute.xlu0 %4892
      %4894 = vrot.lane.b32.xlu0 %v4851, 32
      %v4895 = vpop.permute.xlu0 %4894
      %4896 = vrot.lane.b32.xlu0 %v4852, 32
      %v4897 = vpop.permute.xlu0 %4896
      %4898 = vrot.lane.b32.xlu0 %v4853, 32
      %v4899 = vpop.permute.xlu0 %4898
      %4900 = vrot.lane.b32.xlu0 %v4854, 32
      %v4901 = vpop.permute.xlu0 %4900
      %4902 = vrot.lane.b32.xlu0 %v4855, 32
      %v4903 = vpop.permute.xlu0 %4902
      %4920 = vst.msk [vmem:[#allocation3] sm:$0xf] %vm892, %v4873
      %4921 = vst.msk [vmem:[#allocation3 + $0xc] sm:$0xf] %vm892, %v4875
      %4922 = vst.msk [vmem:[#allocation3 + $0x18] sm:$0xf] %vm892, %v4877
      %4923 = vst.msk [vmem:[#allocation3 + $0x24] sm:$0xf] %vm892, %v4879
      %4924 = vst.msk [vmem:[#allocation3 + $0x30] sm:$0xf] %vm892, %v4881
      %4925 = vst.msk [vmem:[#allocation3 + $0x3c] sm:$0xf] %vm892, %v4883
      %4926 = vst.msk [vmem:[#allocation3 + $0x48] sm:$0xf] %vm892, %v4885
      %4927 = vst.msk [vmem:[#allocation3 + $0x54] sm:$0xf] %vm892, %v4887
      %4928 = vst.msk [vmem:[#allocation3 + $0x60] sm:$0xf] %vm892, %v4889
      %4929 = vst.msk [vmem:[#allocation3 + $0x6c] sm:$0xf] %vm892, %v4891
      %4930 = vst.msk [vmem:[#allocation3 + $0x78] sm:$0xf] %vm892, %v4893
      %4931 = vst.msk [vmem:[#allocation3 + $0x84] sm:$0xf] %vm892, %v4895
      %4932 = vst.msk [vmem:[#allocation3 + $0x90] sm:$0xf] %vm892, %v4897
      %4933 = vst.msk [vmem:[#allocation3 + $0x9c] sm:$0xf] %vm892, %v4899
      %4934 = vst.msk [vmem:[#allocation3 + $0xa8] sm:$0xf] %vm892, %v4901
      %4935 = vst.msk [vmem:[#allocation3 + $0xb4] sm:$0xf] %vm892, %v4903
      %v4936 = vld [vmem:[#allocation2 + $0x6] sm:$0xff]
      %v4937 = vld [vmem:[#allocation2 + $0xe] sm:$0xff]
      %v4938 = vld [vmem:[#allocation2 + $0x16] sm:$0xff]
      %v4939 = vld [vmem:[#allocation2 + $0x1e] sm:$0xff]
      %v4940 = vld [vmem:[#allocation2 + $0x26] sm:$0xff]
      %v4941 = vld [vmem:[#allocation2 + $0x2e] sm:$0xff]
      %v4942 = vld [vmem:[#allocation2 + $0x36] sm:$0xff]
      %v4943 = vld [vmem:[#allocation2 + $0x3e] sm:$0xff]
      %v4944 = vld [vmem:[#allocation2 + $0x46] sm:$0xff]
      %v4945 = vld [vmem:[#allocation2 + $0x4e] sm:$0xff]
      %v4946 = vld [vmem:[#allocation2 + $0x56] sm:$0xff]
      %v4947 = vld [vmem:[#allocation2 + $0x5e] sm:$0xff]
      %v4948 = vld [vmem:[#allocation2 + $0x66] sm:$0xff]
      %v4949 = vld [vmem:[#allocation2 + $0x6e] sm:$0xff]
      %v4950 = vld [vmem:[#allocation2 + $0x76] sm:$0xff]
      %v4951 = vld [vmem:[#allocation2 + $0x7e] sm:$0xff]
      %v4952 = vpack.c.bf16 %v4936, %v4936
      %v4953 = vpack.c.bf16 %v4937, %v4937
      %v4954 = vpack.c.bf16 %v4938, %v4938
      %v4955 = vpack.c.bf16 %v4939, %v4939
      %v4956 = vpack.c.bf16 %v4940, %v4940
      %v4957 = vpack.c.bf16 %v4941, %v4941
      %v4958 = vpack.c.bf16 %v4942, %v4942
      %v4959 = vpack.c.bf16 %v4943, %v4943
      %v4960 = vpack.c.bf16 %v4944, %v4944
      %v4961 = vpack.c.bf16 %v4945, %v4945
      %v4962 = vpack.c.bf16 %v4946, %v4946
      %v4963 = vpack.c.bf16 %v4947, %v4947
      %v4964 = vpack.c.bf16 %v4948, %v4948
      %v4965 = vpack.c.bf16 %v4949, %v4949
      %v4966 = vpack.c.bf16 %v4950, %v4950
      %v4967 = vpack.c.bf16 %v4951, %v4951
      %4984 = vrot.lane.b32.xlu0 %v4952, 64
      %v4985 = vpop.permute.xlu0 %4984
      %4986 = vrot.lane.b32.xlu0 %v4953, 64
      %v4987 = vpop.permute.xlu0 %4986
      %4988 = vrot.lane.b32.xlu0 %v4954, 64
      %v4989 = vpop.permute.xlu0 %4988
      %4990 = vrot.lane.b32.xlu0 %v4955, 64
      %v4991 = vpop.permute.xlu0 %4990
      %4992 = vrot.lane.b32.xlu0 %v4956, 64
      %v4993 = vpop.permute.xlu0 %4992
      %4994 = vrot.lane.b32.xlu0 %v4957, 64
      %v4995 = vpop.permute.xlu0 %4994
      %4996 = vrot.lane.b32.xlu0 %v4958, 64
      %v4997 = vpop.permute.xlu0 %4996
      %4998 = vrot.lane.b32.xlu0 %v4959, 64
      %v4999 = vpop.permute.xlu0 %4998
      %5000 = vrot.lane.b32.xlu0 %v4960, 64
      %v5001 = vpop.permute.xlu0 %5000
      %5002 = vrot.lane.b32.xlu0 %v4961, 64
      %v5003 = vpop.permute.xlu0 %5002
      %5004 = vrot.lane.b32.xlu0 %v4962, 64
      %v5005 = vpop.permute.xlu0 %5004
      %5006 = vrot.lane.b32.xlu0 %v4963, 64
      %v5007 = vpop.permute.xlu0 %5006
      %5008 = vrot.lane.b32.xlu0 %v4964, 64
      %v5009 = vpop.permute.xlu0 %5008
      %5010 = vrot.lane.b32.xlu0 %v4965, 64
      %v5011 = vpop.permute.xlu0 %5010
      %5012 = vrot.lane.b32.xlu0 %v4966, 64
      %v5013 = vpop.permute.xlu0 %5012
      %5014 = vrot.lane.b32.xlu0 %v4967, 64
      %v5015 = vpop.permute.xlu0 %5014
      %5032 = vst.msk [vmem:[#allocation3] sm:$0xf] %vm1005, %v4985
      %5033 = vst.msk [vmem:[#allocation3 + $0xc] sm:$0xf] %vm1005, %v4987
      %5034 = vst.msk [vmem:[#allocation3 + $0x18] sm:$0xf] %vm1005, %v4989
      %5035 = vst.msk [vmem:[#allocation3 + $0x24] sm:$0xf] %vm1005, %v4991
      %5036 = vst.msk [vmem:[#allocation3 + $0x30] sm:$0xf] %vm1005, %v4993
      %5037 = vst.msk [vmem:[#allocation3 + $0x3c] sm:$0xf] %vm1005, %v4995
      %5038 = vst.msk [vmem:[#allocation3 + $0x48] sm:$0xf] %vm1005, %v4997
      %5039 = vst.msk [vmem:[#allocation3 + $0x54] sm:$0xf] %vm1005, %v4999
      %5040 = vst.msk [vmem:[#allocation3 + $0x60] sm:$0xf] %vm1005, %v5001
      %5041 = vst.msk [vmem:[#allocation3 + $0x6c] sm:$0xf] %vm1005, %v5003
      %5042 = vst.msk [vmem:[#allocation3 + $0x78] sm:$0xf] %vm1005, %v5005
      %5043 = vst.msk [vmem:[#allocation3 + $0x84] sm:$0xf] %vm1005, %v5007
      %5044 = vst.msk [vmem:[#allocation3 + $0x90] sm:$0xf] %vm1005, %v5009
      %5045 = vst.msk [vmem:[#allocation3 + $0x9c] sm:$0xf] %vm1005, %v5011
      %5046 = vst.msk [vmem:[#allocation3 + $0xa8] sm:$0xf] %vm1005, %v5013
      %5047 = vst.msk [vmem:[#allocation3 + $0xb4] sm:$0xf] %vm1005, %v5015
      %v5048 = vld [vmem:[#allocation2 + $0xf] sm:$0xff]
      %v5049 = vld [vmem:[#allocation2 + $0x17] sm:$0xff]
      %v5050 = vld [vmem:[#allocation2 + $0x1f] sm:$0xff]
      %v5051 = vld [vmem:[#allocation2 + $0x27] sm:$0xff]
      %v5052 = vld [vmem:[#allocation2 + $0x2f] sm:$0xff]
      %v5053 = vld [vmem:[#allocation2 + $0x37] sm:$0xff]
      %v5054 = vld [vmem:[#allocation2 + $0x3f] sm:$0xff]
      %v5055 = vld [vmem:[#allocation2 + $0x47] sm:$0xff]
      %v5056 = vld [vmem:[#allocation2 + $0x4f] sm:$0xff]
      %v5057 = vld [vmem:[#allocation2 + $0x57] sm:$0xff]
      %v5058 = vld [vmem:[#allocation2 + $0x5f] sm:$0xff]
      %v5059 = vld [vmem:[#allocation2 + $0x67] sm:$0xff]
      %v5060 = vld [vmem:[#allocation2 + $0x6f] sm:$0xff]
      %v5061 = vld [vmem:[#allocation2 + $0x77] sm:$0xff]
      %v5062 = vld [vmem:[#allocation2 + $0x7f] sm:$0xff]
      %v5063 = vld [vmem:[#allocation2 + $0x87] sm:$0xff]
      %v5064 = vpack.c.bf16 %v5048, %v5048
      %v5065 = vpack.c.bf16 %v5049, %v5049
      %v5066 = vpack.c.bf16 %v5050, %v5050
      %v5067 = vpack.c.bf16 %v5051, %v5051
      %v5068 = vpack.c.bf16 %v5052, %v5052
      %v5069 = vpack.c.bf16 %v5053, %v5053
      %v5070 = vpack.c.bf16 %v5054, %v5054
      %v5071 = vpack.c.bf16 %v5055, %v5055
      %v5072 = vpack.c.bf16 %v5056, %v5056
      %v5073 = vpack.c.bf16 %v5057, %v5057
      %v5074 = vpack.c.bf16 %v5058, %v5058
      %v5075 = vpack.c.bf16 %v5059, %v5059
      %v5076 = vpack.c.bf16 %v5060, %v5060
      %v5077 = vpack.c.bf16 %v5061, %v5061
      %v5078 = vpack.c.bf16 %v5062, %v5062
      %v5079 = vpack.c.bf16 %v5063, %v5063
      %5096 = vrot.lane.b32.xlu0 %v5064, 96
      %v5097 = vpop.permute.xlu0 %5096
      %5098 = vrot.lane.b32.xlu0 %v5065, 96
      %v5099 = vpop.permute.xlu0 %5098
      %5100 = vrot.lane.b32.xlu0 %v5066, 96
      %v5101 = vpop.permute.xlu0 %5100
      %5102 = vrot.lane.b32.xlu0 %v5067, 96
      %v5103 = vpop.permute.xlu0 %5102
      %5104 = vrot.lane.b32.xlu0 %v5068, 96
      %v5105 = vpop.permute.xlu0 %5104
      %5106 = vrot.lane.b32.xlu0 %v5069, 96
      %v5107 = vpop.permute.xlu0 %5106
      %5108 = vrot.lane.b32.xlu0 %v5070, 96
      %v5109 = vpop.permute.xlu0 %5108
      %5110 = vrot.lane.b32.xlu0 %v5071, 96
      %v5111 = vpop.permute.xlu0 %5110
      %5112 = vrot.lane.b32.xlu0 %v5072, 96
      %v5113 = vpop.permute.xlu0 %5112
      %5114 = vrot.lane.b32.xlu0 %v5073, 96
      %v5115 = vpop.permute.xlu0 %5114
      %5116 = vrot.lane.b32.xlu0 %v5074, 96
      %v5117 = vpop.permute.xlu0 %5116
      %5118 = vrot.lane.b32.xlu0 %v5075, 96
      %v5119 = vpop.permute.xlu0 %5118
      %5120 = vrot.lane.b32.xlu0 %v5076, 96
      %v5121 = vpop.permute.xlu0 %5120
      %5122 = vrot.lane.b32.xlu0 %v5077, 96
      %v5123 = vpop.permute.xlu0 %5122
      %5124 = vrot.lane.b32.xlu0 %v5078, 96
      %v5125 = vpop.permute.xlu0 %5124
      %5126 = vrot.lane.b32.xlu0 %v5079, 96
      %v5127 = vpop.permute.xlu0 %5126
      %5144 = vst.msk [vmem:[#allocation3] sm:$0xf] %vm1118, %v5097
      %5145 = vst.msk [vmem:[#allocation3 + $0xc] sm:$0xf] %vm1118, %v5099
      %5146 = vst.msk [vmem:[#allocation3 + $0x18] sm:$0xf] %vm1118, %v5101
      %5147 = vst.msk [vmem:[#allocation3 + $0x24] sm:$0xf] %vm1118, %v5103
      %5148 = vst.msk [vmem:[#allocation3 + $0x30] sm:$0xf] %vm1118, %v5105
      %5149 = vst.msk [vmem:[#allocation3 + $0x3c] sm:$0xf] %vm1118, %v5107
      %5150 = vst.msk [vmem:[#allocation3 + $0x48] sm:$0xf] %vm1118, %v5109
      %5151 = vst.msk [vmem:[#allocation3 + $0x54] sm:$0xf] %vm1118, %v5111
      %5152 = vst.msk [vmem:[#allocation3 + $0x60] sm:$0xf] %vm1118, %v5113
      %5153 = vst.msk [vmem:[#allocation3 + $0x6c] sm:$0xf] %vm1118, %v5115
      %5154 = vst.msk [vmem:[#allocation3 + $0x78] sm:$0xf] %vm1118, %v5117
      %5155 = vst.msk [vmem:[#allocation3 + $0x84] sm:$0xf] %vm1118, %v5119
      %5156 = vst.msk [vmem:[#allocation3 + $0x90] sm:$0xf] %vm1118, %v5121
      %5157 = vst.msk [vmem:[#allocation3 + $0x9c] sm:$0xf] %vm1118, %v5123
      %5158 = vst.msk [vmem:[#allocation3 + $0xa8] sm:$0xf] %vm1118, %v5125
      %5159 = vst.msk [vmem:[#allocation3 + $0xb4] sm:$0xf] %vm1118, %v5127
      %v5160 = vld [vmem:[#allocation2 + $0x10] sm:$0xff]
      %v5161 = vld [vmem:[#allocation2 + $0x18] sm:$0xff]
      %v5162 = vld [vmem:[#allocation2 + $0x20] sm:$0xff]
      %v5163 = vld [vmem:[#allocation2 + $0x28] sm:$0xff]
      %v5164 = vld [vmem:[#allocation2 + $0x30] sm:$0xff]
      %v5165 = vld [vmem:[#allocation2 + $0x38] sm:$0xff]
      %v5166 = vld [vmem:[#allocation2 + $0x40] sm:$0xff]
      %v5167 = vld [vmem:[#allocation2 + $0x48] sm:$0xff]
      %v5168 = vld [vmem:[#allocation2 + $0x50] sm:$0xff]
      %v5169 = vld [vmem:[#allocation2 + $0x58] sm:$0xff]
      %v5170 = vld [vmem:[#allocation2 + $0x60] sm:$0xff]
      %v5171 = vld [vmem:[#allocation2 + $0x68] sm:$0xff]
      %v5172 = vld [vmem:[#allocation2 + $0x70] sm:$0xff]
      %v5173 = vld [vmem:[#allocation2 + $0x78] sm:$0xff]
      %v5174 = vld [vmem:[#allocation2 + $0x80] sm:$0xff]
      %v5175 = vld [vmem:[#allocation2 + $0x88] sm:$0xff]
      %v5176 = vpack.c.bf16 %v5160, %v5160
      %v5177 = vpack.c.bf16 %v5161, %v5161
      %v5178 = vpack.c.bf16 %v5162, %v5162
      %v5179 = vpack.c.bf16 %v5163, %v5163
      %v5180 = vpack.c.bf16 %v5164, %v5164
      %v5181 = vpack.c.bf16 %v5165, %v5165
      %v5182 = vpack.c.bf16 %v5166, %v5166
      %v5183 = vpack.c.bf16 %v5167, %v5167
      %v5184 = vpack.c.bf16 %v5168, %v5168
      %v5185 = vpack.c.bf16 %v5169, %v5169
      %v5186 = vpack.c.bf16 %v5170, %v5170
      %v5187 = vpack.c.bf16 %v5171, %v5171
      %v5188 = vpack.c.bf16 %v5172, %v5172
      %v5189 = vpack.c.bf16 %v5173, %v5173
      %v5190 = vpack.c.bf16 %v5174, %v5174
      %v5191 = vpack.c.bf16 %v5175, %v5175
      %5192 = vst.msk [vmem:[#allocation3 + $0x4] sm:$0xf] %vm779, %v5176
      %5193 = vst.msk [vmem:[#allocation3 + $0x10] sm:$0xf] %vm779, %v5177
      %5194 = vst.msk [vmem:[#allocation3 + $0x1c] sm:$0xf] %vm779, %v5178
      %5195 = vst.msk [vmem:[#allocation3 + $0x28] sm:$0xf] %vm779, %v5179
      %5196 = vst.msk [vmem:[#allocation3 + $0x34] sm:$0xf] %vm779, %v5180
      %5197 = vst.msk [vmem:[#allocation3 + $0x40] sm:$0xf] %vm779, %v5181
      %5198 = vst.msk [vmem:[#allocation3 + $0x4c] sm:$0xf] %vm779, %v5182
      %5199 = vst.msk [vmem:[#allocation3 + $0x58] sm:$0xf] %vm779, %v5183
      %5200 = vst.msk [vmem:[#allocation3 + $0x64] sm:$0xf] %vm779, %v5184
      %5201 = vst.msk [vmem:[#allocation3 + $0x70] sm:$0xf] %vm779, %v5185
      %5202 = vst.msk [vmem:[#allocation3 + $0x7c] sm:$0xf] %vm779, %v5186
      %5203 = vst.msk [vmem:[#allocation3 + $0x88] sm:$0xf] %vm779, %v5187
      %5204 = vst.msk [vmem:[#allocation3 + $0x94] sm:$0xf] %vm779, %v5188
      %5205 = vst.msk [vmem:[#allocation3 + $0xa0] sm:$0xf] %vm779, %v5189
      %5206 = vst.msk [vmem:[#allocation3 + $0xac] sm:$0xf] %vm779, %v5190
      %5207 = vst.msk [vmem:[#allocation3 + $0xb8] sm:$0xf] %vm779, %v5191
      %v5208 = vld [vmem:[#allocation2 + $0x11] sm:$0xff]
      %v5209 = vld [vmem:[#allocation2 + $0x19] sm:$0xff]
      %v5210 = vld [vmem:[#allocation2 + $0x21] sm:$0xff]
      %v5211 = vld [vmem:[#allocation2 + $0x29] sm:$0xff]
      %v5212 = vld [vmem:[#allocation2 + $0x31] sm:$0xff]
      %v5213 = vld [vmem:[#allocation2 + $0x39] sm:$0xff]
      %v5214 = vld [vmem:[#allocation2 + $0x41] sm:$0xff]
      %v5215 = vld [vmem:[#allocation2 + $0x49] sm:$0xff]
      %v5216 = vld [vmem:[#allocation2 + $0x51] sm:$0xff]
      %v5217 = vld [vmem:[#allocation2 + $0x59] sm:$0xff]
      %v5218 = vld [vmem:[#allocation2 + $0x61] sm:$0xff]
      %v5219 = vld [vmem:[#allocation2 + $0x69] sm:$0xff]
      %v5220 = vld [vmem:[#allocation2 + $0x71] sm:$0xff]
      %v5221 = vld [vmem:[#allocation2 + $0x79] sm:$0xff]
      %v5222 = vld [vmem:[#allocation2 + $0x81] sm:$0xff]
      %v5223 = vld [vmem:[#allocation2 + $0x89] sm:$0xff]
      %v5224 = vpack.c.bf16 %v5208, %v5208
      %v5225 = vpack.c.bf16 %v5209, %v5209
      %v5226 = vpack.c.bf16 %v5210, %v5210
      %v5227 = vpack.c.bf16 %v5211, %v5211
      %v5228 = vpack.c.bf16 %v5212, %v5212
      %v5229 = vpack.c.bf16 %v5213, %v5213
      %v5230 = vpack.c.bf16 %v5214, %v5214
      %v5231 = vpack.c.bf16 %v5215, %v5215
      %v5232 = vpack.c.bf16 %v5216, %v5216
      %v5233 = vpack.c.bf16 %v5217, %v5217
      %v5234 = vpack.c.bf16 %v5218, %v5218
      %v5235 = vpack.c.bf16 %v5219, %v5219
      %v5236 = vpack.c.bf16 %v5220, %v5220
      %v5237 = vpack.c.bf16 %v5221, %v5221
      %v5238 = vpack.c.bf16 %v5222, %v5222
      %v5239 = vpack.c.bf16 %v5223, %v5223
      %5256 = vrot.lane.b32.xlu0 %v5224, 32
      %v5257 = vpop.permute.xlu0 %5256
      %5258 = vrot.lane.b32.xlu0 %v5225, 32
      %v5259 = vpop.permute.xlu0 %5258
      %5260 = vrot.lane.b32.xlu0 %v5226, 32
      %v5261 = vpop.permute.xlu0 %5260
      %5262 = vrot.lane.b32.xlu0 %v5227, 32
      %v5263 = vpop.permute.xlu0 %5262
      %5264 = vrot.lane.b32.xlu0 %v5228, 32
      %v5265 = vpop.permute.xlu0 %5264
      %5266 = vrot.lane.b32.xlu0 %v5229, 32
      %v5267 = vpop.permute.xlu0 %5266
      %5268 = vrot.lane.b32.xlu0 %v5230, 32
      %v5269 = vpop.permute.xlu0 %5268
      %5270 = vrot.lane.b32.xlu0 %v5231, 32
      %v5271 = vpop.permute.xlu0 %5270
      %5272 = vrot.lane.b32.xlu0 %v5232, 32
      %v5273 = vpop.permute.xlu0 %5272
      %5274 = vrot.lane.b32.xlu0 %v5233, 32
      %v5275 = vpop.permute.xlu0 %5274
      %5276 = vrot.lane.b32.xlu0 %v5234, 32
      %v5277 = vpop.permute.xlu0 %5276
      %5278 = vrot.lane.b32.xlu0 %v5235, 32
      %v5279 = vpop.permute.xlu0 %5278
      %5280 = vrot.lane.b32.xlu0 %v5236, 32
      %v5281 = vpop.permute.xlu0 %5280
      %5282 = vrot.lane.b32.xlu0 %v5237, 32
      %v5283 = vpop.permute.xlu0 %5282
      %5284 = vrot.lane.b32.xlu0 %v5238, 32
      %v5285 = vpop.permute.xlu0 %5284
      %5286 = vrot.lane.b32.xlu0 %v5239, 32
      %v5287 = vpop.permute.xlu0 %5286
      %5304 = vst.msk [vmem:[#allocation3 + $0x4] sm:$0xf] %vm892, %v5257
      %5305 = vst.msk [vmem:[#allocation3 + $0x10] sm:$0xf] %vm892, %v5259
      %5306 = vst.msk [vmem:[#allocation3 + $0x1c] sm:$0xf] %vm892, %v5261
      %5307 = vst.msk [vmem:[#allocation3 + $0x28] sm:$0xf] %vm892, %v5263
      %5308 = vst.msk [vmem:[#allocation3 + $0x34] sm:$0xf] %vm892, %v5265
      %5309 = vst.msk [vmem:[#allocation3 + $0x40] sm:$0xf] %vm892, %v5267
      %5310 = vst.msk [vmem:[#allocation3 + $0x4c] sm:$0xf] %vm892, %v5269
      %5311 = vst.msk [vmem:[#allocation3 + $0x58] sm:$0xf] %vm892, %v5271
      %5312 = vst.msk [vmem:[#allocation3 + $0x64] sm:$0xf] %vm892, %v5273
      %5313 = vst.msk [vmem:[#allocation3 + $0x70] sm:$0xf] %vm892, %v5275
      %5314 = vst.msk [vmem:[#allocation3 + $0x7c] sm:$0xf] %vm892, %v5277
      %5315 = vst.msk [vmem:[#allocation3 + $0x88] sm:$0xf] %vm892, %v5279
      %5316 = vst.msk [vmem:[#allocation3 + $0x94] sm:$0xf] %vm892, %v5281
      %5317 = vst.msk [vmem:[#allocation3 + $0xa0] sm:$0xf] %vm892, %v5283
      %5318 = vst.msk [vmem:[#allocation3 + $0xac] sm:$0xf] %vm892, %v5285
      %5319 = vst.msk [vmem:[#allocation3 + $0xb8] sm:$0xf] %vm892, %v5287
      %v5320 = vld [vmem:[#allocation2 + $0x1a] sm:$0xff]
      %v5321 = vld [vmem:[#allocation2 + $0x22] sm:$0xff]
      %v5322 = vld [vmem:[#allocation2 + $0x2a] sm:$0xff]
      %v5323 = vld [vmem:[#allocation2 + $0x32] sm:$0xff]
      %v5324 = vld [vmem:[#allocation2 + $0x3a] sm:$0xff]
      %v5325 = vld [vmem:[#allocation2 + $0x42] sm:$0xff]
      %v5326 = vld [vmem:[#allocation2 + $0x4a] sm:$0xff]
      %v5327 = vld [vmem:[#allocation2 + $0x52] sm:$0xff]
      %v5328 = vld [vmem:[#allocation2 + $0x5a] sm:$0xff]
      %v5329 = vld [vmem:[#allocation2 + $0x62] sm:$0xff]
      %v5330 = vld [vmem:[#allocation2 + $0x6a] sm:$0xff]
      %v5331 = vld [vmem:[#allocation2 + $0x72] sm:$0xff]
      %v5332 = vld [vmem:[#allocation2 + $0x7a] sm:$0xff]
      %v5333 = vld [vmem:[#allocation2 + $0x82] sm:$0xff]
      %v5334 = vld [vmem:[#allocation2 + $0x8a] sm:$0xff]
      %v5335 = vld [vmem:[#allocation2 + $0x92] sm:$0xff]
      %v5336 = vpack.c.bf16 %v5320, %v5320
      %v5337 = vpack.c.bf16 %v5321, %v5321
      %v5338 = vpack.c.bf16 %v5322, %v5322
      %v5339 = vpack.c.bf16 %v5323, %v5323
      %v5340 = vpack.c.bf16 %v5324, %v5324
      %v5341 = vpack.c.bf16 %v5325, %v5325
      %v5342 = vpack.c.bf16 %v5326, %v5326
      %v5343 = vpack.c.bf16 %v5327, %v5327
      %v5344 = vpack.c.bf16 %v5328, %v5328
      %v5345 = vpack.c.bf16 %v5329, %v5329
      %v5346 = vpack.c.bf16 %v5330, %v5330
      %v5347 = vpack.c.bf16 %v5331, %v5331
      %v5348 = vpack.c.bf16 %v5332, %v5332
      %v5349 = vpack.c.bf16 %v5333, %v5333
      %v5350 = vpack.c.bf16 %v5334, %v5334
      %v5351 = vpack.c.bf16 %v5335, %v5335
      %5368 = vrot.lane.b32.xlu0 %v5336, 64
      %v5369 = vpop.permute.xlu0 %5368
      %5370 = vrot.lane.b32.xlu0 %v5337, 64
      %v5371 = vpop.permute.xlu0 %5370
      %5372 = vrot.lane.b32.xlu0 %v5338, 64
      %v5373 = vpop.permute.xlu0 %5372
      %5374 = vrot.lane.b32.xlu0 %v5339, 64
      %v5375 = vpop.permute.xlu0 %5374
      %5376 = vrot.lane.b32.xlu0 %v5340, 64
      %v5377 = vpop.permute.xlu0 %5376
      %5378 = vrot.lane.b32.xlu0 %v5341, 64
      %v5379 = vpop.permute.xlu0 %5378
      %5380 = vrot.lane.b32.xlu0 %v5342, 64
      %v5381 = vpop.permute.xlu0 %5380
      %5382 = vrot.lane.b32.xlu0 %v5343, 64
      %v5383 = vpop.permute.xlu0 %5382
      %5384 = vrot.lane.b32.xlu0 %v5344, 64
      %v5385 = vpop.permute.xlu0 %5384
      %5386 = vrot.lane.b32.xlu0 %v5345, 64
      %v5387 = vpop.permute.xlu0 %5386
      %5388 = vrot.lane.b32.xlu0 %v5346, 64
      %v5389 = vpop.permute.xlu0 %5388
      %5390 = vrot.lane.b32.xlu0 %v5347, 64
      %v5391 = vpop.permute.xlu0 %5390
      %5392 = vrot.lane.b32.xlu0 %v5348, 64
      %v5393 = vpop.permute.xlu0 %5392
      %5394 = vrot.lane.b32.xlu0 %v5349, 64
      %v5395 = vpop.permute.xlu0 %5394
      %5396 = vrot.lane.b32.xlu0 %v5350, 64
      %v5397 = vpop.permute.xlu0 %5396
      %5398 = vrot.lane.b32.xlu0 %v5351, 64
      %v5399 = vpop.permute.xlu0 %5398
      %5416 = vst.msk [vmem:[#allocation3 + $0x4] sm:$0xf] %vm1005, %v5369
      %5417 = vst.msk [vmem:[#allocation3 + $0x10] sm:$0xf] %vm1005, %v5371
      %5418 = vst.msk [vmem:[#allocation3 + $0x1c] sm:$0xf] %vm1005, %v5373
      %5419 = vst.msk [vmem:[#allocation3 + $0x28] sm:$0xf] %vm1005, %v5375
      %5420 = vst.msk [vmem:[#allocation3 + $0x34] sm:$0xf] %vm1005, %v5377
      %5421 = vst.msk [vmem:[#allocation3 + $0x40] sm:$0xf] %vm1005, %v5379
      %5422 = vst.msk [vmem:[#allocation3 + $0x4c] sm:$0xf] %vm1005, %v5381
      %5423 = vst.msk [vmem:[#allocation3 + $0x58] sm:$0xf] %vm1005, %v5383
      %5424 = vst.msk [vmem:[#allocation3 + $0x64] sm:$0xf] %vm1005, %v5385
      %5425 = vst.msk [vmem:[#allocation3 + $0x70] sm:$0xf] %vm1005, %v5387
      %5426 = vst.msk [vmem:[#allocation3 + $0x7c] sm:$0xf] %vm1005, %v5389
      %5427 = vst.msk [vmem:[#allocation3 + $0x88] sm:$0xf] %vm1005, %v5391
      %5428 = vst.msk [vmem:[#allocation3 + $0x94] sm:$0xf] %vm1005, %v5393
      %5429 = vst.msk [vmem:[#allocation3 + $0xa0] sm:$0xf] %vm1005, %v5395
      %5430 = vst.msk [vmem:[#allocation3 + $0xac] sm:$0xf] %vm1005, %v5397
      %5431 = vst.msk [vmem:[#allocation3 + $0xb8] sm:$0xf] %vm1005, %v5399
      %v5432 = vld [vmem:[#allocation2 + $0x1b] sm:$0xff]
      %v5433 = vld [vmem:[#allocation2 + $0x23] sm:$0xff]
      %v5434 = vld [vmem:[#allocation2 + $0x2b] sm:$0xff]
      %v5435 = vld [vmem:[#allocation2 + $0x33] sm:$0xff]
      %v5436 = vld [vmem:[#allocation2 + $0x3b] sm:$0xff]
      %v5437 = vld [vmem:[#allocation2 + $0x43] sm:$0xff]
      %v5438 = vld [vmem:[#allocation2 + $0x4b] sm:$0xff]
      %v5439 = vld [vmem:[#allocation2 + $0x53] sm:$0xff]
      %v5440 = vld [vmem:[#allocation2 + $0x5b] sm:$0xff]
      %v5441 = vld [vmem:[#allocation2 + $0x63] sm:$0xff]
      %v5442 = vld [vmem:[#allocation2 + $0x6b] sm:$0xff]
      %v5443 = vld [vmem:[#allocation2 + $0x73] sm:$0xff]
      %v5444 = vld [vmem:[#allocation2 + $0x7b] sm:$0xff]
      %v5445 = vld [vmem:[#allocation2 + $0x83] sm:$0xff]
      %v5446 = vld [vmem:[#allocation2 + $0x8b] sm:$0xff]
      %v5447 = vld [vmem:[#allocation2 + $0x93] sm:$0xff]
      %v5448 = vpack.c.bf16 %v5432, %v5432
      %v5449 = vpack.c.bf16 %v5433, %v5433
      %v5450 = vpack.c.bf16 %v5434, %v5434
      %v5451 = vpack.c.bf16 %v5435, %v5435
      %v5452 = vpack.c.bf16 %v5436, %v5436
      %v5453 = vpack.c.bf16 %v5437, %v5437
      %v5454 = vpack.c.bf16 %v5438, %v5438
      %v5455 = vpack.c.bf16 %v5439, %v5439
      %v5456 = vpack.c.bf16 %v5440, %v5440
      %v5457 = vpack.c.bf16 %v5441, %v5441
      %v5458 = vpack.c.bf16 %v5442, %v5442
      %v5459 = vpack.c.bf16 %v5443, %v5443
      %v5460 = vpack.c.bf16 %v5444, %v5444
      %v5461 = vpack.c.bf16 %v5445, %v5445
      %v5462 = vpack.c.bf16 %v5446, %v5446
      %v5463 = vpack.c.bf16 %v5447, %v5447
      %5480 = vrot.lane.b32.xlu0 %v5448, 96
      %v5481 = vpop.permute.xlu0 %5480
      %5482 = vrot.lane.b32.xlu0 %v5449, 96
      %v5483 = vpop.permute.xlu0 %5482
      %5484 = vrot.lane.b32.xlu0 %v5450, 96
      %v5485 = vpop.permute.xlu0 %5484
      %5486 = vrot.lane.b32.xlu0 %v5451, 96
      %v5487 = vpop.permute.xlu0 %5486
      %5488 = vrot.lane.b32.xlu0 %v5452, 96
      %v5489 = vpop.permute.xlu0 %5488
      %5490 = vrot.lane.b32.xlu0 %v5453, 96
      %v5491 = vpop.permute.xlu0 %5490
      %5492 = vrot.lane.b32.xlu0 %v5454, 96
      %v5493 = vpop.permute.xlu0 %5492
      %5494 = vrot.lane.b32.xlu0 %v5455, 96
      %v5495 = vpop.permute.xlu0 %5494
      %5496 = vrot.lane.b32.xlu0 %v5456, 96
      %v5497 = vpop.permute.xlu0 %5496
      %5498 = vrot.lane.b32.xlu0 %v5457, 96
      %v5499 = vpop.permute.xlu0 %5498
      %5500 = vrot.lane.b32.xlu0 %v5458, 96
      %v5501 = vpop.permute.xlu0 %5500
      %5502 = vrot.lane.b32.xlu0 %v5459, 96
      %v5503 = vpop.permute.xlu0 %5502
      %5504 = vrot.lane.b32.xlu0 %v5460, 96
      %v5505 = vpop.permute.xlu0 %5504
      %5506 = vrot.lane.b32.xlu0 %v5461, 96
      %v5507 = vpop.permute.xlu0 %5506
      %5508 = vrot.lane.b32.xlu0 %v5462, 96
      %v5509 = vpop.permute.xlu0 %5508
      %5510 = vrot.lane.b32.xlu0 %v5463, 96
      %v5511 = vpop.permute.xlu0 %5510
      %5528 = vst.msk [vmem:[#allocation3 + $0x4] sm:$0xf] %vm1118, %v5481
      %5529 = vst.msk [vmem:[#allocation3 + $0x10] sm:$0xf] %vm1118, %v5483
      %5530 = vst.msk [vmem:[#allocation3 + $0x1c] sm:$0xf] %vm1118, %v5485
      %5531 = vst.msk [vmem:[#allocation3 + $0x28] sm:$0xf] %vm1118, %v5487
      %5532 = vst.msk [vmem:[#allocation3 + $0x34] sm:$0xf] %vm1118, %v5489
      %5533 = vst.msk [vmem:[#allocation3 + $0x40] sm:$0xf] %vm1118, %v5491
      %5534 = vst.msk [vmem:[#allocation3 + $0x4c] sm:$0xf] %vm1118, %v5493
      %5535 = vst.msk [vmem:[#allocation3 + $0x58] sm:$0xf] %vm1118, %v5495
      %5536 = vst.msk [vmem:[#allocation3 + $0x64] sm:$0xf] %vm1118, %v5497
      %5537 = vst.msk [vmem:[#allocation3 + $0x70] sm:$0xf] %vm1118, %v5499
      %5538 = vst.msk [vmem:[#allocation3 + $0x7c] sm:$0xf] %vm1118, %v5501
      %5539 = vst.msk [vmem:[#allocation3 + $0x88] sm:$0xf] %vm1118, %v5503
      %5540 = vst.msk [vmem:[#allocation3 + $0x94] sm:$0xf] %vm1118, %v5505
      %5541 = vst.msk [vmem:[#allocation3 + $0xa0] sm:$0xf] %vm1118, %v5507
      %5542 = vst.msk [vmem:[#allocation3 + $0xac] sm:$0xf] %vm1118, %v5509
      %5543 = vst.msk [vmem:[#allocation3 + $0xb8] sm:$0xf] %vm1118, %v5511
      %v5544 = vld [vmem:[#allocation2 + $0x1c] sm:$0xff]
      %v5545 = vld [vmem:[#allocation2 + $0x24] sm:$0xff]
      %v5546 = vld [vmem:[#allocation2 + $0x2c] sm:$0xff]
      %v5547 = vld [vmem:[#allocation2 + $0x34] sm:$0xff]
      %v5548 = vld [vmem:[#allocation2 + $0x3c] sm:$0xff]
      %v5549 = vld [vmem:[#allocation2 + $0x44] sm:$0xff]
      %v5550 = vld [vmem:[#allocation2 + $0x4c] sm:$0xff]
      %v5551 = vld [vmem:[#allocation2 + $0x54] sm:$0xff]
      %v5552 = vld [vmem:[#allocation2 + $0x5c] sm:$0xff]
      %v5553 = vld [vmem:[#allocation2 + $0x64] sm:$0xff]
      %v5554 = vld [vmem:[#allocation2 + $0x6c] sm:$0xff]
      %v5555 = vld [vmem:[#allocation2 + $0x74] sm:$0xff]
      %v5556 = vld [vmem:[#allocation2 + $0x7c] sm:$0xff]
      %v5557 = vld [vmem:[#allocation2 + $0x84] sm:$0xff]
      %v5558 = vld [vmem:[#allocation2 + $0x8c] sm:$0xff]
      %v5559 = vld [vmem:[#allocation2 + $0x94] sm:$0xff]
      %v5560 = vpack.c.bf16 %v5544, %v5544
      %v5561 = vpack.c.bf16 %v5545, %v5545
      %v5562 = vpack.c.bf16 %v5546, %v5546
      %v5563 = vpack.c.bf16 %v5547, %v5547
      %v5564 = vpack.c.bf16 %v5548, %v5548
      %v5565 = vpack.c.bf16 %v5549, %v5549
      %v5566 = vpack.c.bf16 %v5550, %v5550
      %v5567 = vpack.c.bf16 %v5551, %v5551
      %v5568 = vpack.c.bf16 %v5552, %v5552
      %v5569 = vpack.c.bf16 %v5553, %v5553
      %v5570 = vpack.c.bf16 %v5554, %v5554
      %v5571 = vpack.c.bf16 %v5555, %v5555
      %v5572 = vpack.c.bf16 %v5556, %v5556
      %v5573 = vpack.c.bf16 %v5557, %v5557
      %v5574 = vpack.c.bf16 %v5558, %v5558
      %v5575 = vpack.c.bf16 %v5559, %v5559
      %5576 = vst.msk [vmem:[#allocation3 + $0x8] sm:$0xf] %vm779, %v5560
      %5577 = vst.msk [vmem:[#allocation3 + $0x14] sm:$0xf] %vm779, %v5561
      %5578 = vst.msk [vmem:[#allocation3 + $0x20] sm:$0xf] %vm779, %v5562
      %5579 = vst.msk [vmem:[#allocation3 + $0x2c] sm:$0xf] %vm779, %v5563
      %5580 = vst.msk [vmem:[#allocation3 + $0x38] sm:$0xf] %vm779, %v5564
      %5581 = vst.msk [vmem:[#allocation3 + $0x44] sm:$0xf] %vm779, %v5565
      %5582 = vst.msk [vmem:[#allocation3 + $0x50] sm:$0xf] %vm779, %v5566
      %5583 = vst.msk [vmem:[#allocation3 + $0x5c] sm:$0xf] %vm779, %v5567
      %5584 = vst.msk [vmem:[#allocation3 + $0x68] sm:$0xf] %vm779, %v5568
      %5585 = vst.msk [vmem:[#allocation3 + $0x74] sm:$0xf] %vm779, %v5569
      %5586 = vst.msk [vmem:[#allocation3 + $0x80] sm:$0xf] %vm779, %v5570
      %5587 = vst.msk [vmem:[#allocation3 + $0x8c] sm:$0xf] %vm779, %v5571
      %5588 = vst.msk [vmem:[#allocation3 + $0x98] sm:$0xf] %vm779, %v5572
      %5589 = vst.msk [vmem:[#allocation3 + $0xa4] sm:$0xf] %vm779, %v5573
      %5590 = vst.msk [vmem:[#allocation3 + $0xb0] sm:$0xf] %vm779, %v5574
      %5591 = vst.msk [vmem:[#allocation3 + $0xbc] sm:$0xf] %vm779, %v5575
      %v5592 = vld [vmem:[#allocation3] sm:$0xff]
      %v5593 = vld [vmem:[#allocation3 + $0x8] sm:$0xf]
      %v5594 = vld [vmem:[#allocation3 + $0xc] sm:$0xff]
      %v5595 = vld [vmem:[#allocation3 + $0x14] sm:$0xf]
      %v5596 = vld [vmem:[#allocation3 + $0x18] sm:$0xff]
      %v5597 = vld [vmem:[#allocation3 + $0x20] sm:$0xf]
      %v5598 = vld [vmem:[#allocation3 + $0x24] sm:$0xff]
      %v5599 = vld [vmem:[#allocation3 + $0x2c] sm:$0xf]
      %v5600 = vld [vmem:[#allocation3 + $0x30] sm:$0xff]
      %v5601 = vld [vmem:[#allocation3 + $0x38] sm:$0xf]
      %v5602 = vld [vmem:[#allocation3 + $0x3c] sm:$0xff]
      %v5603 = vld [vmem:[#allocation3 + $0x44] sm:$0xf]
      %v5604 = vld [vmem:[#allocation3 + $0x48] sm:$0xff]
      %v5605 = vld [vmem:[#allocation3 + $0x50] sm:$0xf]
      %v5606 = vld [vmem:[#allocation3 + $0x54] sm:$0xff]
      %v5607 = vld [vmem:[#allocation3 + $0x5c] sm:$0xf]
      %v5608 = vld [vmem:[#allocation3 + $0x60] sm:$0xff]
      %v5609 = vld [vmem:[#allocation3 + $0x68] sm:$0xf]
      %v5610 = vld [vmem:[#allocation3 + $0x6c] sm:$0xff]
      %v5611 = vld [vmem:[#allocation3 + $0x74] sm:$0xf]
      %v5612 = vld [vmem:[#allocation3 + $0x78] sm:$0xff]
      %v5613 = vld [vmem:[#allocation3 + $0x80] sm:$0xf]
      %v5614 = vld [vmem:[#allocation3 + $0x84] sm:$0xff]
      %v5615 = vld [vmem:[#allocation3 + $0x8c] sm:$0xf]
      %v5616 = vld [vmem:[#allocation3 + $0x90] sm:$0xff]
      %v5617 = vld [vmem:[#allocation3 + $0x98] sm:$0xf]
      %v5618 = vld [vmem:[#allocation3 + $0x9c] sm:$0xff]
      %v5619 = vld [vmem:[#allocation3 + $0xa4] sm:$0xf]
      %v5620 = vld [vmem:[#allocation3 + $0xa8] sm:$0xff]
      %v5621 = vld [vmem:[#allocation3 + $0xb0] sm:$0xf]
      %v5622 = vld [vmem:[#allocation3 + $0xb4] sm:$0xff]
      %v5623 = vld [vmem:[#allocation3 + $0xbc] sm:$0xf]
      %v5625 = vperm.slane %v4775, 0
      %v5659 = vunpack.c.l.b16 %v5592
      %v5660 = vunpack.c.h.b16 %v5592
      %v5661 = vunpack.c.l.b16 %v5593
      %v5662 = vunpack.c.l.b16 %v5594
      %v5663 = vunpack.c.h.b16 %v5594
      %v5664 = vunpack.c.l.b16 %v5595
      %v5665 = vunpack.c.l.b16 %v5596
      %v5666 = vunpack.c.h.b16 %v5596
      %v5667 = vunpack.c.l.b16 %v5597
      %v5668 = vunpack.c.l.b16 %v5598
      %v5669 = vunpack.c.h.b16 %v5598
      %v5670 = vunpack.c.l.b16 %v5599
      %v5671 = vunpack.c.l.b16 %v5600
      %v5672 = vunpack.c.h.b16 %v5600
      %v5673 = vunpack.c.l.b16 %v5601
      %v5674 = vunpack.c.l.b16 %v5602
      %v5675 = vunpack.c.h.b16 %v5602
      %v5676 = vunpack.c.l.b16 %v5603
      %v5677 = vunpack.c.l.b16 %v5604
      %v5678 = vunpack.c.h.b16 %v5604
      %v5679 = vunpack.c.l.b16 %v5605
      %v5680 = vunpack.c.l.b16 %v5606
      %v5681 = vunpack.c.h.b16 %v5606
      %v5682 = vunpack.c.l.b16 %v5607
      %v5683 = vunpack.c.l.b16 %v5608
      %v5684 = vunpack.c.h.b16 %v5608
      %v5685 = vunpack.c.l.b16 %v5609
      %v5686 = vunpack.c.l.b16 %v5610
      %v5687 = vunpack.c.h.b16 %v5610
      %v5688 = vunpack.c.l.b16 %v5611
      %v5689 = vunpack.c.l.b16 %v5612
      %v5690 = vunpack.c.h.b16 %v5612
      %v5691 = vunpack.c.l.b16 %v5613
      %v5692 = vunpack.c.l.b16 %v5614
      %v5693 = vunpack.c.h.b16 %v5614
      %v5694 = vunpack.c.l.b16 %v5615
      %v5695 = vunpack.c.l.b16 %v5616
      %v5696 = vunpack.c.h.b16 %v5616
      %v5697 = vunpack.c.l.b16 %v5617
      %v5698 = vunpack.c.l.b16 %v5618
      %v5699 = vunpack.c.h.b16 %v5618
      %v5700 = vunpack.c.l.b16 %v5619
      %v5701 = vunpack.c.l.b16 %v5620
      %v5702 = vunpack.c.h.b16 %v5620
      %v5703 = vunpack.c.l.b16 %v5621
      %v5704 = vunpack.c.l.b16 %v5622
      %v5705 = vunpack.c.h.b16 %v5622
      %v5706 = vunpack.c.l.b16 %v5623
      %v5707 = vpack.c.b16 %v5662, %v5659
      %v5708 = vpack.c.b16 %v5663, %v5660
      %v5709 = vpack.c.b16 %v5664, %v5661
      %v5710 = vpack.c.b16 %v5668, %v5665
      %v5711 = vpack.c.b16 %v5669, %v5666
      %v5712 = vpack.c.b16 %v5670, %v5667
      %v5713 = vpack.c.b16 %v5674, %v5671
      %v5714 = vpack.c.b16 %v5675, %v5672
      %v5715 = vpack.c.b16 %v5676, %v5673
      %v5716 = vpack.c.b16 %v5680, %v5677
      %v5717 = vpack.c.b16 %v5681, %v5678
      %v5718 = vpack.c.b16 %v5682, %v5679
      %v5719 = vpack.c.b16 %v5686, %v5683
      %v5720 = vpack.c.b16 %v5687, %v5684
      %v5721 = vpack.c.b16 %v5688, %v5685
      %v5722 = vpack.c.b16 %v5692, %v5689
      %v5723 = vpack.c.b16 %v5693, %v5690
      %v5724 = vpack.c.b16 %v5694, %v5691
      %v5725 = vpack.c.b16 %v5698, %v5695
      %v5726 = vpack.c.b16 %v5699, %v5696
      %v5727 = vpack.c.b16 %v5700, %v5697
      %v5728 = vpack.c.b16 %v5704, %v5701
      %v5729 = vpack.c.b16 %v5705, %v5702
      %v5730 = vpack.c.b16 %v5706, %v5703
      %v5783 = vunpack.c.l.b16 %v4738
      %v5784 = vunpack.c.l.b16 %v4739
      %v5785 = vunpack.c.l.b16 %v4740
      %v5786 = vunpack.c.l.b16 %v4741
      %v5787 = vunpack.c.l.b16 %v4742
      %v5788 = vunpack.c.l.b16 %v4743
      %v5789 = vunpack.c.l.b16 %v4744
      %v5790 = vunpack.c.l.b16 %v4745
      %v5791 = vunpack.c.l.b16 %v4746
      %v5792 = vunpack.c.l.b16 %v4747
      %v5793 = vunpack.c.l.b16 %v4748
      %v5794 = vunpack.c.l.b16 %v4749
      %v5795 = vunpack.c.l.b16 %v4750
      %v5796 = vunpack.c.l.b16 %v4751
      %v5797 = vunpack.c.l.b16 %v4752
      %v5798 = vunpack.c.l.b16 %v4753
      %v5799 = vunpack.c.l.b16 %v4754
      %v5800 = vunpack.c.l.b16 %v4755
      %v5801 = vunpack.c.l.b16 %v4756
      %v5802 = vunpack.c.l.b16 %v4757
      %v5803 = vunpack.c.l.b16 %v4758
      %v5804 = vunpack.c.l.b16 %v4759
      %v5805 = vunpack.c.l.b16 %v4760
      %v5806 = vunpack.c.l.b16 %v4761
      %v5807 = vunpack.c.l.b16 %v4762
      %v5808 = vunpack.c.l.b16 %v4763
      %v5809 = vunpack.c.l.b16 %v4764
      %v5810 = vunpack.c.l.b16 %v4765
      %v5811 = vunpack.c.l.b16 %v4766
      %v5812 = vunpack.c.l.b16 %v4767
      %v5813 = vunpack.c.l.b16 %v4768
      %v5814 = vunpack.c.l.b16 %v4769
      %v5815 = vunpack.c.l.b16 %v4770
      %v5816 = vunpack.c.l.b16 %v4771
      %v5817 = vunpack.c.l.b16 %v4772
      %v5818 = vunpack.c.l.b16 %v4773
      %v5819 = vpack.c.b16 %v5784, %v5783
      %v5820 = vpack.c.b16 %v5786, %v5785
      %v5821 = vpack.c.b16 %v5788, %v5787
      %v5822 = vpack.c.b16 %v5790, %v5789
      %v5823 = vpack.c.b16 %v5792, %v5791
      %v5824 = vpack.c.b16 %v5794, %v5793
      %v5825 = vpack.c.b16 %v5796, %v5795
      %v5826 = vpack.c.b16 %v5798, %v5797
      %v5827 = vpack.c.b16 %v5800, %v5799
      %v5828 = vpack.c.b16 %v5802, %v5801
      %v5829 = vpack.c.b16 %v5804, %v5803
      %v5830 = vpack.c.b16 %v5806, %v5805
      %v5831 = vpack.c.b16 %v5808, %v5807
      %v5832 = vpack.c.b16 %v5810, %v5809
      %v5833 = vpack.c.b16 %v5812, %v5811
      %v5834 = vpack.c.b16 %v5814, %v5813
      %v5835 = vpack.c.b16 %v5816, %v5815
      %v5836 = vpack.c.b16 %v5818, %v5817
      %v5856 = vsel %vm561, %v5709, 0
      %v5859 = vsel %vm561, %v5712, 0
      %v5862 = vsel %vm561, %v5715, 0
      %v5865 = vsel %vm561, %v5718, 0
      %v5868 = vsel %vm561, %v5721, 0
      %v5871 = vsel %vm561, %v5724, 0
      %v5874 = vsel %vm561, %v5727, 0
      %v5877 = vsel %vm561, %v5730, 0
      %5879 = vmatpush.bf16.msra.mxu0 %v5826
      %5880 = vmatpush.bf16.msra.mxu0 %v5825
      %5881 = vmatpush.bf16.msra.mxu0 %v5824
      %5882 = vmatpush.bf16.msra.mxu0 %v5823
      %5883 = vmatpush.bf16.msra.mxu0 %v5822
      %5884 = vmatpush.bf16.msra.mxu0 %v5821
      %5885 = vmatpush.bf16.msra.mxu0 %v5820
      %5886 = vmatpush.bf16.msra.mxu0 %v5819
      %5887 = vmatmul.bf16.gmra.mxu0 %v5707
      %v5888 = vpop.f32.mrf.mxu0
      %v5889 = vadd.f32 %v5625, %v5888
      %v5890 = vpop.f32.mrf.mxu0
      %v5891 = vadd.f32 %v5625, %v5890
      %5892 = vmatmul.bf16.gmra.mxu0 %v5710
      %v5893 = vpop.f32.mrf.mxu0
      %v5894 = vadd.f32 %v5625, %v5893
      %v5895 = vpop.f32.mrf.mxu0
      %v5896 = vadd.f32 %v5625, %v5895
      %5897 = vmatmul.bf16.gmra.mxu0 %v5713
      %v5898 = vpop.f32.mrf.mxu0
      %v5899 = vadd.f32 %v5625, %v5898
      %v5900 = vpop.f32.mrf.mxu0
      %v5901 = vadd.f32 %v5625, %v5900
      %5902 = vmatmul.bf16.gmra.mxu0 %v5716
      %v5903 = vpop.f32.mrf.mxu0
      %v5904 = vadd.f32 %v5625, %v5903
      %v5905 = vpop.f32.mrf.mxu0
      %v5906 = vadd.f32 %v5625, %v5905
      %5907 = vmatmul.bf16.gmra.mxu0 %v5719
      %v5908 = vpop.f32.mrf.mxu0
      %v5909 = vadd.f32 %v5625, %v5908
      %v5910 = vpop.f32.mrf.mxu0
      %v5911 = vadd.f32 %v5625, %v5910
      %5912 = vmatmul.bf16.gmra.mxu0 %v5722
      %v5913 = vpop.f32.mrf.mxu0
      %v5914 = vadd.f32 %v5625, %v5913
      %v5915 = vpop.f32.mrf.mxu0
      %v5916 = vadd.f32 %v5625, %v5915
      %5917 = vmatmul.bf16.gmra.mxu0 %v5725
      %v5918 = vpop.f32.mrf.mxu0
      %v5919 = vadd.f32 %v5625, %v5918
      %v5920 = vpop.f32.mrf.mxu0
      %v5921 = vadd.f32 %v5625, %v5920
      %5922 = vmatmul.bf16.gmra.mxu0 %v5728
      %v5923 = vpop.f32.mrf.mxu0
      %v5924 = vadd.f32 %v5625, %v5923
      %v5925 = vpop.f32.mrf.mxu0
      %v5926 = vadd.f32 %v5625, %v5925
      %5927 = vdwg.mxu0
      %5928 = vmatpush.bf16.msra.mxu0 %v5834
      %5929 = vmatpush.bf16.msra.mxu0 %v5833
      %5930 = vmatpush.bf16.msra.mxu0 %v5832
      %5931 = vmatpush.bf16.msra.mxu0 %v5831
      %5932 = vmatpush.bf16.msra.mxu0 %v5830
      %5933 = vmatpush.bf16.msra.mxu0 %v5829
      %5934 = vmatpush.bf16.msra.mxu0 %v5828
      %5935 = vmatpush.bf16.msra.mxu0 %v5827
      %5936 = vmatmul.bf16.gmra.mxu0 %v5708
      %v5937 = vpop.f32.mrf.mxu0
      %v5938 = vadd.f32 %v5889, %v5937
      %v5939 = vpop.f32.mrf.mxu0
      %v5940 = vadd.f32 %v5891, %v5939
      %5941 = vmatmul.bf16.gmra.mxu0 %v5711
      %v5942 = vpop.f32.mrf.mxu0
      %v5943 = vadd.f32 %v5894, %v5942
      %v5944 = vpop.f32.mrf.mxu0
      %v5945 = vadd.f32 %v5896, %v5944
      %5946 = vmatmul.bf16.gmra.mxu0 %v5714
      %v5947 = vpop.f32.mrf.mxu0
      %v5948 = vadd.f32 %v5899, %v5947
      %v5949 = vpop.f32.mrf.mxu0
      %v5950 = vadd.f32 %v5901, %v5949
      %5951 = vmatmul.bf16.gmra.mxu0 %v5717
      %v5952 = vpop.f32.mrf.mxu0
      %v5953 = vadd.f32 %v5904, %v5952
      %v5954 = vpop.f32.mrf.mxu0
      %v5955 = vadd.f32 %v5906, %v5954
      %5956 = vmatmul.bf16.gmra.mxu0 %v5720
      %v5957 = vpop.f32.mrf.mxu0
      %v5958 = vadd.f32 %v5909, %v5957
      %v5959 = vpop.f32.mrf.mxu0
      %v5960 = vadd.f32 %v5911, %v5959
      %5961 = vmatmul.bf16.gmra.mxu0 %v5723
      %v5962 = vpop.f32.mrf.mxu0
      %v5963 = vadd.f32 %v5914, %v5962
      %v5964 = vpop.f32.mrf.mxu0
      %v5965 = vadd.f32 %v5916, %v5964
      %5966 = vmatmul.bf16.gmra.mxu0 %v5726
      %v5967 = vpop.f32.mrf.mxu0
      %v5968 = vadd.f32 %v5919, %v5967
      %v5969 = vpop.f32.mrf.mxu0
      %v5970 = vadd.f32 %v5921, %v5969
      %5971 = vmatmul.bf16.gmra.mxu0 %v5729
      %v5972 = vpop.f32.mrf.mxu0
      %v5973 = vadd.f32 %v5924, %v5972
      %v5974 = vpop.f32.mrf.mxu0
      %v5975 = vadd.f32 %v5926, %v5974
      %5976 = vdwg.mxu0
      %5977 = vmatpush.bf16.msra.mxu0 0
      %5978 = vmatpush.bf16.msra.mxu0 0
      %5979 = vmatpush.bf16.msra.mxu0 0
      %5980 = vmatpush.bf16.msra.mxu0 0
      %5981 = vmatpush.bf16.msra.mxu0 0
      %5982 = vmatpush.bf16.msra.mxu0 0
      %5983 = vmatpush.bf16.msra.mxu0 %v5836
      %5984 = vmatpush.bf16.msra.mxu0 %v5835
      %5985 = vmatmul.bf16.gmra.mxu0 %v5856
      %v5986 = vpop.f32.mrf.mxu0
      %v5987 = vadd.f32 %v5938, %v5986
      %v5988 = vpop.f32.mrf.mxu0
      %v5989 = vadd.f32 %v5940, %v5988
      %5990 = vmatmul.bf16.gmra.mxu0 %v5859
      %v5991 = vpop.f32.mrf.mxu0
      %v5992 = vadd.f32 %v5943, %v5991
      %v5993 = vpop.f32.mrf.mxu0
      %v5994 = vadd.f32 %v5945, %v5993
      %5995 = vmatmul.bf16.gmra.mxu0 %v5862
      %v5996 = vpop.f32.mrf.mxu0
      %v5997 = vadd.f32 %v5948, %v5996
      %v5998 = vpop.f32.mrf.mxu0
      %v5999 = vadd.f32 %v5950, %v5998
      %6000 = vmatmul.bf16.gmra.mxu0 %v5865
      %v6001 = vpop.f32.mrf.mxu0
      %v6002 = vadd.f32 %v5953, %v6001
      %v6003 = vpop.f32.mrf.mxu0
      %v6004 = vadd.f32 %v5955, %v6003
      %6005 = vmatmul.bf16.gmra.mxu0 %v5868
      %v6006 = vpop.f32.mrf.mxu0
      %v6007 = vadd.f32 %v5958, %v6006
      %v6008 = vpop.f32.mrf.mxu0
      %v6009 = vadd.f32 %v5960, %v6008
      %6010 = vmatmul.bf16.gmra.mxu0 %v5871
      %v6011 = vpop.f32.mrf.mxu0
      %v6012 = vadd.f32 %v5963, %v6011
      %v6013 = vpop.f32.mrf.mxu0
      %v6014 = vadd.f32 %v5965, %v6013
      %6015 = vmatmul.bf16.gmra.mxu0 %v5874
      %v6016 = vpop.f32.mrf.mxu0
      %v6017 = vadd.f32 %v5968, %v6016
      %v6018 = vpop.f32.mrf.mxu0
      %v6019 = vadd.f32 %v5970, %v6018
      %6020 = vmatmul.bf16.gmra.mxu0 %v5877
      %v6021 = vpop.f32.mrf.mxu0
      %v6022 = vadd.f32 %v5973, %v6021
      %v6023 = vpop.f32.mrf.mxu0
      %v6024 = vadd.f32 %v5975, %v6023
      %6025 = vdwg.mxu0
      %v6026 = vmax.f32 %v5987, 0.0
      %v6027 = vmax.f32 %v5989, 0.0
      %v6028 = vmax.f32 %v5992, 0.0
      %v6029 = vmax.f32 %v5994, 0.0
      %v6030 = vmax.f32 %v5997, 0.0
      %v6031 = vmax.f32 %v5999, 0.0
      %v6032 = vmax.f32 %v6002, 0.0
      %v6033 = vmax.f32 %v6004, 0.0
      %v6034 = vmax.f32 %v6007, 0.0
      %v6035 = vmax.f32 %v6009, 0.0
      %v6036 = vmax.f32 %v6012, 0.0
      %v6037 = vmax.f32 %v6014, 0.0
      %v6038 = vmax.f32 %v6017, 0.0
      %v6039 = vmax.f32 %v6019, 0.0
      %v6040 = vmax.f32 %v6022, 0.0
      %v6041 = vmax.f32 %v6024, 0.0
      %v6042 = vmul.f32 %v6026, %v633
      %v6043 = vmul.f32 %v6027, %v638
      %v6044 = vmul.f32 %v6028, %v643
      %v6045 = vmul.f32 %v6029, %v648
      %v6046 = vmul.f32 %v6030, %v653
      %v6047 = vmul.f32 %v6031, %v658
      %v6048 = vmul.f32 %v6032, %v663
      %v6049 = vmul.f32 %v6033, %v668
      %v6050 = vmul.f32 %v6034, %v673
      %v6051 = vmul.f32 %v6035, %v678
      %v6052 = vmul.f32 %v6036, %v683
      %v6053 = vmul.f32 %v6037, %v688
      %v6054 = vmul.f32 %v6038, %v693
      %v6055 = vmul.f32 %v6039, %v698
      %v6056 = vmul.f32 %v6040, %v703
      %v6057 = vmul.f32 %v6041, %v708
      %6058 = vst.msk [vmem:[#allocation2 + $0x10] sm:$0xff] %vm561, %v6042
      %6059 = vst.msk [vmem:[#allocation2 + $0x18] sm:$0xff] %vm561, %v6043
      %6060 = vst.msk [vmem:[#allocation2 + $0x20] sm:$0xff] %vm561, %v6044
      %6061 = vst.msk [vmem:[#allocation2 + $0x28] sm:$0xff] %vm561, %v6045
      %6062 = vst.msk [vmem:[#allocation2 + $0x30] sm:$0xff] %vm561, %v6046
      %6063 = vst.msk [vmem:[#allocation2 + $0x38] sm:$0xff] %vm561, %v6047
      %6064 = vst.msk [vmem:[#allocation2 + $0x40] sm:$0xff] %vm561, %v6048
      %6065 = vst.msk [vmem:[#allocation2 + $0x48] sm:$0xff] %vm561, %v6049
      %6066 = vst.msk [vmem:[#allocation2 + $0x50] sm:$0xff] %vm561, %v6050
      %6067 = vst.msk [vmem:[#allocation2 + $0x58] sm:$0xff] %vm561, %v6051
      %6068 = vst.msk [vmem:[#allocation2 + $0x60] sm:$0xff] %vm561, %v6052
      %6069 = vst.msk [vmem:[#allocation2 + $0x68] sm:$0xff] %vm561, %v6053
      %6070 = vst.msk [vmem:[#allocation2 + $0x70] sm:$0xff] %vm561, %v6054
      %6071 = vst.msk [vmem:[#allocation2 + $0x78] sm:$0xff] %vm561, %v6055
      %6072 = vst.msk [vmem:[#allocation2 + $0x80] sm:$0xff] %vm561, %v6056
      %6073 = vst.msk [vmem:[#allocation2 + $0x88] sm:$0xff] %vm561, %v6057
      %s6074 = scalar_lea.vmem %s4, 432
      %v6075 = vld [vmem:[%s6074] sm:$0xf]
      %v6076 = vld [vmem:[%s6074 + $0x4] sm:$0xf]
      %v6077 = vld [vmem:[%s6074 + $0x8] sm:$0xf]
      %v6078 = vld [vmem:[%s6074 + $0xc] sm:$0xf]
      %v6079 = vld [vmem:[%s6074 + $0x10] sm:$0xf]
      %v6080 = vld [vmem:[%s6074 + $0x14] sm:$0xf]
      %v6081 = vld [vmem:[%s6074 + $0x18] sm:$0xf]
      %v6082 = vld [vmem:[%s6074 + $0x1c] sm:$0xf]
      %v6083 = vld [vmem:[%s6074 + $0x20] sm:$0xf]
      %v6084 = vld [vmem:[%s6074 + $0x24] sm:$0xf]
      %v6085 = vld [vmem:[%s6074 + $0x28] sm:$0xf]
      %v6086 = vld [vmem:[%s6074 + $0x2c] sm:$0xf]
      %v6087 = vld [vmem:[%s6074 + $0x30] sm:$0xf]
      %v6088 = vld [vmem:[%s6074 + $0x34] sm:$0xf]
      %v6089 = vld [vmem:[%s6074 + $0x38] sm:$0xf]
      %v6090 = vld [vmem:[%s6074 + $0x3c] sm:$0xf]
      %v6091 = vld [vmem:[%s6074 + $0x40] sm:$0xf]
      %v6092 = vld [vmem:[%s6074 + $0x44] sm:$0xf]
      %v6093 = vld [vmem:[%s6074 + $0x48] sm:$0xf]
      %v6094 = vld [vmem:[%s6074 + $0x4c] sm:$0xf]
      %v6095 = vld [vmem:[%s6074 + $0x50] sm:$0xf]
      %v6096 = vld [vmem:[%s6074 + $0x54] sm:$0xf]
      %v6097 = vld [vmem:[%s6074 + $0x58] sm:$0xf]
      %v6098 = vld [vmem:[%s6074 + $0x5c] sm:$0xf]
      %v6099 = vld [vmem:[%s6074 + $0x60] sm:$0xf]
      %v6100 = vld [vmem:[%s6074 + $0x64] sm:$0xf]
      %v6101 = vld [vmem:[%s6074 + $0x68] sm:$0xf]
      %v6102 = vld [vmem:[%s6074 + $0x6c] sm:$0xf]
      %v6103 = vld [vmem:[%s6074 + $0x70] sm:$0xf]
      %v6104 = vld [vmem:[%s6074 + $0x74] sm:$0xf]
      %v6105 = vld [vmem:[%s6074 + $0x78] sm:$0xf]
      %v6106 = vld [vmem:[%s6074 + $0x7c] sm:$0xf]
      %v6107 = vld [vmem:[%s6074 + $0x80] sm:$0xf]
      %v6108 = vld [vmem:[%s6074 + $0x84] sm:$0xf]
      %v6109 = vld [vmem:[%s6074 + $0x88] sm:$0xf]
      %v6110 = vld [vmem:[%s6074 + $0x8c] sm:$0xf]
      %s6111 = scalar_lea.vmem %s5, 3
      %v6112 = vld [vmem:[%s6111] sm:$0x1]
      %v6113 = vld [vmem:[#allocation2 + $0x4] sm:$0xff]
      %v6114 = vld [vmem:[#allocation2 + $0xc] sm:$0xff]
      %v6115 = vld [vmem:[#allocation2 + $0x14] sm:$0xff]
      %v6116 = vld [vmem:[#allocation2 + $0x1c] sm:$0xff]
      %v6117 = vld [vmem:[#allocation2 + $0x24] sm:$0xff]
      %v6118 = vld [vmem:[#allocation2 + $0x2c] sm:$0xff]
      %v6119 = vld [vmem:[#allocation2 + $0x34] sm:$0xff]
      %v6120 = vld [vmem:[#allocation2 + $0x3c] sm:$0xff]
      %v6121 = vld [vmem:[#allocation2 + $0x44] sm:$0xff]
      %v6122 = vld [vmem:[#allocation2 + $0x4c] sm:$0xff]
      %v6123 = vld [vmem:[#allocation2 + $0x54] sm:$0xff]
      %v6124 = vld [vmem:[#allocation2 + $0x5c] sm:$0xff]
      %v6125 = vld [vmem:[#allocation2 + $0x64] sm:$0xff]
      %v6126 = vld [vmem:[#allocation2 + $0x6c] sm:$0xff]
      %v6127 = vld [vmem:[#allocation2 + $0x74] sm:$0xff]
      %v6128 = vld [vmem:[#allocation2 + $0x7c] sm:$0xff]
      %v6129 = vpack.c.bf16 %v6113, %v6113
      %v6130 = vpack.c.bf16 %v6114, %v6114
      %v6131 = vpack.c.bf16 %v6115, %v6115
      %v6132 = vpack.c.bf16 %v6116, %v6116
      %v6133 = vpack.c.bf16 %v6117, %v6117
      %v6134 = vpack.c.bf16 %v6118, %v6118
      %v6135 = vpack.c.bf16 %v6119, %v6119
      %v6136 = vpack.c.bf16 %v6120, %v6120
      %v6137 = vpack.c.bf16 %v6121, %v6121
      %v6138 = vpack.c.bf16 %v6122, %v6122
      %v6139 = vpack.c.bf16 %v6123, %v6123
      %v6140 = vpack.c.bf16 %v6124, %v6124
      %v6141 = vpack.c.bf16 %v6125, %v6125
      %v6142 = vpack.c.bf16 %v6126, %v6126
      %v6143 = vpack.c.bf16 %v6127, %v6127
      %v6144 = vpack.c.bf16 %v6128, %v6128
      %6145 = vst.msk [vmem:[#allocation3] sm:$0xf] %vm779, %v6129
      %6146 = vst.msk [vmem:[#allocation3 + $0xc] sm:$0xf] %vm779, %v6130
      %6147 = vst.msk [vmem:[#allocation3 + $0x18] sm:$0xf] %vm779, %v6131
      %6148 = vst.msk [vmem:[#allocation3 + $0x24] sm:$0xf] %vm779, %v6132
      %6149 = vst.msk [vmem:[#allocation3 + $0x30] sm:$0xf] %vm779, %v6133
      %6150 = vst.msk [vmem:[#allocation3 + $0x3c] sm:$0xf] %vm779, %v6134
      %6151 = vst.msk [vmem:[#allocation3 + $0x48] sm:$0xf] %vm779, %v6135
      %6152 = vst.msk [vmem:[#allocation3 + $0x54] sm:$0xf] %vm779, %v6136
      %6153 = vst.msk [vmem:[#allocation3 + $0x60] sm:$0xf] %vm779, %v6137
      %6154 = vst.msk [vmem:[#allocation3 + $0x6c] sm:$0xf] %vm779, %v6138
      %6155 = vst.msk [vmem:[#allocation3 + $0x78] sm:$0xf] %vm779, %v6139
      %6156 = vst.msk [vmem:[#allocation3 + $0x84] sm:$0xf] %vm779, %v6140
      %6157 = vst.msk [vmem:[#allocation3 + $0x90] sm:$0xf] %vm779, %v6141
      %6158 = vst.msk [vmem:[#allocation3 + $0x9c] sm:$0xf] %vm779, %v6142
      %6159 = vst.msk [vmem:[#allocation3 + $0xa8] sm:$0xf] %vm779, %v6143
      %6160 = vst.msk [vmem:[#allocation3 + $0xb4] sm:$0xf] %vm779, %v6144
      %v6161 = vld [vmem:[#allocation2 + $0x5] sm:$0xff]
      %v6162 = vld [vmem:[#allocation2 + $0xd] sm:$0xff]
      %v6163 = vld [vmem:[#allocation2 + $0x15] sm:$0xff]
      %v6164 = vld [vmem:[#allocation2 + $0x1d] sm:$0xff]
      %v6165 = vld [vmem:[#allocation2 + $0x25] sm:$0xff]
      %v6166 = vld [vmem:[#allocation2 + $0x2d] sm:$0xff]
      %v6167 = vld [vmem:[#allocation2 + $0x35] sm:$0xff]
      %v6168 = vld [vmem:[#allocation2 + $0x3d] sm:$0xff]
      %v6169 = vld [vmem:[#allocation2 + $0x45] sm:$0xff]
      %v6170 = vld [vmem:[#allocation2 + $0x4d] sm:$0xff]
      %v6171 = vld [vmem:[#allocation2 + $0x55] sm:$0xff]
      %v6172 = vld [vmem:[#allocation2 + $0x5d] sm:$0xff]
      %v6173 = vld [vmem:[#allocation2 + $0x65] sm:$0xff]
      %v6174 = vld [vmem:[#allocation2 + $0x6d] sm:$0xff]
      %v6175 = vld [vmem:[#allocation2 + $0x75] sm:$0xff]
      %v6176 = vld [vmem:[#allocation2 + $0x7d] sm:$0xff]
      %v6177 = vpack.c.bf16 %v6161, %v6161
      %v6178 = vpack.c.bf16 %v6162, %v6162
      %v6179 = vpack.c.bf16 %v6163, %v6163
      %v6180 = vpack.c.bf16 %v6164, %v6164
      %v6181 = vpack.c.bf16 %v6165, %v6165
      %v6182 = vpack.c.bf16 %v6166, %v6166
      %v6183 = vpack.c.bf16 %v6167, %v6167
      %v6184 = vpack.c.bf16 %v6168, %v6168
      %v6185 = vpack.c.bf16 %v6169, %v6169
      %v6186 = vpack.c.bf16 %v6170, %v6170
      %v6187 = vpack.c.bf16 %v6171, %v6171
      %v6188 = vpack.c.bf16 %v6172, %v6172
      %v6189 = vpack.c.bf16 %v6173, %v6173
      %v6190 = vpack.c.bf16 %v6174, %v6174
      %v6191 = vpack.c.bf16 %v6175, %v6175
      %v6192 = vpack.c.bf16 %v6176, %v6176
      %6209 = vrot.lane.b32.xlu0 %v6177, 32
      %v6210 = vpop.permute.xlu0 %6209
      %6211 = vrot.lane.b32.xlu0 %v6178, 32
      %v6212 = vpop.permute.xlu0 %6211
      %6213 = vrot.lane.b32.xlu0 %v6179, 32
      %v6214 = vpop.permute.xlu0 %6213
      %6215 = vrot.lane.b32.xlu0 %v6180, 32
      %v6216 = vpop.permute.xlu0 %6215
      %6217 = vrot.lane.b32.xlu0 %v6181, 32
      %v6218 = vpop.permute.xlu0 %6217
      %6219 = vrot.lane.b32.xlu0 %v6182, 32
      %v6220 = vpop.permute.xlu0 %6219
      %6221 = vrot.lane.b32.xlu0 %v6183, 32
      %v6222 = vpop.permute.xlu0 %6221
      %6223 = vrot.lane.b32.xlu0 %v6184, 32
      %v6224 = vpop.permute.xlu0 %6223
      %6225 = vrot.lane.b32.xlu0 %v6185, 32
      %v6226 = vpop.permute.xlu0 %6225
      %6227 = vrot.lane.b32.xlu0 %v6186, 32
      %v6228 = vpop.permute.xlu0 %6227
      %6229 = vrot.lane.b32.xlu0 %v6187, 32
      %v6230 = vpop.permute.xlu0 %6229
      %6231 = vrot.lane.b32.xlu0 %v6188, 32
      %v6232 = vpop.permute.xlu0 %6231
      %6233 = vrot.lane.b32.xlu0 %v6189, 32
      %v6234 = vpop.permute.xlu0 %6233
      %6235 = vrot.lane.b32.xlu0 %v6190, 32
      %v6236 = vpop.permute.xlu0 %6235
      %6237 = vrot.lane.b32.xlu0 %v6191, 32
      %v6238 = vpop.permute.xlu0 %6237
      %6239 = vrot.lane.b32.xlu0 %v6192, 32
      %v6240 = vpop.permute.xlu0 %6239
      %6257 = vst.msk [vmem:[#allocation3] sm:$0xf] %vm892, %v6210
      %6258 = vst.msk [vmem:[#allocation3 + $0xc] sm:$0xf] %vm892, %v6212
      %6259 = vst.msk [vmem:[#allocation3 + $0x18] sm:$0xf] %vm892, %v6214
      %6260 = vst.msk [vmem:[#allocation3 + $0x24] sm:$0xf] %vm892, %v6216
      %6261 = vst.msk [vmem:[#allocation3 + $0x30] sm:$0xf] %vm892, %v6218
      %6262 = vst.msk [vmem:[#allocation3 + $0x3c] sm:$0xf] %vm892, %v6220
      %6263 = vst.msk [vmem:[#allocation3 + $0x48] sm:$0xf] %vm892, %v6222
      %6264 = vst.msk [vmem:[#allocation3 + $0x54] sm:$0xf] %vm892, %v6224
      %6265 = vst.msk [vmem:[#allocation3 + $0x60] sm:$0xf] %vm892, %v6226
      %6266 = vst.msk [vmem:[#allocation3 + $0x6c] sm:$0xf] %vm892, %v6228
      %6267 = vst.msk [vmem:[#allocation3 + $0x78] sm:$0xf] %vm892, %v6230
      %6268 = vst.msk [vmem:[#allocation3 + $0x84] sm:$0xf] %vm892, %v6232
      %6269 = vst.msk [vmem:[#allocation3 + $0x90] sm:$0xf] %vm892, %v6234
      %6270 = vst.msk [vmem:[#allocation3 + $0x9c] sm:$0xf] %vm892, %v6236
      %6271 = vst.msk [vmem:[#allocation3 + $0xa8] sm:$0xf] %vm892, %v6238
      %6272 = vst.msk [vmem:[#allocation3 + $0xb4] sm:$0xf] %vm892, %v6240
      %v6273 = vld [vmem:[#allocation2 + $0x6] sm:$0xff]
      %v6274 = vld [vmem:[#allocation2 + $0xe] sm:$0xff]
      %v6275 = vld [vmem:[#allocation2 + $0x16] sm:$0xff]
      %v6276 = vld [vmem:[#allocation2 + $0x1e] sm:$0xff]
      %v6277 = vld [vmem:[#allocation2 + $0x26] sm:$0xff]
      %v6278 = vld [vmem:[#allocation2 + $0x2e] sm:$0xff]
      %v6279 = vld [vmem:[#allocation2 + $0x36] sm:$0xff]
      %v6280 = vld [vmem:[#allocation2 + $0x3e] sm:$0xff]
      %v6281 = vld [vmem:[#allocation2 + $0x46] sm:$0xff]
      %v6282 = vld [vmem:[#allocation2 + $0x4e] sm:$0xff]
      %v6283 = vld [vmem:[#allocation2 + $0x56] sm:$0xff]
      %v6284 = vld [vmem:[#allocation2 + $0x5e] sm:$0xff]
      %v6285 = vld [vmem:[#allocation2 + $0x66] sm:$0xff]
      %v6286 = vld [vmem:[#allocation2 + $0x6e] sm:$0xff]
      %v6287 = vld [vmem:[#allocation2 + $0x76] sm:$0xff]
      %v6288 = vld [vmem:[#allocation2 + $0x7e] sm:$0xff]
      %v6289 = vpack.c.bf16 %v6273, %v6273
      %v6290 = vpack.c.bf16 %v6274, %v6274
      %v6291 = vpack.c.bf16 %v6275, %v6275
      %v6292 = vpack.c.bf16 %v6276, %v6276
      %v6293 = vpack.c.bf16 %v6277, %v6277
      %v6294 = vpack.c.bf16 %v6278, %v6278
      %v6295 = vpack.c.bf16 %v6279, %v6279
      %v6296 = vpack.c.bf16 %v6280, %v6280
      %v6297 = vpack.c.bf16 %v6281, %v6281
      %v6298 = vpack.c.bf16 %v6282, %v6282
      %v6299 = vpack.c.bf16 %v6283, %v6283
      %v6300 = vpack.c.bf16 %v6284, %v6284
      %v6301 = vpack.c.bf16 %v6285, %v6285
      %v6302 = vpack.c.bf16 %v6286, %v6286
      %v6303 = vpack.c.bf16 %v6287, %v6287
      %v6304 = vpack.c.bf16 %v6288, %v6288
      %6321 = vrot.lane.b32.xlu0 %v6289, 64
      %v6322 = vpop.permute.xlu0 %6321
      %6323 = vrot.lane.b32.xlu0 %v6290, 64
      %v6324 = vpop.permute.xlu0 %6323
      %6325 = vrot.lane.b32.xlu0 %v6291, 64
      %v6326 = vpop.permute.xlu0 %6325
      %6327 = vrot.lane.b32.xlu0 %v6292, 64
      %v6328 = vpop.permute.xlu0 %6327
      %6329 = vrot.lane.b32.xlu0 %v6293, 64
      %v6330 = vpop.permute.xlu0 %6329
      %6331 = vrot.lane.b32.xlu0 %v6294, 64
      %v6332 = vpop.permute.xlu0 %6331
      %6333 = vrot.lane.b32.xlu0 %v6295, 64
      %v6334 = vpop.permute.xlu0 %6333
      %6335 = vrot.lane.b32.xlu0 %v6296, 64
      %v6336 = vpop.permute.xlu0 %6335
      %6337 = vrot.lane.b32.xlu0 %v6297, 64
      %v6338 = vpop.permute.xlu0 %6337
      %6339 = vrot.lane.b32.xlu0 %v6298, 64
      %v6340 = vpop.permute.xlu0 %6339
      %6341 = vrot.lane.b32.xlu0 %v6299, 64
      %v6342 = vpop.permute.xlu0 %6341
      %6343 = vrot.lane.b32.xlu0 %v6300, 64
      %v6344 = vpop.permute.xlu0 %6343
      %6345 = vrot.lane.b32.xlu0 %v6301, 64
      %v6346 = vpop.permute.xlu0 %6345
      %6347 = vrot.lane.b32.xlu0 %v6302, 64
      %v6348 = vpop.permute.xlu0 %6347
      %6349 = vrot.lane.b32.xlu0 %v6303, 64
      %v6350 = vpop.permute.xlu0 %6349
      %6351 = vrot.lane.b32.xlu0 %v6304, 64
      %v6352 = vpop.permute.xlu0 %6351
      %6369 = vst.msk [vmem:[#allocation3] sm:$0xf] %vm1005, %v6322
      %6370 = vst.msk [vmem:[#allocation3 + $0xc] sm:$0xf] %vm1005, %v6324
      %6371 = vst.msk [vmem:[#allocation3 + $0x18] sm:$0xf] %vm1005, %v6326
      %6372 = vst.msk [vmem:[#allocation3 + $0x24] sm:$0xf] %vm1005, %v6328
      %6373 = vst.msk [vmem:[#allocation3 + $0x30] sm:$0xf] %vm1005, %v6330
      %6374 = vst.msk [vmem:[#allocation3 + $0x3c] sm:$0xf] %vm1005, %v6332
      %6375 = vst.msk [vmem:[#allocation3 + $0x48] sm:$0xf] %vm1005, %v6334
      %6376 = vst.msk [vmem:[#allocation3 + $0x54] sm:$0xf] %vm1005, %v6336
      %6377 = vst.msk [vmem:[#allocation3 + $0x60] sm:$0xf] %vm1005, %v6338
      %6378 = vst.msk [vmem:[#allocation3 + $0x6c] sm:$0xf] %vm1005, %v6340
      %6379 = vst.msk [vmem:[#allocation3 + $0x78] sm:$0xf] %vm1005, %v6342
      %6380 = vst.msk [vmem:[#allocation3 + $0x84] sm:$0xf] %vm1005, %v6344
      %6381 = vst.msk [vmem:[#allocation3 + $0x90] sm:$0xf] %vm1005, %v6346
      %6382 = vst.msk [vmem:[#allocation3 + $0x9c] sm:$0xf] %vm1005, %v6348
      %6383 = vst.msk [vmem:[#allocation3 + $0xa8] sm:$0xf] %vm1005, %v6350
      %6384 = vst.msk [vmem:[#allocation3 + $0xb4] sm:$0xf] %vm1005, %v6352
      %v6385 = vld [vmem:[#allocation2 + $0xf] sm:$0xff]
      %v6386 = vld [vmem:[#allocation2 + $0x17] sm:$0xff]
      %v6387 = vld [vmem:[#allocation2 + $0x1f] sm:$0xff]
      %v6388 = vld [vmem:[#allocation2 + $0x27] sm:$0xff]
      %v6389 = vld [vmem:[#allocation2 + $0x2f] sm:$0xff]
      %v6390 = vld [vmem:[#allocation2 + $0x37] sm:$0xff]
      %v6391 = vld [vmem:[#allocation2 + $0x3f] sm:$0xff]
      %v6392 = vld [vmem:[#allocation2 + $0x47] sm:$0xff]
      %v6393 = vld [vmem:[#allocation2 + $0x4f] sm:$0xff]
      %v6394 = vld [vmem:[#allocation2 + $0x57] sm:$0xff]
      %v6395 = vld [vmem:[#allocation2 + $0x5f] sm:$0xff]
      %v6396 = vld [vmem:[#allocation2 + $0x67] sm:$0xff]
      %v6397 = vld [vmem:[#allocation2 + $0x6f] sm:$0xff]
      %v6398 = vld [vmem:[#allocation2 + $0x77] sm:$0xff]
      %v6399 = vld [vmem:[#allocation2 + $0x7f] sm:$0xff]
      %v6400 = vld [vmem:[#allocation2 + $0x87] sm:$0xff]
      %v6401 = vpack.c.bf16 %v6385, %v6385
      %v6402 = vpack.c.bf16 %v6386, %v6386
      %v6403 = vpack.c.bf16 %v6387, %v6387
      %v6404 = vpack.c.bf16 %v6388, %v6388
      %v6405 = vpack.c.bf16 %v6389, %v6389
      %v6406 = vpack.c.bf16 %v6390, %v6390
      %v6407 = vpack.c.bf16 %v6391, %v6391
      %v6408 = vpack.c.bf16 %v6392, %v6392
      %v6409 = vpack.c.bf16 %v6393, %v6393
      %v6410 = vpack.c.bf16 %v6394, %v6394
      %v6411 = vpack.c.bf16 %v6395, %v6395
      %v6412 = vpack.c.bf16 %v6396, %v6396
      %v6413 = vpack.c.bf16 %v6397, %v6397
      %v6414 = vpack.c.bf16 %v6398, %v6398
      %v6415 = vpack.c.bf16 %v6399, %v6399
      %v6416 = vpack.c.bf16 %v6400, %v6400
      %6433 = vrot.lane.b32.xlu0 %v6401, 96
      %v6434 = vpop.permute.xlu0 %6433
      %6435 = vrot.lane.b32.xlu0 %v6402, 96
      %v6436 = vpop.permute.xlu0 %6435
      %6437 = vrot.lane.b32.xlu0 %v6403, 96
      %v6438 = vpop.permute.xlu0 %6437
      %6439 = vrot.lane.b32.xlu0 %v6404, 96
      %v6440 = vpop.permute.xlu0 %6439
      %6441 = vrot.lane.b32.xlu0 %v6405, 96
      %v6442 = vpop.permute.xlu0 %6441
      %6443 = vrot.lane.b32.xlu0 %v6406, 96
      %v6444 = vpop.permute.xlu0 %6443
      %6445 = vrot.lane.b32.xlu0 %v6407, 96
      %v6446 = vpop.permute.xlu0 %6445
      %6447 = vrot.lane.b32.xlu0 %v6408, 96
      %v6448 = vpop.permute.xlu0 %6447
      %6449 = vrot.lane.b32.xlu0 %v6409, 96
      %v6450 = vpop.permute.xlu0 %6449
      %6451 = vrot.lane.b32.xlu0 %v6410, 96
      %v6452 = vpop.permute.xlu0 %6451
      %6453 = vrot.lane.b32.xlu0 %v6411, 96
      %v6454 = vpop.permute.xlu0 %6453
      %6455 = vrot.lane.b32.xlu0 %v6412, 96
      %v6456 = vpop.permute.xlu0 %6455
      %6457 = vrot.lane.b32.xlu0 %v6413, 96
      %v6458 = vpop.permute.xlu0 %6457
      %6459 = vrot.lane.b32.xlu0 %v6414, 96
      %v6460 = vpop.permute.xlu0 %6459
      %6461 = vrot.lane.b32.xlu0 %v6415, 96
      %v6462 = vpop.permute.xlu0 %6461
      %6463 = vrot.lane.b32.xlu0 %v6416, 96
      %v6464 = vpop.permute.xlu0 %6463
      %6481 = vst.msk [vmem:[#allocation3] sm:$0xf] %vm1118, %v6434
      %6482 = vst.msk [vmem:[#allocation3 + $0xc] sm:$0xf] %vm1118, %v6436
      %6483 = vst.msk [vmem:[#allocation3 + $0x18] sm:$0xf] %vm1118, %v6438
      %6484 = vst.msk [vmem:[#allocation3 + $0x24] sm:$0xf] %vm1118, %v6440
      %6485 = vst.msk [vmem:[#allocation3 + $0x30] sm:$0xf] %vm1118, %v6442
      %6486 = vst.msk [vmem:[#allocation3 + $0x3c] sm:$0xf] %vm1118, %v6444
      %6487 = vst.msk [vmem:[#allocation3 + $0x48] sm:$0xf] %vm1118, %v6446
      %6488 = vst.msk [vmem:[#allocation3 + $0x54] sm:$0xf] %vm1118, %v6448
      %6489 = vst.msk [vmem:[#allocation3 + $0x60] sm:$0xf] %vm1118, %v6450
      %6490 = vst.msk [vmem:[#allocation3 + $0x6c] sm:$0xf] %vm1118, %v6452
      %6491 = vst.msk [vmem:[#allocation3 + $0x78] sm:$0xf] %vm1118, %v6454
      %6492 = vst.msk [vmem:[#allocation3 + $0x84] sm:$0xf] %vm1118, %v6456
      %6493 = vst.msk [vmem:[#allocation3 + $0x90] sm:$0xf] %vm1118, %v6458
      %6494 = vst.msk [vmem:[#allocation3 + $0x9c] sm:$0xf] %vm1118, %v6460
      %6495 = vst.msk [vmem:[#allocation3 + $0xa8] sm:$0xf] %vm1118, %v6462
      %6496 = vst.msk [vmem:[#allocation3 + $0xb4] sm:$0xf] %vm1118, %v6464
      %v6497 = vld [vmem:[#allocation2 + $0x10] sm:$0xff]
      %v6498 = vld [vmem:[#allocation2 + $0x18] sm:$0xff]
      %v6499 = vld [vmem:[#allocation2 + $0x20] sm:$0xff]
      %v6500 = vld [vmem:[#allocation2 + $0x28] sm:$0xff]
      %v6501 = vld [vmem:[#allocation2 + $0x30] sm:$0xff]
      %v6502 = vld [vmem:[#allocation2 + $0x38] sm:$0xff]
      %v6503 = vld [vmem:[#allocation2 + $0x40] sm:$0xff]
      %v6504 = vld [vmem:[#allocation2 + $0x48] sm:$0xff]
      %v6505 = vld [vmem:[#allocation2 + $0x50] sm:$0xff]
      %v6506 = vld [vmem:[#allocation2 + $0x58] sm:$0xff]
      %v6507 = vld [vmem:[#allocation2 + $0x60] sm:$0xff]
      %v6508 = vld [vmem:[#allocation2 + $0x68] sm:$0xff]
      %v6509 = vld [vmem:[#allocation2 + $0x70] sm:$0xff]
      %v6510 = vld [vmem:[#allocation2 + $0x78] sm:$0xff]
      %v6511 = vld [vmem:[#allocation2 + $0x80] sm:$0xff]
      %v6512 = vld [vmem:[#allocation2 + $0x88] sm:$0xff]
      %v6513 = vpack.c.bf16 %v6497, %v6497
      %v6514 = vpack.c.bf16 %v6498, %v6498
      %v6515 = vpack.c.bf16 %v6499, %v6499
      %v6516 = vpack.c.bf16 %v6500, %v6500
      %v6517 = vpack.c.bf16 %v6501, %v6501
      %v6518 = vpack.c.bf16 %v6502, %v6502
      %v6519 = vpack.c.bf16 %v6503, %v6503
      %v6520 = vpack.c.bf16 %v6504, %v6504
      %v6521 = vpack.c.bf16 %v6505, %v6505
      %v6522 = vpack.c.bf16 %v6506, %v6506
      %v6523 = vpack.c.bf16 %v6507, %v6507
      %v6524 = vpack.c.bf16 %v6508, %v6508
      %v6525 = vpack.c.bf16 %v6509, %v6509
      %v6526 = vpack.c.bf16 %v6510, %v6510
      %v6527 = vpack.c.bf16 %v6511, %v6511
      %v6528 = vpack.c.bf16 %v6512, %v6512
      %6529 = vst.msk [vmem:[#allocation3 + $0x4] sm:$0xf] %vm779, %v6513
      %6530 = vst.msk [vmem:[#allocation3 + $0x10] sm:$0xf] %vm779, %v6514
      %6531 = vst.msk [vmem:[#allocation3 + $0x1c] sm:$0xf] %vm779, %v6515
      %6532 = vst.msk [vmem:[#allocation3 + $0x28] sm:$0xf] %vm779, %v6516
      %6533 = vst.msk [vmem:[#allocation3 + $0x34] sm:$0xf] %vm779, %v6517
      %6534 = vst.msk [vmem:[#allocation3 + $0x40] sm:$0xf] %vm779, %v6518
      %6535 = vst.msk [vmem:[#allocation3 + $0x4c] sm:$0xf] %vm779, %v6519
      %6536 = vst.msk [vmem:[#allocation3 + $0x58] sm:$0xf] %vm779, %v6520
      %6537 = vst.msk [vmem:[#allocation3 + $0x64] sm:$0xf] %vm779, %v6521
      %6538 = vst.msk [vmem:[#allocation3 + $0x70] sm:$0xf] %vm779, %v6522
      %6539 = vst.msk [vmem:[#allocation3 + $0x7c] sm:$0xf] %vm779, %v6523
      %6540 = vst.msk [vmem:[#allocation3 + $0x88] sm:$0xf] %vm779, %v6524
      %6541 = vst.msk [vmem:[#allocation3 + $0x94] sm:$0xf] %vm779, %v6525
      %6542 = vst.msk [vmem:[#allocation3 + $0xa0] sm:$0xf] %vm779, %v6526
      %6543 = vst.msk [vmem:[#allocation3 + $0xac] sm:$0xf] %vm779, %v6527
      %6544 = vst.msk [vmem:[#allocation3 + $0xb8] sm:$0xf] %vm779, %v6528
      %v6545 = vld [vmem:[#allocation2 + $0x11] sm:$0xff]
      %v6546 = vld [vmem:[#allocation2 + $0x19] sm:$0xff]
      %v6547 = vld [vmem:[#allocation2 + $0x21] sm:$0xff]
      %v6548 = vld [vmem:[#allocation2 + $0x29] sm:$0xff]
      %v6549 = vld [vmem:[#allocation2 + $0x31] sm:$0xff]
      %v6550 = vld [vmem:[#allocation2 + $0x39] sm:$0xff]
      %v6551 = vld [vmem:[#allocation2 + $0x41] sm:$0xff]
      %v6552 = vld [vmem:[#allocation2 + $0x49] sm:$0xff]
      %v6553 = vld [vmem:[#allocation2 + $0x51] sm:$0xff]
      %v6554 = vld [vmem:[#allocation2 + $0x59] sm:$0xff]
      %v6555 = vld [vmem:[#allocation2 + $0x61] sm:$0xff]
      %v6556 = vld [vmem:[#allocation2 + $0x69] sm:$0xff]
      %v6557 = vld [vmem:[#allocation2 + $0x71] sm:$0xff]
      %v6558 = vld [vmem:[#allocation2 + $0x79] sm:$0xff]
      %v6559 = vld [vmem:[#allocation2 + $0x81] sm:$0xff]
      %v6560 = vld [vmem:[#allocation2 + $0x89] sm:$0xff]
      %v6561 = vpack.c.bf16 %v6545, %v6545
      %v6562 = vpack.c.bf16 %v6546, %v6546
      %v6563 = vpack.c.bf16 %v6547, %v6547
      %v6564 = vpack.c.bf16 %v6548, %v6548
      %v6565 = vpack.c.bf16 %v6549, %v6549
      %v6566 = vpack.c.bf16 %v6550, %v6550
      %v6567 = vpack.c.bf16 %v6551, %v6551
      %v6568 = vpack.c.bf16 %v6552, %v6552
      %v6569 = vpack.c.bf16 %v6553, %v6553
      %v6570 = vpack.c.bf16 %v6554, %v6554
      %v6571 = vpack.c.bf16 %v6555, %v6555
      %v6572 = vpack.c.bf16 %v6556, %v6556
      %v6573 = vpack.c.bf16 %v6557, %v6557
      %v6574 = vpack.c.bf16 %v6558, %v6558
      %v6575 = vpack.c.bf16 %v6559, %v6559
      %v6576 = vpack.c.bf16 %v6560, %v6560
      %6593 = vrot.lane.b32.xlu0 %v6561, 32
      %v6594 = vpop.permute.xlu0 %6593
      %6595 = vrot.lane.b32.xlu0 %v6562, 32
      %v6596 = vpop.permute.xlu0 %6595
      %6597 = vrot.lane.b32.xlu0 %v6563, 32
      %v6598 = vpop.permute.xlu0 %6597
      %6599 = vrot.lane.b32.xlu0 %v6564, 32
      %v6600 = vpop.permute.xlu0 %6599
      %6601 = vrot.lane.b32.xlu0 %v6565, 32
      %v6602 = vpop.permute.xlu0 %6601
      %6603 = vrot.lane.b32.xlu0 %v6566, 32
      %v6604 = vpop.permute.xlu0 %6603
      %6605 = vrot.lane.b32.xlu0 %v6567, 32
      %v6606 = vpop.permute.xlu0 %6605
      %6607 = vrot.lane.b32.xlu0 %v6568, 32
      %v6608 = vpop.permute.xlu0 %6607
      %6609 = vrot.lane.b32.xlu0 %v6569, 32
      %v6610 = vpop.permute.xlu0 %6609
      %6611 = vrot.lane.b32.xlu0 %v6570, 32
      %v6612 = vpop.permute.xlu0 %6611
      %6613 = vrot.lane.b32.xlu0 %v6571, 32
      %v6614 = vpop.permute.xlu0 %6613
      %6615 = vrot.lane.b32.xlu0 %v6572, 32
      %v6616 = vpop.permute.xlu0 %6615
      %6617 = vrot.lane.b32.xlu0 %v6573, 32
      %v6618 = vpop.permute.xlu0 %6617
      %6619 = vrot.lane.b32.xlu0 %v6574, 32
      %v6620 = vpop.permute.xlu0 %6619
      %6621 = vrot.lane.b32.xlu0 %v6575, 32
      %v6622 = vpop.permute.xlu0 %6621
      %6623 = vrot.lane.b32.xlu0 %v6576, 32
      %v6624 = vpop.permute.xlu0 %6623
      %6641 = vst.msk [vmem:[#allocation3 + $0x4] sm:$0xf] %vm892, %v6594
      %6642 = vst.msk [vmem:[#allocation3 + $0x10] sm:$0xf] %vm892, %v6596
      %6643 = vst.msk [vmem:[#allocation3 + $0x1c] sm:$0xf] %vm892, %v6598
      %6644 = vst.msk [vmem:[#allocation3 + $0x28] sm:$0xf] %vm892, %v6600
      %6645 = vst.msk [vmem:[#allocation3 + $0x34] sm:$0xf] %vm892, %v6602
      %6646 = vst.msk [vmem:[#allocation3 + $0x40] sm:$0xf] %vm892, %v6604
      %6647 = vst.msk [vmem:[#allocation3 + $0x4c] sm:$0xf] %vm892, %v6606
      %6648 = vst.msk [vmem:[#allocation3 + $0x58] sm:$0xf] %vm892, %v6608
      %6649 = vst.msk [vmem:[#allocation3 + $0x64] sm:$0xf] %vm892, %v6610
      %6650 = vst.msk [vmem:[#allocation3 + $0x70] sm:$0xf] %vm892, %v6612
      %6651 = vst.msk [vmem:[#allocation3 + $0x7c] sm:$0xf] %vm892, %v6614
      %6652 = vst.msk [vmem:[#allocation3 + $0x88] sm:$0xf] %vm892, %v6616
      %6653 = vst.msk [vmem:[#allocation3 + $0x94] sm:$0xf] %vm892, %v6618
      %6654 = vst.msk [vmem:[#allocation3 + $0xa0] sm:$0xf] %vm892, %v6620
      %6655 = vst.msk [vmem:[#allocation3 + $0xac] sm:$0xf] %vm892, %v6622
      %6656 = vst.msk [vmem:[#allocation3 + $0xb8] sm:$0xf] %vm892, %v6624
      %v6657 = vld [vmem:[#allocation2 + $0x1a] sm:$0xff]
      %v6658 = vld [vmem:[#allocation2 + $0x22] sm:$0xff]
      %v6659 = vld [vmem:[#allocation2 + $0x2a] sm:$0xff]
      %v6660 = vld [vmem:[#allocation2 + $0x32] sm:$0xff]
      %v6661 = vld [vmem:[#allocation2 + $0x3a] sm:$0xff]
      %v6662 = vld [vmem:[#allocation2 + $0x42] sm:$0xff]
      %v6663 = vld [vmem:[#allocation2 + $0x4a] sm:$0xff]
      %v6664 = vld [vmem:[#allocation2 + $0x52] sm:$0xff]
      %v6665 = vld [vmem:[#allocation2 + $0x5a] sm:$0xff]
      %v6666 = vld [vmem:[#allocation2 + $0x62] sm:$0xff]
      %v6667 = vld [vmem:[#allocation2 + $0x6a] sm:$0xff]
      %v6668 = vld [vmem:[#allocation2 + $0x72] sm:$0xff]
      %v6669 = vld [vmem:[#allocation2 + $0x7a] sm:$0xff]
      %v6670 = vld [vmem:[#allocation2 + $0x82] sm:$0xff]
      %v6671 = vld [vmem:[#allocation2 + $0x8a] sm:$0xff]
      %v6672 = vld [vmem:[#allocation2 + $0x92] sm:$0xff]
      %v6673 = vpack.c.bf16 %v6657, %v6657
      %v6674 = vpack.c.bf16 %v6658, %v6658
      %v6675 = vpack.c.bf16 %v6659, %v6659
      %v6676 = vpack.c.bf16 %v6660, %v6660
      %v6677 = vpack.c.bf16 %v6661, %v6661
      %v6678 = vpack.c.bf16 %v6662, %v6662
      %v6679 = vpack.c.bf16 %v6663, %v6663
      %v6680 = vpack.c.bf16 %v6664, %v6664
      %v6681 = vpack.c.bf16 %v6665, %v6665
      %v6682 = vpack.c.bf16 %v6666, %v6666
      %v6683 = vpack.c.bf16 %v6667, %v6667
      %v6684 = vpack.c.bf16 %v6668, %v6668
      %v6685 = vpack.c.bf16 %v6669, %v6669
      %v6686 = vpack.c.bf16 %v6670, %v6670
      %v6687 = vpack.c.bf16 %v6671, %v6671
      %v6688 = vpack.c.bf16 %v6672, %v6672
      %6705 = vrot.lane.b32.xlu0 %v6673, 64
      %v6706 = vpop.permute.xlu0 %6705
      %6707 = vrot.lane.b32.xlu0 %v6674, 64
      %v6708 = vpop.permute.xlu0 %6707
      %6709 = vrot.lane.b32.xlu0 %v6675, 64
      %v6710 = vpop.permute.xlu0 %6709
      %6711 = vrot.lane.b32.xlu0 %v6676, 64
      %v6712 = vpop.permute.xlu0 %6711
      %6713 = vrot.lane.b32.xlu0 %v6677, 64
      %v6714 = vpop.permute.xlu0 %6713
      %6715 = vrot.lane.b32.xlu0 %v6678, 64
      %v6716 = vpop.permute.xlu0 %6715
      %6717 = vrot.lane.b32.xlu0 %v6679, 64
      %v6718 = vpop.permute.xlu0 %6717
      %6719 = vrot.lane.b32.xlu0 %v6680, 64
      %v6720 = vpop.permute.xlu0 %6719
      %6721 = vrot.lane.b32.xlu0 %v6681, 64
      %v6722 = vpop.permute.xlu0 %6721
      %6723 = vrot.lane.b32.xlu0 %v6682, 64
      %v6724 = vpop.permute.xlu0 %6723
      %6725 = vrot.lane.b32.xlu0 %v6683, 64
      %v6726 = vpop.permute.xlu0 %6725
      %6727 = vrot.lane.b32.xlu0 %v6684, 64
      %v6728 = vpop.permute.xlu0 %6727
      %6729 = vrot.lane.b32.xlu0 %v6685, 64
      %v6730 = vpop.permute.xlu0 %6729
      %6731 = vrot.lane.b32.xlu0 %v6686, 64
      %v6732 = vpop.permute.xlu0 %6731
      %6733 = vrot.lane.b32.xlu0 %v6687, 64
      %v6734 = vpop.permute.xlu0 %6733
      %6735 = vrot.lane.b32.xlu0 %v6688, 64
      %v6736 = vpop.permute.xlu0 %6735
      %6753 = vst.msk [vmem:[#allocation3 + $0x4] sm:$0xf] %vm1005, %v6706
      %6754 = vst.msk [vmem:[#allocation3 + $0x10] sm:$0xf] %vm1005, %v6708
      %6755 = vst.msk [vmem:[#allocation3 + $0x1c] sm:$0xf] %vm1005, %v6710
      %6756 = vst.msk [vmem:[#allocation3 + $0x28] sm:$0xf] %vm1005, %v6712
      %6757 = vst.msk [vmem:[#allocation3 + $0x34] sm:$0xf] %vm1005, %v6714
      %6758 = vst.msk [vmem:[#allocation3 + $0x40] sm:$0xf] %vm1005, %v6716
      %6759 = vst.msk [vmem:[#allocation3 + $0x4c] sm:$0xf] %vm1005, %v6718
      %6760 = vst.msk [vmem:[#allocation3 + $0x58] sm:$0xf] %vm1005, %v6720
      %6761 = vst.msk [vmem:[#allocation3 + $0x64] sm:$0xf] %vm1005, %v6722
      %6762 = vst.msk [vmem:[#allocation3 + $0x70] sm:$0xf] %vm1005, %v6724
      %6763 = vst.msk [vmem:[#allocation3 + $0x7c] sm:$0xf] %vm1005, %v6726
      %6764 = vst.msk [vmem:[#allocation3 + $0x88] sm:$0xf] %vm1005, %v6728
      %6765 = vst.msk [vmem:[#allocation3 + $0x94] sm:$0xf] %vm1005, %v6730
      %6766 = vst.msk [vmem:[#allocation3 + $0xa0] sm:$0xf] %vm1005, %v6732
      %6767 = vst.msk [vmem:[#allocation3 + $0xac] sm:$0xf] %vm1005, %v6734
      %6768 = vst.msk [vmem:[#allocation3 + $0xb8] sm:$0xf] %vm1005, %v6736
      %v6769 = vld [vmem:[#allocation2 + $0x1b] sm:$0xff]
      %v6770 = vld [vmem:[#allocation2 + $0x23] sm:$0xff]
      %v6771 = vld [vmem:[#allocation2 + $0x2b] sm:$0xff]
      %v6772 = vld [vmem:[#allocation2 + $0x33] sm:$0xff]
      %v6773 = vld [vmem:[#allocation2 + $0x3b] sm:$0xff]
      %v6774 = vld [vmem:[#allocation2 + $0x43] sm:$0xff]
      %v6775 = vld [vmem:[#allocation2 + $0x4b] sm:$0xff]
      %v6776 = vld [vmem:[#allocation2 + $0x53] sm:$0xff]
      %v6777 = vld [vmem:[#allocation2 + $0x5b] sm:$0xff]
      %v6778 = vld [vmem:[#allocation2 + $0x63] sm:$0xff]
      %v6779 = vld [vmem:[#allocation2 + $0x6b] sm:$0xff]
      %v6780 = vld [vmem:[#allocation2 + $0x73] sm:$0xff]
      %v6781 = vld [vmem:[#allocation2 + $0x7b] sm:$0xff]
      %v6782 = vld [vmem:[#allocation2 + $0x83] sm:$0xff]
      %v6783 = vld [vmem:[#allocation2 + $0x8b] sm:$0xff]
      %v6784 = vld [vmem:[#allocation2 + $0x93] sm:$0xff]
      %v6785 = vpack.c.bf16 %v6769, %v6769
      %v6786 = vpack.c.bf16 %v6770, %v6770
      %v6787 = vpack.c.bf16 %v6771, %v6771
      %v6788 = vpack.c.bf16 %v6772, %v6772
      %v6789 = vpack.c.bf16 %v6773, %v6773
      %v6790 = vpack.c.bf16 %v6774, %v6774
      %v6791 = vpack.c.bf16 %v6775, %v6775
      %v6792 = vpack.c.bf16 %v6776, %v6776
      %v6793 = vpack.c.bf16 %v6777, %v6777
      %v6794 = vpack.c.bf16 %v6778, %v6778
      %v6795 = vpack.c.bf16 %v6779, %v6779
      %v6796 = vpack.c.bf16 %v6780, %v6780
      %v6797 = vpack.c.bf16 %v6781, %v6781
      %v6798 = vpack.c.bf16 %v6782, %v6782
      %v6799 = vpack.c.bf16 %v6783, %v6783
      %v6800 = vpack.c.bf16 %v6784, %v6784
      %6817 = vrot.lane.b32.xlu0 %v6785, 96
      %v6818 = vpop.permute.xlu0 %6817
      %6819 = vrot.lane.b32.xlu0 %v6786, 96
      %v6820 = vpop.permute.xlu0 %6819
      %6821 = vrot.lane.b32.xlu0 %v6787, 96
      %v6822 = vpop.permute.xlu0 %6821
      %6823 = vrot.lane.b32.xlu0 %v6788, 96
      %v6824 = vpop.permute.xlu0 %6823
      %6825 = vrot.lane.b32.xlu0 %v6789, 96
      %v6826 = vpop.permute.xlu0 %6825
      %6827 = vrot.lane.b32.xlu0 %v6790, 96
      %v6828 = vpop.permute.xlu0 %6827
      %6829 = vrot.lane.b32.xlu0 %v6791, 96
      %v6830 = vpop.permute.xlu0 %6829
      %6831 = vrot.lane.b32.xlu0 %v6792, 96
      %v6832 = vpop.permute.xlu0 %6831
      %6833 = vrot.lane.b32.xlu0 %v6793, 96
      %v6834 = vpop.permute.xlu0 %6833
      %6835 = vrot.lane.b32.xlu0 %v6794, 96
      %v6836 = vpop.permute.xlu0 %6835
      %6837 = vrot.lane.b32.xlu0 %v6795, 96
      %v6838 = vpop.permute.xlu0 %6837
      %6839 = vrot.lane.b32.xlu0 %v6796, 96
      %v6840 = vpop.permute.xlu0 %6839
      %6841 = vrot.lane.b32.xlu0 %v6797, 96
      %v6842 = vpop.permute.xlu0 %6841
      %6843 = vrot.lane.b32.xlu0 %v6798, 96
      %v6844 = vpop.permute.xlu0 %6843
      %6845 = vrot.lane.b32.xlu0 %v6799, 96
      %v6846 = vpop.permute.xlu0 %6845
      %6847 = vrot.lane.b32.xlu0 %v6800, 96
      %v6848 = vpop.permute.xlu0 %6847
      %6865 = vst.msk [vmem:[#allocation3 + $0x4] sm:$0xf] %vm1118, %v6818
      %6866 = vst.msk [vmem:[#allocation3 + $0x10] sm:$0xf] %vm1118, %v6820
      %6867 = vst.msk [vmem:[#allocation3 + $0x1c] sm:$0xf] %vm1118, %v6822
      %6868 = vst.msk [vmem:[#allocation3 + $0x28] sm:$0xf] %vm1118, %v6824
      %6869 = vst.msk [vmem:[#allocation3 + $0x34] sm:$0xf] %vm1118, %v6826
      %6870 = vst.msk [vmem:[#allocation3 + $0x40] sm:$0xf] %vm1118, %v6828
      %6871 = vst.msk [vmem:[#allocation3 + $0x4c] sm:$0xf] %vm1118, %v6830
      %6872 = vst.msk [vmem:[#allocation3 + $0x58] sm:$0xf] %vm1118, %v6832
      %6873 = vst.msk [vmem:[#allocation3 + $0x64] sm:$0xf] %vm1118, %v6834
      %6874 = vst.msk [vmem:[#allocation3 + $0x70] sm:$0xf] %vm1118, %v6836
      %6875 = vst.msk [vmem:[#allocation3 + $0x7c] sm:$0xf] %vm1118, %v6838
      %6876 = vst.msk [vmem:[#allocation3 + $0x88] sm:$0xf] %vm1118, %v6840
      %6877 = vst.msk [vmem:[#allocation3 + $0x94] sm:$0xf] %vm1118, %v6842
      %6878 = vst.msk [vmem:[#allocation3 + $0xa0] sm:$0xf] %vm1118, %v6844
      %6879 = vst.msk [vmem:[#allocation3 + $0xac] sm:$0xf] %vm1118, %v6846
      %6880 = vst.msk [vmem:[#allocation3 + $0xb8] sm:$0xf] %vm1118, %v6848
      %v6881 = vld [vmem:[#allocation2 + $0x1c] sm:$0xff]
      %v6882 = vld [vmem:[#allocation2 + $0x24] sm:$0xff]
      %v6883 = vld [vmem:[#allocation2 + $0x2c] sm:$0xff]
      %v6884 = vld [vmem:[#allocation2 + $0x34] sm:$0xff]
      %v6885 = vld [vmem:[#allocation2 + $0x3c] sm:$0xff]
      %v6886 = vld [vmem:[#allocation2 + $0x44] sm:$0xff]
      %v6887 = vld [vmem:[#allocation2 + $0x4c] sm:$0xff]
      %v6888 = vld [vmem:[#allocation2 + $0x54] sm:$0xff]
      %v6889 = vld [vmem:[#allocation2 + $0x5c] sm:$0xff]
      %v6890 = vld [vmem:[#allocation2 + $0x64] sm:$0xff]
      %v6891 = vld [vmem:[#allocation2 + $0x6c] sm:$0xff]
      %v6892 = vld [vmem:[#allocation2 + $0x74] sm:$0xff]
      %v6893 = vld [vmem:[#allocation2 + $0x7c] sm:$0xff]
      %v6894 = vld [vmem:[#allocation2 + $0x84] sm:$0xff]
      %v6895 = vld [vmem:[#allocation2 + $0x8c] sm:$0xff]
      %v6896 = vld [vmem:[#allocation2 + $0x94] sm:$0xff]
      %v6897 = vpack.c.bf16 %v6881, %v6881
      %v6898 = vpack.c.bf16 %v6882, %v6882
      %v6899 = vpack.c.bf16 %v6883, %v6883
      %v6900 = vpack.c.bf16 %v6884, %v6884
      %v6901 = vpack.c.bf16 %v6885, %v6885
      %v6902 = vpack.c.bf16 %v6886, %v6886
      %v6903 = vpack.c.bf16 %v6887, %v6887
      %v6904 = vpack.c.bf16 %v6888, %v6888
      %v6905 = vpack.c.bf16 %v6889, %v6889
      %v6906 = vpack.c.bf16 %v6890, %v6890
      %v6907 = vpack.c.bf16 %v6891, %v6891
      %v6908 = vpack.c.bf16 %v6892, %v6892
      %v6909 = vpack.c.bf16 %v6893, %v6893
      %v6910 = vpack.c.bf16 %v6894, %v6894
      %v6911 = vpack.c.bf16 %v6895, %v6895
      %v6912 = vpack.c.bf16 %v6896, %v6896
      %6913 = vst.msk [vmem:[#allocation3 + $0x8] sm:$0xf] %vm779, %v6897
      %6914 = vst.msk [vmem:[#allocation3 + $0x14] sm:$0xf] %vm779, %v6898
      %6915 = vst.msk [vmem:[#allocation3 + $0x20] sm:$0xf] %vm779, %v6899
      %6916 = vst.msk [vmem:[#allocation3 + $0x2c] sm:$0xf] %vm779, %v6900
      %6917 = vst.msk [vmem:[#allocation3 + $0x38] sm:$0xf] %vm779, %v6901
      %6918 = vst.msk [vmem:[#allocation3 + $0x44] sm:$0xf] %vm779, %v6902
      %6919 = vst.msk [vmem:[#allocation3 + $0x50] sm:$0xf] %vm779, %v6903
      %6920 = vst.msk [vmem:[#allocation3 + $0x5c] sm:$0xf] %vm779, %v6904
      %6921 = vst.msk [vmem:[#allocation3 + $0x68] sm:$0xf] %vm779, %v6905
      %6922 = vst.msk [vmem:[#allocation3 + $0x74] sm:$0xf] %vm779, %v6906
      %6923 = vst.msk [vmem:[#allocation3 + $0x80] sm:$0xf] %vm779, %v6907
      %6924 = vst.msk [vmem:[#allocation3 + $0x8c] sm:$0xf] %vm779, %v6908
      %6925 = vst.msk [vmem:[#allocation3 + $0x98] sm:$0xf] %vm779, %v6909
      %6926 = vst.msk [vmem:[#allocation3 + $0xa4] sm:$0xf] %vm779, %v6910
      %6927 = vst.msk [vmem:[#allocation3 + $0xb0] sm:$0xf] %vm779, %v6911
      %6928 = vst.msk [vmem:[#allocation3 + $0xbc] sm:$0xf] %vm779, %v6912
      %v6929 = vld [vmem:[#allocation3] sm:$0xff]
      %v6930 = vld [vmem:[#allocation3 + $0x8] sm:$0xf]
      %v6931 = vld [vmem:[#allocation3 + $0xc] sm:$0xff]
      %v6932 = vld [vmem:[#allocation3 + $0x14] sm:$0xf]
      %v6933 = vld [vmem:[#allocation3 + $0x18] sm:$0xff]
      %v6934 = vld [vmem:[#allocation3 + $0x20] sm:$0xf]
      %v6935 = vld [vmem:[#allocation3 + $0x24] sm:$0xff]
      %v6936 = vld [vmem:[#allocation3 + $0x2c] sm:$0xf]
      %v6937 = vld [vmem:[#allocation3 + $0x30] sm:$0xff]
      %v6938 = vld [vmem:[#allocation3 + $0x38] sm:$0xf]
      %v6939 = vld [vmem:[#allocation3 + $0x3c] sm:$0xff]
      %v6940 = vld [vmem:[#allocation3 + $0x44] sm:$0xf]
      %v6941 = vld [vmem:[#allocation3 + $0x48] sm:$0xff]
      %v6942 = vld [vmem:[#allocation3 + $0x50] sm:$0xf]
      %v6943 = vld [vmem:[#allocation3 + $0x54] sm:$0xff]
      %v6944 = vld [vmem:[#allocation3 + $0x5c] sm:$0xf]
      %v6945 = vld [vmem:[#allocation3 + $0x60] sm:$0xff]
      %v6946 = vld [vmem:[#allocation3 + $0x68] sm:$0xf]
      %v6947 = vld [vmem:[#allocation3 + $0x6c] sm:$0xff]
      %v6948 = vld [vmem:[#allocation3 + $0x74] sm:$0xf]
      %v6949 = vld [vmem:[#allocation3 + $0x78] sm:$0xff]
      %v6950 = vld [vmem:[#allocation3 + $0x80] sm:$0xf]
      %v6951 = vld [vmem:[#allocation3 + $0x84] sm:$0xff]
      %v6952 = vld [vmem:[#allocation3 + $0x8c] sm:$0xf]
      %v6953 = vld [vmem:[#allocation3 + $0x90] sm:$0xff]
      %v6954 = vld [vmem:[#allocation3 + $0x98] sm:$0xf]
      %v6955 = vld [vmem:[#allocation3 + $0x9c] sm:$0xff]
      %v6956 = vld [vmem:[#allocation3 + $0xa4] sm:$0xf]
      %v6957 = vld [vmem:[#allocation3 + $0xa8] sm:$0xff]
      %v6958 = vld [vmem:[#allocation3 + $0xb0] sm:$0xf]
      %v6959 = vld [vmem:[#allocation3 + $0xb4] sm:$0xff]
      %v6960 = vld [vmem:[#allocation3 + $0xbc] sm:$0xf]
      %v6962 = vperm.slane %v6112, 0
      %v6996 = vunpack.c.l.b16 %v6929
      %v6997 = vunpack.c.h.b16 %v6929
      %v6998 = vunpack.c.l.b16 %v6930
      %v6999 = vunpack.c.l.b16 %v6931
      %v7000 = vunpack.c.h.b16 %v6931
      %v7001 = vunpack.c.l.b16 %v6932
      %v7002 = vunpack.c.l.b16 %v6933
      %v7003 = vunpack.c.h.b16 %v6933
      %v7004 = vunpack.c.l.b16 %v6934
      %v7005 = vunpack.c.l.b16 %v6935
      %v7006 = vunpack.c.h.b16 %v6935
      %v7007 = vunpack.c.l.b16 %v6936
      %v7008 = vunpack.c.l.b16 %v6937
      %v7009 = vunpack.c.h.b16 %v6937
      %v7010 = vunpack.c.l.b16 %v6938
      %v7011 = vunpack.c.l.b16 %v6939
      %v7012 = vunpack.c.h.b16 %v6939
      %v7013 = vunpack.c.l.b16 %v6940
      %v7014 = vunpack.c.l.b16 %v6941
      %v7015 = vunpack.c.h.b16 %v6941
      %v7016 = vunpack.c.l.b16 %v6942
      %v7017 = vunpack.c.l.b16 %v6943
      %v7018 = vunpack.c.h.b16 %v6943
      %v7019 = vunpack.c.l.b16 %v6944
      %v7020 = vunpack.c.l.b16 %v6945
      %v7021 = vunpack.c.h.b16 %v6945
      %v7022 = vunpack.c.l.b16 %v6946
      %v7023 = vunpack.c.l.b16 %v6947
      %v7024 = vunpack.c.h.b16 %v6947
      %v7025 = vunpack.c.l.b16 %v6948
      %v7026 = vunpack.c.l.b16 %v6949
      %v7027 = vunpack.c.h.b16 %v6949
      %v7028 = vunpack.c.l.b16 %v6950
      %v7029 = vunpack.c.l.b16 %v6951
      %v7030 = vunpack.c.h.b16 %v6951
      %v7031 = vunpack.c.l.b16 %v6952
      %v7032 = vunpack.c.l.b16 %v6953
      %v7033 = vunpack.c.h.b16 %v6953
      %v7034 = vunpack.c.l.b16 %v6954
      %v7035 = vunpack.c.l.b16 %v6955
      %v7036 = vunpack.c.h.b16 %v6955
      %v7037 = vunpack.c.l.b16 %v6956
      %v7038 = vunpack.c.l.b16 %v6957
      %v7039 = vunpack.c.h.b16 %v6957
      %v7040 = vunpack.c.l.b16 %v6958
      %v7041 = vunpack.c.l.b16 %v6959
      %v7042 = vunpack.c.h.b16 %v6959
      %v7043 = vunpack.c.l.b16 %v6960
      %v7044 = vpack.c.b16 %v6999, %v6996
      %v7045 = vpack.c.b16 %v7000, %v6997
      %v7046 = vpack.c.b16 %v7001, %v6998
      %v7047 = vpack.c.b16 %v7005, %v7002
      %v7048 = vpack.c.b16 %v7006, %v7003
      %v7049 = vpack.c.b16 %v7007, %v7004
      %v7050 = vpack.c.b16 %v7011, %v7008
      %v7051 = vpack.c.b16 %v7012, %v7009
      %v7052 = vpack.c.b16 %v7013, %v7010
      %v7053 = vpack.c.b16 %v7017, %v7014
      %v7054 = vpack.c.b16 %v7018, %v7015
      %v7055 = vpack.c.b16 %v7019, %v7016
      %v7056 = vpack.c.b16 %v7023, %v7020
      %v7057 = vpack.c.b16 %v7024, %v7021
      %v7058 = vpack.c.b16 %v7025, %v7022
      %v7059 = vpack.c.b16 %v7029, %v7026
      %v7060 = vpack.c.b16 %v7030, %v7027
      %v7061 = vpack.c.b16 %v7031, %v7028
      %v7062 = vpack.c.b16 %v7035, %v7032
      %v7063 = vpack.c.b16 %v7036, %v7033
      %v7064 = vpack.c.b16 %v7037, %v7034
      %v7065 = vpack.c.b16 %v7041, %v7038
      %v7066 = vpack.c.b16 %v7042, %v7039
      %v7067 = vpack.c.b16 %v7043, %v7040
      %v7120 = vunpack.c.l.b16 %v6075
      %v7121 = vunpack.c.l.b16 %v6076
      %v7122 = vunpack.c.l.b16 %v6077
      %v7123 = vunpack.c.l.b16 %v6078
      %v7124 = vunpack.c.l.b16 %v6079
      %v7125 = vunpack.c.l.b16 %v6080
      %v7126 = vunpack.c.l.b16 %v6081
      %v7127 = vunpack.c.l.b16 %v6082
      %v7128 = vunpack.c.l.b16 %v6083
      %v7129 = vunpack.c.l.b16 %v6084
      %v7130 = vunpack.c.l.b16 %v6085
      %v7131 = vunpack.c.l.b16 %v6086
      %v7132 = vunpack.c.l.b16 %v6087
      %v7133 = vunpack.c.l.b16 %v6088
      %v7134 = vunpack.c.l.b16 %v6089
      %v7135 = vunpack.c.l.b16 %v6090
      %v7136 = vunpack.c.l.b16 %v6091
      %v7137 = vunpack.c.l.b16 %v6092
      %v7138 = vunpack.c.l.b16 %v6093
      %v7139 = vunpack.c.l.b16 %v6094
      %v7140 = vunpack.c.l.b16 %v6095
      %v7141 = vunpack.c.l.b16 %v6096
      %v7142 = vunpack.c.l.b16 %v6097
      %v7143 = vunpack.c.l.b16 %v6098
      %v7144 = vunpack.c.l.b16 %v6099
      %v7145 = vunpack.c.l.b16 %v6100
      %v7146 = vunpack.c.l.b16 %v6101
      %v7147 = vunpack.c.l.b16 %v6102
      %v7148 = vunpack.c.l.b16 %v6103
      %v7149 = vunpack.c.l.b16 %v6104
      %v7150 = vunpack.c.l.b16 %v6105
      %v7151 = vunpack.c.l.b16 %v6106
      %v7152 = vunpack.c.l.b16 %v6107
      %v7153 = vunpack.c.l.b16 %v6108
      %v7154 = vunpack.c.l.b16 %v6109
      %v7155 = vunpack.c.l.b16 %v6110
      %v7156 = vpack.c.b16 %v7121, %v7120
      %v7157 = vpack.c.b16 %v7123, %v7122
      %v7158 = vpack.c.b16 %v7125, %v7124
      %v7159 = vpack.c.b16 %v7127, %v7126
      %v7160 = vpack.c.b16 %v7129, %v7128
      %v7161 = vpack.c.b16 %v7131, %v7130
      %v7162 = vpack.c.b16 %v7133, %v7132
      %v7163 = vpack.c.b16 %v7135, %v7134
      %v7164 = vpack.c.b16 %v7137, %v7136
      %v7165 = vpack.c.b16 %v7139, %v7138
      %v7166 = vpack.c.b16 %v7141, %v7140
      %v7167 = vpack.c.b16 %v7143, %v7142
      %v7168 = vpack.c.b16 %v7145, %v7144
      %v7169 = vpack.c.b16 %v7147, %v7146
      %v7170 = vpack.c.b16 %v7149, %v7148
      %v7171 = vpack.c.b16 %v7151, %v7150
      %v7172 = vpack.c.b16 %v7153, %v7152
      %v7173 = vpack.c.b16 %v7155, %v7154
      %v7193 = vsel %vm561, %v7046, 0
      %v7196 = vsel %vm561, %v7049, 0
      %v7199 = vsel %vm561, %v7052, 0
      %v7202 = vsel %vm561, %v7055, 0
      %v7205 = vsel %vm561, %v7058, 0
      %v7208 = vsel %vm561, %v7061, 0
      %v7211 = vsel %vm561, %v7064, 0
      %v7214 = vsel %vm561, %v7067, 0
      %7216 = vmatpush.bf16.msra.mxu0 %v7163
      %7217 = vmatpush.bf16.msra.mxu0 %v7162
      %7218 = vmatpush.bf16.msra.mxu0 %v7161
      %7219 = vmatpush.bf16.msra.mxu0 %v7160
      %7220 = vmatpush.bf16.msra.mxu0 %v7159
      %7221 = vmatpush.bf16.msra.mxu0 %v7158
      %7222 = vmatpush.bf16.msra.mxu0 %v7157
      %7223 = vmatpush.bf16.msra.mxu0 %v7156
      %7224 = vmatmul.bf16.gmra.mxu0 %v7044
      %v7225 = vpop.f32.mrf.mxu0
      %v7226 = vadd.f32 %v6962, %v7225
      %v7227 = vpop.f32.mrf.mxu0
      %v7228 = vadd.f32 %v6962, %v7227
      %7229 = vmatmul.bf16.gmra.mxu0 %v7047
      %v7230 = vpop.f32.mrf.mxu0
      %v7231 = vadd.f32 %v6962, %v7230
      %v7232 = vpop.f32.mrf.mxu0
      %v7233 = vadd.f32 %v6962, %v7232
      %7234 = vmatmul.bf16.gmra.mxu0 %v7050
      %v7235 = vpop.f32.mrf.mxu0
      %v7236 = vadd.f32 %v6962, %v7235
      %v7237 = vpop.f32.mrf.mxu0
      %v7238 = vadd.f32 %v6962, %v7237
      %7239 = vmatmul.bf16.gmra.mxu0 %v7053
      %v7240 = vpop.f32.mrf.mxu0
      %v7241 = vadd.f32 %v6962, %v7240
      %v7242 = vpop.f32.mrf.mxu0
      %v7243 = vadd.f32 %v6962, %v7242
      %7244 = vmatmul.bf16.gmra.mxu0 %v7056
      %v7245 = vpop.f32.mrf.mxu0
      %v7246 = vadd.f32 %v6962, %v7245
      %v7247 = vpop.f32.mrf.mxu0
      %v7248 = vadd.f32 %v6962, %v7247
      %7249 = vmatmul.bf16.gmra.mxu0 %v7059
      %v7250 = vpop.f32.mrf.mxu0
      %v7251 = vadd.f32 %v6962, %v7250
      %v7252 = vpop.f32.mrf.mxu0
      %v7253 = vadd.f32 %v6962, %v7252
      %7254 = vmatmul.bf16.gmra.mxu0 %v7062
      %v7255 = vpop.f32.mrf.mxu0
      %v7256 = vadd.f32 %v6962, %v7255
      %v7257 = vpop.f32.mrf.mxu0
      %v7258 = vadd.f32 %v6962, %v7257
      %7259 = vmatmul.bf16.gmra.mxu0 %v7065
      %v7260 = vpop.f32.mrf.mxu0
      %v7261 = vadd.f32 %v6962, %v7260
      %v7262 = vpop.f32.mrf.mxu0
      %v7263 = vadd.f32 %v6962, %v7262
      %7264 = vdwg.mxu0
      %7265 = vmatpush.bf16.msra.mxu0 %v7171
      %7266 = vmatpush.bf16.msra.mxu0 %v7170
      %7267 = vmatpush.bf16.msra.mxu0 %v7169
      %7268 = vmatpush.bf16.msra.mxu0 %v7168
      %7269 = vmatpush.bf16.msra.mxu0 %v7167
      %7270 = vmatpush.bf16.msra.mxu0 %v7166
      %7271 = vmatpush.bf16.msra.mxu0 %v7165
      %7272 = vmatpush.bf16.msra.mxu0 %v7164
      %7273 = vmatmul.bf16.gmra.mxu0 %v7045
      %v7274 = vpop.f32.mrf.mxu0
      %v7275 = vadd.f32 %v7226, %v7274
      %v7276 = vpop.f32.mrf.mxu0
      %v7277 = vadd.f32 %v7228, %v7276
      %7278 = vmatmul.bf16.gmra.mxu0 %v7048
      %v7279 = vpop.f32.mrf.mxu0
      %v7280 = vadd.f32 %v7231, %v7279
      %v7281 = vpop.f32.mrf.mxu0
      %v7282 = vadd.f32 %v7233, %v7281
      %7283 = vmatmul.bf16.gmra.mxu0 %v7051
      %v7284 = vpop.f32.mrf.mxu0
      %v7285 = vadd.f32 %v7236, %v7284
      %v7286 = vpop.f32.mrf.mxu0
      %v7287 = vadd.f32 %v7238, %v7286
      %7288 = vmatmul.bf16.gmra.mxu0 %v7054
      %v7289 = vpop.f32.mrf.mxu0
      %v7290 = vadd.f32 %v7241, %v7289
      %v7291 = vpop.f32.mrf.mxu0
      %v7292 = vadd.f32 %v7243, %v7291
      %7293 = vmatmul.bf16.gmra.mxu0 %v7057
      %v7294 = vpop.f32.mrf.mxu0
      %v7295 = vadd.f32 %v7246, %v7294
      %v7296 = vpop.f32.mrf.mxu0
      %v7297 = vadd.f32 %v7248, %v7296
      %7298 = vmatmul.bf16.gmra.mxu0 %v7060
      %v7299 = vpop.f32.mrf.mxu0
      %v7300 = vadd.f32 %v7251, %v7299
      %v7301 = vpop.f32.mrf.mxu0
      %v7302 = vadd.f32 %v7253, %v7301
      %7303 = vmatmul.bf16.gmra.mxu0 %v7063
      %v7304 = vpop.f32.mrf.mxu0
      %v7305 = vadd.f32 %v7256, %v7304
      %v7306 = vpop.f32.mrf.mxu0
      %v7307 = vadd.f32 %v7258, %v7306
      %7308 = vmatmul.bf16.gmra.mxu0 %v7066
      %v7309 = vpop.f32.mrf.mxu0
      %v7310 = vadd.f32 %v7261, %v7309
      %v7311 = vpop.f32.mrf.mxu0
      %v7312 = vadd.f32 %v7263, %v7311
      %7313 = vdwg.mxu0
      %7314 = vmatpush.bf16.msra.mxu0 0
      %7315 = vmatpush.bf16.msra.mxu0 0
      %7316 = vmatpush.bf16.msra.mxu0 0
      %7317 = vmatpush.bf16.msra.mxu0 0
      %7318 = vmatpush.bf16.msra.mxu0 0
      %7319 = vmatpush.bf16.msra.mxu0 0
      %7320 = vmatpush.bf16.msra.mxu0 %v7173
      %7321 = vmatpush.bf16.msra.mxu0 %v7172
      %7322 = vmatmul.bf16.gmra.mxu0 %v7193
      %v7323 = vpop.f32.mrf.mxu0
      %v7324 = vadd.f32 %v7275, %v7323
      %v7325 = vpop.f32.mrf.mxu0
      %v7326 = vadd.f32 %v7277, %v7325
      %7327 = vmatmul.bf16.gmra.mxu0 %v7196
      %v7328 = vpop.f32.mrf.mxu0
      %v7329 = vadd.f32 %v7280, %v7328
      %v7330 = vpop.f32.mrf.mxu0
      %v7331 = vadd.f32 %v7282, %v7330
      %7332 = vmatmul.bf16.gmra.mxu0 %v7199
      %v7333 = vpop.f32.mrf.mxu0
      %v7334 = vadd.f32 %v7285, %v7333
      %v7335 = vpop.f32.mrf.mxu0
      %v7336 = vadd.f32 %v7287, %v7335
      %7337 = vmatmul.bf16.gmra.mxu0 %v7202
      %v7338 = vpop.f32.mrf.mxu0
      %v7339 = vadd.f32 %v7290, %v7338
      %v7340 = vpop.f32.mrf.mxu0
      %v7341 = vadd.f32 %v7292, %v7340
      %7342 = vmatmul.bf16.gmra.mxu0 %v7205
      %v7343 = vpop.f32.mrf.mxu0
      %v7344 = vadd.f32 %v7295, %v7343
      %v7345 = vpop.f32.mrf.mxu0
      %v7346 = vadd.f32 %v7297, %v7345
      %7347 = vmatmul.bf16.gmra.mxu0 %v7208
      %v7348 = vpop.f32.mrf.mxu0
      %v7349 = vadd.f32 %v7300, %v7348
      %v7350 = vpop.f32.mrf.mxu0
      %v7351 = vadd.f32 %v7302, %v7350
      %7352 = vmatmul.bf16.gmra.mxu0 %v7211
      %v7353 = vpop.f32.mrf.mxu0
      %v7354 = vadd.f32 %v7305, %v7353
      %v7355 = vpop.f32.mrf.mxu0
      %v7356 = vadd.f32 %v7307, %v7355
      %7357 = vmatmul.bf16.gmra.mxu0 %v7214
      %v7358 = vpop.f32.mrf.mxu0
      %v7359 = vadd.f32 %v7310, %v7358
      %v7360 = vpop.f32.mrf.mxu0
      %v7361 = vadd.f32 %v7312, %v7360
      %7362 = vdwg.mxu0
      %v7363 = vadd.f32 %v7324, %v4705
      %v7364 = vadd.f32 %v7326, %v4706
      %v7365 = vadd.f32 %v7329, %v4707
      %v7366 = vadd.f32 %v7331, %v4708
      %v7367 = vadd.f32 %v7334, %v4709
      %v7368 = vadd.f32 %v7336, %v4710
      %v7369 = vadd.f32 %v7339, %v4711
      %v7370 = vadd.f32 %v7341, %v4712
      %v7371 = vadd.f32 %v7344, %v4713
      %v7372 = vadd.f32 %v7346, %v4714
      %v7373 = vadd.f32 %v7349, %v4715
      %v7374 = vadd.f32 %v7351, %v4716
      %v7375 = vadd.f32 %v7354, %v4717
      %v7376 = vadd.f32 %v7356, %v4718
      %v7377 = vadd.f32 %v7359, %v4719
      %v7378 = vadd.f32 %v7361, %v4720
      %v7379 = vmax.f32 %v7363, 0.0
      %v7380 = vmax.f32 %v7364, 0.0
      %v7381 = vmax.f32 %v7365, 0.0
      %v7382 = vmax.f32 %v7366, 0.0
      %v7383 = vmax.f32 %v7367, 0.0
      %v7384 = vmax.f32 %v7368, 0.0
      %v7385 = vmax.f32 %v7369, 0.0
      %v7386 = vmax.f32 %v7370, 0.0
      %v7387 = vmax.f32 %v7371, 0.0
      %v7388 = vmax.f32 %v7372, 0.0
      %v7389 = vmax.f32 %v7373, 0.0
      %v7390 = vmax.f32 %v7374, 0.0
      %v7391 = vmax.f32 %v7375, 0.0
      %v7392 = vmax.f32 %v7376, 0.0
      %v7393 = vmax.f32 %v7377, 0.0
      %v7394 = vmax.f32 %v7378, 0.0
      %v7395 = vmul.f32 %v7379, %v633
      %v7396 = vmul.f32 %v7380, %v638
      %v7397 = vmul.f32 %v7381, %v643
      %v7398 = vmul.f32 %v7382, %v648
      %v7399 = vmul.f32 %v7383, %v653
      %v7400 = vmul.f32 %v7384, %v658
      %v7401 = vmul.f32 %v7385, %v663
      %v7402 = vmul.f32 %v7386, %v668
      %v7403 = vmul.f32 %v7387, %v673
      %v7404 = vmul.f32 %v7388, %v678
      %v7405 = vmul.f32 %v7389, %v683
      %v7406 = vmul.f32 %v7390, %v688
      %v7407 = vmul.f32 %v7391, %v693
      %v7408 = vmul.f32 %v7392, %v698
      %v7409 = vmul.f32 %v7393, %v703
      %v7410 = vmul.f32 %v7394, %v708
      %v7411 = vld [vmem:[%s6] sm:$0xff]
      %v7412 = vld [vmem:[%s6 + $0x8] sm:$0xff]
      %v7413 = vld [vmem:[%s6 + $0x10] sm:$0xff]
      %v7414 = vld [vmem:[%s6 + $0x18] sm:$0xff]
      %v7415 = vld [vmem:[%s7] sm:$0x1]
      %v7417 = vperm.slane %v7415, 0
      %v7420 = vsel %vm561, %v7395, 0
      %v7423 = vsel %vm561, %v7396, 0
      %v7426 = vsel %vm561, %v7397, 0
      %v7429 = vsel %vm561, %v7398, 0
      %v7432 = vsel %vm561, %v7399, 0
      %v7435 = vsel %vm561, %v7400, 0
      %v7438 = vsel %vm561, %v7401, 0
      %v7441 = vsel %vm561, %v7402, 0
      %v7444 = vsel %vm561, %v7403, 0
      %v7447 = vsel %vm561, %v7404, 0
      %v7450 = vsel %vm561, %v7405, 0
      %v7453 = vsel %vm561, %v7406, 0
      %v7456 = vsel %vm561, %v7407, 0
      %v7459 = vsel %vm561, %v7408, 0
      %v7462 = vsel %vm561, %v7409, 0
      %v7465 = vsel %vm561, %v7410, 0
      %7467 = vmatpush.msra.mxu0 0.0
      %7468 = vmatpush.msra.mxu0 0.0
      %7469 = vmatpush.msra.mxu0 0.0
      %7470 = vmatpush.msra.mxu0 0.0
      %7471 = vmatpush.msra.mxu0 0.0
      %7472 = vmatpush.msra.mxu0 0.0
      %7473 = vmatpush.msra.mxu0 0.0
      %7474 = vmatpush.msra.mxu0 0.0
      %7475 = vmatpush.msra.mxu0 0.0
      %7476 = vmatpush.msra.mxu0 0.0
      %7477 = vmatpush.msra.mxu0 0.0
      %7478 = vmatpush.msra.mxu0 0.0
      %7479 = vmatpush.msra.mxu0 %v7414
      %7480 = vmatpush.msra.mxu0 %v7413
      %7481 = vmatpush.msra.mxu0 %v7412
      %7482 = vmatpush.msra.mxu0 %v7411
      %7483 = vmatmul.f32.gmra.mxu0 %v7420
      %v7484 = vpop.f32.mrf.mxu0
      %v7485 = vadd.f32 %v7417, %v7484
      %7486 = vmatmul.f32.gmra.mxu0 %v7423
      %v7487 = vpop.f32.mrf.mxu0
      %v7488 = vadd.f32 %v7417, %v7487
      %7489 = vmatmul.f32.gmra.mxu0 %v7426
      %v7490 = vpop.f32.mrf.mxu0
      %v7491 = vadd.f32 %v7417, %v7490
      %7492 = vmatmul.f32.gmra.mxu0 %v7429
      %v7493 = vpop.f32.mrf.mxu0
      %v7494 = vadd.f32 %v7417, %v7493
      %7495 = vmatmul.f32.gmra.mxu0 %v7432
      %v7496 = vpop.f32.mrf.mxu0
      %v7497 = vadd.f32 %v7417, %v7496
      %7498 = vmatmul.f32.gmra.mxu0 %v7435
      %v7499 = vpop.f32.mrf.mxu0
      %v7500 = vadd.f32 %v7417, %v7499
      %7501 = vmatmul.f32.gmra.mxu0 %v7438
      %v7502 = vpop.f32.mrf.mxu0
      %v7503 = vadd.f32 %v7417, %v7502
      %7504 = vmatmul.f32.gmra.mxu0 %v7441
      %v7505 = vpop.f32.mrf.mxu0
      %v7506 = vadd.f32 %v7417, %v7505
      %7507 = vmatmul.f32.gmra.mxu0 %v7444
      %v7508 = vpop.f32.mrf.mxu0
      %v7509 = vadd.f32 %v7417, %v7508
      %7510 = vmatmul.f32.gmra.mxu0 %v7447
      %v7511 = vpop.f32.mrf.mxu0
      %v7512 = vadd.f32 %v7417, %v7511
      %7513 = vmatmul.f32.gmra.mxu0 %v7450
      %v7514 = vpop.f32.mrf.mxu0
      %v7515 = vadd.f32 %v7417, %v7514
      %7516 = vmatmul.f32.gmra.mxu0 %v7453
      %v7517 = vpop.f32.mrf.mxu0
      %v7518 = vadd.f32 %v7417, %v7517
      %7519 = vmatmul.f32.gmra.mxu0 %v7456
      %v7520 = vpop.f32.mrf.mxu0
      %v7521 = vadd.f32 %v7417, %v7520
      %7522 = vmatmul.f32.gmra.mxu0 %v7459
      %v7523 = vpop.f32.mrf.mxu0
      %v7524 = vadd.f32 %v7417, %v7523
      %7525 = vmatmul.f32.gmra.mxu0 %v7462
      %v7526 = vpop.f32.mrf.mxu0
      %v7527 = vadd.f32 %v7417, %v7526
      %7528 = vmatmul.f32.gmra.mxu0 %v7465
      %v7529 = vpop.f32.mrf.mxu0
      %v7530 = vadd.f32 %v7417, %v7529
      %7531 = vdwg.mxu0
      %v7532 = vmax.f32 %v7485, 0.0
      %v7533 = vmax.f32 %v7488, 0.0
      %v7534 = vmax.f32 %v7491, 0.0
      %v7535 = vmax.f32 %v7494, 0.0
      %v7536 = vmax.f32 %v7497, 0.0
      %v7537 = vmax.f32 %v7500, 0.0
      %v7538 = vmax.f32 %v7503, 0.0
      %v7539 = vmax.f32 %v7506, 0.0
      %v7540 = vmax.f32 %v7509, 0.0
      %v7541 = vmax.f32 %v7512, 0.0
      %v7542 = vmax.f32 %v7515, 0.0
      %v7543 = vmax.f32 %v7518, 0.0
      %v7544 = vmax.f32 %v7521, 0.0
      %v7545 = vmax.f32 %v7524, 0.0
      %v7546 = vmax.f32 %v7527, 0.0
      %v7547 = vmax.f32 %v7530, 0.0
      %v7548 = vld [vmem:[%s8] sm:$0xff]
      %v7549 = vld [vmem:[%s8 + $0x8] sm:$0xff]
      %v7550 = vld [vmem:[%s8 + $0x10] sm:$0xff]
      %v7551 = vld [vmem:[%s8 + $0x18] sm:$0xff]
      %v7552 = vld [vmem:[%s8 + $0x20] sm:$0xff]
      %v7553 = vld [vmem:[%s8 + $0x28] sm:$0xff]
      %v7554 = vld [vmem:[%s8 + $0x30] sm:$0xff]
      %v7555 = vld [vmem:[%s8 + $0x38] sm:$0xff]
      %v7556 = vld [vmem:[%s8 + $0x40] sm:$0xff]
      %v7557 = vld [vmem:[%s8 + $0x48] sm:$0xff]
      %v7558 = vld [vmem:[%s8 + $0x50] sm:$0xff]
      %v7559 = vld [vmem:[%s8 + $0x58] sm:$0xff]
      %v7560 = vld [vmem:[%s8 + $0x60] sm:$0xff]
      %v7561 = vld [vmem:[%s8 + $0x68] sm:$0xff]
      %v7562 = vld [vmem:[%s8 + $0x70] sm:$0xff]
      %v7563 = vld [vmem:[%s8 + $0x78] sm:$0xff]
      %7565 = vset.pattern.permute.xlu0 0
      %7566 = vperm.xlu0 %7565, %v7532
      %v7567 = vpop.permute.xlu0 %7566
      %7570 = vset.pattern.permute.xlu0 0
      %7571 = vperm.xlu0 %7570, %v7533
      %v7572 = vpop.permute.xlu0 %7571
      %7575 = vset.pattern.permute.xlu0 0
      %7576 = vperm.xlu0 %7575, %v7534
      %v7577 = vpop.permute.xlu0 %7576
      %7580 = vset.pattern.permute.xlu0 0
      %7581 = vperm.xlu0 %7580, %v7535
      %v7582 = vpop.permute.xlu0 %7581
      %7585 = vset.pattern.permute.xlu0 0
      %7586 = vperm.xlu0 %7585, %v7536
      %v7587 = vpop.permute.xlu0 %7586
      %7590 = vset.pattern.permute.xlu0 0
      %7591 = vperm.xlu0 %7590, %v7537
      %v7592 = vpop.permute.xlu0 %7591
      %7595 = vset.pattern.permute.xlu0 0
      %7596 = vperm.xlu0 %7595, %v7538
      %v7597 = vpop.permute.xlu0 %7596
      %7600 = vset.pattern.permute.xlu0 0
      %7601 = vperm.xlu0 %7600, %v7539
      %v7602 = vpop.permute.xlu0 %7601
      %7605 = vset.pattern.permute.xlu0 0
      %7606 = vperm.xlu0 %7605, %v7540
      %v7607 = vpop.permute.xlu0 %7606
      %7610 = vset.pattern.permute.xlu0 0
      %7611 = vperm.xlu0 %7610, %v7541
      %v7612 = vpop.permute.xlu0 %7611
      %7615 = vset.pattern.permute.xlu0 0
      %7616 = vperm.xlu0 %7615, %v7542
      %v7617 = vpop.permute.xlu0 %7616
      %7620 = vset.pattern.permute.xlu0 0
      %7621 = vperm.xlu0 %7620, %v7543
      %v7622 = vpop.permute.xlu0 %7621
      %7625 = vset.pattern.permute.xlu0 0
      %7626 = vperm.xlu0 %7625, %v7544
      %v7627 = vpop.permute.xlu0 %7626
      %7630 = vset.pattern.permute.xlu0 0
      %7631 = vperm.xlu0 %7630, %v7545
      %v7632 = vpop.permute.xlu0 %7631
      %7635 = vset.pattern.permute.xlu0 0
      %7636 = vperm.xlu0 %7635, %v7546
      %v7637 = vpop.permute.xlu0 %7636
      %7640 = vset.pattern.permute.xlu0 0
      %7641 = vperm.xlu0 %7640, %v7547
      %v7642 = vpop.permute.xlu0 %7641
      %v7644 = vmul.f32 %v7567, %v7548
      %v7645 = vmul.f32 %v7572, %v7549
      %v7646 = vmul.f32 %v7577, %v7550
      %v7647 = vmul.f32 %v7582, %v7551
      %v7648 = vmul.f32 %v7587, %v7552
      %v7649 = vmul.f32 %v7592, %v7553
      %v7650 = vmul.f32 %v7597, %v7554
      %v7651 = vmul.f32 %v7602, %v7555
      %v7652 = vmul.f32 %v7607, %v7556
      %v7653 = vmul.f32 %v7612, %v7557
      %v7654 = vmul.f32 %v7617, %v7558
      %v7655 = vmul.f32 %v7622, %v7559
      %v7656 = vmul.f32 %v7627, %v7560
      %v7657 = vmul.f32 %v7632, %v7561
      %v7658 = vmul.f32 %v7637, %v7562
      %v7659 = vmul.f32 %v7642, %v7563
      %v7660 = vld [vmem:[%s9] sm:$0xff]
      %v7661 = vld [vmem:[%s9 + $0x8] sm:$0xff]
      %v7662 = vld [vmem:[%s9 + $0x10] sm:$0xff]
      %v7663 = vld [vmem:[%s9 + $0x18] sm:$0xff]
      %v7664 = vld [vmem:[%s9 + $0x20] sm:$0xff]
      %v7665 = vld [vmem:[%s9 + $0x28] sm:$0xff]
      %v7666 = vld [vmem:[%s9 + $0x30] sm:$0xff]
      %v7667 = vld [vmem:[%s9 + $0x38] sm:$0xff]
      %v7668 = vld [vmem:[%s9 + $0x40] sm:$0xff]
      %v7669 = vld [vmem:[%s9 + $0x48] sm:$0xff]
      %v7670 = vld [vmem:[%s9 + $0x50] sm:$0xff]
      %v7671 = vld [vmem:[%s9 + $0x58] sm:$0xff]
      %v7672 = vld [vmem:[%s9 + $0x60] sm:$0xff]
      %v7673 = vld [vmem:[%s9 + $0x68] sm:$0xff]
      %v7674 = vld [vmem:[%s9 + $0x70] sm:$0xff]
      %v7675 = vld [vmem:[%s9 + $0x78] sm:$0xff]
      %7676 = vset.pattern.permute.xlu0 1
      %7677 = vperm.xlu0 %7676, %v7532
      %v7678 = vpop.permute.xlu0 %7677
      %7680 = vset.pattern.permute.xlu0 1
      %7681 = vperm.xlu0 %7680, %v7533
      %v7682 = vpop.permute.xlu0 %7681
      %7684 = vset.pattern.permute.xlu0 1
      %7685 = vperm.xlu0 %7684, %v7534
      %v7686 = vpop.permute.xlu0 %7685
      %7688 = vset.pattern.permute.xlu0 1
      %7689 = vperm.xlu0 %7688, %v7535
      %v7690 = vpop.permute.xlu0 %7689
      %7692 = vset.pattern.permute.xlu0 1
      %7693 = vperm.xlu0 %7692, %v7536
      %v7694 = vpop.permute.xlu0 %7693
      %7696 = vset.pattern.permute.xlu0 1
      %7697 = vperm.xlu0 %7696, %v7537
      %v7698 = vpop.permute.xlu0 %7697
      %7700 = vset.pattern.permute.xlu0 1
      %7701 = vperm.xlu0 %7700, %v7538
      %v7702 = vpop.permute.xlu0 %7701
      %7704 = vset.pattern.permute.xlu0 1
      %7705 = vperm.xlu0 %7704, %v7539
      %v7706 = vpop.permute.xlu0 %7705
      %7708 = vset.pattern.permute.xlu0 1
      %7709 = vperm.xlu0 %7708, %v7540
      %v7710 = vpop.permute.xlu0 %7709
      %7712 = vset.pattern.permute.xlu0 1
      %7713 = vperm.xlu0 %7712, %v7541
      %v7714 = vpop.permute.xlu0 %7713
      %7716 = vset.pattern.permute.xlu0 1
      %7717 = vperm.xlu0 %7716, %v7542
      %v7718 = vpop.permute.xlu0 %7717
      %7720 = vset.pattern.permute.xlu0 1
      %7721 = vperm.xlu0 %7720, %v7543
      %v7722 = vpop.permute.xlu0 %7721
      %7724 = vset.pattern.permute.xlu0 1
      %7725 = vperm.xlu0 %7724, %v7544
      %v7726 = vpop.permute.xlu0 %7725
      %7728 = vset.pattern.permute.xlu0 1
      %7729 = vperm.xlu0 %7728, %v7545
      %v7730 = vpop.permute.xlu0 %7729
      %7732 = vset.pattern.permute.xlu0 1
      %7733 = vperm.xlu0 %7732, %v7546
      %v7734 = vpop.permute.xlu0 %7733
      %7736 = vset.pattern.permute.xlu0 1
      %7737 = vperm.xlu0 %7736, %v7547
      %v7738 = vpop.permute.xlu0 %7737
      %v7740 = vmul.f32 %v7678, %v7660
      %v7741 = vmul.f32 %v7682, %v7661
      %v7742 = vmul.f32 %v7686, %v7662
      %v7743 = vmul.f32 %v7690, %v7663
      %v7744 = vmul.f32 %v7694, %v7664
      %v7745 = vmul.f32 %v7698, %v7665
      %v7746 = vmul.f32 %v7702, %v7666
      %v7747 = vmul.f32 %v7706, %v7667
      %v7748 = vmul.f32 %v7710, %v7668
      %v7749 = vmul.f32 %v7714, %v7669
      %v7750 = vmul.f32 %v7718, %v7670
      %v7751 = vmul.f32 %v7722, %v7671
      %v7752 = vmul.f32 %v7726, %v7672
      %v7753 = vmul.f32 %v7730, %v7673
      %v7754 = vmul.f32 %v7734, %v7674
      %v7755 = vmul.f32 %v7738, %v7675
      %v7756 = vadd.f32 %v7644, %v7740
      %v7757 = vadd.f32 %v7645, %v7741
      %v7758 = vadd.f32 %v7646, %v7742
      %v7759 = vadd.f32 %v7647, %v7743
      %v7760 = vadd.f32 %v7648, %v7744
      %v7761 = vadd.f32 %v7649, %v7745
      %v7762 = vadd.f32 %v7650, %v7746
      %v7763 = vadd.f32 %v7651, %v7747
      %v7764 = vadd.f32 %v7652, %v7748
      %v7765 = vadd.f32 %v7653, %v7749
      %v7766 = vadd.f32 %v7654, %v7750
      %v7767 = vadd.f32 %v7655, %v7751
      %v7768 = vadd.f32 %v7656, %v7752
      %v7769 = vadd.f32 %v7657, %v7753
      %v7770 = vadd.f32 %v7658, %v7754
      %v7771 = vadd.f32 %v7659, %v7755
      %v7772 = vld [vmem:[%s10] sm:$0xff]
      %v7773 = vld [vmem:[%s10 + $0x8] sm:$0xff]
      %v7774 = vld [vmem:[%s10 + $0x10] sm:$0xff]
      %v7775 = vld [vmem:[%s10 + $0x18] sm:$0xff]
      %v7776 = vld [vmem:[%s10 + $0x20] sm:$0xff]
      %v7777 = vld [vmem:[%s10 + $0x28] sm:$0xff]
      %v7778 = vld [vmem:[%s10 + $0x30] sm:$0xff]
      %v7779 = vld [vmem:[%s10 + $0x38] sm:$0xff]
      %v7780 = vld [vmem:[%s10 + $0x40] sm:$0xff]
      %v7781 = vld [vmem:[%s10 + $0x48] sm:$0xff]
      %v7782 = vld [vmem:[%s10 + $0x50] sm:$0xff]
      %v7783 = vld [vmem:[%s10 + $0x58] sm:$0xff]
      %v7784 = vld [vmem:[%s10 + $0x60] sm:$0xff]
      %v7785 = vld [vmem:[%s10 + $0x68] sm:$0xff]
      %v7786 = vld [vmem:[%s10 + $0x70] sm:$0xff]
      %v7787 = vld [vmem:[%s10 + $0x78] sm:$0xff]
      %v7788 = vld [vmem:[%s10 + $0x80] sm:$0xff]
      %v7789 = vld [vmem:[%s10 + $0x88] sm:$0xff]
      %v7790 = vld [vmem:[%s10 + $0x90] sm:$0xff]
      %v7791 = vld [vmem:[%s10 + $0x98] sm:$0xff]
      %v7792 = vld [vmem:[%s10 + $0xa0] sm:$0xff]
      %v7793 = vld [vmem:[%s10 + $0xa8] sm:$0xff]
      %v7794 = vld [vmem:[%s10 + $0xb0] sm:$0xff]
      %v7795 = vld [vmem:[%s10 + $0xb8] sm:$0xff]
      %v7796 = vld [vmem:[%s10 + $0xc0] sm:$0xff]
      %v7797 = vld [vmem:[%s10 + $0xc8] sm:$0xff]
      %v7798 = vld [vmem:[%s10 + $0xd0] sm:$0xff]
      %v7799 = vld [vmem:[%s10 + $0xd8] sm:$0xff]
      %v7800 = vld [vmem:[%s10 + $0xe0] sm:$0xff]
      %v7801 = vld [vmem:[%s10 + $0xe8] sm:$0xff]
      %v7802 = vld [vmem:[%s10 + $0xf0] sm:$0xff]
      %v7803 = vld [vmem:[%s10 + $0xf8] sm:$0xff]
      %7804 = vset.pattern.permute.xlu0 2
      %7805 = vperm.xlu0 %7804, %v7532
      %v7806 = vpop.permute.xlu0 %7805
      %7808 = vset.pattern.permute.xlu0 2
      %7809 = vperm.xlu0 %7808, %v7533
      %v7810 = vpop.permute.xlu0 %7809
      %7812 = vset.pattern.permute.xlu0 2
      %7813 = vperm.xlu0 %7812, %v7534
      %v7814 = vpop.permute.xlu0 %7813
      %7816 = vset.pattern.permute.xlu0 2
      %7817 = vperm.xlu0 %7816, %v7535
      %v7818 = vpop.permute.xlu0 %7817
      %7820 = vset.pattern.permute.xlu0 2
      %7821 = vperm.xlu0 %7820, %v7536
      %v7822 = vpop.permute.xlu0 %7821
      %7824 = vset.pattern.permute.xlu0 2
      %7825 = vperm.xlu0 %7824, %v7537
      %v7826 = vpop.permute.xlu0 %7825
      %7828 = vset.pattern.permute.xlu0 2
      %7829 = vperm.xlu0 %7828, %v7538
      %v7830 = vpop.permute.xlu0 %7829
      %7832 = vset.pattern.permute.xlu0 2
      %7833 = vperm.xlu0 %7832, %v7539
      %v7834 = vpop.permute.xlu0 %7833
      %7836 = vset.pattern.permute.xlu0 2
      %7837 = vperm.xlu0 %7836, %v7540
      %v7838 = vpop.permute.xlu0 %7837
      %7840 = vset.pattern.permute.xlu0 2
      %7841 = vperm.xlu0 %7840, %v7541
      %v7842 = vpop.permute.xlu0 %7841
      %7844 = vset.pattern.permute.xlu0 2
      %7845 = vperm.xlu0 %7844, %v7542
      %v7846 = vpop.permute.xlu0 %7845
      %7848 = vset.pattern.permute.xlu0 2
      %7849 = vperm.xlu0 %7848, %v7543
      %v7850 = vpop.permute.xlu0 %7849
      %7852 = vset.pattern.permute.xlu0 2
      %7853 = vperm.xlu0 %7852, %v7544
      %v7854 = vpop.permute.xlu0 %7853
      %7856 = vset.pattern.permute.xlu0 2
      %7857 = vperm.xlu0 %7856, %v7545
      %v7858 = vpop.permute.xlu0 %7857
      %7860 = vset.pattern.permute.xlu0 2
      %7861 = vperm.xlu0 %7860, %v7546
      %v7862 = vpop.permute.xlu0 %7861
      %7864 = vset.pattern.permute.xlu0 2
      %7865 = vperm.xlu0 %7864, %v7547
      %v7866 = vpop.permute.xlu0 %7865
      %v7868 = vmul.f32 %v7806, %v7772
      %v7869 = vmul.f32 %v7806, %v7773
      %v7870 = vmul.f32 %v7810, %v7774
      %v7871 = vmul.f32 %v7810, %v7775
      %v7872 = vmul.f32 %v7814, %v7776
      %v7873 = vmul.f32 %v7814, %v7777
      %v7874 = vmul.f32 %v7818, %v7778
      %v7875 = vmul.f32 %v7818, %v7779
      %v7876 = vmul.f32 %v7822, %v7780
      %v7877 = vmul.f32 %v7822, %v7781
      %v7878 = vmul.f32 %v7826, %v7782
      %v7879 = vmul.f32 %v7826, %v7783
      %v7880 = vmul.f32 %v7830, %v7784
      %v7881 = vmul.f32 %v7830, %v7785
      %v7882 = vmul.f32 %v7834, %v7786
      %v7883 = vmul.f32 %v7834, %v7787
      %v7884 = vmul.f32 %v7838, %v7788
      %v7885 = vmul.f32 %v7838, %v7789
      %v7886 = vmul.f32 %v7842, %v7790
      %v7887 = vmul.f32 %v7842, %v7791
      %v7888 = vmul.f32 %v7846, %v7792
      %v7889 = vmul.f32 %v7846, %v7793
      %v7890 = vmul.f32 %v7850, %v7794
      %v7891 = vmul.f32 %v7850, %v7795
      %v7892 = vmul.f32 %v7854, %v7796
      %v7893 = vmul.f32 %v7854, %v7797
      %v7894 = vmul.f32 %v7858, %v7798
      %v7895 = vmul.f32 %v7858, %v7799
      %v7896 = vmul.f32 %v7862, %v7800
      %v7897 = vmul.f32 %v7862, %v7801
      %v7898 = vmul.f32 %v7866, %v7802
      %v7899 = vmul.f32 %v7866, %v7803
      %v7900 = vld [vmem:[%s15] sm:$0xff]
      %v7901 = vld [vmem:[%s11] sm:$0x1]
      %v7903 = vperm.slane %v7901, 0
      %7905 = vmatpush.msra.mxu0 %v7771
      %7906 = vmatpush.msra.mxu0 %v7770
      %7907 = vmatpush.msra.mxu0 %v7769
      %7908 = vmatpush.msra.mxu0 %v7768
      %7909 = vmatpush.msra.mxu0 %v7767
      %7910 = vmatpush.msra.mxu0 %v7766
      %7911 = vmatpush.msra.mxu0 %v7765
      %7912 = vmatpush.msra.mxu0 %v7764
      %7913 = vmatpush.msra.mxu0 %v7763
      %7914 = vmatpush.msra.mxu0 %v7762
      %7915 = vmatpush.msra.mxu0 %v7761
      %7916 = vmatpush.msra.mxu0 %v7760
      %7917 = vmatpush.msra.mxu0 %v7759
      %7918 = vmatpush.msra.mxu0 %v7758
      %7919 = vmatpush.msra.mxu0 %v7757
      %7920 = vmatpush.msra.mxu0 %v7756
      %7921 = vmatmul.f32.gmra.mxu0 %v7900
      %v7922 = vpop.f32.mrf.mxu0
      %v7923 = vadd.f32 %v7903, %v7922
      %7924 = vdwg.mxu0
      %v7925 = vld [vmem:[%s12] sm:$0x3]
      %v7927 = vperm.slane %v7925, 0
      %v7928 = vperm.slane %v7925, 1
      %7931 = vmatpush.msra.mxu0 %v7898
      %7932 = vmatpush.msra.mxu0 %v7896
      %7933 = vmatpush.msra.mxu0 %v7894
      %7934 = vmatpush.msra.mxu0 %v7892
      %7935 = vmatpush.msra.mxu0 %v7890
      %7936 = vmatpush.msra.mxu0 %v7888
      %7937 = vmatpush.msra.mxu0 %v7886
      %7938 = vmatpush.msra.mxu0 %v7884
      %7939 = vmatpush.msra.mxu0 %v7882
      %7940 = vmatpush.msra.mxu0 %v7880
      %7941 = vmatpush.msra.mxu0 %v7878
      %7942 = vmatpush.msra.mxu0 %v7876
      %7943 = vmatpush.msra.mxu0 %v7874
      %7944 = vmatpush.msra.mxu0 %v7872
      %7945 = vmatpush.msra.mxu0 %v7870
      %7946 = vmatpush.msra.mxu0 %v7868
      %7947 = vmatmul.f32.gmra.mxu0 %v7900
      %v7948 = vpop.f32.mrf.mxu0
      %v7949 = vadd.f32 %v7927, %v7948
      %7950 = vdwg.mxu0
      %7951 = vmatpush.msra.mxu0 %v7899
      %7952 = vmatpush.msra.mxu0 %v7897
      %7953 = vmatpush.msra.mxu0 %v7895
      %7954 = vmatpush.msra.mxu0 %v7893
      %7955 = vmatpush.msra.mxu0 %v7891
      %7956 = vmatpush.msra.mxu0 %v7889
      %7957 = vmatpush.msra.mxu0 %v7887
      %7958 = vmatpush.msra.mxu0 %v7885
      %7959 = vmatpush.msra.mxu0 %v7883
      %7960 = vmatpush.msra.mxu0 %v7881
      %7961 = vmatpush.msra.mxu0 %v7879
      %7962 = vmatpush.msra.mxu0 %v7877
      %7963 = vmatpush.msra.mxu0 %v7875
      %7964 = vmatpush.msra.mxu0 %v7873
      %7965 = vmatpush.msra.mxu0 %v7871
      %7966 = vmatpush.msra.mxu0 %v7869
      %7967 = vmatmul.f32.gmra.mxu0 %v7900
      %v7968 = vpop.f32.mrf.mxu0
      %v7969 = vadd.f32 %v7928, %v7968
      %7970 = vdwg.mxu0
      %v7971 = vmax.f32 %v7949, 0.0
      %v7972 = vmax.f32 %v7969, 0.0
      %v7973 = vld [vmem:[%s13] sm:$0xff]
      %v7974 = vld [vmem:[%s13 + $0x8] sm:$0xff]
      %v7975 = vld [vmem:[%s13 + $0x10] sm:$0xff]
      %v7976 = vld [vmem:[%s13 + $0x18] sm:$0xff]
      %v7977 = vld [vmem:[%s13 + $0x20] sm:$0xff]
      %v7978 = vld [vmem:[%s13 + $0x28] sm:$0xff]
      %v7979 = vld [vmem:[%s13 + $0x30] sm:$0xff]
      %v7980 = vld [vmem:[%s13 + $0x38] sm:$0xff]
      %v7981 = vld [vmem:[%s13 + $0x40] sm:$0xff]
      %v7982 = vld [vmem:[%s13 + $0x48] sm:$0xff]
      %v7983 = vld [vmem:[%s13 + $0x50] sm:$0xff]
      %v7984 = vld [vmem:[%s13 + $0x58] sm:$0xff]
      %v7985 = vld [vmem:[%s13 + $0x60] sm:$0xff]
      %v7986 = vld [vmem:[%s13 + $0x68] sm:$0xff]
      %v7987 = vld [vmem:[%s13 + $0x70] sm:$0xff]
      %v7988 = vld [vmem:[%s13 + $0x78] sm:$0xff]
      %v7989 = vld [vmem:[%s13 + $0x80] sm:$0xff]
      %v7990 = vld [vmem:[%s13 + $0x88] sm:$0xff]
      %v7991 = vld [vmem:[%s13 + $0x90] sm:$0xff]
      %v7992 = vld [vmem:[%s13 + $0x98] sm:$0xff]
      %v7993 = vld [vmem:[%s13 + $0xa0] sm:$0xff]
      %v7994 = vld [vmem:[%s13 + $0xa8] sm:$0xff]
      %v7995 = vld [vmem:[%s13 + $0xb0] sm:$0xff]
      %v7996 = vld [vmem:[%s13 + $0xb8] sm:$0xff]
      %v7997 = vld [vmem:[%s13 + $0xc0] sm:$0xff]
      %v7998 = vld [vmem:[%s13 + $0xc8] sm:$0xff]
      %v7999 = vld [vmem:[%s13 + $0xd0] sm:$0xff]
      %v8000 = vld [vmem:[%s13 + $0xd8] sm:$0xff]
      %v8001 = vld [vmem:[%s13 + $0xe0] sm:$0xff]
      %v8002 = vld [vmem:[%s13 + $0xe8] sm:$0xff]
      %v8003 = vld [vmem:[%s13 + $0xf0] sm:$0xff]
      %v8004 = vld [vmem:[%s13 + $0xf8] sm:$0xff]
      %v8005 = vld [vmem:[%s14] sm:$0x1]
      %v8007 = vperm.slane %v8005, 0
      %8009 = vmatpush.msra.mxu0 %v7988
      %8010 = vmatpush.msra.mxu0 %v7987
      %8011 = vmatpush.msra.mxu0 %v7986
      %8012 = vmatpush.msra.mxu0 %v7985
      %8013 = vmatpush.msra.mxu0 %v7984
      %8014 = vmatpush.msra.mxu0 %v7983
      %8015 = vmatpush.msra.mxu0 %v7982
      %8016 = vmatpush.msra.mxu0 %v7981
      %8017 = vmatpush.msra.mxu0 %v7980
      %8018 = vmatpush.msra.mxu0 %v7979
      %8019 = vmatpush.msra.mxu0 %v7978
      %8020 = vmatpush.msra.mxu0 %v7977
      %8021 = vmatpush.msra.mxu0 %v7976
      %8022 = vmatpush.msra.mxu0 %v7975
      %8023 = vmatpush.msra.mxu0 %v7974
      %8024 = vmatpush.msra.mxu0 %v7973
      %8025 = vmatmul.f32.gmra.mxu0 %v7971
      %v8026 = vpop.f32.mrf.mxu0
      %v8027 = vadd.f32 %v8007, %v8026
      %8028 = vdwg.mxu0
      %8029 = vmatpush.msra.mxu0 %v8004
      %8030 = vmatpush.msra.mxu0 %v8003
      %8031 = vmatpush.msra.mxu0 %v8002
      %8032 = vmatpush.msra.mxu0 %v8001
      %8033 = vmatpush.msra.mxu0 %v8000
      %8034 = vmatpush.msra.mxu0 %v7999
      %8035 = vmatpush.msra.mxu0 %v7998
      %8036 = vmatpush.msra.mxu0 %v7997
      %8037 = vmatpush.msra.mxu0 %v7996
      %8038 = vmatpush.msra.mxu0 %v7995
      %8039 = vmatpush.msra.mxu0 %v7994
      %8040 = vmatpush.msra.mxu0 %v7993
      %8041 = vmatpush.msra.mxu0 %v7992
      %8042 = vmatpush.msra.mxu0 %v7991
      %8043 = vmatpush.msra.mxu0 %v7990
      %8044 = vmatpush.msra.mxu0 %v7989
      %8045 = vmatmul.f32.gmra.mxu0 %v7972
      %v8046 = vpop.f32.mrf.mxu0
      %v8047 = vadd.f32 %v8027, %v8046
      %8048 = vdwg.mxu0
      %v8049 = vtanh.pop %v8047
      %8050 = vst [vmem:[%s555] sm:$0xff] %v7923
      %8051 = vst [vmem:[%s559] sm:$0xff] %v8049
      %p8052 = scmp.lt.s32.totalorder %s29, 1
      %s8053 = scalar_select %p8052, %s29, 1
      %s8054 = smul.addr %s8053, 8
      %s8055 = scalar_lea.vmem %s16, %s8054
      %p8056 = scmp.lt.s32.totalorder %s29, 1
      %s8057 = scalar_select %p8056, %s29, 1
      %s8058 = smul.addr %s8057, 8
      %s8059 = scalar_lea.vmem %s17, %s8058
      // Predicated region
      $region85: #{policy_value_forward.1} parent=83 // pred_check
        %p8060 = pneg %p388
      $region86: #{policy_value_forward.1} parent=83 // pred_check_branch
        %8062 = sbr.rel (%p8060) target = $region88
      $region87: #{policy_value_forward.1} parent=83 // pred_region
        _
      $region88: #{policy_value_forward.1} parent=83 // pred_fallthru
        _
      // Predicated region
      $region89: #{policy_value_forward.1} parent=83 // pred_check
        %p8063 = pneg %p414
      $region90: #{policy_value_forward.1} parent=83 // pred_check_branch
        %8065 = sbr.rel (%p8063) target = $region92
      $region91: #{policy_value_forward.1} parent=83 // pred_region
        _
      $region92: #{policy_value_forward.1} parent=83 // pred_fallthru
        _
    $region84: #{policy_value_forward.1} parent=5 // pred_fallthru
      _
    %p8066 = scmp.le.s32.totalorder 2, %s24
    // Predicated region
    $region93: #{policy_value_forward.1} parent=5 // pred_check
      %p8067 = pneg %p8066
    $region94: #{policy_value_forward.1} parent=5 // pred_check_branch
      %8069 = sbr.rel (%p8067) target = $region96
    $region95: #{policy_value_forward.1} parent=5 // pred_region
      %s8070 = ssub.s32 %s24, 2
      // Predicated region
      $region97: #{policy_value_forward.1} parent=95 // pred_check
        %p8071 = pneg %p394
      $region98: #{policy_value_forward.1} parent=95 // pred_check_branch
        %8073 = sbr.rel (%p8071) target = $region100
      $region99: #{policy_value_forward.1} parent=95 // pred_region
        %p8074 = scmp.lt.s32.totalorder %s30, 1
        %s8075 = scalar_select %p8074, %s30, 1
        %s8076 = smul.addr %s8075, 8
        %s8077 = scalar_lea.vmem %s16, %s8076
      $region100: #{policy_value_forward.1} parent=95 // pred_fallthru
        _
      // Predicated region
      $region101: #{policy_value_forward.1} parent=95 // pred_check
        %p8078 = pneg %p420
      $region102: #{policy_value_forward.1} parent=95 // pred_check_branch
        %8080 = sbr.rel (%p8078) target = $region104
      $region103: #{policy_value_forward.1} parent=95 // pred_region
        %p8081 = scmp.lt.s32.totalorder %s30, 1
        %s8082 = scalar_select %p8081, %s30, 1
        %s8083 = smul.addr %s8082, 8
        %s8084 = scalar_lea.vmem %s17, %s8083
      $region104: #{policy_value_forward.1} parent=95 // pred_fallthru
        _
    $region96: #{policy_value_forward.1} parent=5 // pred_fallthru
      _
  $region6: #{policy_value_forward.1} parent=0 // loop_footer
    %s28 = sadd.s32 1, %s24
  $region7: #{policy_value_forward.1} parent=0 // loop_footer_branch
    %23 = sbr.rel target = $region3
  $region8: #{policy_value_forward.1} parent=0 // loop_exit
    _

</llo_original>
